<compile_context>
chip_gen: v7x
topology: tpu7x:2x2x1
jax: 0.10.0
libtpu: 0.0.40
codegen_flags: <defaults>
</compile_context>

<pallas_src>
import functools
import math

import numpy as np
import jax
import jax.numpy as jnp
from jax.experimental import pallas as pl
from jax.experimental.pallas import tpu as pltpu

F32 = jnp.float32


# ----------------------------------------------------------------------------
# Fused decoder kernel: one grid step == one decoder layer.
# ----------------------------------------------------------------------------
def _fused_decoder_kernel(
    # shared inputs (constant block index -> resident across layers)
    inputs_ref, timing_ref, enc_ref, dec_mask_ref, src_mask_ref,
    s1_ref, w_emb_ref, lno_g_ref, lno_b_ref,
    # per-layer inputs (blocked on the layer grid axis)
    lng_ref, lnb_ref,
    wq_s_ref, wk_s_ref, wv_s_ref, wo_s_ref,
    wq_c_ref, wk_c_ref, wv_c_ref, wo_c_ref,
    w1_ref, b1_ref, w2_ref, b2_ref,
    # outputs
    y_ref, attn_ref,
    # scratch (persists across grid steps -> carries x between layers)
    x_sc,
    *, B, Lt, Ls, nh, dk, dv, num_layers, eps):
  layer = pl.program_id(0)
  H = w_emb_ref.shape[1]
  scale = dk ** -0.5

  # --- layer 0: embedding projection + timing signal (fused epilogue add) ---
  @pl.when(layer == 0)
  def _init():
    x0 = jnp.dot(inputs_ref[...], w_emb_ref[...],
                 preferred_element_type=jnp.float32)
    x_sc[...] = x0 + timing_ref[...]

  def layer_norm(x, g, b):
    mean = jnp.mean(x, axis=-1, keepdims=True)
    d = x - mean
    # torch.std -> Bessel correction (N-1); reference LN divides by (std + eps).
    std = jnp.sqrt(jnp.sum(d * d, axis=-1, keepdims=True) / (H - 1))
    return g * d / (std + eps) + b

  def mha(x_q, x_kv, Lq, Lk, mask, wq_ref, wk_ref, wv_ref, wo_ref, need_dist):
    """x_q: [B*Lq, H], x_kv: [B*Lk, H]; weights are full [H,Dk]/[H,Dv]/[Dv,H]."""
    # Full-width projections -> single large MXU ops per tensor.
    q = jnp.dot(x_q, wq_ref[...], preferred_element_type=jnp.float32) * scale
    k = jnp.dot(x_kv, wk_ref[...], preferred_element_type=jnp.float32)
    v = jnp.dot(x_kv, wv_ref[...], preferred_element_type=jnp.float32)

    logit_sum = (jnp.zeros((B, Lq, Lk), dtype=jnp.float32)
                 if need_dist else None)
    ctx_heads = []
    for h in range(nh):                         # static unroll over heads
      qh = q[:, h * dk:(h + 1) * dk].reshape(B, Lq, dk)
      kh = k[:, h * dk:(h + 1) * dk].reshape(B, Lk, dk)
      vh = v[:, h * dv:(h + 1) * dv].reshape(B, Lk, dv)
      logits = jnp.einsum('bqd,bkd->bqk', qh, kh,
                          preferred_element_type=jnp.float32)
      logits = jnp.where(mask > 0, jnp.float32(-1e18), logits)   # masked_fill
      if need_dist:
        logit_sum = logit_sum + logits
      mx = jnp.max(logits, axis=-1, keepdims=True)
      e = jnp.exp(logits - mx)
      p = e / jnp.sum(e, axis=-1, keepdims=True)
      ctx_heads.append(jnp.einsum('bqk,bkd->bqd', p, vh,
                                  preferred_element_type=jnp.float32))
    # Re-join heads on the lane axis and do ONE output projection matmul
    # (exactly the reference's single [Dv, H] linear).
    ctx = jnp.concatenate(ctx_heads, axis=-1).reshape(B * Lq, nh * dv)
    out = jnp.dot(ctx, wo_ref[...], preferred_element_type=jnp.float32)
    if need_dist:
      return out, logit_sum / nh
    return out, None

  def causal_conv(x, w_ref, bias):
    # out[t] = x[t-2]@w[0] + x[t-1]@w[1] + x[t]@w[2] + b, then ReLU.
    # Temporal shifts realized with one tiny block-diagonal shift-by-1 matrix
    # applied twice (keeps everything tile-aligned; no sublane-offset slices).
    xs1 = jnp.dot(s1_ref[...], x, preferred_element_type=jnp.float32)
    xs2 = jnp.dot(s1_ref[...], xs1, preferred_element_type=jnp.float32)
    acc = jnp.dot(xs2, w_ref[0], preferred_element_type=jnp.float32)
    acc = acc + jnp.dot(xs1, w_ref[1], preferred_element_type=jnp.float32)
    acc = acc + jnp.dot(x, w_ref[2], preferred_element_type=jnp.float32)
    acc = acc + bias
    return jnp.maximum(acc, 0.0)

  x = x_sc[...]                  # [B*Lt, H]
  g = lng_ref[...]               # [3, H]  (ln1/ln2/ln3 gammas of this layer)
  b = lnb_ref[...]               # [3, H]

  # --- self attention block (attention distribution is discarded) ---
  xn = layer_norm(x, g[0:1, :], b[0:1, :])
  sa, _ = mha(xn, xn, Lt, Lt, dec_mask_ref[...],
              wq_s_ref, wk_s_ref, wv_s_ref, wo_s_ref, need_dist=False)
  x = x + sa

  # --- cross attention block ---
  xn = layer_norm(x, g[1:2, :], b[1:2, :])
  ca, attn_dist = mha(xn, enc_ref[...], Lt, Ls, src_mask_ref[...],
                      wq_c_ref, wk_c_ref, wv_c_ref, wo_c_ref, need_dist=True)
  x = x + ca

  # Only the last layer's cross-attention distribution is returned.
  @pl.when(layer == num_layers - 1)
  def _store_attn():
    attn_ref[...] = attn_dist

  # --- positionwise FFN: two k=3 causal convs, ReLU after each ---
  xn = layer_norm(x, g[2:3, :], b[2:3, :])
  h1 = causal_conv(xn, w1_ref, b1_ref[...])
  h2 = causal_conv(h1, w2_ref, b2_ref[...])
  x = x + h2

  x_sc[...] = x

  # --- final output LayerNorm, only on the last layer ---
  @pl.when(layer == num_layers - 1)
  def _finalize():
    y_ref[...] = layer_norm(x, lno_g_ref[...], lno_b_ref[...])


# ----------------------------------------------------------------------------
# Wrapper: parameter packing + single pallas_call
# ----------------------------------------------------------------------------
def decoder_forward(params, inputs, encoder_output, src_mask, mask_trg,
                    num_heads, num_layers):
  B, Lt, E = inputs.shape
  Ls = encoder_output.shape[1]
  H = params['embedding_proj'].shape[1]
  layers = params['layers']
  Dk = layers[0]['self_attn']['wq'].shape[1]
  Dv = layers[0]['self_attn']['wv'].shape[1]
  dk, dv = Dk // num_heads, Dv // num_heads
  Ff = layers[0]['ffn']['w1'].shape[2]
  M = B * Lt
  N = B * Ls

  # dec_mask = (mask_trg + subsequent_mask) > 0     (broadcast [B,1,Lt]+[Lt,Lt])
  subsequent = jnp.triu(jnp.ones((Lt, Lt), dtype=F32), k=1)
  dec_mask_f = ((mask_trg.astype(F32) + subsequent[None, :, :]) > 0).astype(F32)
  src_mask_f = jnp.broadcast_to(src_mask.astype(F32), (B, Lt, Ls))

  inputs2d = inputs.reshape(M, E)
  enc2d = encoder_output.reshape(N, H)
  timing = jnp.tile(params['timing_signal'][0, :Lt, :], (B, 1))   # [M, H]

  # Block-diagonal per-batch shift-by-1 matrix (constant).  Shift-by-2 is
  # obtained in-kernel by applying it twice (S2 = S1 @ S1).
  def shift_mat(k):
    s = np.zeros((M, M), np.float32)
    for i in range(M):
      if i % Lt >= k:
        s[i, i - k] = 1.0
    return jnp.asarray(s)
  s1 = shift_mat(1)

  # Per-layer weight stacking (done once, XLA side).  Attention weights stay
  # full-width ([H,Dk]/[H,Dv]/[Dv,H]); heads are split in-kernel by lane slices.
  stack = lambda f: jnp.stack([f(p) for p in layers])
  ln_g = stack(lambda p: jnp.stack([p['ln1_g'], p['ln2_g'], p['ln3_g']]))
  ln_b = stack(lambda p: jnp.stack([p['ln1_b'], p['ln2_b'], p['ln3_b']]))
  wq_s = stack(lambda p: p['self_attn']['wq'])
  wk_s = stack(lambda p: p['self_attn']['wk'])
  wv_s = stack(lambda p: p['self_attn']['wv'])
  wo_s = stack(lambda p: p['self_attn']['wo'])
  wq_c = stack(lambda p: p['cross_attn']['wq'])
  wk_c = stack(lambda p: p['cross_attn']['wk'])
  wv_c = stack(lambda p: p['cross_attn']['wv'])
  wo_c = stack(lambda p: p['cross_attn']['wo'])
  w1 = stack(lambda p: p['ffn']['w1'])                 # [L, 3, H, Ff]
  b1 = stack(lambda p: p['ffn']['b1'].reshape(1, Ff))  # [L, 1, Ff]
  w2 = stack(lambda p: p['ffn']['w2'])                 # [L, 3, Ff, H]
  b2 = stack(lambda p: p['ffn']['b2'].reshape(1, H))   # [L, 1, H]

  kernel = functools.partial(
      _fused_decoder_kernel, B=B, Lt=Lt, Ls=Ls, nh=num_heads, dk=dk, dv=dv,
      num_layers=num_layers, eps=1e-6)

  def shared_spec(shape):
    return pl.BlockSpec(shape, lambda l, _n=len(shape): (0,) * _n)

  def layer_spec(shape):
    return pl.BlockSpec((None,) + shape,
                        lambda l, _n=len(shape): (l,) + (0,) * _n)

  y2d, attn_dist = pl.pallas_call(
      kernel,
      out_shape=(
          jax.ShapeDtypeStruct((M, H), F32),
          jax.ShapeDtypeStruct((B, Lt, Ls), F32),
      ),
      grid_spec=pltpu.PrefetchScalarGridSpec(
          num_scalar_prefetch=0,
          grid=(num_layers,),
          in_specs=[
              shared_spec((M, E)),              # inputs2d
              shared_spec((M, H)),              # timing (tiled over batch)
              shared_spec((N, H)),              # encoder output
              shared_spec((B, Lt, Lt)),         # decoder mask (1.0 = masked)
              shared_spec((B, Lt, Ls)),         # source mask (1.0 = masked)
              shared_spec((M, M)),              # shift-by-1 matrix
              shared_spec((E, H)),              # embedding projection
              shared_spec((1, H)),              # final LN gamma
              shared_spec((1, H)),              # final LN beta
              layer_spec((3, H)),               # per-layer LN gammas
              layer_spec((3, H)),               # per-layer LN betas
              layer_spec((H, Dk)),              # self-attn Wq
              layer_spec((H, Dk)),              # self-attn Wk
              layer_spec((H, Dv)),              # self-attn Wv
              layer_spec((Dv, H)),              # self-attn Wo
              layer_spec((H, Dk)),              # cross-attn Wq
              layer_spec((H, Dk)),              # cross-attn Wk
              layer_spec((H, Dv)),              # cross-attn Wv
              layer_spec((Dv, H)),              # cross-attn Wo
              layer_spec((3, H, Ff)),           # FFN conv1 weight
              layer_spec((1, Ff)),              # FFN conv1 bias
              layer_spec((3, Ff, H)),           # FFN conv2 weight
              layer_spec((1, H)),               # FFN conv2 bias
          ],
          out_specs=[
              shared_spec((M, H)),              # y
              shared_spec((B, Lt, Ls)),         # attn_dist (last layer)
          ],
          scratch_shapes=[pltpu.VMEM((M, H), jnp.float32)],
      ),
      compiler_params=pltpu.CompilerParams(
          dimension_semantics=("arbitrary",)),
  )(inputs2d, timing, enc2d, dec_mask_f, src_mask_f, s1,
    params['embedding_proj'],
    params['ln_out_g'].reshape(1, H), params['ln_out_b'].reshape(1, H),
    ln_g, ln_b, wq_s, wk_s, wv_s, wo_s, wq_c, wk_c, wv_c, wo_c,
    w1, b1, w2, b2)

  return y2d.reshape(B, Lt, H), attn_dist


# ----------------------------------------------------------------------------
# Deterministic parameter / signal construction
# ----------------------------------------------------------------------------
def gen_timing_signal(length, channels, min_timescale=1.0, max_timescale=1.0e4):
  position = np.arange(length, dtype=np.float64)
  num_timescales = channels // 2
  log_timescale_increment = (math.log(float(max_timescale) / float(min_timescale))
                             / max(float(num_timescales) - 1.0, 1.0))
  inv_timescales = min_timescale * np.exp(
      np.arange(num_timescales, dtype=np.float64) * -log_timescale_increment)
  scaled_time = position[:, None] * inv_timescales[None, :]
  signal = np.concatenate([np.sin(scaled_time), np.cos(scaled_time)], axis=1)
  signal = np.pad(signal, [[0, 0], [0, channels % 2]])
  return jnp.asarray(signal.reshape(1, length, channels), dtype=F32)


def init_params(key, E, H, Dk, Dv, Ff, num_layers, max_length):
  cnt = [0]

  def nk():
    cnt[0] += 1
    return jax.random.fold_in(key, cnt[0])

  def nrm(shape, scale=0.1):
    return (scale * jax.random.normal(nk(), shape)).astype(F32)

  def ln_params():
    g = (jnp.ones((H,)) + 0.01 * jax.random.normal(nk(), (H,))).astype(F32)
    b = (0.01 * jax.random.normal(nk(), (H,))).astype(F32)
    return g, b

  def mha_params():
    return {'wq': nrm((H, Dk)), 'wk': nrm((H, Dk)),
            'wv': nrm((H, Dv)), 'wo': nrm((Dv, H))}

  layers = []
  for _ in range(num_layers):
    ln1g, ln1b = ln_params()
    ln2g, ln2b = ln_params()
    ln3g, ln3b = ln_params()
    layers.append({
        'ln1_g': ln1g, 'ln1_b': ln1b, 'self_attn': mha_params(),
        'ln2_g': ln2g, 'ln2_b': ln2b, 'cross_attn': mha_params(),
        'ln3_g': ln3g, 'ln3_b': ln3b,
        'ffn': {'w1': nrm((3, H, Ff)), 'b1': nrm((Ff,)),
                'w2': nrm((3, Ff, H)), 'b2': nrm((H,))},
    })
  lng, lnb = ln_params()
  return {'embedding_proj': nrm((E, H)),
          'timing_signal': gen_timing_signal(max_length, H),
          'layers': layers,
          'ln_out_g': lng, 'ln_out_b': lnb}


# ----------------------------------------------------------------------------
if __name__ == "__main__":
  B, Lt, Ls = 2, 8, 8
  E, H, Ff = 32, 32, 64
  num_heads, num_layers = 4, 2
  total_key_depth = total_value_depth = 32
  max_length = 64

  key = jax.random.PRNGKey(0)
  k_in, k_enc, k_par = jax.random.split(key, 3)

  inputs = jax.random.normal(k_in, (B, Lt, E), dtype=F32)
  encoder_output = jax.random.normal(k_enc, (B, Ls, H), dtype=F32)
  # padding masks (True = pad), shaped like the PyTorch .eq(PAD).unsqueeze(1)
  src_mask = jnp.array([[0, 0, 0, 0, 0, 0, 0, 0],
                        [0, 0, 0, 0, 0, 0, 1, 1]], dtype=bool).reshape(B, 1, Ls)
  mask_trg = jnp.array([[0, 0, 0, 0, 0, 0, 0, 0],
                        [0, 0, 0, 0, 0, 1, 1, 1]], dtype=bool).reshape(B, 1, Lt)

  params = init_params(k_par, E, H, total_key_depth, total_value_depth,
                       Ff, num_layers, max_length)

  # TODO(synk): universal/ACT branch (config.act, position_signal) is not exercised
  # since universal=False in the implemented path.
  y, attn_dist = decoder_forward(params, inputs, encoder_output,
                                 src_mask, mask_trg, num_heads, num_layers)
  y = jax.block_until_ready(y)
  attn_dist = jax.block_until_ready(attn_dist)
  assert y.shape == (B, Lt, H) and attn_dist.shape == (B, Lt, Ls)
  assert bool(jnp.all(jnp.isfinite(y)))
  print("KERNEL_OK")
</pallas_src>

<mosaic_0001>
module attributes {stable_mosaic.version = 11 : i64} {
  func.func @_fused_decoder_kernel(%arg0: i32, %arg1: memref<16x32xf32, #tpu.memory_space<vmem>>, %arg2: memref<16x32xf32, #tpu.memory_space<vmem>>, %arg3: memref<16x32xf32, #tpu.memory_space<vmem>>, %arg4: memref<2x8x8xf32, #tpu.memory_space<vmem>>, %arg5: memref<2x8x8xf32, #tpu.memory_space<vmem>>, %arg6: memref<16x16xf32, #tpu.memory_space<vmem>>, %arg7: memref<32x32xf32, #tpu.memory_space<vmem>>, %arg8: memref<1x32xf32, #tpu.memory_space<vmem>>, %arg9: memref<1x32xf32, #tpu.memory_space<vmem>>, %arg10: memref<1x3x32xf32, #tpu.memory_space<vmem>>, %arg11: memref<1x3x32xf32, #tpu.memory_space<vmem>>, %arg12: memref<1x32x32xf32, #tpu.memory_space<vmem>>, %arg13: memref<1x32x32xf32, #tpu.memory_space<vmem>>, %arg14: memref<1x32x32xf32, #tpu.memory_space<vmem>>, %arg15: memref<1x32x32xf32, #tpu.memory_space<vmem>>, %arg16: memref<1x32x32xf32, #tpu.memory_space<vmem>>, %arg17: memref<1x32x32xf32, #tpu.memory_space<vmem>>, %arg18: memref<1x32x32xf32, #tpu.memory_space<vmem>>, %arg19: memref<1x32x32xf32, #tpu.memory_space<vmem>>, %arg20: memref<1x3x32x64xf32, #tpu.memory_space<vmem>>, %arg21: memref<1x1x64xf32, #tpu.memory_space<vmem>>, %arg22: memref<1x3x64x32xf32, #tpu.memory_space<vmem>>, %arg23: memref<1x1x32xf32, #tpu.memory_space<vmem>>, %arg24: memref<16x32xf32, #tpu.memory_space<vmem>>, %arg25: memref<2x8x8xf32, #tpu.memory_space<vmem>>, %arg26: memref<16x32xf32, #tpu.memory_space<vmem>>) attributes {dimension_semantics = [#tpu.dimension_semantics<arbitrary>], iteration_bounds = array<i64: 2>, scalar_prefetch = 0 : i64, scratch_operands = 1 : i64, tpu.core_type = #tpu.core_type<tc>, window_params = [{pipeline_mode = #tpu.pipeline_mode<synchronous>, transform_indices = @transform_0, window_bounds = array<i64: 16, 32>}, {pipeline_mode = #tpu.pipeline_mode<synchronous>, transform_indices = @transform_1, window_bounds = array<i64: 16, 32>}, {pipeline_mode = #tpu.pipeline_mode<synchronous>, transform_indices = @transform_2, window_bounds = array<i64: 16, 32>}, {pipeline_mode = #tpu.pipeline_mode<synchronous>, transform_indices = @transform_3, window_bounds = array<i64: 2, 8, 8>}, {pipeline_mode = #tpu.pipeline_mode<synchronous>, transform_indices = @transform_4, window_bounds = array<i64: 2, 8, 8>}, {pipeline_mode = #tpu.pipeline_mode<synchronous>, transform_indices = @transform_5, window_bounds = array<i64: 16, 16>}, {pipeline_mode = #tpu.pipeline_mode<synchronous>, transform_indices = @transform_6, window_bounds = array<i64: 32, 32>}, {pipeline_mode = #tpu.pipeline_mode<synchronous>, transform_indices = @transform_7, window_bounds = array<i64: 1, 32>}, {pipeline_mode = #tpu.pipeline_mode<synchronous>, transform_indices = @transform_8, window_bounds = array<i64: 1, 32>}, {transform_indices = @transform_9, window_bounds = array<i64: 1, 3, 32>}, {transform_indices = @transform_10, window_bounds = array<i64: 1, 3, 32>}, {transform_indices = @transform_11, window_bounds = array<i64: 1, 32, 32>}, {transform_indices = @transform_12, window_bounds = array<i64: 1, 32, 32>}, {transform_indices = @transform_13, window_bounds = array<i64: 1, 32, 32>}, {transform_indices = @transform_14, window_bounds = array<i64: 1, 32, 32>}, {transform_indices = @transform_15, window_bounds = array<i64: 1, 32, 32>}, {transform_indices = @transform_16, window_bounds = array<i64: 1, 32, 32>}, {transform_indices = @transform_17, window_bounds = array<i64: 1, 32, 32>}, {transform_indices = @transform_18, window_bounds = array<i64: 1, 32, 32>}, {transform_indices = @transform_19, window_bounds = array<i64: 1, 3, 32, 64>}, {transform_indices = @transform_20, window_bounds = array<i64: 1, 1, 64>}, {transform_indices = @transform_21, window_bounds = array<i64: 1, 3, 64, 32>}, {transform_indices = @transform_22, window_bounds = array<i64: 1, 1, 32>}, {pipeline_mode = #tpu.pipeline_mode<synchronous>, transform_indices = @transform_23, window_bounds = array<i64: 16, 32>}, {pipeline_mode = #tpu.pipeline_mode<synchronous>, transform_indices = @transform_24, window_bounds = array<i64: 2, 8, 8>}]} {
    %c0_i32 = arith.constant 0 : i32
    %0 = arith.cmpi eq, %arg0, %c0_i32 : i32
    %1 = arith.extui %0 : i1 to i32
    %c0_i32_0 = arith.constant 0 : i32
    %2 = arith.cmpi ne, %1, %c0_i32_0 : i32
    scf.if %2 {
      %c0_167 = arith.constant 0 : index
      %c0_168 = arith.constant 0 : index
      %336 = vector.load %arg1[%c0_167, %c0_168] : memref<16x32xf32, #tpu.memory_space<vmem>>, vector<16x32xf32>
      %c0_169 = arith.constant 0 : index
      %c0_170 = arith.constant 0 : index
      %337 = vector.load %arg7[%c0_169, %c0_170] : memref<32x32xf32, #tpu.memory_space<vmem>>, vector<32x32xf32>
      %cst_171 = arith.constant dense<0.000000e+00> : vector<16x32xf32>
      %338 = tpu.matmul %336, %337, %cst_171 {dimension_numbers = #tpu.dot_dimension_numbers<[1], [0], [0], [1], [0, 0, 1, 1], [], []>} : vector<16x32xf32>, vector<32x32xf32>, vector<16x32xf32> -> vector<16x32xf32>
      %c0_172 = arith.constant 0 : index
      %c0_173 = arith.constant 0 : index
      %339 = vector.load %arg2[%c0_172, %c0_173] : memref<16x32xf32, #tpu.memory_space<vmem>>, vector<16x32xf32>
      %340 = arith.addf %338, %339 : vector<16x32xf32>
      %c0_174 = arith.constant 0 : index
      %c0_175 = arith.constant 0 : index
      %341 = vector.load %arg26[%c0_174, %c0_175] : memref<16x32xf32, #tpu.memory_space<vmem>>, vector<16x32xf32>
      tpu.vector_store %arg26[%c0_174, %c0_175], %340 {strides = array<i32>} : memref<16x32xf32, #tpu.memory_space<vmem>>, vector<16x32xf32>,
    } else {
    }
    %c0 = arith.constant 0 : index
    %c0_1 = arith.constant 0 : index
    %3 = vector.load %arg26[%c0, %c0_1] : memref<16x32xf32, #tpu.memory_space<vmem>>, vector<16x32xf32>
    %c0_2 = arith.constant 0 : index
    %c0_3 = arith.constant 0 : index
    %c0_4 = arith.constant 0 : index
    %4 = vector.load %arg10[%c0_2, %c0_3, %c0_4] : memref<1x3x32xf32, #tpu.memory_space<vmem>>, vector<1x3x32xf32>
    %5 = vector.shape_cast %4 : vector<1x3x32xf32> to vector<3x32xf32>
    %c0_5 = arith.constant 0 : index
    %c0_6 = arith.constant 0 : index
    %c0_7 = arith.constant 0 : index
    %6 = vector.load %arg11[%c0_5, %c0_6, %c0_7] : memref<1x3x32xf32, #tpu.memory_space<vmem>>, vector<1x3x32xf32>
    %7 = vector.shape_cast %6 : vector<1x3x32xf32> to vector<3x32xf32>
    %8 = vector.extract_strided_slice %5 {offsets = [0, 0], sizes = [1, 32], strides = [1, 1]} : vector<3x32xf32> to vector<1x32xf32>
    %9 = vector.extract_strided_slice %7 {offsets = [0, 0], sizes = [1, 32], strides = [1, 1]} : vector<3x32xf32> to vector<1x32xf32>
    %cst = arith.constant dense<0.000000e+00> : vector<16xf32>
    %10 = vector.multi_reduction <add>, %3, %cst [1] : vector<16x32xf32> to vector<16xf32>
    %11 = vector.shape_cast %10 : vector<16xf32> to vector<16x1xf32>
    %cst_8 = arith.constant 3.200000e+01 : f32
    %12 = vector.broadcast %cst_8 : f32 to vector<16x1xf32>
    %13 = arith.divf %11, %12 : vector<16x1xf32>
    %14 = vector.broadcast %13 : vector<16x1xf32> to vector<16x32xf32>
    %15 = arith.subf %3, %14 : vector<16x32xf32>
    %16 = arith.mulf %15, %15 : vector<16x32xf32>
    %cst_9 = arith.constant dense<0.000000e+00> : vector<16xf32>
    %17 = vector.multi_reduction <add>, %16, %cst_9 [1] : vector<16x32xf32> to vector<16xf32>
    %18 = vector.shape_cast %17 : vector<16xf32> to vector<16x1xf32>
    %cst_10 = arith.constant 3.100000e+01 : f32
    %19 = vector.broadcast %cst_10 : f32 to vector<16x1xf32>
    %20 = arith.divf %18, %19 : vector<16x1xf32>
    %21 = math.sqrt %20 : vector<16x1xf32>
    %22 = vector.broadcast %8 : vector<1x32xf32> to vector<16x32xf32>
    %23 = arith.mulf %22, %15 : vector<16x32xf32>
    %cst_11 = arith.constant 9.99999997E-7 : f32
    %24 = vector.broadcast %cst_11 : f32 to vector<16x1xf32>
    %25 = arith.addf %21, %24 : vector<16x1xf32>
    %26 = vector.broadcast %25 : vector<16x1xf32> to vector<16x32xf32>
    %27 = arith.divf %23, %26 : vector<16x32xf32>
    %28 = vector.broadcast %9 : vector<1x32xf32> to vector<16x32xf32>
    %29 = arith.addf %27, %28 : vector<16x32xf32>
    %c0_12 = arith.constant 0 : index
    %c0_13 = arith.constant 0 : index
    %c0_14 = arith.constant 0 : index
    %30 = vector.load %arg4[%c0_12, %c0_13, %c0_14] : memref<2x8x8xf32, #tpu.memory_space<vmem>>, vector<2x8x8xf32>
    %c0_15 = arith.constant 0 : index
    %c0_16 = arith.constant 0 : index
    %c0_17 = arith.constant 0 : index
    %31 = vector.load %arg12[%c0_15, %c0_16, %c0_17] : memref<1x32x32xf32, #tpu.memory_space<vmem>>, vector<1x32x32xf32>
    %32 = vector.shape_cast %31 : vector<1x32x32xf32> to vector<32x32xf32>
    %cst_18 = arith.constant dense<0.000000e+00> : vector<16x32xf32>
    %33 = tpu.matmul %29, %32, %cst_18 {dimension_numbers = #tpu.dot_dimension_numbers<[1], [0], [0], [1], [0, 0, 1, 1], [], []>} : vector<16x32xf32>, vector<32x32xf32>, vector<16x32xf32> -> vector<16x32xf32>
    %cst_19 = arith.constant 0.353553385 : f32
    %34 = vector.broadcast %cst_19 : f32 to vector<16x32xf32>
    %35 = arith.mulf %33, %34 : vector<16x32xf32>
    %c0_20 = arith.constant 0 : index
    %c0_21 = arith.constant 0 : index
    %c0_22 = arith.constant 0 : index
    %36 = vector.load %arg13[%c0_20, %c0_21, %c0_22] : memref<1x32x32xf32, #tpu.memory_space<vmem>>, vector<1x32x32xf32>
    %37 = vector.shape_cast %36 : vector<1x32x32xf32> to vector<32x32xf32>
    %cst_23 = arith.constant dense<0.000000e+00> : vector<16x32xf32>
    %38 = tpu.matmul %29, %37, %cst_23 {dimension_numbers = #tpu.dot_dimension_numbers<[1], [0], [0], [1], [0, 0, 1, 1], [], []>} : vector<16x32xf32>, vector<32x32xf32>, vector<16x32xf32> -> vector<16x32xf32>
    %c0_24 = arith.constant 0 : index
    %c0_25 = arith.constant 0 : index
    %c0_26 = arith.constant 0 : index
    %39 = vector.load %arg14[%c0_24, %c0_25, %c0_26] : memref<1x32x32xf32, #tpu.memory_space<vmem>>, vector<1x32x32xf32>
    %40 = vector.shape_cast %39 : vector<1x32x32xf32> to vector<32x32xf32>
    %cst_27 = arith.constant dense<0.000000e+00> : vector<16x32xf32>
    %41 = tpu.matmul %29, %40, %cst_27 {dimension_numbers = #tpu.dot_dimension_numbers<[1], [0], [0], [1], [0, 0, 1, 1], [], []>} : vector<16x32xf32>, vector<32x32xf32>, vector<16x32xf32> -> vector<16x32xf32>
    %42 = vector.extract_strided_slice %35 {offsets = [0, 0], sizes = [16, 8], strides = [1, 1]} : vector<16x32xf32> to vector<16x8xf32>
    %43 = vector.shape_cast %42 : vector<16x8xf32> to vector<2x8x8xf32>
    %44 = vector.extract_strided_slice %38 {offsets = [0, 0], sizes = [16, 8], strides = [1, 1]} : vector<16x32xf32> to vector<16x8xf32>
    %45 = vector.shape_cast %44 : vector<16x8xf32> to vector<2x8x8xf32>
    %46 = vector.extract_strided_slice %41 {offsets = [0, 0], sizes = [16, 8], strides = [1, 1]} : vector<16x32xf32> to vector<16x8xf32>
    %47 = vector.shape_cast %46 : vector<16x8xf32> to vector<2x8x8xf32>
    "tpu.trace_start"() <{level = 10 : i32, message = "bqd,bkd->bqk"}> : () -> ()
    %cst_28 = arith.constant dense<0.000000e+00> : vector<2x8x8xf32>
    %48 = tpu.matmul %43, %45, %cst_28 {dimension_numbers = #tpu.dot_dimension_numbers<[2], [2], [1], [1], [0, 0, 0, 1, 1, 1], [0], [0]>} : vector<2x8x8xf32>, vector<2x8x8xf32>, vector<2x8x8xf32> -> vector<2x8x8xf32>
    %cst_29 = arith.constant 0.000000e+00 : f32
    "tpu.trace_stop"() : () -> ()
    %49 = vector.broadcast %cst_29 : f32 to vector<2x8x8xf32>
    %50 = arith.cmpf ogt, %30, %49 : vector<2x8x8xf32>
    %cst_30 = arith.constant -9.99999984E+17 : f32
    %51 = vector.broadcast %cst_30 : f32 to vector<2x8x8xf32>
    %52 = arith.select %50, %51, %48 : vector<2x8x8xi1>, vector<2x8x8xf32>
    %cst_31 = arith.constant dense<0xFF800000> : vector<2x8xf32>
    %53 = vector.multi_reduction <maximumf>, %52, %cst_31 [2] : vector<2x8x8xf32> to vector<2x8xf32>
    %54 = vector.shape_cast %53 : vector<2x8xf32> to vector<2x8x1xf32>
    %55 = vector.broadcast %54 : vector<2x8x1xf32> to vector<2x8x8xf32>
    %56 = arith.subf %52, %55 : vector<2x8x8xf32>
    %57 = math.exp %56 : vector<2x8x8xf32>
    %cst_32 = arith.constant dense<0.000000e+00> : vector<2x8xf32>
    %58 = vector.multi_reduction <add>, %57, %cst_32 [2] : vector<2x8x8xf32> to vector<2x8xf32>
    %59 = vector.shape_cast %58 : vector<2x8xf32> to vector<2x8x1xf32>
    %60 = vector.broadcast %59 : vector<2x8x1xf32> to vector<2x8x8xf32>
    %61 = arith.divf %57, %60 : vector<2x8x8xf32>
    "tpu.trace_start"() <{level = 10 : i32, message = "bqk,bkd->bqd"}> : () -> ()
    %cst_33 = arith.constant dense<0.000000e+00> : vector<2x8x8xf32>
    %62 = tpu.matmul %61, %47, %cst_33 {dimension_numbers = #tpu.dot_dimension_numbers<[2], [1], [1], [2], [0, 0, 0, 1, 1, 2], [0], [0]>} : vector<2x8x8xf32>, vector<2x8x8xf32>, vector<2x8x8xf32> -> vector<2x8x8xf32>
    "tpu.trace_stop"() : () -> ()
    %63 = vector.extract_strided_slice %35 {offsets = [0, 8], sizes = [16, 8], strides = [1, 1]} : vector<16x32xf32> to vector<16x8xf32>
    %64 = vector.shape_cast %63 : vector<16x8xf32> to vector<2x8x8xf32>
    %65 = vector.extract_strided_slice %38 {offsets = [0, 8], sizes = [16, 8], strides = [1, 1]} : vector<16x32xf32> to vector<16x8xf32>
    %66 = vector.shape_cast %65 : vector<16x8xf32> to vector<2x8x8xf32>
    %67 = vector.extract_strided_slice %41 {offsets = [0, 8], sizes = [16, 8], strides = [1, 1]} : vector<16x32xf32> to vector<16x8xf32>
    %68 = vector.shape_cast %67 : vector<16x8xf32> to vector<2x8x8xf32>
    "tpu.trace_start"() <{level = 10 : i32, message = "bqd,bkd->bqk"}> : () -> ()
    %cst_34 = arith.constant dense<0.000000e+00> : vector<2x8x8xf32>
    %69 = tpu.matmul %64, %66, %cst_34 {dimension_numbers = #tpu.dot_dimension_numbers<[2], [2], [1], [1], [0, 0, 0, 1, 1, 1], [0], [0]>} : vector<2x8x8xf32>, vector<2x8x8xf32>, vector<2x8x8xf32> -> vector<2x8x8xf32>
    %cst_35 = arith.constant 0.000000e+00 : f32
    "tpu.trace_stop"() : () -> ()
    %70 = vector.broadcast %cst_35 : f32 to vector<2x8x8xf32>
    %71 = arith.cmpf ogt, %30, %70 : vector<2x8x8xf32>
    %cst_36 = arith.constant -9.99999984E+17 : f32
    %72 = vector.broadcast %cst_36 : f32 to vector<2x8x8xf32>
    %73 = arith.select %71, %72, %69 : vector<2x8x8xi1>, vector<2x8x8xf32>
    %cst_37 = arith.constant dense<0xFF800000> : vector<2x8xf32>
    %74 = vector.multi_reduction <maximumf>, %73, %cst_37 [2] : vector<2x8x8xf32> to vector<2x8xf32>
    %75 = vector.shape_cast %74 : vector<2x8xf32> to vector<2x8x1xf32>
    %76 = vector.broadcast %75 : vector<2x8x1xf32> to vector<2x8x8xf32>
    %77 = arith.subf %73, %76 : vector<2x8x8xf32>
    %78 = math.exp %77 : vector<2x8x8xf32>
    %cst_38 = arith.constant dense<0.000000e+00> : vector<2x8xf32>
    %79 = vector.multi_reduction <add>, %78, %cst_38 [2] : vector<2x8x8xf32> to vector<2x8xf32>
    %80 = vector.shape_cast %79 : vector<2x8xf32> to vector<2x8x1xf32>
    %81 = vector.broadcast %80 : vector<2x8x1xf32> to vector<2x8x8xf32>
    %82 = arith.divf %78, %81 : vector<2x8x8xf32>
    "tpu.trace_start"() <{level = 10 : i32, message = "bqk,bkd->bqd"}> : () -> ()
    %cst_39 = arith.constant dense<0.000000e+00> : vector<2x8x8xf32>
    %83 = tpu.matmul %82, %68, %cst_39 {dimension_numbers = #tpu.dot_dimension_numbers<[2], [1], [1], [2], [0, 0, 0, 1, 1, 2], [0], [0]>} : vector<2x8x8xf32>, vector<2x8x8xf32>, vector<2x8x8xf32> -> vector<2x8x8xf32>
    "tpu.trace_stop"() : () -> ()
    %84 = vector.extract_strided_slice %35 {offsets = [0, 16], sizes = [16, 8], strides = [1, 1]} : vector<16x32xf32> to vector<16x8xf32>
    %85 = vector.shape_cast %84 : vector<16x8xf32> to vector<2x8x8xf32>
    %86 = vector.extract_strided_slice %38 {offsets = [0, 16], sizes = [16, 8], strides = [1, 1]} : vector<16x32xf32> to vector<16x8xf32>
    %87 = vector.shape_cast %86 : vector<16x8xf32> to vector<2x8x8xf32>
    %88 = vector.extract_strided_slice %41 {offsets = [0, 16], sizes = [16, 8], strides = [1, 1]} : vector<16x32xf32> to vector<16x8xf32>
    %89 = vector.shape_cast %88 : vector<16x8xf32> to vector<2x8x8xf32>
    "tpu.trace_start"() <{level = 10 : i32, message = "bqd,bkd->bqk"}> : () -> ()
    %cst_40 = arith.constant dense<0.000000e+00> : vector<2x8x8xf32>
    %90 = tpu.matmul %85, %87, %cst_40 {dimension_numbers = #tpu.dot_dimension_numbers<[2], [2], [1], [1], [0, 0, 0, 1, 1, 1], [0], [0]>} : vector<2x8x8xf32>, vector<2x8x8xf32>, vector<2x8x8xf32> -> vector<2x8x8xf32>
    %cst_41 = arith.constant 0.000000e+00 : f32
    "tpu.trace_stop"() : () -> ()
    %91 = vector.broadcast %cst_41 : f32 to vector<2x8x8xf32>
    %92 = arith.cmpf ogt, %30, %91 : vector<2x8x8xf32>
    %cst_42 = arith.constant -9.99999984E+17 : f32
    %93 = vector.broadcast %cst_42 : f32 to vector<2x8x8xf32>
    %94 = arith.select %92, %93, %90 : vector<2x8x8xi1>, vector<2x8x8xf32>
    %cst_43 = arith.constant dense<0xFF800000> : vector<2x8xf32>
    %95 = vector.multi_reduction <maximumf>, %94, %cst_43 [2] : vector<2x8x8xf32> to vector<2x8xf32>
    %96 = vector.shape_cast %95 : vector<2x8xf32> to vector<2x8x1xf32>
    %97 = vector.broadcast %96 : vector<2x8x1xf32> to vector<2x8x8xf32>
    %98 = arith.subf %94, %97 : vector<2x8x8xf32>
    %99 = math.exp %98 : vector<2x8x8xf32>
    %cst_44 = arith.constant dense<0.000000e+00> : vector<2x8xf32>
    %100 = vector.multi_reduction <add>, %99, %cst_44 [2] : vector<2x8x8xf32> to vector<2x8xf32>
    %101 = vector.shape_cast %100 : vector<2x8xf32> to vector<2x8x1xf32>
    %102 = vector.broadcast %101 : vector<2x8x1xf32> to vector<2x8x8xf32>
    %103 = arith.divf %99, %102 : vector<2x8x8xf32>
    "tpu.trace_start"() <{level = 10 : i32, message = "bqk,bkd->bqd"}> : () -> ()
    %cst_45 = arith.constant dense<0.000000e+00> : vector<2x8x8xf32>
    %104 = tpu.matmul %103, %89, %cst_45 {dimension_numbers = #tpu.dot_dimension_numbers<[2], [1], [1], [2], [0, 0, 0, 1, 1, 2], [0], [0]>} : vector<2x8x8xf32>, vector<2x8x8xf32>, vector<2x8x8xf32> -> vector<2x8x8xf32>
    "tpu.trace_stop"() : () -> ()
    %105 = vector.extract_strided_slice %35 {offsets = [0, 24], sizes = [16, 8], strides = [1, 1]} : vector<16x32xf32> to vector<16x8xf32>
    %106 = vector.shape_cast %105 : vector<16x8xf32> to vector<2x8x8xf32>
    %107 = vector.extract_strided_slice %38 {offsets = [0, 24], sizes = [16, 8], strides = [1, 1]} : vector<16x32xf32> to vector<16x8xf32>
    %108 = vector.shape_cast %107 : vector<16x8xf32> to vector<2x8x8xf32>
    %109 = vector.extract_strided_slice %41 {offsets = [0, 24], sizes = [16, 8], strides = [1, 1]} : vector<16x32xf32> to vector<16x8xf32>
    %110 = vector.shape_cast %109 : vector<16x8xf32> to vector<2x8x8xf32>
    "tpu.trace_start"() <{level = 10 : i32, message = "bqd,bkd->bqk"}> : () -> ()
    %cst_46 = arith.constant dense<0.000000e+00> : vector<2x8x8xf32>
    %111 = tpu.matmul %106, %108, %cst_46 {dimension_numbers = #tpu.dot_dimension_numbers<[2], [2], [1], [1], [0, 0, 0, 1, 1, 1], [0], [0]>} : vector<2x8x8xf32>, vector<2x8x8xf32>, vector<2x8x8xf32> -> vector<2x8x8xf32>
    %cst_47 = arith.constant 0.000000e+00 : f32
    "tpu.trace_stop"() : () -> ()
    %112 = vector.broadcast %cst_47 : f32 to vector<2x8x8xf32>
    %113 = arith.cmpf ogt, %30, %112 : vector<2x8x8xf32>
    %cst_48 = arith.constant -9.99999984E+17 : f32
    %114 = vector.broadcast %cst_48 : f32 to vector<2x8x8xf32>
    %115 = arith.select %113, %114, %111 : vector<2x8x8xi1>, vector<2x8x8xf32>
    %cst_49 = arith.constant dense<0xFF800000> : vector<2x8xf32>
    %116 = vector.multi_reduction <maximumf>, %115, %cst_49 [2] : vector<2x8x8xf32> to vector<2x8xf32>
    %117 = vector.shape_cast %116 : vector<2x8xf32> to vector<2x8x1xf32>
    %118 = vector.broadcast %117 : vector<2x8x1xf32> to vector<2x8x8xf32>
    %119 = arith.subf %115, %118 : vector<2x8x8xf32>
    %120 = math.exp %119 : vector<2x8x8xf32>
    %cst_50 = arith.constant dense<0.000000e+00> : vector<2x8xf32>
    %121 = vector.multi_reduction <add>, %120, %cst_50 [2] : vector<2x8x8xf32> to vector<2x8xf32>
    %122 = vector.shape_cast %121 : vector<2x8xf32> to vector<2x8x1xf32>
    %123 = vector.broadcast %122 : vector<2x8x1xf32> to vector<2x8x8xf32>
    %124 = arith.divf %120, %123 : vector<2x8x8xf32>
    "tpu.trace_start"() <{level = 10 : i32, message = "bqk,bkd->bqd"}> : () -> ()
    %cst_51 = arith.constant dense<0.000000e+00> : vector<2x8x8xf32>
    %125 = tpu.matmul %124, %110, %cst_51 {dimension_numbers = #tpu.dot_dimension_numbers<[2], [1], [1], [2], [0, 0, 0, 1, 1, 2], [0], [0]>} : vector<2x8x8xf32>, vector<2x8x8xf32>, vector<2x8x8xf32> -> vector<2x8x8xf32>
    "tpu.trace_stop"() : () -> ()
    %126 = tpu.concatenate %62, %83, %104, %125 in 2 : vector<2x8x8xf32>, vector<2x8x8xf32>, vector<2x8x8xf32>, vector<2x8x8xf32> -> vector<2x8x32xf32>
    %127 = vector.shape_cast %126 : vector<2x8x32xf32> to vector<16x32xf32>
    %c0_52 = arith.constant 0 : index
    %c0_53 = arith.constant 0 : index
    %c0_54 = arith.constant 0 : index
    %128 = vector.load %arg15[%c0_52, %c0_53, %c0_54] : memref<1x32x32xf32, #tpu.memory_space<vmem>>, vector<1x32x32xf32>
    %129 = vector.shape_cast %128 : vector<1x32x32xf32> to vector<32x32xf32>
    %cst_55 = arith.constant dense<0.000000e+00> : vector<16x32xf32>
    %130 = tpu.matmul %127, %129, %cst_55 {dimension_numbers = #tpu.dot_dimension_numbers<[1], [0], [0], [1], [0, 0, 1, 1], [], []>} : vector<16x32xf32>, vector<32x32xf32>, vector<16x32xf32> -> vector<16x32xf32>
    %131 = arith.addf %3, %130 : vector<16x32xf32>
    %132 = vector.extract_strided_slice %5 {offsets = [1, 0], sizes = [1, 32], strides = [1, 1]} : vector<3x32xf32> to vector<1x32xf32>
    %133 = vector.extract_strided_slice %7 {offsets = [1, 0], sizes = [1, 32], strides = [1, 1]} : vector<3x32xf32> to vector<1x32xf32>
    %cst_56 = arith.constant dense<0.000000e+00> : vector<16xf32>
    %134 = vector.multi_reduction <add>, %131, %cst_56 [1] : vector<16x32xf32> to vector<16xf32>
    %135 = vector.shape_cast %134 : vector<16xf32> to vector<16x1xf32>
    %cst_57 = arith.constant 3.200000e+01 : f32
    %136 = vector.broadcast %cst_57 : f32 to vector<16x1xf32>
    %137 = arith.divf %135, %136 : vector<16x1xf32>
    %138 = vector.broadcast %137 : vector<16x1xf32> to vector<16x32xf32>
    %139 = arith.subf %131, %138 : vector<16x32xf32>
    %140 = arith.mulf %139, %139 : vector<16x32xf32>
    %cst_58 = arith.constant dense<0.000000e+00> : vector<16xf32>
    %141 = vector.multi_reduction <add>, %140, %cst_58 [1] : vector<16x32xf32> to vector<16xf32>
    %142 = vector.shape_cast %141 : vector<16xf32> to vector<16x1xf32>
    %cst_59 = arith.constant 3.100000e+01 : f32
    %143 = vector.broadcast %cst_59 : f32 to vector<16x1xf32>
    %144 = arith.divf %142, %143 : vector<16x1xf32>
    %145 = math.sqrt %144 : vector<16x1xf32>
    %146 = vector.broadcast %132 : vector<1x32xf32> to vector<16x32xf32>
    %147 = arith.mulf %146, %139 : vector<16x32xf32>
    %cst_60 = arith.constant 9.99999997E-7 : f32
    %148 = vector.broadcast %cst_60 : f32 to vector<16x1xf32>
    %149 = arith.addf %145, %148 : vector<16x1xf32>
    %150 = vector.broadcast %149 : vector<16x1xf32> to vector<16x32xf32>
    %151 = arith.divf %147, %150 : vector<16x32xf32>
    %152 = vector.broadcast %133 : vector<1x32xf32> to vector<16x32xf32>
    %153 = arith.addf %151, %152 : vector<16x32xf32>
    %c0_61 = arith.constant 0 : index
    %c0_62 = arith.constant 0 : index
    %154 = vector.load %arg3[%c0_61, %c0_62] : memref<16x32xf32, #tpu.memory_space<vmem>>, vector<16x32xf32>
    %c0_63 = arith.constant 0 : index
    %c0_64 = arith.constant 0 : index
    %c0_65 = arith.constant 0 : index
    %155 = vector.load %arg5[%c0_63, %c0_64, %c0_65] : memref<2x8x8xf32, #tpu.memory_space<vmem>>, vector<2x8x8xf32>
    %c0_66 = arith.constant 0 : index
    %c0_67 = arith.constant 0 : index
    %c0_68 = arith.constant 0 : index
    %156 = vector.load %arg16[%c0_66, %c0_67, %c0_68] : memref<1x32x32xf32, #tpu.memory_space<vmem>>, vector<1x32x32xf32>
    %157 = vector.shape_cast %156 : vector<1x32x32xf32> to vector<32x32xf32>
    %cst_69 = arith.constant dense<0.000000e+00> : vector<16x32xf32>
    %158 = tpu.matmul %153, %157, %cst_69 {dimension_numbers = #tpu.dot_dimension_numbers<[1], [0], [0], [1], [0, 0, 1, 1], [], []>} : vector<16x32xf32>, vector<32x32xf32>, vector<16x32xf32> -> vector<16x32xf32>
    %cst_70 = arith.constant 0.353553385 : f32
    %159 = vector.broadcast %cst_70 : f32 to vector<16x32xf32>
    %160 = arith.mulf %158, %159 : vector<16x32xf32>
    %c0_71 = arith.constant 0 : index
    %c0_72 = arith.constant 0 : index
    %c0_73 = arith.constant 0 : index
    %161 = vector.load %arg17[%c0_71, %c0_72, %c0_73] : memref<1x32x32xf32, #tpu.memory_space<vmem>>, vector<1x32x32xf32>
    %162 = vector.shape_cast %161 : vector<1x32x32xf32> to vector<32x32xf32>
    %cst_74 = arith.constant dense<0.000000e+00> : vector<16x32xf32>
    %163 = tpu.matmul %154, %162, %cst_74 {dimension_numbers = #tpu.dot_dimension_numbers<[1], [0], [0], [1], [0, 0, 1, 1], [], []>} : vector<16x32xf32>, vector<32x32xf32>, vector<16x32xf32> -> vector<16x32xf32>
    %c0_75 = arith.constant 0 : index
    %c0_76 = arith.constant 0 : index
    %c0_77 = arith.constant 0 : index
    %164 = vector.load %arg18[%c0_75, %c0_76, %c0_77] : memref<1x32x32xf32, #tpu.memory_space<vmem>>, vector<1x32x32xf32>
    %165 = vector.shape_cast %164 : vector<1x32x32xf32> to vector<32x32xf32>
    %cst_78 = arith.constant dense<0.000000e+00> : vector<16x32xf32>
    %166 = tpu.matmul %154, %165, %cst_78 {dimension_numbers = #tpu.dot_dimension_numbers<[1], [0], [0], [1], [0, 0, 1, 1], [], []>} : vector<16x32xf32>, vector<32x32xf32>, vector<16x32xf32> -> vector<16x32xf32>
    %cst_79 = arith.constant 0.000000e+00 : f32
    %167 = vector.broadcast %cst_79 : f32 to vector<2x8x8xf32>
    %168 = vector.extract_strided_slice %160 {offsets = [0, 0], sizes = [16, 8], strides = [1, 1]} : vector<16x32xf32> to vector<16x8xf32>
    %169 = vector.shape_cast %168 : vector<16x8xf32> to vector<2x8x8xf32>
    %170 = vector.extract_strided_slice %163 {offsets = [0, 0], sizes = [16, 8], strides = [1, 1]} : vector<16x32xf32> to vector<16x8xf32>
    %171 = vector.shape_cast %170 : vector<16x8xf32> to vector<2x8x8xf32>
    %172 = vector.extract_strided_slice %166 {offsets = [0, 0], sizes = [16, 8], strides = [1, 1]} : vector<16x32xf32> to vector<16x8xf32>
    %173 = vector.shape_cast %172 : vector<16x8xf32> to vector<2x8x8xf32>
    "tpu.trace_start"() <{level = 10 : i32, message = "bqd,bkd->bqk"}> : () -> ()
    %cst_80 = arith.constant dense<0.000000e+00> : vector<2x8x8xf32>
    %174 = tpu.matmul %169, %171, %cst_80 {dimension_numbers = #tpu.dot_dimension_numbers<[2], [2], [1], [1], [0, 0, 0, 1, 1, 1], [0], [0]>} : vector<2x8x8xf32>, vector<2x8x8xf32>, vector<2x8x8xf32> -> vector<2x8x8xf32>
    %cst_81 = arith.constant 0.000000e+00 : f32
    "tpu.trace_stop"() : () -> ()
    %175 = vector.broadcast %cst_81 : f32 to vector<2x8x8xf32>
    %176 = arith.cmpf ogt, %155, %175 : vector<2x8x8xf32>
    %cst_82 = arith.constant -9.99999984E+17 : f32
    %177 = vector.broadcast %cst_82 : f32 to vector<2x8x8xf32>
    %178 = arith.select %176, %177, %174 : vector<2x8x8xi1>, vector<2x8x8xf32>
    %179 = arith.addf %167, %178 : vector<2x8x8xf32>
    %cst_83 = arith.constant dense<0xFF800000> : vector<2x8xf32>
    %180 = vector.multi_reduction <maximumf>, %178, %cst_83 [2] : vector<2x8x8xf32> to vector<2x8xf32>
    %181 = vector.shape_cast %180 : vector<2x8xf32> to vector<2x8x1xf32>
    %182 = vector.broadcast %181 : vector<2x8x1xf32> to vector<2x8x8xf32>
    %183 = arith.subf %178, %182 : vector<2x8x8xf32>
    %184 = math.exp %183 : vector<2x8x8xf32>
    %cst_84 = arith.constant dense<0.000000e+00> : vector<2x8xf32>
    %185 = vector.multi_reduction <add>, %184, %cst_84 [2] : vector<2x8x8xf32> to vector<2x8xf32>
    %186 = vector.shape_cast %185 : vector<2x8xf32> to vector<2x8x1xf32>
    %187 = vector.broadcast %186 : vector<2x8x1xf32> to vector<2x8x8xf32>
    %188 = arith.divf %184, %187 : vector<2x8x8xf32>
    "tpu.trace_start"() <{level = 10 : i32, message = "bqk,bkd->bqd"}> : () -> ()
    %cst_85 = arith.constant dense<0.000000e+00> : vector<2x8x8xf32>
    %189 = tpu.matmul %188, %173, %cst_85 {dimension_numbers = #tpu.dot_dimension_numbers<[2], [1], [1], [2], [0, 0, 0, 1, 1, 2], [0], [0]>} : vector<2x8x8xf32>, vector<2x8x8xf32>, vector<2x8x8xf32> -> vector<2x8x8xf32>
    "tpu.trace_stop"() : () -> ()
    %190 = vector.extract_strided_slice %160 {offsets = [0, 8], sizes = [16, 8], strides = [1, 1]} : vector<16x32xf32> to vector<16x8xf32>
    %191 = vector.shape_cast %190 : vector<16x8xf32> to vector<2x8x8xf32>
    %192 = vector.extract_strided_slice %163 {offsets = [0, 8], sizes = [16, 8], strides = [1, 1]} : vector<16x32xf32> to vector<16x8xf32>
    %193 = vector.shape_cast %192 : vector<16x8xf32> to vector<2x8x8xf32>
    %194 = vector.extract_strided_slice %166 {offsets = [0, 8], sizes = [16, 8], strides = [1, 1]} : vector<16x32xf32> to vector<16x8xf32>
    %195 = vector.shape_cast %194 : vector<16x8xf32> to vector<2x8x8xf32>
    "tpu.trace_start"() <{level = 10 : i32, message = "bqd,bkd->bqk"}> : () -> ()
    %cst_86 = arith.constant dense<0.000000e+00> : vector<2x8x8xf32>
    %196 = tpu.matmul %191, %193, %cst_86 {dimension_numbers = #tpu.dot_dimension_numbers<[2], [2], [1], [1], [0, 0, 0, 1, 1, 1], [0], [0]>} : vector<2x8x8xf32>, vector<2x8x8xf32>, vector<2x8x8xf32> -> vector<2x8x8xf32>
    %cst_87 = arith.constant 0.000000e+00 : f32
    "tpu.trace_stop"() : () -> ()
    %197 = vector.broadcast %cst_87 : f32 to vector<2x8x8xf32>
    %198 = arith.cmpf ogt, %155, %197 : vector<2x8x8xf32>
    %cst_88 = arith.constant -9.99999984E+17 : f32
    %199 = vector.broadcast %cst_88 : f32 to vector<2x8x8xf32>
    %200 = arith.select %198, %199, %196 : vector<2x8x8xi1>, vector<2x8x8xf32>
    %201 = arith.addf %179, %200 : vector<2x8x8xf32>
    %cst_89 = arith.constant dense<0xFF800000> : vector<2x8xf32>
    %202 = vector.multi_reduction <maximumf>, %200, %cst_89 [2] : vector<2x8x8xf32> to vector<2x8xf32>
    %203 = vector.shape_cast %202 : vector<2x8xf32> to vector<2x8x1xf32>
    %204 = vector.broadcast %203 : vector<2x8x1xf32> to vector<2x8x8xf32>
    %205 = arith.subf %200, %204 : vector<2x8x8xf32>
    %206 = math.exp %205 : vector<2x8x8xf32>
    %cst_90 = arith.constant dense<0.000000e+00> : vector<2x8xf32>
    %207 = vector.multi_reduction <add>, %206, %cst_90 [2] : vector<2x8x8xf32> to vector<2x8xf32>
    %208 = vector.shape_cast %207 : vector<2x8xf32> to vector<2x8x1xf32>
    %209 = vector.broadcast %208 : vector<2x8x1xf32> to vector<2x8x8xf32>
    %210 = arith.divf %206, %209 : vector<2x8x8xf32>
    "tpu.trace_start"() <{level = 10 : i32, message = "bqk,bkd->bqd"}> : () -> ()
    %cst_91 = arith.constant dense<0.000000e+00> : vector<2x8x8xf32>
    %211 = tpu.matmul %210, %195, %cst_91 {dimension_numbers = #tpu.dot_dimension_numbers<[2], [1], [1], [2], [0, 0, 0, 1, 1, 2], [0], [0]>} : vector<2x8x8xf32>, vector<2x8x8xf32>, vector<2x8x8xf32> -> vector<2x8x8xf32>
    "tpu.trace_stop"() : () -> ()
    %212 = vector.extract_strided_slice %160 {offsets = [0, 16], sizes = [16, 8], strides = [1, 1]} : vector<16x32xf32> to vector<16x8xf32>
    %213 = vector.shape_cast %212 : vector<16x8xf32> to vector<2x8x8xf32>
    %214 = vector.extract_strided_slice %163 {offsets = [0, 16], sizes = [16, 8], strides = [1, 1]} : vector<16x32xf32> to vector<16x8xf32>
    %215 = vector.shape_cast %214 : vector<16x8xf32> to vector<2x8x8xf32>
    %216 = vector.extract_strided_slice %166 {offsets = [0, 16], sizes = [16, 8], strides = [1, 1]} : vector<16x32xf32> to vector<16x8xf32>
    %217 = vector.shape_cast %216 : vector<16x8xf32> to vector<2x8x8xf32>
    "tpu.trace_start"() <{level = 10 : i32, message = "bqd,bkd->bqk"}> : () -> ()
    %cst_92 = arith.constant dense<0.000000e+00> : vector<2x8x8xf32>
    %218 = tpu.matmul %213, %215, %cst_92 {dimension_numbers = #tpu.dot_dimension_numbers<[2], [2], [1], [1], [0, 0, 0, 1, 1, 1], [0], [0]>} : vector<2x8x8xf32>, vector<2x8x8xf32>, vector<2x8x8xf32> -> vector<2x8x8xf32>
    %cst_93 = arith.constant 0.000000e+00 : f32
    "tpu.trace_stop"() : () -> ()
    %219 = vector.broadcast %cst_93 : f32 to vector<2x8x8xf32>
    %220 = arith.cmpf ogt, %155, %219 : vector<2x8x8xf32>
    %cst_94 = arith.constant -9.99999984E+17 : f32
    %221 = vector.broadcast %cst_94 : f32 to vector<2x8x8xf32>
    %222 = arith.select %220, %221, %218 : vector<2x8x8xi1>, vector<2x8x8xf32>
    %223 = arith.addf %201, %222 : vector<2x8x8xf32>
    %cst_95 = arith.constant dense<0xFF800000> : vector<2x8xf32>
    %224 = vector.multi_reduction <maximumf>, %222, %cst_95 [2] : vector<2x8x8xf32> to vector<2x8xf32>
    %225 = vector.shape_cast %224 : vector<2x8xf32> to vector<2x8x1xf32>
    %226 = vector.broadcast %225 : vector<2x8x1xf32> to vector<2x8x8xf32>
    %227 = arith.subf %222, %226 : vector<2x8x8xf32>
    %228 = math.exp %227 : vector<2x8x8xf32>
    %cst_96 = arith.constant dense<0.000000e+00> : vector<2x8xf32>
    %229 = vector.multi_reduction <add>, %228, %cst_96 [2] : vector<2x8x8xf32> to vector<2x8xf32>
    %230 = vector.shape_cast %229 : vector<2x8xf32> to vector<2x8x1xf32>
    %231 = vector.broadcast %230 : vector<2x8x1xf32> to vector<2x8x8xf32>
    %232 = arith.divf %228, %231 : vector<2x8x8xf32>
    "tpu.trace_start"() <{level = 10 : i32, message = "bqk,bkd->bqd"}> : () -> ()
    %cst_97 = arith.constant dense<0.000000e+00> : vector<2x8x8xf32>
    %233 = tpu.matmul %232, %217, %cst_97 {dimension_numbers = #tpu.dot_dimension_numbers<[2], [1], [1], [2], [0, 0, 0, 1, 1, 2], [0], [0]>} : vector<2x8x8xf32>, vector<2x8x8xf32>, vector<2x8x8xf32> -> vector<2x8x8xf32>
    "tpu.trace_stop"() : () -> ()
    %234 = vector.extract_strided_slice %160 {offsets = [0, 24], sizes = [16, 8], strides = [1, 1]} : vector<16x32xf32> to vector<16x8xf32>
    %235 = vector.shape_cast %234 : vector<16x8xf32> to vector<2x8x8xf32>
    %236 = vector.extract_strided_slice %163 {offsets = [0, 24], sizes = [16, 8], strides = [1, 1]} : vector<16x32xf32> to vector<16x8xf32>
    %237 = vector.shape_cast %236 : vector<16x8xf32> to vector<2x8x8xf32>
    %238 = vector.extract_strided_slice %166 {offsets = [0, 24], sizes = [16, 8], strides = [1, 1]} : vector<16x32xf32> to vector<16x8xf32>
    %239 = vector.shape_cast %238 : vector<16x8xf32> to vector<2x8x8xf32>
    "tpu.trace_start"() <{level = 10 : i32, message = "bqd,bkd->bqk"}> : () -> ()
    %cst_98 = arith.constant dense<0.000000e+00> : vector<2x8x8xf32>
    %240 = tpu.matmul %235, %237, %cst_98 {dimension_numbers = #tpu.dot_dimension_numbers<[2], [2], [1], [1], [0, 0, 0, 1, 1, 1], [0], [0]>} : vector<2x8x8xf32>, vector<2x8x8xf32>, vector<2x8x8xf32> -> vector<2x8x8xf32>
    %cst_99 = arith.constant 0.000000e+00 : f32
    "tpu.trace_stop"() : () -> ()
    %241 = vector.broadcast %cst_99 : f32 to vector<2x8x8xf32>
    %242 = arith.cmpf ogt, %155, %241 : vector<2x8x8xf32>
    %cst_100 = arith.constant -9.99999984E+17 : f32
    %243 = vector.broadcast %cst_100 : f32 to vector<2x8x8xf32>
    %244 = arith.select %242, %243, %240 : vector<2x8x8xi1>, vector<2x8x8xf32>
    %245 = arith.addf %223, %244 : vector<2x8x8xf32>
    %cst_101 = arith.constant dense<0xFF800000> : vector<2x8xf32>
    %246 = vector.multi_reduction <maximumf>, %244, %cst_101 [2] : vector<2x8x8xf32> to vector<2x8xf32>
    %247 = vector.shape_cast %246 : vector<2x8xf32> to vector<2x8x1xf32>
    %248 = vector.broadcast %247 : vector<2x8x1xf32> to vector<2x8x8xf32>
    %249 = arith.subf %244, %248 : vector<2x8x8xf32>
    %250 = math.exp %249 : vector<2x8x8xf32>
    %cst_102 = arith.constant dense<0.000000e+00> : vector<2x8xf32>
    %251 = vector.multi_reduction <add>, %250, %cst_102 [2] : vector<2x8x8xf32> to vector<2x8xf32>
    %252 = vector.shape_cast %251 : vector<2x8xf32> to vector<2x8x1xf32>
    %253 = vector.broadcast %252 : vector<2x8x1xf32> to vector<2x8x8xf32>
    %254 = arith.divf %250, %253 : vector<2x8x8xf32>
    "tpu.trace_start"() <{level = 10 : i32, message = "bqk,bkd->bqd"}> : () -> ()
    %cst_103 = arith.constant dense<0.000000e+00> : vector<2x8x8xf32>
    %255 = tpu.matmul %254, %239, %cst_103 {dimension_numbers = #tpu.dot_dimension_numbers<[2], [1], [1], [2], [0, 0, 0, 1, 1, 2], [0], [0]>} : vector<2x8x8xf32>, vector<2x8x8xf32>, vector<2x8x8xf32> -> vector<2x8x8xf32>
    "tpu.trace_stop"() : () -> ()
    %256 = tpu.concatenate %189, %211, %233, %255 in 2 : vector<2x8x8xf32>, vector<2x8x8xf32>, vector<2x8x8xf32>, vector<2x8x8xf32> -> vector<2x8x32xf32>
    %257 = vector.shape_cast %256 : vector<2x8x32xf32> to vector<16x32xf32>
    %c0_104 = arith.constant 0 : index
    %c0_105 = arith.constant 0 : index
    %c0_106 = arith.constant 0 : index
    %258 = vector.load %arg19[%c0_104, %c0_105, %c0_106] : memref<1x32x32xf32, #tpu.memory_space<vmem>>, vector<1x32x32xf32>
    %259 = vector.shape_cast %258 : vector<1x32x32xf32> to vector<32x32xf32>
    %cst_107 = arith.constant dense<0.000000e+00> : vector<16x32xf32>
    %260 = tpu.matmul %257, %259, %cst_107 {dimension_numbers = #tpu.dot_dimension_numbers<[1], [0], [0], [1], [0, 0, 1, 1], [], []>} : vector<16x32xf32>, vector<32x32xf32>, vector<16x32xf32> -> vector<16x32xf32>
    %cst_108 = arith.constant 4.000000e+00 : f32
    %261 = vector.broadcast %cst_108 : f32 to vector<2x8x8xf32>
    %262 = arith.divf %245, %261 : vector<2x8x8xf32>
    %263 = arith.addf %131, %260 : vector<16x32xf32>
    %c1_i32 = arith.constant 1 : i32
    %264 = arith.cmpi eq, %arg0, %c1_i32 : i32
    %265 = arith.extui %264 : i1 to i32
    %c0_i32_109 = arith.constant 0 : i32
    %266 = arith.cmpi ne, %265, %c0_i32_109 : i32
    scf.if %266 {
      %c0_167 = arith.constant 0 : index
      %c0_168 = arith.constant 0 : index
      %c0_169 = arith.constant 0 : index
      %336 = vector.load %arg25[%c0_167, %c0_168, %c0_169] : memref<2x8x8xf32, #tpu.memory_space<vmem>>, vector<2x8x8xf32>
      tpu.vector_store %arg25[%c0_167, %c0_168, %c0_169], %262 {strides = array<i32>} : memref<2x8x8xf32, #tpu.memory_space<vmem>>, vector<2x8x8xf32>,
    } else {
    }
    %267 = vector.extract_strided_slice %5 {offsets = [2, 0], sizes = [1, 32], strides = [1, 1]} : vector<3x32xf32> to vector<1x32xf32>
    %268 = vector.extract_strided_slice %7 {offsets = [2, 0], sizes = [1, 32], strides = [1, 1]} : vector<3x32xf32> to vector<1x32xf32>
    %cst_110 = arith.constant dense<0.000000e+00> : vector<16xf32>
    %269 = vector.multi_reduction <add>, %263, %cst_110 [1] : vector<16x32xf32> to vector<16xf32>
    %270 = vector.shape_cast %269 : vector<16xf32> to vector<16x1xf32>
    %cst_111 = arith.constant 3.200000e+01 : f32
    %271 = vector.broadcast %cst_111 : f32 to vector<16x1xf32>
    %272 = arith.divf %270, %271 : vector<16x1xf32>
    %273 = vector.broadcast %272 : vector<16x1xf32> to vector<16x32xf32>
    %274 = arith.subf %263, %273 : vector<16x32xf32>
    %275 = arith.mulf %274, %274 : vector<16x32xf32>
    %cst_112 = arith.constant dense<0.000000e+00> : vector<16xf32>
    %276 = vector.multi_reduction <add>, %275, %cst_112 [1] : vector<16x32xf32> to vector<16xf32>
    %277 = vector.shape_cast %276 : vector<16xf32> to vector<16x1xf32>
    %cst_113 = arith.constant 3.100000e+01 : f32
    %278 = vector.broadcast %cst_113 : f32 to vector<16x1xf32>
    %279 = arith.divf %277, %278 : vector<16x1xf32>
    %280 = math.sqrt %279 : vector<16x1xf32>
    %281 = vector.broadcast %267 : vector<1x32xf32> to vector<16x32xf32>
    %282 = arith.mulf %281, %274 : vector<16x32xf32>
    %cst_114 = arith.constant 9.99999997E-7 : f32
    %283 = vector.broadcast %cst_114 : f32 to vector<16x1xf32>
    %284 = arith.addf %280, %283 : vector<16x1xf32>
    %285 = vector.broadcast %284 : vector<16x1xf32> to vector<16x32xf32>
    %286 = arith.divf %282, %285 : vector<16x32xf32>
    %287 = vector.broadcast %268 : vector<1x32xf32> to vector<16x32xf32>
    %288 = arith.addf %286, %287 : vector<16x32xf32>
    %c0_115 = arith.constant 0 : index
    %c0_116 = arith.constant 0 : index
    %c0_117 = arith.constant 0 : index
    %289 = vector.load %arg21[%c0_115, %c0_116, %c0_117] : memref<1x1x64xf32, #tpu.memory_space<vmem>>, vector<1x1x64xf32>
    %290 = vector.shape_cast %289 : vector<1x1x64xf32> to vector<1x64xf32>
    %c0_118 = arith.constant 0 : index
    %c0_119 = arith.constant 0 : index
    %291 = vector.load %arg6[%c0_118, %c0_119] : memref<16x16xf32, #tpu.memory_space<vmem>>, vector<16x16xf32>
    %cst_120 = arith.constant dense<0.000000e+00> : vector<16x32xf32>
    %292 = tpu.matmul %291, %288, %cst_120 {dimension_numbers = #tpu.dot_dimension_numbers<[1], [0], [0], [1], [0, 0, 1, 1], [], []>} : vector<16x16xf32>, vector<16x32xf32>, vector<16x32xf32> -> vector<16x32xf32>
    %c0_121 = arith.constant 0 : index
    %c0_122 = arith.constant 0 : index
    %293 = vector.load %arg6[%c0_121, %c0_122] : memref<16x16xf32, #tpu.memory_space<vmem>>, vector<16x16xf32>
    %cst_123 = arith.constant dense<0.000000e+00> : vector<16x32xf32>
    %294 = tpu.matmul %293, %292, %cst_123 {dimension_numbers = #tpu.dot_dimension_numbers<[1], [0], [0], [1], [0, 0, 1, 1], [], []>} : vector<16x16xf32>, vector<16x32xf32>, vector<16x32xf32> -> vector<16x32xf32>
    %c0_124 = arith.constant 0 : index
    %c0_125 = arith.constant 0 : index
    %c0_126 = arith.constant 0 : index
    %c0_127 = arith.constant 0 : index
    %295 = vector.load %arg20[%c0_124, %c0_125, %c0_126, %c0_127] : memref<1x3x32x64xf32, #tpu.memory_space<vmem>>, vector<1x1x32x64xf32>
    %296 = vector.shape_cast %295 : vector<1x1x32x64xf32> to vector<32x64xf32>
    %cst_128 = arith.constant dense<0.000000e+00> : vector<16x64xf32>
    %297 = tpu.matmul %294, %296, %cst_128 {dimension_numbers = #tpu.dot_dimension_numbers<[1], [0], [0], [1], [0, 0, 1, 1], [], []>} : vector<16x32xf32>, vector<32x64xf32>, vector<16x64xf32> -> vector<16x64xf32>
    %c0_129 = arith.constant 0 : index
    %c1 = arith.constant 1 : index
    %c0_130 = arith.constant 0 : index
    %c0_131 = arith.constant 0 : index
    %298 = vector.load %arg20[%c0_129, %c1, %c0_130, %c0_131] : memref<1x3x32x64xf32, #tpu.memory_space<vmem>>, vector<1x1x32x64xf32>
    %299 = vector.shape_cast %298 : vector<1x1x32x64xf32> to vector<32x64xf32>
    %cst_132 = arith.constant dense<0.000000e+00> : vector<16x64xf32>
    %300 = tpu.matmul %292, %299, %cst_132 {dimension_numbers = #tpu.dot_dimension_numbers<[1], [0], [0], [1], [0, 0, 1, 1], [], []>} : vector<16x32xf32>, vector<32x64xf32>, vector<16x64xf32> -> vector<16x64xf32>
    %301 = arith.addf %297, %300 : vector<16x64xf32>
    %c0_133 = arith.constant 0 : index
    %c2 = arith.constant 2 : index
    %c0_134 = arith.constant 0 : index
    %c0_135 = arith.constant 0 : index
    %302 = vector.load %arg20[%c0_133, %c2, %c0_134, %c0_135] : memref<1x3x32x64xf32, #tpu.memory_space<vmem>>, vector<1x1x32x64xf32>
    %303 = vector.shape_cast %302 : vector<1x1x32x64xf32> to vector<32x64xf32>
    %cst_136 = arith.constant dense<0.000000e+00> : vector<16x64xf32>
    %304 = tpu.matmul %288, %303, %cst_136 {dimension_numbers = #tpu.dot_dimension_numbers<[1], [0], [0], [1], [0, 0, 1, 1], [], []>} : vector<16x32xf32>, vector<32x64xf32>, vector<16x64xf32> -> vector<16x64xf32>
    %305 = arith.addf %301, %304 : vector<16x64xf32>
    %306 = vector.broadcast %290 : vector<1x64xf32> to vector<16x64xf32>
    %307 = arith.addf %305, %306 : vector<16x64xf32>
    %cst_137 = arith.constant 0.000000e+00 : f32
    %308 = vector.broadcast %cst_137 : f32 to vector<16x64xf32>
    %309 = arith.maximumf %307, %308 : vector<16x64xf32>
    %c0_138 = arith.constant 0 : index
    %c0_139 = arith.constant 0 : index
    %c0_140 = arith.constant 0 : index
    %310 = vector.load %arg23[%c0_138, %c0_139, %c0_140] : memref<1x1x32xf32, #tpu.memory_space<vmem>>, vector<1x1x32xf32>
    %311 = vector.shape_cast %310 : vector<1x1x32xf32> to vector<1x32xf32>
    %c0_141 = arith.constant 0 : index
    %c0_142 = arith.constant 0 : index
    %312 = vector.load %arg6[%c0_141, %c0_142] : memref<16x16xf32, #tpu.memory_space<vmem>>, vector<16x16xf32>
    %cst_143 = arith.constant dense<0.000000e+00> : vector<16x64xf32>
    %313 = tpu.matmul %312, %309, %cst_143 {dimension_numbers = #tpu.dot_dimension_numbers<[1], [0], [0], [1], [0, 0, 1, 1], [], []>} : vector<16x16xf32>, vector<16x64xf32>, vector<16x64xf32> -> vector<16x64xf32>
    %c0_144 = arith.constant 0 : index
    %c0_145 = arith.constant 0 : index
    %314 = vector.load %arg6[%c0_144, %c0_145] : memref<16x16xf32, #tpu.memory_space<vmem>>, vector<16x16xf32>
    %cst_146 = arith.constant dense<0.000000e+00> : vector<16x64xf32>
    %315 = tpu.matmul %314, %313, %cst_146 {dimension_numbers = #tpu.dot_dimension_numbers<[1], [0], [0], [1], [0, 0, 1, 1], [], []>} : vector<16x16xf32>, vector<16x64xf32>, vector<16x64xf32> -> vector<16x64xf32>
    %c0_147 = arith.constant 0 : index
    %c0_148 = arith.constant 0 : index
    %c0_149 = arith.constant 0 : index
    %c0_150 = arith.constant 0 : index
    %316 = vector.load %arg22[%c0_147, %c0_148, %c0_149, %c0_150] : memref<1x3x64x32xf32, #tpu.memory_space<vmem>>, vector<1x1x64x32xf32>
    %317 = vector.shape_cast %316 : vector<1x1x64x32xf32> to vector<64x32xf32>
    %cst_151 = arith.constant dense<0.000000e+00> : vector<16x32xf32>
    %318 = tpu.matmul %315, %317, %cst_151 {dimension_numbers = #tpu.dot_dimension_numbers<[1], [0], [0], [1], [0, 0, 1, 1], [], []>} : vector<16x64xf32>, vector<64x32xf32>, vector<16x32xf32> -> vector<16x32xf32>
    %c0_152 = arith.constant 0 : index
    %c1_153 = arith.constant 1 : index
    %c0_154 = arith.constant 0 : index
    %c0_155 = arith.constant 0 : index
    %319 = vector.load %arg22[%c0_152, %c1_153, %c0_154, %c0_155] : memref<1x3x64x32xf32, #tpu.memory_space<vmem>>, vector<1x1x64x32xf32>
    %320 = vector.shape_cast %319 : vector<1x1x64x32xf32> to vector<64x32xf32>
    %cst_156 = arith.constant dense<0.000000e+00> : vector<16x32xf32>
    %321 = tpu.matmul %313, %320, %cst_156 {dimension_numbers = #tpu.dot_dimension_numbers<[1], [0], [0], [1], [0, 0, 1, 1], [], []>} : vector<16x64xf32>, vector<64x32xf32>, vector<16x32xf32> -> vector<16x32xf32>
    %322 = arith.addf %318, %321 : vector<16x32xf32>
    %c0_157 = arith.constant 0 : index
    %c2_158 = arith.constant 2 : index
    %c0_159 = arith.constant 0 : index
    %c0_160 = arith.constant 0 : index
    %323 = vector.load %arg22[%c0_157, %c2_158, %c0_159, %c0_160] : memref<1x3x64x32xf32, #tpu.memory_space<vmem>>, vector<1x1x64x32xf32>
    %324 = vector.shape_cast %323 : vector<1x1x64x32xf32> to vector<64x32xf32>
    %cst_161 = arith.constant dense<0.000000e+00> : vector<16x32xf32>
    %325 = tpu.matmul %309, %324, %cst_161 {dimension_numbers = #tpu.dot_dimension_numbers<[1], [0], [0], [1], [0, 0, 1, 1], [], []>} : vector<16x64xf32>, vector<64x32xf32>, vector<16x32xf32> -> vector<16x32xf32>
    %326 = arith.addf %322, %325 : vector<16x32xf32>
    %327 = vector.broadcast %311 : vector<1x32xf32> to vector<16x32xf32>
    %328 = arith.addf %326, %327 : vector<16x32xf32>
    %cst_162 = arith.constant 0.000000e+00 : f32
    %329 = vector.broadcast %cst_162 : f32 to vector<16x32xf32>
    %330 = arith.maximumf %328, %329 : vector<16x32xf32>
    %331 = arith.addf %263, %330 : vector<16x32xf32>
    %c0_163 = arith.constant 0 : index
    %c0_164 = arith.constant 0 : index
    %332 = vector.load %arg26[%c0_163, %c0_164] : memref<16x32xf32, #tpu.memory_space<vmem>>, vector<16x32xf32>
    tpu.vector_store %arg26[%c0_163, %c0_164], %331 {strides = array<i32>} : memref<16x32xf32, #tpu.memory_space<vmem>>, vector<16x32xf32>,
    %c1_i32_165 = arith.constant 1 : i32
    %333 = arith.cmpi eq, %arg0, %c1_i32_165 : i32
    %334 = arith.extui %333 : i1 to i32
    %c0_i32_166 = arith.constant 0 : i32
    %335 = arith.cmpi ne, %334, %c0_i32_166 : i32
    scf.if %335 {
      %c0_167 = arith.constant 0 : index
      %c0_168 = arith.constant 0 : index
      %336 = vector.load %arg8[%c0_167, %c0_168] : memref<1x32xf32, #tpu.memory_space<vmem>>, vector<1x32xf32>
      %c0_169 = arith.constant 0 : index
      %c0_170 = arith.constant 0 : index
      %337 = vector.load %arg9[%c0_169, %c0_170] : memref<1x32xf32, #tpu.memory_space<vmem>>, vector<1x32xf32>
      %cst_171 = arith.constant dense<0.000000e+00> : vector<16xf32>
      %338 = vector.multi_reduction <add>, %331, %cst_171 [1] : vector<16x32xf32> to vector<16xf32>
      %339 = vector.shape_cast %338 : vector<16xf32> to vector<16x1xf32>
      %cst_172 = arith.constant 3.200000e+01 : f32
      %340 = vector.broadcast %cst_172 : f32 to vector<16x1xf32>
      %341 = arith.divf %339, %340 : vector<16x1xf32>
      %342 = vector.broadcast %341 : vector<16x1xf32> to vector<16x32xf32>
      %343 = arith.subf %331, %342 : vector<16x32xf32>
      %344 = arith.mulf %343, %343 : vector<16x32xf32>
      %cst_173 = arith.constant dense<0.000000e+00> : vector<16xf32>
      %345 = vector.multi_reduction <add>, %344, %cst_173 [1] : vector<16x32xf32> to vector<16xf32>
      %346 = vector.shape_cast %345 : vector<16xf32> to vector<16x1xf32>
      %cst_174 = arith.constant 3.100000e+01 : f32
      %347 = vector.broadcast %cst_174 : f32 to vector<16x1xf32>
      %348 = arith.divf %346, %347 : vector<16x1xf32>
      %349 = math.sqrt %348 : vector<16x1xf32>
      %350 = vector.broadcast %336 : vector<1x32xf32> to vector<16x32xf32>
      %351 = arith.mulf %350, %343 : vector<16x32xf32>
      %cst_175 = arith.constant 9.99999997E-7 : f32
      %352 = vector.broadcast %cst_175 : f32 to vector<16x1xf32>
      %353 = arith.addf %349, %352 : vector<16x1xf32>
      %354 = vector.broadcast %353 : vector<16x1xf32> to vector<16x32xf32>
      %355 = arith.divf %351, %354 : vector<16x32xf32>
      %356 = vector.broadcast %337 : vector<1x32xf32> to vector<16x32xf32>
      %357 = arith.addf %355, %356 : vector<16x32xf32>
      %c0_176 = arith.constant 0 : index
      %c0_177 = arith.constant 0 : index
      %358 = vector.load %arg24[%c0_176, %c0_177] : memref<16x32xf32, #tpu.memory_space<vmem>>, vector<16x32xf32>
      tpu.vector_store %arg24[%c0_176, %c0_177], %357 {strides = array<i32>} : memref<16x32xf32, #tpu.memory_space<vmem>>, vector<16x32xf32>,
    } else {
    }
    return
  }
  func.func @transform_0(%arg0: i32) -> (i32, i32) {
    %c0_i32 = arith.constant 0 : i32
    %c0_i32_0 = arith.constant 0 : i32
    %c0_i32_1 = arith.constant 0 : i32
    return %c0_i32, %c0_i32_0 : i32, i32
  }
  func.func @transform_1(%arg0: i32) -> (i32, i32) {
    %c0_i32 = arith.constant 0 : i32
    %c0_i32_0 = arith.constant 0 : i32
    %c0_i32_1 = arith.constant 0 : i32
    return %c0_i32, %c0_i32_0 : i32, i32
  }
  func.func @transform_2(%arg0: i32) -> (i32, i32) {
    %c0_i32 = arith.constant 0 : i32
    %c0_i32_0 = arith.constant 0 : i32
    %c0_i32_1 = arith.constant 0 : i32
    return %c0_i32, %c0_i32_0 : i32, i32
  }
  func.func @transform_3(%arg0: i32) -> (i32, i32, i32) {
    %c0_i32 = arith.constant 0 : i32
    %c0_i32_0 = arith.constant 0 : i32
    %c0_i32_1 = arith.constant 0 : i32
    %c0_i32_2 = arith.constant 0 : i32
    return %c0_i32, %c0_i32_0, %c0_i32_1 : i32, i32, i32
  }
  func.func @transform_4(%arg0: i32) -> (i32, i32, i32) {
    %c0_i32 = arith.constant 0 : i32
    %c0_i32_0 = arith.constant 0 : i32
    %c0_i32_1 = arith.constant 0 : i32
    %c0_i32_2 = arith.constant 0 : i32
    return %c0_i32, %c0_i32_0, %c0_i32_1 : i32, i32, i32
  }
  func.func @transform_5(%arg0: i32) -> (i32, i32) {
    %c0_i32 = arith.constant 0 : i32
    %c0_i32_0 = arith.constant 0 : i32
    %c0_i32_1 = arith.constant 0 : i32
    return %c0_i32, %c0_i32_0 : i32, i32
  }
  func.func @transform_6(%arg0: i32) -> (i32, i32) {
    %c0_i32 = arith.constant 0 : i32
    %c0_i32_0 = arith.constant 0 : i32
    %c0_i32_1 = arith.constant 0 : i32
    return %c0_i32, %c0_i32_0 : i32, i32
  }
  func.func @transform_7(%arg0: i32) -> (i32, i32) {
    %c0_i32 = arith.constant 0 : i32
    %c0_i32_0 = arith.constant 0 : i32
    %c0_i32_1 = arith.constant 0 : i32
    return %c0_i32, %c0_i32_0 : i32, i32
  }
  func.func @transform_8(%arg0: i32) -> (i32, i32) {
    %c0_i32 = arith.constant 0 : i32
    %c0_i32_0 = arith.constant 0 : i32
    %c0_i32_1 = arith.constant 0 : i32
    return %c0_i32, %c0_i32_0 : i32, i32
  }
  func.func @transform_9(%arg0: i32) -> (i32, i32, i32) {
    %c0_i32 = arith.constant 0 : i32
    %c0_i32_0 = arith.constant 0 : i32
    %c0_i32_1 = arith.constant 0 : i32
    return %arg0, %c0_i32, %c0_i32_0 : i32, i32, i32
  }
  func.func @transform_10(%arg0: i32) -> (i32, i32, i32) {
    %c0_i32 = arith.constant 0 : i32
    %c0_i32_0 = arith.constant 0 : i32
    %c0_i32_1 = arith.constant 0 : i32
    return %arg0, %c0_i32, %c0_i32_0 : i32, i32, i32
  }
  func.func @transform_11(%arg0: i32) -> (i32, i32, i32) {
    %c0_i32 = arith.constant 0 : i32
    %c0_i32_0 = arith.constant 0 : i32
    %c0_i32_1 = arith.constant 0 : i32
    return %arg0, %c0_i32, %c0_i32_0 : i32, i32, i32
  }
  func.func @transform_12(%arg0: i32) -> (i32, i32, i32) {
    %c0_i32 = arith.constant 0 : i32
    %c0_i32_0 = arith.constant 0 : i32
    %c0_i32_1 = arith.constant 0 : i32
    return %arg0, %c0_i32, %c0_i32_0 : i32, i32, i32
  }
  func.func @transform_13(%arg0: i32) -> (i32, i32, i32) {
    %c0_i32 = arith.constant 0 : i32
    %c0_i32_0 = arith.constant 0 : i32
    %c0_i32_1 = arith.constant 0 : i32
    return %arg0, %c0_i32, %c0_i32_0 : i32, i32, i32
  }
  func.func @transform_14(%arg0: i32) -> (i32, i32, i32) {
    %c0_i32 = arith.constant 0 : i32
    %c0_i32_0 = arith.constant 0 : i32
    %c0_i32_1 = arith.constant 0 : i32
    return %arg0, %c0_i32, %c0_i32_0 : i32, i32, i32
  }
  func.func @transform_15(%arg0: i32) -> (i32, i32, i32) {
    %c0_i32 = arith.constant 0 : i32
    %c0_i32_0 = arith.constant 0 : i32
    %c0_i32_1 = arith.constant 0 : i32
    return %arg0, %c0_i32, %c0_i32_0 : i32, i32, i32
  }
  func.func @transform_16(%arg0: i32) -> (i32, i32, i32) {
    %c0_i32 = arith.constant 0 : i32
    %c0_i32_0 = arith.constant 0 : i32
    %c0_i32_1 = arith.constant 0 : i32
    return %arg0, %c0_i32, %c0_i32_0 : i32, i32, i32
  }
  func.func @transform_17(%arg0: i32) -> (i32, i32, i32) {
    %c0_i32 = arith.constant 0 : i32
    %c0_i32_0 = arith.constant 0 : i32
    %c0_i32_1 = arith.constant 0 : i32
    return %arg0, %c0_i32, %c0_i32_0 : i32, i32, i32
  }
  func.func @transform_18(%arg0: i32) -> (i32, i32, i32) {
    %c0_i32 = arith.constant 0 : i32
    %c0_i32_0 = arith.constant 0 : i32
    %c0_i32_1 = arith.constant 0 : i32
    return %arg0, %c0_i32, %c0_i32_0 : i32, i32, i32
  }
  func.func @transform_19(%arg0: i32) -> (i32, i32, i32, i32) {
    %c0_i32 = arith.constant 0 : i32
    %c0_i32_0 = arith.constant 0 : i32
    %c0_i32_1 = arith.constant 0 : i32
    %c0_i32_2 = arith.constant 0 : i32
    return %arg0, %c0_i32, %c0_i32_0, %c0_i32_1 : i32, i32, i32, i32
  }
  func.func @transform_20(%arg0: i32) -> (i32, i32, i32) {
    %c0_i32 = arith.constant 0 : i32
    %c0_i32_0 = arith.constant 0 : i32
    %c0_i32_1 = arith.constant 0 : i32
    return %arg0, %c0_i32, %c0_i32_0 : i32, i32, i32
  }
  func.func @transform_21(%arg0: i32) -> (i32, i32, i32, i32) {
    %c0_i32 = arith.constant 0 : i32
    %c0_i32_0 = arith.constant 0 : i32
    %c0_i32_1 = arith.constant 0 : i32
    %c0_i32_2 = arith.constant 0 : i32
    return %arg0, %c0_i32, %c0_i32_0, %c0_i32_1 : i32, i32, i32, i32
  }
  func.func @transform_22(%arg0: i32) -> (i32, i32, i32) {
    %c0_i32 = arith.constant 0 : i32
    %c0_i32_0 = arith.constant 0 : i32
    %c0_i32_1 = arith.constant 0 : i32
    return %arg0, %c0_i32, %c0_i32_0 : i32, i32, i32
  }
  func.func @transform_23(%arg0: i32) -> (i32, i32) {
    %c0_i32 = arith.constant 0 : i32
    %c0_i32_0 = arith.constant 0 : i32
    %c0_i32_1 = arith.constant 0 : i32
    return %c0_i32, %c0_i32_0 : i32, i32
  }
  func.func @transform_24(%arg0: i32) -> (i32, i32, i32) {
    %c0_i32 = arith.constant 0 : i32
    %c0_i32_0 = arith.constant 0 : i32
    %c0_i32_1 = arith.constant 0 : i32
    %c0_i32_2 = arith.constant 0 : i32
    return %c0_i32, %c0_i32_0, %c0_i32_1 : i32, i32, i32
  }
}

</mosaic_0001>

<llo_original>
// kernel: tpu_custom_call.1
$region0: #{tpu_custom_call.1}
  #allocation0 [shape = 'u32[]', space=smem, size = 0x4, offset = 0x4, fixed_abs, tag = 'smem constant byte address 0x4 - core index']
  #allocation1 [shape = 'u32[144,128]{1,0:T(1,128)}', space=vmem, size = 0x12000, scoped, tag = 'internal scratch']
  #allocation2 [shape = 'f32[16,32]{1,0:T(8,128)}', space=vmem, size = 0x2000, scoped, tag = 'scratch operand']
  %s0 = inlined_call_operand.hbm [shape: f32[16,32], index: 0, kind: input, shape index: {}]
  %s1 = inlined_call_operand.hbm [shape: f32[16,32], index: 1, kind: input, shape index: {}]
  %s2 = inlined_call_operand.hbm [shape: f32[16,32], index: 2, kind: input, shape index: {}]
  %s3 = inlined_call_operand.hbm [shape: f32[2,8,8], index: 3, kind: input, shape index: {}]
  %s4 = inlined_call_operand.hbm [shape: f32[2,8,8], index: 4, kind: input, shape index: {}]
  %s5 = inlined_call_operand.hbm [shape: f32[16,16], index: 5, kind: input, shape index: {}]
  %s6 = inlined_call_operand.hbm [shape: f32[32,32], index: 6, kind: input, shape index: {}]
  %s7 = inlined_call_operand.vmem [shape: f32[1,32], index: 7, kind: input, shape index: {}]
  %s8 = inlined_call_operand.hbm [shape: f32[1,32], index: 8, kind: input, shape index: {}]
  %s9 = inlined_call_operand.vmem [shape: f32[2,3,32], index: 9, kind: input, shape index: {}]
  %s10 = inlined_call_operand.vmem [shape: f32[2,3,32], index: 10, kind: input, shape index: {}]
  %s11 = inlined_call_operand.vmem [shape: f32[2,32,32], index: 11, kind: input, shape index: {}]
  %s12 = inlined_call_operand.vmem [shape: f32[2,32,32], index: 12, kind: input, shape index: {}]
  %s13 = inlined_call_operand.vmem [shape: f32[2,32,32], index: 13, kind: input, shape index: {}]
  %s14 = inlined_call_operand.vmem [shape: f32[2,32,32], index: 14, kind: input, shape index: {}]
  %s15 = inlined_call_operand.vmem [shape: f32[2,32,32], index: 15, kind: input, shape index: {}]
  %s16 = inlined_call_operand.vmem [shape: f32[2,32,32], index: 16, kind: input, shape index: {}]
  %s17 = inlined_call_operand.vmem [shape: f32[2,32,32], index: 17, kind: input, shape index: {}]
  %s18 = inlined_call_operand.hbm [shape: f32[2,32,32], index: 18, kind: input, shape index: {}]
  %s19 = inlined_call_operand.vmem [shape: f32[2,3,32,64], index: 19, kind: input, shape index: {}]
  %s20 = inlined_call_operand.vmem [shape: f32[2,1,64], index: 20, kind: input, shape index: {}]
  %s21 = inlined_call_operand.vmem [shape: f32[2,3,64,32], index: 21, kind: input, shape index: {}]
  %s22 = inlined_call_operand.vmem [shape: f32[2,1,32], index: 22, kind: input, shape index: {}]
  %s23 = inlined_call_operand.hbm [shape: f32[16,32], index: 23, kind: output, shape index: {0}]
  %s24 = inlined_call_operand.hbm [shape: f32[2,8,8], index: 24, kind: output, shape index: {1}]
  %25 = xla_tuple %s23, %s24
  %s26 = sld [smem:[#allocation0]]
  $region181: #{tpu_custom_call.1} parent=0
    _
  %s28 = ssub.s32 1, %s26
  %s29 = scalar_select 0, %s28, %s26
  $region1: #{tpu_custom_call.1} parent=0
    #allocation3 [shape = 'u8[8192]{0}', space=vmem, size = 0x2000, scoped, tag = 'input window, operand 0, single buffered']
    #allocation4 [shape = 's32[2]{0}', space=sflag, size = 0x8, scoped, tag = 'scoped memory for tpu_custom_call.1']
    #allocation5 [shape = 's32[2]{0}', space=sflag, size = 0x8, scoped, tag = 'scoped memory for tpu_custom_call.1']
    #allocation6 [shape = 'u8[8192]{0}', space=vmem, size = 0x2000, scoped, tag = 'input window, operand 1, single buffered']
    #allocation7 [shape = 's32[1]{0}', space=sflag, size = 0x4, scoped, tag = 'scoped memory for tpu_custom_call.1']
    #allocation8 [shape = 'u8[8192]{0}', space=vmem, size = 0x2000, scoped, tag = 'input window, operand 2, single buffered']
    #allocation9 [shape = 'u8[8192]{0}', space=vmem, size = 0x2000, scoped, tag = 'input window, operand 3, single buffered']
    #allocation10 [shape = 's32[1]{0}', space=sflag, size = 0x4, scoped, tag = 'scoped memory for tpu_custom_call.1']
    #allocation11 [shape = 'u8[8192]{0}', space=vmem, size = 0x2000, scoped, tag = 'input window, operand 4, single buffered']
    #allocation12 [shape = 'u8[8192]{0}', space=vmem, size = 0x2000, scoped, tag = 'input window, operand 5, single buffered']
    #allocation13 [shape = 's32[1]{0}', space=sflag, size = 0x4, scoped, tag = 'scoped memory for tpu_custom_call.1']
    #allocation14 [shape = 'u8[16384]{0}', space=vmem, size = 0x4000, scoped, tag = 'input window, operand 6, single buffered']
    #allocation15 [shape = 'u8[512]{0}', space=vmem, size = 0x400, scoped, tag = 'input window, operand 8, single buffered']
    #allocation16 [shape = 's32[1]{0}', space=sflag, size = 0x4, scoped, tag = 'scoped memory for tpu_custom_call.1']
    #allocation17 [shape = 'u8[32768]{0}', space=vmem, size = 0x8000, scoped, tag = 'input window, operand 18']
    #allocation18 [shape = 'u8[8192]{0}', space=vmem, size = 0x2000, scoped, tag = 'output window, operand 0, single buffered']
    #allocation19 [shape = 'u8[8192]{0}', space=vmem, size = 0x2000, scoped, tag = 'output window, operand 1, single buffered']
    #allocation20 [shape = 's32[1]{0}', space=sflag, size = 0x4, scoped, tag = 'scoped memory for tpu_custom_call.1']
    %30 = vsyncpa [#allocation4], 0
    %31 = vsyncpa [#allocation7], 0
    %32 = vsyncpa [#allocation10], 0
    %33 = vsyncpa [#allocation13], 0
    %34 = vsyncpa [#allocation16], 0
    %35 = vsyncpa [#allocation5], 0
    %36 = vsyncpa [#allocation20], 0
    loop: start=0, step=1, limit=4
    $region2: #{tpu_custom_call.1} parent=1 // loop_pre_header
      _
    $region3: #{tpu_custom_call.1} parent=1 // loop_header
      %s38 = sphi 0, %s42
      %p39 = scmp.ge.s32.totalorder %s38, 4
      %s46 = sphi 0, %s46
      %s48 = sphi 0, %s46
      %s49 = sphi 0, %s48
      %s63 = sphi 0, %s49
      %s67 = sphi 0, %s67
      %s69 = sphi 0, %s67
      %s70 = sphi 0, %s69
      %s84 = sphi 0, %s70
      %s88 = sphi 0, %s88
      %s90 = sphi 0, %s88
      %s91 = sphi 0, %s90
      %s105 = sphi 0, %s91
      %s109 = sphi 0, %s109
      %s111 = sphi 0, %s109
      %s112 = sphi 0, %s111
      %s126 = sphi 0, %s112
      %s130 = sphi 0, %s130
      %s132 = sphi 0, %s130
      %s133 = sphi 0, %s132
      %s147 = sphi 0, %s133
      %s151 = sphi 0, %s151
      %s153 = sphi 0, %s151
      %s154 = sphi 0, %s153
      %s168 = sphi 0, %s154
      %s172 = sphi 0, %s172
      %s174 = sphi 0, %s172
      %s175 = sphi 0, %s174
      %s189 = sphi 0, %s175
      %s193 = sphi 0, %s193
      %s195 = sphi 0, %s193
      %s196 = sphi 0, %s195
      %s210 = sphi 0, %s196
      %s214 = sphi 0, %s214
      %s216 = sphi 0, %s214
      %s217 = sphi 0, %s216
      %s231 = sphi 0, %s217
      %s237 = sphi 0, %s239
      %s240 = sphi 0, %s237
      %s241 = sphi 0, %s240
      %s257 = sphi 0, %s241
      %s263 = sphi 0, %s265
      %s266 = sphi 0, %s263
      %s267 = sphi 0, %s266
      %s283 = sphi 0, %s267
      %s289 = sphi 0, %s291
      %s292 = sphi 0, %s289
      %s293 = sphi 0, %s292
      %s309 = sphi 0, %s293
      %s315 = sphi 0, %s317
      %s318 = sphi 0, %s315
      %s319 = sphi 0, %s318
      %s335 = sphi 0, %s319
      %s341 = sphi 0, %s343
      %s344 = sphi 0, %s341
      %s345 = sphi 0, %s344
      %s361 = sphi 0, %s345
      %s367 = sphi 0, %s369
      %s370 = sphi 0, %s367
      %s371 = sphi 0, %s370
      %s387 = sphi 0, %s371
      %s393 = sphi 0, %s395
      %s396 = sphi 0, %s393
      %s397 = sphi 0, %s396
      %s413 = sphi 0, %s397
      %s419 = sphi 0, %s421
      %s422 = sphi 0, %s419
      %s423 = sphi 0, %s422
      %s439 = sphi 0, %s423
      %s445 = sphi 0, %s447
      %s448 = sphi 0, %s445
      %s449 = sphi 0, %s448
      %s465 = sphi 0, %s449
      %s471 = sphi 0, %s473
      %s474 = sphi 0, %s471
      %s475 = sphi 0, %s474
      %s491 = sphi 0, %s475
      %s497 = sphi 0, %s499
      %s500 = sphi 0, %s497
      %s501 = sphi 0, %s500
      %s517 = sphi 0, %s501
      %s523 = sphi 0, %s525
      %s526 = sphi 0, %s523
      %s527 = sphi 0, %s526
      %s543 = sphi 0, %s527
      %s549 = sphi 0, %s551
      %s552 = sphi 0, %s549
      %s553 = sphi 0, %s552
      %s569 = sphi 0, %s553
      %s575 = sphi 0, %s577
      %s578 = sphi 0, %s575
      %s579 = sphi 0, %s578
      %s595 = sphi 0, %s579
      %s599 = sphi 0, %s599
      %s601 = sphi 0, %s599
      %s602 = sphi 0, %s601
      %s616 = sphi 0, %s602
      %s620 = sphi 0, %s620
      %s622 = sphi 0, %s620
      %s623 = sphi 0, %s622
      %s637 = sphi 0, %s623
    $region4: #{tpu_custom_call.1} parent=1 // loop_header_branch
      %41 = sbr.rel (%p39) target = $region8
    $region5: #{tpu_custom_call.1} parent=1 // loop_body
      %s43 = ssub.s32 %s38, 1
      %s44 = ssub.s32 %s38, 2
      %s45 = sadd.s32 %s38, 1
      %s47 = sadd.s32 %s46, 1
      %p50 = scmp.eq.s32.totalorder %s38, 1
      %p51 = scmp.ne.s32.totalorder %s46, %s48
      %p52 = scmp.eq.s32.totalorder %s38, 0
      %p53 = por %p51, %p52
      %p54 = scmp.ne.s32.totalorder %s46, %s48
      %p55 = scmp.eq.s32.totalorder %s43, 1
      %p56 = por %p54, %p55
      %p57 = scmp.ne.s32.totalorder %s48, %s49
      %p58 = scmp.eq.s32.totalorder %s43, 0
      %p59 = por %p57, %p58
      %p60 = scmp.ne.s32.totalorder %s48, %s49
      %p61 = scmp.eq.s32.totalorder %s44, 1
      %p62 = por %p60, %p61
      %p64 = scmp.ne.s32.totalorder %s49, %s63
      %p65 = scmp.eq.s32.totalorder %s44, 0
      %p66 = por %p64, %p65
      %s68 = sadd.s32 %s67, 1
      %p71 = scmp.eq.s32.totalorder %s38, 1
      %p72 = scmp.ne.s32.totalorder %s67, %s69
      %p73 = scmp.eq.s32.totalorder %s38, 0
      %p74 = por %p72, %p73
      %p75 = scmp.ne.s32.totalorder %s67, %s69
      %p76 = scmp.eq.s32.totalorder %s43, 1
      %p77 = por %p75, %p76
      %p78 = scmp.ne.s32.totalorder %s69, %s70
      %p79 = scmp.eq.s32.totalorder %s43, 0
      %p80 = por %p78, %p79
      %p81 = scmp.ne.s32.totalorder %s69, %s70
      %p82 = scmp.eq.s32.totalorder %s44, 1
      %p83 = por %p81, %p82
      %p85 = scmp.ne.s32.totalorder %s70, %s84
      %p86 = scmp.eq.s32.totalorder %s44, 0
      %p87 = por %p85, %p86
      %s89 = sadd.s32 %s88, 1
      %p92 = scmp.eq.s32.totalorder %s38, 1
      %p93 = scmp.ne.s32.totalorder %s88, %s90
      %p94 = scmp.eq.s32.totalorder %s38, 0
      %p95 = por %p93, %p94
      %p96 = scmp.ne.s32.totalorder %s88, %s90
      %p97 = scmp.eq.s32.totalorder %s43, 1
      %p98 = por %p96, %p97
      %p99 = scmp.ne.s32.totalorder %s90, %s91
      %p100 = scmp.eq.s32.totalorder %s43, 0
      %p101 = por %p99, %p100
      %p102 = scmp.ne.s32.totalorder %s90, %s91
      %p103 = scmp.eq.s32.totalorder %s44, 1
      %p104 = por %p102, %p103
      %p106 = scmp.ne.s32.totalorder %s91, %s105
      %p107 = scmp.eq.s32.totalorder %s44, 0
      %p108 = por %p106, %p107
      %s110 = sadd.s32 %s109, 1
      %p113 = scmp.eq.s32.totalorder %s38, 1
      %p114 = scmp.ne.s32.totalorder %s109, %s111
      %p115 = scmp.eq.s32.totalorder %s38, 0
      %p116 = por %p114, %p115
      %p117 = scmp.ne.s32.totalorder %s109, %s111
      %p118 = scmp.eq.s32.totalorder %s43, 1
      %p119 = por %p117, %p118
      %p120 = scmp.ne.s32.totalorder %s111, %s112
      %p121 = scmp.eq.s32.totalorder %s43, 0
      %p122 = por %p120, %p121
      %p123 = scmp.ne.s32.totalorder %s111, %s112
      %p124 = scmp.eq.s32.totalorder %s44, 1
      %p125 = por %p123, %p124
      %p127 = scmp.ne.s32.totalorder %s112, %s126
      %p128 = scmp.eq.s32.totalorder %s44, 0
      %p129 = por %p127, %p128
      %s131 = sadd.s32 %s130, 1
      %p134 = scmp.eq.s32.totalorder %s38, 1
      %p135 = scmp.ne.s32.totalorder %s130, %s132
      %p136 = scmp.eq.s32.totalorder %s38, 0
      %p137 = por %p135, %p136
      %p138 = scmp.ne.s32.totalorder %s130, %s132
      %p139 = scmp.eq.s32.totalorder %s43, 1
      %p140 = por %p138, %p139
      %p141 = scmp.ne.s32.totalorder %s132, %s133
      %p142 = scmp.eq.s32.totalorder %s43, 0
      %p143 = por %p141, %p142
      %p144 = scmp.ne.s32.totalorder %s132, %s133
      %p145 = scmp.eq.s32.totalorder %s44, 1
      %p146 = por %p144, %p145
      %p148 = scmp.ne.s32.totalorder %s133, %s147
      %p149 = scmp.eq.s32.totalorder %s44, 0
      %p150 = por %p148, %p149
      %s152 = sadd.s32 %s151, 1
      %p155 = scmp.eq.s32.totalorder %s38, 1
      %p156 = scmp.ne.s32.totalorder %s151, %s153
      %p157 = scmp.eq.s32.totalorder %s38, 0
      %p158 = por %p156, %p157
      %p159 = scmp.ne.s32.totalorder %s151, %s153
      %p160 = scmp.eq.s32.totalorder %s43, 1
      %p161 = por %p159, %p160
      %p162 = scmp.ne.s32.totalorder %s153, %s154
      %p163 = scmp.eq.s32.totalorder %s43, 0
      %p164 = por %p162, %p163
      %p165 = scmp.ne.s32.totalorder %s153, %s154
      %p166 = scmp.eq.s32.totalorder %s44, 1
      %p167 = por %p165, %p166
      %p169 = scmp.ne.s32.totalorder %s154, %s168
      %p170 = scmp.eq.s32.totalorder %s44, 0
      %p171 = por %p169, %p170
      %s173 = sadd.s32 %s172, 1
      %p176 = scmp.eq.s32.totalorder %s38, 1
      %p177 = scmp.ne.s32.totalorder %s172, %s174
      %p178 = scmp.eq.s32.totalorder %s38, 0
      %p179 = por %p177, %p178
      %p180 = scmp.ne.s32.totalorder %s172, %s174
      %p181 = scmp.eq.s32.totalorder %s43, 1
      %p182 = por %p180, %p181
      %p183 = scmp.ne.s32.totalorder %s174, %s175
      %p184 = scmp.eq.s32.totalorder %s43, 0
      %p185 = por %p183, %p184
      %p186 = scmp.ne.s32.totalorder %s174, %s175
      %p187 = scmp.eq.s32.totalorder %s44, 1
      %p188 = por %p186, %p187
      %p190 = scmp.ne.s32.totalorder %s175, %s189
      %p191 = scmp.eq.s32.totalorder %s44, 0
      %p192 = por %p190, %p191
      %s194 = sadd.s32 %s193, 1
      %p197 = scmp.eq.s32.totalorder %s38, 1
      %p198 = scmp.ne.s32.totalorder %s193, %s195
      %p199 = scmp.eq.s32.totalorder %s38, 0
      %p200 = por %p198, %p199
      %p201 = scmp.ne.s32.totalorder %s193, %s195
      %p202 = scmp.eq.s32.totalorder %s43, 1
      %p203 = por %p201, %p202
      %p204 = scmp.ne.s32.totalorder %s195, %s196
      %p205 = scmp.eq.s32.totalorder %s43, 0
      %p206 = por %p204, %p205
      %p207 = scmp.ne.s32.totalorder %s195, %s196
      %p208 = scmp.eq.s32.totalorder %s44, 1
      %p209 = por %p207, %p208
      %p211 = scmp.ne.s32.totalorder %s196, %s210
      %p212 = scmp.eq.s32.totalorder %s44, 0
      %p213 = por %p211, %p212
      %s215 = sadd.s32 %s214, 1
      %p218 = scmp.eq.s32.totalorder %s38, 1
      %p219 = scmp.ne.s32.totalorder %s214, %s216
      %p220 = scmp.eq.s32.totalorder %s38, 0
      %p221 = por %p219, %p220
      %p222 = scmp.ne.s32.totalorder %s214, %s216
      %p223 = scmp.eq.s32.totalorder %s43, 1
      %p224 = por %p222, %p223
      %p225 = scmp.ne.s32.totalorder %s216, %s217
      %p226 = scmp.eq.s32.totalorder %s43, 0
      %p227 = por %p225, %p226
      %p228 = scmp.ne.s32.totalorder %s216, %s217
      %p229 = scmp.eq.s32.totalorder %s44, 1
      %p230 = por %p228, %p229
      %p232 = scmp.ne.s32.totalorder %s217, %s231
      %p233 = scmp.eq.s32.totalorder %s44, 0
      %p234 = por %p232, %p233
      %s235 = ssub.s32 %s38, %s45
      %p236 = scmp.eq.s32.totalorder %s235, 0
      %s238 = sadd.s32 %s237, 1
      %s239 = scalar_select %p236, %s237, %s238
      %p242 = pneg %p236
      %p243 = scmp.eq.s32.totalorder %s38, 1
      %p244 = por %p242, %p243
      %p245 = scmp.ne.s32.totalorder %s237, %s240
      %p246 = scmp.eq.s32.totalorder %s38, 0
      %p247 = por %p245, %p246
      %p248 = scmp.ne.s32.totalorder %s237, %s240
      %p249 = scmp.eq.s32.totalorder %s43, 1
      %p250 = por %p248, %p249
      %p251 = scmp.ne.s32.totalorder %s240, %s241
      %p252 = scmp.eq.s32.totalorder %s43, 0
      %p253 = por %p251, %p252
      %p254 = scmp.ne.s32.totalorder %s240, %s241
      %p255 = scmp.eq.s32.totalorder %s44, 1
      %p256 = por %p254, %p255
      %p258 = scmp.ne.s32.totalorder %s241, %s257
      %p259 = scmp.eq.s32.totalorder %s44, 0
      %p260 = por %p258, %p259
      %s261 = ssub.s32 %s38, %s45
      %p262 = scmp.eq.s32.totalorder %s261, 0
      %s264 = sadd.s32 %s263, 1
      %s265 = scalar_select %p262, %s263, %s264
      %p268 = pneg %p262
      %p269 = scmp.eq.s32.totalorder %s38, 1
      %p270 = por %p268, %p269
      %p271 = scmp.ne.s32.totalorder %s263, %s266
      %p272 = scmp.eq.s32.totalorder %s38, 0
      %p273 = por %p271, %p272
      %p274 = scmp.ne.s32.totalorder %s263, %s266
      %p275 = scmp.eq.s32.totalorder %s43, 1
      %p276 = por %p274, %p275
      %p277 = scmp.ne.s32.totalorder %s266, %s267
      %p278 = scmp.eq.s32.totalorder %s43, 0
      %p279 = por %p277, %p278
      %p280 = scmp.ne.s32.totalorder %s266, %s267
      %p281 = scmp.eq.s32.totalorder %s44, 1
      %p282 = por %p280, %p281
      %p284 = scmp.ne.s32.totalorder %s267, %s283
      %p285 = scmp.eq.s32.totalorder %s44, 0
      %p286 = por %p284, %p285
      %s287 = ssub.s32 %s38, %s45
      %p288 = scmp.eq.s32.totalorder %s287, 0
      %s290 = sadd.s32 %s289, 1
      %s291 = scalar_select %p288, %s289, %s290
      %p294 = pneg %p288
      %p295 = scmp.eq.s32.totalorder %s38, 1
      %p296 = por %p294, %p295
      %p297 = scmp.ne.s32.totalorder %s289, %s292
      %p298 = scmp.eq.s32.totalorder %s38, 0
      %p299 = por %p297, %p298
      %p300 = scmp.ne.s32.totalorder %s289, %s292
      %p301 = scmp.eq.s32.totalorder %s43, 1
      %p302 = por %p300, %p301
      %p303 = scmp.ne.s32.totalorder %s292, %s293
      %p304 = scmp.eq.s32.totalorder %s43, 0
      %p305 = por %p303, %p304
      %p306 = scmp.ne.s32.totalorder %s292, %s293
      %p307 = scmp.eq.s32.totalorder %s44, 1
      %p308 = por %p306, %p307
      %p310 = scmp.ne.s32.totalorder %s293, %s309
      %p311 = scmp.eq.s32.totalorder %s44, 0
      %p312 = por %p310, %p311
      %s313 = ssub.s32 %s38, %s45
      %p314 = scmp.eq.s32.totalorder %s313, 0
      %s316 = sadd.s32 %s315, 1
      %s317 = scalar_select %p314, %s315, %s316
      %p320 = pneg %p314
      %p321 = scmp.eq.s32.totalorder %s38, 1
      %p322 = por %p320, %p321
      %p323 = scmp.ne.s32.totalorder %s315, %s318
      %p324 = scmp.eq.s32.totalorder %s38, 0
      %p325 = por %p323, %p324
      %p326 = scmp.ne.s32.totalorder %s315, %s318
      %p327 = scmp.eq.s32.totalorder %s43, 1
      %p328 = por %p326, %p327
      %p329 = scmp.ne.s32.totalorder %s318, %s319
      %p330 = scmp.eq.s32.totalorder %s43, 0
      %p331 = por %p329, %p330
      %p332 = scmp.ne.s32.totalorder %s318, %s319
      %p333 = scmp.eq.s32.totalorder %s44, 1
      %p334 = por %p332, %p333
      %p336 = scmp.ne.s32.totalorder %s319, %s335
      %p337 = scmp.eq.s32.totalorder %s44, 0
      %p338 = por %p336, %p337
      %s339 = ssub.s32 %s38, %s45
      %p340 = scmp.eq.s32.totalorder %s339, 0
      %s342 = sadd.s32 %s341, 1
      %s343 = scalar_select %p340, %s341, %s342
      %p346 = pneg %p340
      %p347 = scmp.eq.s32.totalorder %s38, 1
      %p348 = por %p346, %p347
      %p349 = scmp.ne.s32.totalorder %s341, %s344
      %p350 = scmp.eq.s32.totalorder %s38, 0
      %p351 = por %p349, %p350
      %p352 = scmp.ne.s32.totalorder %s341, %s344
      %p353 = scmp.eq.s32.totalorder %s43, 1
      %p354 = por %p352, %p353
      %p355 = scmp.ne.s32.totalorder %s344, %s345
      %p356 = scmp.eq.s32.totalorder %s43, 0
      %p357 = por %p355, %p356
      %p358 = scmp.ne.s32.totalorder %s344, %s345
      %p359 = scmp.eq.s32.totalorder %s44, 1
      %p360 = por %p358, %p359
      %p362 = scmp.ne.s32.totalorder %s345, %s361
      %p363 = scmp.eq.s32.totalorder %s44, 0
      %p364 = por %p362, %p363
      %s365 = ssub.s32 %s38, %s45
      %p366 = scmp.eq.s32.totalorder %s365, 0
      %s368 = sadd.s32 %s367, 1
      %s369 = scalar_select %p366, %s367, %s368
      %p372 = pneg %p366
      %p373 = scmp.eq.s32.totalorder %s38, 1
      %p374 = por %p372, %p373
      %p375 = scmp.ne.s32.totalorder %s367, %s370
      %p376 = scmp.eq.s32.totalorder %s38, 0
      %p377 = por %p375, %p376
      %p378 = scmp.ne.s32.totalorder %s367, %s370
      %p379 = scmp.eq.s32.totalorder %s43, 1
      %p380 = por %p378, %p379
      %p381 = scmp.ne.s32.totalorder %s370, %s371
      %p382 = scmp.eq.s32.totalorder %s43, 0
      %p383 = por %p381, %p382
      %p384 = scmp.ne.s32.totalorder %s370, %s371
      %p385 = scmp.eq.s32.totalorder %s44, 1
      %p386 = por %p384, %p385
      %p388 = scmp.ne.s32.totalorder %s371, %s387
      %p389 = scmp.eq.s32.totalorder %s44, 0
      %p390 = por %p388, %p389
      %s391 = ssub.s32 %s38, %s45
      %p392 = scmp.eq.s32.totalorder %s391, 0
      %s394 = sadd.s32 %s393, 1
      %s395 = scalar_select %p392, %s393, %s394
      %p398 = pneg %p392
      %p399 = scmp.eq.s32.totalorder %s38, 1
      %p400 = por %p398, %p399
      %p401 = scmp.ne.s32.totalorder %s393, %s396
      %p402 = scmp.eq.s32.totalorder %s38, 0
      %p403 = por %p401, %p402
      %p404 = scmp.ne.s32.totalorder %s393, %s396
      %p405 = scmp.eq.s32.totalorder %s43, 1
      %p406 = por %p404, %p405
      %p407 = scmp.ne.s32.totalorder %s396, %s397
      %p408 = scmp.eq.s32.totalorder %s43, 0
      %p409 = por %p407, %p408
      %p410 = scmp.ne.s32.totalorder %s396, %s397
      %p411 = scmp.eq.s32.totalorder %s44, 1
      %p412 = por %p410, %p411
      %p414 = scmp.ne.s32.totalorder %s397, %s413
      %p415 = scmp.eq.s32.totalorder %s44, 0
      %p416 = por %p414, %p415
      %s417 = ssub.s32 %s38, %s45
      %p418 = scmp.eq.s32.totalorder %s417, 0
      %s420 = sadd.s32 %s419, 1
      %s421 = scalar_select %p418, %s419, %s420
      %p424 = pneg %p418
      %p425 = scmp.eq.s32.totalorder %s38, 1
      %p426 = por %p424, %p425
      %p427 = scmp.ne.s32.totalorder %s419, %s422
      %p428 = scmp.eq.s32.totalorder %s38, 0
      %p429 = por %p427, %p428
      %p430 = scmp.ne.s32.totalorder %s419, %s422
      %p431 = scmp.eq.s32.totalorder %s43, 1
      %p432 = por %p430, %p431
      %p433 = scmp.ne.s32.totalorder %s422, %s423
      %p434 = scmp.eq.s32.totalorder %s43, 0
      %p435 = por %p433, %p434
      %p436 = scmp.ne.s32.totalorder %s422, %s423
      %p437 = scmp.eq.s32.totalorder %s44, 1
      %p438 = por %p436, %p437
      %p440 = scmp.ne.s32.totalorder %s423, %s439
      %p441 = scmp.eq.s32.totalorder %s44, 0
      %p442 = por %p440, %p441
      %s443 = ssub.s32 %s38, %s45
      %p444 = scmp.eq.s32.totalorder %s443, 0
      %s446 = sadd.s32 %s445, 1
      %s447 = scalar_select %p444, %s445, %s446
      %p450 = pneg %p444
      %p451 = scmp.eq.s32.totalorder %s38, 1
      %p452 = por %p450, %p451
      %p453 = scmp.ne.s32.totalorder %s445, %s448
      %p454 = scmp.eq.s32.totalorder %s38, 0
      %p455 = por %p453, %p454
      %p456 = scmp.ne.s32.totalorder %s445, %s448
      %p457 = scmp.eq.s32.totalorder %s43, 1
      %p458 = por %p456, %p457
      %p459 = scmp.ne.s32.totalorder %s448, %s449
      %p460 = scmp.eq.s32.totalorder %s43, 0
      %p461 = por %p459, %p460
      %p462 = scmp.ne.s32.totalorder %s448, %s449
      %p463 = scmp.eq.s32.totalorder %s44, 1
      %p464 = por %p462, %p463
      %p466 = scmp.ne.s32.totalorder %s449, %s465
      %p467 = scmp.eq.s32.totalorder %s44, 0
      %p468 = por %p466, %p467
      %s469 = ssub.s32 %s38, %s45
      %p470 = scmp.eq.s32.totalorder %s469, 0
      %s472 = sadd.s32 %s471, 1
      %s473 = scalar_select %p470, %s471, %s472
      %p476 = pneg %p470
      %p477 = scmp.eq.s32.totalorder %s38, 1
      %p478 = por %p476, %p477
      %p479 = scmp.ne.s32.totalorder %s471, %s474
      %p480 = scmp.eq.s32.totalorder %s38, 0
      %p481 = por %p479, %p480
      %p482 = scmp.ne.s32.totalorder %s471, %s474
      %p483 = scmp.eq.s32.totalorder %s43, 1
      %p484 = por %p482, %p483
      %p485 = scmp.ne.s32.totalorder %s474, %s475
      %p486 = scmp.eq.s32.totalorder %s43, 0
      %p487 = por %p485, %p486
      %p488 = scmp.ne.s32.totalorder %s474, %s475
      %p489 = scmp.eq.s32.totalorder %s44, 1
      %p490 = por %p488, %p489
      %p492 = scmp.ne.s32.totalorder %s475, %s491
      %p493 = scmp.eq.s32.totalorder %s44, 0
      %p494 = por %p492, %p493
      %s495 = ssub.s32 %s38, %s45
      %p496 = scmp.eq.s32.totalorder %s495, 0
      %s498 = sadd.s32 %s497, 1
      %s499 = scalar_select %p496, %s497, %s498
      %p502 = pneg %p496
      %p503 = scmp.eq.s32.totalorder %s38, 1
      %p504 = por %p502, %p503
      %p505 = scmp.ne.s32.totalorder %s497, %s500
      %p506 = scmp.eq.s32.totalorder %s38, 0
      %p507 = por %p505, %p506
      %p508 = scmp.ne.s32.totalorder %s497, %s500
      %p509 = scmp.eq.s32.totalorder %s43, 1
      %p510 = por %p508, %p509
      %p511 = scmp.ne.s32.totalorder %s500, %s501
      %p512 = scmp.eq.s32.totalorder %s43, 0
      %p513 = por %p511, %p512
      %p514 = scmp.ne.s32.totalorder %s500, %s501
      %p515 = scmp.eq.s32.totalorder %s44, 1
      %p516 = por %p514, %p515
      %p518 = scmp.ne.s32.totalorder %s501, %s517
      %p519 = scmp.eq.s32.totalorder %s44, 0
      %p520 = por %p518, %p519
      %s521 = ssub.s32 %s38, %s45
      %p522 = scmp.eq.s32.totalorder %s521, 0
      %s524 = sadd.s32 %s523, 1
      %s525 = scalar_select %p522, %s523, %s524
      %p528 = pneg %p522
      %p529 = scmp.eq.s32.totalorder %s38, 1
      %p530 = por %p528, %p529
      %p531 = scmp.ne.s32.totalorder %s523, %s526
      %p532 = scmp.eq.s32.totalorder %s38, 0
      %p533 = por %p531, %p532
      %p534 = scmp.ne.s32.totalorder %s523, %s526
      %p535 = scmp.eq.s32.totalorder %s43, 1
      %p536 = por %p534, %p535
      %p537 = scmp.ne.s32.totalorder %s526, %s527
      %p538 = scmp.eq.s32.totalorder %s43, 0
      %p539 = por %p537, %p538
      %p540 = scmp.ne.s32.totalorder %s526, %s527
      %p541 = scmp.eq.s32.totalorder %s44, 1
      %p542 = por %p540, %p541
      %p544 = scmp.ne.s32.totalorder %s527, %s543
      %p545 = scmp.eq.s32.totalorder %s44, 0
      %p546 = por %p544, %p545
      %s547 = ssub.s32 %s38, %s45
      %p548 = scmp.eq.s32.totalorder %s547, 0
      %s550 = sadd.s32 %s549, 1
      %s551 = scalar_select %p548, %s549, %s550
      %p554 = pneg %p548
      %p555 = scmp.eq.s32.totalorder %s38, 1
      %p556 = por %p554, %p555
      %p557 = scmp.ne.s32.totalorder %s549, %s552
      %p558 = scmp.eq.s32.totalorder %s38, 0
      %p559 = por %p557, %p558
      %p560 = scmp.ne.s32.totalorder %s549, %s552
      %p561 = scmp.eq.s32.totalorder %s43, 1
      %p562 = por %p560, %p561
      %p563 = scmp.ne.s32.totalorder %s552, %s553
      %p564 = scmp.eq.s32.totalorder %s43, 0
      %p565 = por %p563, %p564
      %p566 = scmp.ne.s32.totalorder %s552, %s553
      %p567 = scmp.eq.s32.totalorder %s44, 1
      %p568 = por %p566, %p567
      %p570 = scmp.ne.s32.totalorder %s553, %s569
      %p571 = scmp.eq.s32.totalorder %s44, 0
      %p572 = por %p570, %p571
      %s573 = ssub.s32 %s38, %s45
      %p574 = scmp.eq.s32.totalorder %s573, 0
      %s576 = sadd.s32 %s575, 1
      %s577 = scalar_select %p574, %s575, %s576
      %p580 = pneg %p574
      %p581 = scmp.eq.s32.totalorder %s38, 1
      %p582 = por %p580, %p581
      %p583 = scmp.ne.s32.totalorder %s575, %s578
      %p584 = scmp.eq.s32.totalorder %s38, 0
      %p585 = por %p583, %p584
      %p586 = scmp.ne.s32.totalorder %s575, %s578
      %p587 = scmp.eq.s32.totalorder %s43, 1
      %p588 = por %p586, %p587
      %p589 = scmp.ne.s32.totalorder %s578, %s579
      %p590 = scmp.eq.s32.totalorder %s43, 0
      %p591 = por %p589, %p590
      %p592 = scmp.ne.s32.totalorder %s578, %s579
      %p593 = scmp.eq.s32.totalorder %s44, 1
      %p594 = por %p592, %p593
      %p596 = scmp.ne.s32.totalorder %s579, %s595
      %p597 = scmp.eq.s32.totalorder %s44, 0
      %p598 = por %p596, %p597
      %s600 = sadd.s32 %s599, 1
      %p603 = scmp.eq.s32.totalorder %s38, 1
      %p604 = scmp.ne.s32.totalorder %s599, %s601
      %p605 = scmp.eq.s32.totalorder %s38, 0
      %p606 = por %p604, %p605
      %p607 = scmp.ne.s32.totalorder %s599, %s601
      %p608 = scmp.eq.s32.totalorder %s43, 1
      %p609 = por %p607, %p608
      %p610 = scmp.ne.s32.totalorder %s601, %s602
      %p611 = scmp.eq.s32.totalorder %s43, 0
      %p612 = por %p610, %p611
      %p613 = scmp.ne.s32.totalorder %s601, %s602
      %p614 = scmp.eq.s32.totalorder %s44, 1
      %p615 = por %p613, %p614
      %p617 = scmp.ne.s32.totalorder %s602, %s616
      %p618 = scmp.eq.s32.totalorder %s44, 0
      %p619 = por %p617, %p618
      %s621 = sadd.s32 %s620, 1
      %p624 = scmp.eq.s32.totalorder %s38, 1
      %p625 = scmp.ne.s32.totalorder %s620, %s622
      %p626 = scmp.eq.s32.totalorder %s38, 0
      %p627 = por %p625, %p626
      %p628 = scmp.ne.s32.totalorder %s620, %s622
      %p629 = scmp.eq.s32.totalorder %s43, 1
      %p630 = por %p628, %p629
      %p631 = scmp.ne.s32.totalorder %s622, %s623
      %p632 = scmp.eq.s32.totalorder %s43, 0
      %p633 = por %p631, %p632
      %p634 = scmp.ne.s32.totalorder %s622, %s623
      %p635 = scmp.eq.s32.totalorder %s44, 1
      %p636 = por %p634, %p635
      %p638 = scmp.ne.s32.totalorder %s623, %s637
      %p639 = scmp.eq.s32.totalorder %s44, 0
      %p640 = por %p638, %p639
      %p641 = scmp.le.s32.totalorder 1, %s38
      %p642 = scmp.lt.s32.totalorder %s38, 3
      %p643 = pnand %p641, %p642
      %p644 = pneg %p643
      // Predicated region
      $region9: #{tpu_custom_call.1} parent=5 // pred_check
        _
      $region10: #{tpu_custom_call.1} parent=5 // pred_check_branch
        %646 = sbr.rel (%p643) target = $region12
      $region11: #{tpu_custom_call.1} parent=5 // pred_region
        %s647 = ssub.s32 %s38, 1
        // Predicated region
        $region13: #{tpu_custom_call.1} parent=11 // pred_check
          %p648 = pneg %p59
        $region14: #{tpu_custom_call.1} parent=11 // pred_check_branch
          %650 = sbr.rel (%p648) target = $region16
        $region15: #{tpu_custom_call.1} parent=11 // pred_region
          %s652 = ssub.s32 256, 256
          %653 = vsyncadd [#allocation4], %s652
          %s654 = sshll.u32 [#allocation3], 4
          %s655 = int_to_ptr.vmem [resolvable:$true] %s654
          %660 = dma.hbm_to_vmem [thread:$0]  %s0, 256, %s655, [#allocation4], 128, 128, 8
        $region16: #{tpu_custom_call.1} parent=11 // pred_fallthru
          _
        // Predicated region
        $region17: #{tpu_custom_call.1} parent=11 // pred_check
          %p661 = pneg %p80
        $region18: #{tpu_custom_call.1} parent=11 // pred_check_branch
          %663 = sbr.rel (%p661) target = $region20
        $region19: #{tpu_custom_call.1} parent=11 // pred_region
          %s665 = ssub.s32 256, 256
          %666 = vsyncadd [#allocation7], %s665
          %s667 = sshll.u32 [#allocation6], 4
          %s668 = int_to_ptr.vmem [resolvable:$true] %s667
          %673 = dma.hbm_to_vmem [thread:$0]  %s1, 256, %s668, [#allocation7], 128, 128, 8
        $region20: #{tpu_custom_call.1} parent=11 // pred_fallthru
          _
        // Predicated region
        $region21: #{tpu_custom_call.1} parent=11 // pred_check
          %p674 = pneg %p101
        $region22: #{tpu_custom_call.1} parent=11 // pred_check_branch
          %676 = sbr.rel (%p674) target = $region24
        $region23: #{tpu_custom_call.1} parent=11 // pred_region
          %s678 = ssub.s32 256, 256
          %679 = vsyncadd [#allocation7], %s678
          %s680 = sshll.u32 [#allocation8], 4
          %s681 = int_to_ptr.vmem [resolvable:$true] %s680
          %686 = dma.hbm_to_vmem [thread:$0]  %s2, 256, %s681, [#allocation7], 128, 128, 8
        $region24: #{tpu_custom_call.1} parent=11 // pred_fallthru
          _
        // Predicated region
        $region25: #{tpu_custom_call.1} parent=11 // pred_check
          %p687 = pneg %p122
        $region26: #{tpu_custom_call.1} parent=11 // pred_check_branch
          %689 = sbr.rel (%p687) target = $region28
        $region27: #{tpu_custom_call.1} parent=11 // pred_region
          %s691 = ssub.s32 256, 256
          %692 = vsyncadd [#allocation10], %s691
          %s693 = sshll.u32 [#allocation9], 4
          %s694 = int_to_ptr.vmem [resolvable:$true] %s693
          %699 = dma.hbm_to_vmem [thread:$0]  %s3, 256, %s694, [#allocation10], 128, 128, 8
        $region28: #{tpu_custom_call.1} parent=11 // pred_fallthru
          _
        // Predicated region
        $region29: #{tpu_custom_call.1} parent=11 // pred_check
          %p700 = pneg %p143
        $region30: #{tpu_custom_call.1} parent=11 // pred_check_branch
          %702 = sbr.rel (%p700) target = $region32
        $region31: #{tpu_custom_call.1} parent=11 // pred_region
          %s704 = ssub.s32 256, 256
          %705 = vsyncadd [#allocation10], %s704
          %s706 = sshll.u32 [#allocation11], 4
          %s707 = int_to_ptr.vmem [resolvable:$true] %s706
          %712 = dma.hbm_to_vmem [thread:$0]  %s4, 256, %s707, [#allocation10], 128, 128, 8
        $region32: #{tpu_custom_call.1} parent=11 // pred_fallthru
          _
        // Predicated region
        $region33: #{tpu_custom_call.1} parent=11 // pred_check
          %p713 = pneg %p164
        $region34: #{tpu_custom_call.1} parent=11 // pred_check_branch
          %715 = sbr.rel (%p713) target = $region36
        $region35: #{tpu_custom_call.1} parent=11 // pred_region
          %s717 = ssub.s32 256, 256
          %718 = vsyncadd [#allocation13], %s717
          %s719 = sshll.u32 [#allocation12], 4
          %s720 = int_to_ptr.vmem [resolvable:$true] %s719
          %725 = dma.hbm_to_vmem [thread:$0]  %s5, 256, %s720, [#allocation13], 128, 128, 8
        $region36: #{tpu_custom_call.1} parent=11 // pred_fallthru
          _
        // Predicated region
        $region37: #{tpu_custom_call.1} parent=11 // pred_check
          %p726 = pneg %p185
        $region38: #{tpu_custom_call.1} parent=11 // pred_check_branch
          %728 = sbr.rel (%p726) target = $region40
        $region39: #{tpu_custom_call.1} parent=11 // pred_region
          %s730 = ssub.s32 512, 512
          %731 = vsyncadd [#allocation13], %s730
          %s732 = sshll.u32 [#allocation14], 4
          %s733 = int_to_ptr.vmem [resolvable:$true] %s732
          %738 = dma.hbm_to_vmem [thread:$0]  %s6, 512, %s733, [#allocation13], 128, 128, 8
        $region40: #{tpu_custom_call.1} parent=11 // pred_fallthru
          _
        // Predicated region
        $region41: #{tpu_custom_call.1} parent=11 // pred_check
          %p739 = pneg %p206
        $region42: #{tpu_custom_call.1} parent=11 // pred_check_branch
          %741 = sbr.rel (%p739) target = $region44
        $region43: #{tpu_custom_call.1} parent=11 // pred_region
          _
        $region44: #{tpu_custom_call.1} parent=11 // pred_fallthru
          _
        // Predicated region
        $region45: #{tpu_custom_call.1} parent=11 // pred_check
          %p742 = pneg %p227
        $region46: #{tpu_custom_call.1} parent=11 // pred_check_branch
          %744 = sbr.rel (%p742) target = $region48
        $region47: #{tpu_custom_call.1} parent=11 // pred_region
          %s746 = ssub.s32 16, 16
          %747 = vsyncadd [#allocation16], %s746
          %s749 = sshll.u32 [#allocation15], 4
          %s750 = int_to_ptr.vmem [resolvable:$true] %s749
          %752 = dma.hbm_to_vmem [thread:$0]  %s8, 16, %s750, [#allocation16]
        $region48: #{tpu_custom_call.1} parent=11 // pred_fallthru
          _
      $region12: #{tpu_custom_call.1} parent=5 // pred_fallthru
        _
      %p753 = scmp.lt.s32.totalorder %s38, 2
      // Predicated region
      $region49: #{tpu_custom_call.1} parent=5 // pred_check
        %p754 = pneg %p753
      $region50: #{tpu_custom_call.1} parent=5 // pred_check_branch
        %756 = sbr.rel (%p754) target = $region52
      $region51: #{tpu_custom_call.1} parent=5 // pred_region
        // Predicated region
        $region53: #{tpu_custom_call.1} parent=51 // pred_check
          %p757 = pneg %p247
        $region54: #{tpu_custom_call.1} parent=51 // pred_check_branch
          %759 = sbr.rel (%p757) target = $region56
        $region55: #{tpu_custom_call.1} parent=51 // pred_region
          %p760 = scmp.lt.s32.totalorder %s38, 1
          %s761 = scalar_select %p760, %s38, 1
          %s762 = smul.addr %s761, 4
          %s763 = scalar_lea.vmem %s9, %s762
        $region56: #{tpu_custom_call.1} parent=51 // pred_fallthru
          _
        // Predicated region
        $region57: #{tpu_custom_call.1} parent=51 // pred_check
          %p764 = pneg %p273
        $region58: #{tpu_custom_call.1} parent=51 // pred_check_branch
          %766 = sbr.rel (%p764) target = $region60
        $region59: #{tpu_custom_call.1} parent=51 // pred_region
          %p767 = scmp.lt.s32.totalorder %s38, 1
          %s768 = scalar_select %p767, %s38, 1
          %s769 = smul.addr %s768, 4
          %s770 = scalar_lea.vmem %s10, %s769
        $region60: #{tpu_custom_call.1} parent=51 // pred_fallthru
          _
        // Predicated region
        $region61: #{tpu_custom_call.1} parent=51 // pred_check
          %p771 = pneg %p299
        $region62: #{tpu_custom_call.1} parent=51 // pred_check_branch
          %773 = sbr.rel (%p771) target = $region64
        $region63: #{tpu_custom_call.1} parent=51 // pred_region
          %p774 = scmp.lt.s32.totalorder %s38, 1
          %s775 = scalar_select %p774, %s38, 1
          %s776 = smul.addr %s775, 4
          %s777 = smul.addr %s776, 8
          %s778 = scalar_lea.vmem %s11, %s777
        $region64: #{tpu_custom_call.1} parent=51 // pred_fallthru
          _
        // Predicated region
        $region65: #{tpu_custom_call.1} parent=51 // pred_check
          %p779 = pneg %p325
        $region66: #{tpu_custom_call.1} parent=51 // pred_check_branch
          %781 = sbr.rel (%p779) target = $region68
        $region67: #{tpu_custom_call.1} parent=51 // pred_region
          %p782 = scmp.lt.s32.totalorder %s38, 1
          %s783 = scalar_select %p782, %s38, 1
          %s784 = smul.addr %s783, 4
          %s785 = smul.addr %s784, 8
          %s786 = scalar_lea.vmem %s12, %s785
        $region68: #{tpu_custom_call.1} parent=51 // pred_fallthru
          _
        // Predicated region
        $region69: #{tpu_custom_call.1} parent=51 // pred_check
          %p787 = pneg %p351
        $region70: #{tpu_custom_call.1} parent=51 // pred_check_branch
          %789 = sbr.rel (%p787) target = $region72
        $region71: #{tpu_custom_call.1} parent=51 // pred_region
          %p790 = scmp.lt.s32.totalorder %s38, 1
          %s791 = scalar_select %p790, %s38, 1
          %s792 = smul.addr %s791, 4
          %s793 = smul.addr %s792, 8
          %s794 = scalar_lea.vmem %s13, %s793
        $region72: #{tpu_custom_call.1} parent=51 // pred_fallthru
          _
        // Predicated region
        $region73: #{tpu_custom_call.1} parent=51 // pred_check
          %p795 = pneg %p377
        $region74: #{tpu_custom_call.1} parent=51 // pred_check_branch
          %797 = sbr.rel (%p795) target = $region76
        $region75: #{tpu_custom_call.1} parent=51 // pred_region
          %p798 = scmp.lt.s32.totalorder %s38, 1
          %s799 = scalar_select %p798, %s38, 1
          %s800 = smul.addr %s799, 4
          %s801 = smul.addr %s800, 8
          %s802 = scalar_lea.vmem %s14, %s801
        $region76: #{tpu_custom_call.1} parent=51 // pred_fallthru
          _
        // Predicated region
        $region77: #{tpu_custom_call.1} parent=51 // pred_check
          %p803 = pneg %p403
        $region78: #{tpu_custom_call.1} parent=51 // pred_check_branch
          %805 = sbr.rel (%p803) target = $region80
        $region79: #{tpu_custom_call.1} parent=51 // pred_region
          %p806 = scmp.lt.s32.totalorder %s38, 1
          %s807 = scalar_select %p806, %s38, 1
          %s808 = smul.addr %s807, 4
          %s809 = smul.addr %s808, 8
          %s810 = scalar_lea.vmem %s15, %s809
        $region80: #{tpu_custom_call.1} parent=51 // pred_fallthru
          _
        // Predicated region
        $region81: #{tpu_custom_call.1} parent=51 // pred_check
          %p811 = pneg %p429
        $region82: #{tpu_custom_call.1} parent=51 // pred_check_branch
          %813 = sbr.rel (%p811) target = $region84
        $region83: #{tpu_custom_call.1} parent=51 // pred_region
          %p814 = scmp.lt.s32.totalorder %s38, 1
          %s815 = scalar_select %p814, %s38, 1
          %s816 = smul.addr %s815, 4
          %s817 = smul.addr %s816, 8
          %s818 = scalar_lea.vmem %s16, %s817
        $region84: #{tpu_custom_call.1} parent=51 // pred_fallthru
          _
        // Predicated region
        $region85: #{tpu_custom_call.1} parent=51 // pred_check
          %p819 = pneg %p455
        $region86: #{tpu_custom_call.1} parent=51 // pred_check_branch
          %821 = sbr.rel (%p819) target = $region88
        $region87: #{tpu_custom_call.1} parent=51 // pred_region
          %p822 = scmp.lt.s32.totalorder %s38, 1
          %s823 = scalar_select %p822, %s38, 1
          %s824 = smul.addr %s823, 4
          %s825 = smul.addr %s824, 8
          %s826 = scalar_lea.vmem %s17, %s825
        $region88: #{tpu_custom_call.1} parent=51 // pred_fallthru
          _
        // Predicated region
        $region89: #{tpu_custom_call.1} parent=51 // pred_check
          %p827 = pneg %p481
        $region90: #{tpu_custom_call.1} parent=51 // pred_check_branch
          %829 = sbr.rel (%p827) target = $region92
        $region91: #{tpu_custom_call.1} parent=51 // pred_region
          %s830 = sand.u32 %s38, 1
          %s831 = scalar_lea.sflag [#allocation4], %s830
          %s832 = sand.u32 %s471, 1
          %s833 = smul.addr %s832, 32
          %s834 = scalar_lea.vmem [#allocation17], %s833
          %s836 = ssub.s32 512, 512
          %837 = vsyncadd %s831, %s836
          %s838 = smul.addr %s38, 4
          %s839 = smul.addr %s838, 128
          %s840 = scalar_lea.hbm %s18, %s839
          %s841 = sshll.u32 %s834, 4
          %s842 = int_to_ptr.vmem [resolvable:$true] %s841
          %847 = dma.hbm_to_vmem [thread:$0]  %s840, 512, %s842, %s831, 128, 128, 8
        $region92: #{tpu_custom_call.1} parent=51 // pred_fallthru
          _
        // Predicated region
        $region93: #{tpu_custom_call.1} parent=51 // pred_check
          %p848 = pneg %p507
        $region94: #{tpu_custom_call.1} parent=51 // pred_check_branch
          %850 = sbr.rel (%p848) target = $region96
        $region95: #{tpu_custom_call.1} parent=51 // pred_region
          %p851 = scmp.lt.s32.totalorder %s38, 1
          %s852 = scalar_select %p851, %s38, 1
          %s853 = smul.addr %s852, 12
          %s854 = smul.addr %s853, 8
          %s855 = scalar_lea.vmem %s19, %s854
        $region96: #{tpu_custom_call.1} parent=51 // pred_fallthru
          _
        // Predicated region
        $region97: #{tpu_custom_call.1} parent=51 // pred_check
          %p856 = pneg %p533
        $region98: #{tpu_custom_call.1} parent=51 // pred_check_branch
          %858 = sbr.rel (%p856) target = $region100
        $region99: #{tpu_custom_call.1} parent=51 // pred_region
          %p859 = scmp.lt.s32.totalorder %s38, 1
          %s860 = scalar_select %p859, %s38, 1
          %s861 = scalar_lea.vmem %s20, %s860
        $region100: #{tpu_custom_call.1} parent=51 // pred_fallthru
          _
        // Predicated region
        $region101: #{tpu_custom_call.1} parent=51 // pred_check
          %p862 = pneg %p559
        $region102: #{tpu_custom_call.1} parent=51 // pred_check_branch
          %864 = sbr.rel (%p862) target = $region104
        $region103: #{tpu_custom_call.1} parent=51 // pred_region
          %p865 = scmp.lt.s32.totalorder %s38, 1
          %s866 = scalar_select %p865, %s38, 1
          %s867 = smul.addr %s866, 24
          %s868 = smul.addr %s867, 8
          %s869 = scalar_lea.vmem %s21, %s868
        $region104: #{tpu_custom_call.1} parent=51 // pred_fallthru
          _
        // Predicated region
        $region105: #{tpu_custom_call.1} parent=51 // pred_check
          %p870 = pneg %p585
        $region106: #{tpu_custom_call.1} parent=51 // pred_check_branch
          %872 = sbr.rel (%p870) target = $region108
        $region107: #{tpu_custom_call.1} parent=51 // pred_region
          %p873 = scmp.lt.s32.totalorder %s38, 1
          %s874 = scalar_select %p873, %s38, 1
          %s875 = scalar_lea.vmem %s22, %s874
        $region108: #{tpu_custom_call.1} parent=51 // pred_fallthru
          _
      $region52: #{tpu_custom_call.1} parent=5 // pred_fallthru
        _
      %p876 = scmp.le.s32.totalorder 1, %s38
      %p877 = scmp.lt.s32.totalorder %s38, 3
      %p878 = pnand %p876, %p877
      %p879 = pneg %p878
      // Predicated region
      $region109: #{tpu_custom_call.1} parent=5 // pred_check
        _
      $region110: #{tpu_custom_call.1} parent=5 // pred_check_branch
        %881 = sbr.rel (%p878) target = $region112
      $region111: #{tpu_custom_call.1} parent=5 // pred_region
        %s882 = ssub.s32 %s38, 1
        // Predicated region
        $region113: #{tpu_custom_call.1} parent=111 // pred_check
          %p883 = pneg %p59
        $region114: #{tpu_custom_call.1} parent=111 // pred_check_branch
          %885 = sbr.rel (%p883) target = $region116
        $region115: #{tpu_custom_call.1} parent=111 // pred_region
          %886 = dma.done [#allocation4], 256
        $region116: #{tpu_custom_call.1} parent=111 // pred_fallthru
          _
        // Predicated region
        $region117: #{tpu_custom_call.1} parent=111 // pred_check
          %p887 = pneg %p80
        $region118: #{tpu_custom_call.1} parent=111 // pred_check_branch
          %889 = sbr.rel (%p887) target = $region120
        $region119: #{tpu_custom_call.1} parent=111 // pred_region
          %890 = dma.done [#allocation7], 256
        $region120: #{tpu_custom_call.1} parent=111 // pred_fallthru
          _
        // Predicated region
        $region121: #{tpu_custom_call.1} parent=111 // pred_check
          %p891 = pneg %p101
        $region122: #{tpu_custom_call.1} parent=111 // pred_check_branch
          %893 = sbr.rel (%p891) target = $region124
        $region123: #{tpu_custom_call.1} parent=111 // pred_region
          %894 = dma.done [#allocation7], 256
        $region124: #{tpu_custom_call.1} parent=111 // pred_fallthru
          _
        // Predicated region
        $region125: #{tpu_custom_call.1} parent=111 // pred_check
          %p895 = pneg %p122
        $region126: #{tpu_custom_call.1} parent=111 // pred_check_branch
          %897 = sbr.rel (%p895) target = $region128
        $region127: #{tpu_custom_call.1} parent=111 // pred_region
          %898 = dma.done [#allocation10], 256
        $region128: #{tpu_custom_call.1} parent=111 // pred_fallthru
          _
        // Predicated region
        $region129: #{tpu_custom_call.1} parent=111 // pred_check
          %p899 = pneg %p143
        $region130: #{tpu_custom_call.1} parent=111 // pred_check_branch
          %901 = sbr.rel (%p899) target = $region132
        $region131: #{tpu_custom_call.1} parent=111 // pred_region
          %902 = dma.done [#allocation10], 256
        $region132: #{tpu_custom_call.1} parent=111 // pred_fallthru
          _
        // Predicated region
        $region133: #{tpu_custom_call.1} parent=111 // pred_check
          %p903 = pneg %p164
        $region134: #{tpu_custom_call.1} parent=111 // pred_check_branch
          %905 = sbr.rel (%p903) target = $region136
        $region135: #{tpu_custom_call.1} parent=111 // pred_region
          %906 = dma.done [#allocation13], 256
        $region136: #{tpu_custom_call.1} parent=111 // pred_fallthru
          _
        // Predicated region
        $region137: #{tpu_custom_call.1} parent=111 // pred_check
          %p907 = pneg %p185
        $region138: #{tpu_custom_call.1} parent=111 // pred_check_branch
          %909 = sbr.rel (%p907) target = $region140
        $region139: #{tpu_custom_call.1} parent=111 // pred_region
          %910 = dma.done [#allocation13], 512
        $region140: #{tpu_custom_call.1} parent=111 // pred_fallthru
          _
        // Predicated region
        $region141: #{tpu_custom_call.1} parent=111 // pred_check
          %p911 = pneg %p227
        $region142: #{tpu_custom_call.1} parent=111 // pred_check_branch
          %913 = sbr.rel (%p911) target = $region144
        $region143: #{tpu_custom_call.1} parent=111 // pred_region
          %914 = dma.done [#allocation16], 16
        $region144: #{tpu_custom_call.1} parent=111 // pred_fallthru
          _
        %s915 = sand.u32 %s43, 1
        %s916 = scalar_lea.sflag [#allocation4], %s915
        %s917 = sand.u32 %s474, 1
        %s918 = smul.addr %s917, 32
        %s919 = scalar_lea.vmem [#allocation17], %s918
        // Predicated region
        $region145: #{tpu_custom_call.1} parent=111 // pred_check
          %p920 = pneg %p487
        $region146: #{tpu_custom_call.1} parent=111 // pred_check_branch
          %922 = sbr.rel (%p920) target = $region148
        $region147: #{tpu_custom_call.1} parent=111 // pred_region
          %923 = dma.done %s916, 512
        $region148: #{tpu_custom_call.1} parent=111 // pred_fallthru
          _
        %p924 = pneg %p59
        %p925 = pneg %p56
        %p926 = pneg %p80
        %p927 = pneg %p77
        %p928 = pneg %p101
        %p929 = pneg %p98
        %p930 = pneg %p122
        %p931 = pneg %p119
        %p932 = pneg %p143
        %p933 = pneg %p140
        %p934 = pneg %p164
        %p935 = pneg %p161
        %p936 = pneg %p185
        %p937 = pneg %p182
        %p938 = pneg %p206
        %p939 = pneg %p203
        %p940 = pneg %p227
        %p941 = pneg %p224
        %p942 = scmp.lt.s32.totalorder %s43, 1
        %s943 = scalar_select %p942, %s43, 1
        %s944 = smul.addr %s943, 4
        %s945 = scalar_lea.vmem %s9, %s944
        %p946 = pneg %p253
        %p947 = pneg %p250
        %p948 = scmp.lt.s32.totalorder %s43, 1
        %s949 = scalar_select %p948, %s43, 1
        %s950 = smul.addr %s949, 4
        %s951 = scalar_lea.vmem %s10, %s950
        %p952 = pneg %p279
        %p953 = pneg %p276
        %p954 = scmp.lt.s32.totalorder %s43, 1
        %s955 = scalar_select %p954, %s43, 1
        %s956 = smul.addr %s955, 4
        %s957 = smul.addr %s956, 8
        %s958 = scalar_lea.vmem %s11, %s957
        %p959 = pneg %p305
        %p960 = pneg %p302
        %p961 = scmp.lt.s32.totalorder %s43, 1
        %s962 = scalar_select %p961, %s43, 1
        %s963 = smul.addr %s962, 4
        %s964 = smul.addr %s963, 8
        %s965 = scalar_lea.vmem %s12, %s964
        %p966 = pneg %p331
        %p967 = pneg %p328
        %p968 = scmp.lt.s32.totalorder %s43, 1
        %s969 = scalar_select %p968, %s43, 1
        %s970 = smul.addr %s969, 4
        %s971 = smul.addr %s970, 8
        %s972 = scalar_lea.vmem %s13, %s971
        %p973 = pneg %p357
        %p974 = pneg %p354
        %p975 = scmp.lt.s32.totalorder %s43, 1
        %s976 = scalar_select %p975, %s43, 1
        %s977 = smul.addr %s976, 4
        %s978 = smul.addr %s977, 8
        %s979 = scalar_lea.vmem %s14, %s978
        %p980 = pneg %p383
        %p981 = pneg %p380
        %p982 = scmp.lt.s32.totalorder %s43, 1
        %s983 = scalar_select %p982, %s43, 1
        %s984 = smul.addr %s983, 4
        %s985 = smul.addr %s984, 8
        %s986 = scalar_lea.vmem %s15, %s985
        %p987 = pneg %p409
        %p988 = pneg %p406
        %p989 = scmp.lt.s32.totalorder %s43, 1
        %s990 = scalar_select %p989, %s43, 1
        %s991 = smul.addr %s990, 4
        %s992 = smul.addr %s991, 8
        %s993 = scalar_lea.vmem %s16, %s992
        %p994 = pneg %p435
        %p995 = pneg %p432
        %p996 = scmp.lt.s32.totalorder %s43, 1
        %s997 = scalar_select %p996, %s43, 1
        %s998 = smul.addr %s997, 4
        %s999 = smul.addr %s998, 8
        %s1000 = scalar_lea.vmem %s17, %s999
        %p1001 = pneg %p461
        %p1002 = pneg %p458
        %s1003 = sand.u32 %s43, 1
        %s1004 = scalar_lea.sflag [#allocation4], %s1003
        %s1005 = sand.u32 %s474, 1
        %s1006 = smul.addr %s1005, 32
        %s1007 = scalar_lea.vmem [#allocation17], %s1006
        %p1008 = pneg %p487
        %p1009 = pneg %p484
        %p1010 = scmp.lt.s32.totalorder %s43, 1
        %s1011 = scalar_select %p1010, %s43, 1
        %s1012 = smul.addr %s1011, 12
        %s1013 = smul.addr %s1012, 8
        %s1014 = scalar_lea.vmem %s19, %s1013
        %p1015 = pneg %p513
        %p1016 = pneg %p510
        %p1017 = scmp.lt.s32.totalorder %s43, 1
        %s1018 = scalar_select %p1017, %s43, 1
        %s1019 = scalar_lea.vmem %s20, %s1018
        %p1020 = pneg %p539
        %p1021 = pneg %p536
        %p1022 = scmp.lt.s32.totalorder %s43, 1
        %s1023 = scalar_select %p1022, %s43, 1
        %s1024 = smul.addr %s1023, 24
        %s1025 = smul.addr %s1024, 8
        %s1026 = scalar_lea.vmem %s21, %s1025
        %p1027 = pneg %p565
        %p1028 = pneg %p562
        %p1029 = scmp.lt.s32.totalorder %s43, 1
        %s1030 = scalar_select %p1029, %s43, 1
        %s1031 = scalar_lea.vmem %s22, %s1030
        %p1032 = pneg %p591
        %p1033 = pneg %p588
        %p1034 = pneg %p612
        %p1035 = pneg %p609
        %p1036 = pneg %p633
        %p1037 = pneg %p630
        %p1038 = scmp.lt.s32.totalorder %s43, 1
        %s1039 = scalar_select %p1038, %s43, 1
        %s1040 = smul.addr %s1039, 4
        %s1041 = scalar_lea.vmem %s9, %s1040
        %p1042 = scmp.lt.s32.totalorder %s43, 1
        %s1043 = scalar_select %p1042, %s43, 1
        %s1044 = smul.addr %s1043, 4
        %s1045 = scalar_lea.vmem %s10, %s1044
        %p1046 = scmp.lt.s32.totalorder %s43, 1
        %s1047 = scalar_select %p1046, %s43, 1
        %s1048 = smul.addr %s1047, 4
        %s1049 = smul.addr %s1048, 8
        %s1050 = scalar_lea.vmem %s11, %s1049
        %p1051 = scmp.lt.s32.totalorder %s43, 1
        %s1052 = scalar_select %p1051, %s43, 1
        %s1053 = smul.addr %s1052, 4
        %s1054 = smul.addr %s1053, 8
        %s1055 = scalar_lea.vmem %s12, %s1054
        %p1056 = scmp.lt.s32.totalorder %s43, 1
        %s1057 = scalar_select %p1056, %s43, 1
        %s1058 = smul.addr %s1057, 4
        %s1059 = smul.addr %s1058, 8
        %s1060 = scalar_lea.vmem %s13, %s1059
        %p1061 = scmp.lt.s32.totalorder %s43, 1
        %s1062 = scalar_select %p1061, %s43, 1
        %s1063 = smul.addr %s1062, 4
        %s1064 = smul.addr %s1063, 8
        %s1065 = scalar_lea.vmem %s14, %s1064
        %p1066 = scmp.lt.s32.totalorder %s43, 1
        %s1067 = scalar_select %p1066, %s43, 1
        %s1068 = smul.addr %s1067, 4
        %s1069 = smul.addr %s1068, 8
        %s1070 = scalar_lea.vmem %s15, %s1069
        %p1071 = scmp.lt.s32.totalorder %s43, 1
        %s1072 = scalar_select %p1071, %s43, 1
        %s1073 = smul.addr %s1072, 4
        %s1074 = smul.addr %s1073, 8
        %s1075 = scalar_lea.vmem %s16, %s1074
        %p1076 = scmp.lt.s32.totalorder %s43, 1
        %s1077 = scalar_select %p1076, %s43, 1
        %s1078 = smul.addr %s1077, 4
        %s1079 = smul.addr %s1078, 8
        %s1080 = scalar_lea.vmem %s17, %s1079
        %p1081 = scmp.lt.s32.totalorder %s43, 1
        %s1082 = scalar_select %p1081, %s43, 1
        %s1083 = smul.addr %s1082, 12
        %s1084 = smul.addr %s1083, 8
        %s1085 = scalar_lea.vmem %s19, %s1084
        %p1086 = scmp.lt.s32.totalorder %s43, 1
        %s1087 = scalar_select %p1086, %s43, 1
        %s1088 = scalar_lea.vmem %s20, %s1087
        %p1089 = scmp.lt.s32.totalorder %s43, 1
        %s1090 = scalar_select %p1089, %s43, 1
        %s1091 = smul.addr %s1090, 24
        %s1092 = smul.addr %s1091, 8
        %s1093 = scalar_lea.vmem %s21, %s1092
        %p1094 = scmp.lt.s32.totalorder %s43, 1
        %s1095 = scalar_select %p1094, %s43, 1
        %s1096 = scalar_lea.vmem %s22, %s1095
        %p1097 = scmp.eq.s32.totalorder %s43, 0
        // Predicated region
        $region149: #{tpu_custom_call.1} parent=111 // pred_check
          %p1098 = pneg %p1097
        $region150: #{tpu_custom_call.1} parent=111 // pred_check_branch
          %1100 = sbr.rel (%p1098) target = $region152
        $region151: #{tpu_custom_call.1} parent=111 // pred_region
          %v1101 = vld [vmem:[#allocation3] sm:$0xff]
          %v1102 = vld [vmem:[#allocation3 + $0x8] sm:$0xff]
          %v1103 = vld [vmem:[#allocation14] sm:$0xff]
          %v1104 = vld [vmem:[#allocation14 + $0x8] sm:$0xff]
          %v1105 = vld [vmem:[#allocation14 + $0x10] sm:$0xff]
          %v1106 = vld [vmem:[#allocation14 + $0x18] sm:$0xff]
          %v1107 = vld [vmem:[#allocation6] sm:$0xff]
          %v1108 = vld [vmem:[#allocation6 + $0x8] sm:$0xff]
          %vm1109 = vcmask 261120
          %v1111 = vsel %vm1109, %v1101, 0
          %v1114 = vsel %vm1109, %v1102, 0
          %1116 = vmatprep.subr.mxu0 0.0
          %1117 = vmatpush1.msra.mxu0 %v1103
          %1118 = vmatprep.subr.mxu0 0.0
          %1119 = vmatpush1.msra.mxu0 %v1104
          %1120 = vmatprep.subr.mxu0 0.0
          %1121 = vmatpush1.msra.mxu0 %v1105
          %1122 = vmatprep.subr.mxu0 0.0
          %1123 = vmatpush1.msra.mxu0 %v1106
          %1124 = vmatprep.subr.mxu0 0.0
          %1125 = vmatpush1.msra.mxu0 0.0
          %1126 = vmatprep.subr.mxu0 0.0
          %1127 = vmatpush1.msra.mxu0 0.0
          %1128 = vmatprep.subr.mxu0 0.0
          %1129 = vmatpush1.msra.mxu0 0.0
          %1130 = vmatprep.subr.mxu0 0.0
          %1131 = vmatpush1.msra.mxu0 0.0
          %1132 = vmatprep.subr.mxu0 0.0
          %1133 = vmatpush1.msra.mxu0 0.0
          %1134 = vmatprep.subr.mxu0 0.0
          %1135 = vmatpush1.msra.mxu0 0.0
          %1136 = vmatprep.subr.mxu0 0.0
          %1137 = vmatpush1.msra.mxu0 0.0
          %1138 = vmatprep.subr.mxu0 0.0
          %1139 = vmatpush1.msra.mxu0 0.0
          %1140 = vmatprep.subr.mxu0 0.0
          %1141 = vmatpush1.msra.mxu0 0.0
          %1142 = vmatprep.subr.mxu0 0.0
          %1143 = vmatpush1.msra.mxu0 0.0
          %1144 = vmatprep.subr.mxu0 0.0
          %1145 = vmatpush1.msra.mxu0 0.0
          %1146 = vmatprep.subr.mxu0 0.0
          %1147 = vmatpush1.msra.mxu0 0.0
          %1148 = vmatprep.subr.mxu0 0.0
          %1149 = vmatpush1.msra.mxu0 0.0
          %1150 = vmatprep.subr.mxu0 0.0
          %1151 = vmatpush1.msra.mxu0 0.0
          %1152 = vmatprep.subr.mxu0 0.0
          %1153 = vmatpush1.msra.mxu0 0.0
          %1154 = vmatprep.subr.mxu0 0.0
          %1155 = vmatpush1.msra.mxu0 0.0
          %1156 = vmatprep.subr.mxu0 0.0
          %1157 = vmatpush1.msra.mxu0 0.0
          %1158 = vmatprep.subr.mxu0 0.0
          %1159 = vmatpush1.msra.mxu0 0.0
          %1160 = vmatprep.subr.mxu0 0.0
          %1161 = vmatpush1.msra.mxu0 0.0
          %1162 = vmatprep.subr.mxu0 0.0
          %1163 = vmatpush1.msra.mxu0 0.0
          %1164 = vmatprep.subr.mxu0 0.0
          %1165 = vmatpush1.msra.mxu0 0.0
          %1166 = vmatprep.subr.mxu0 0.0
          %1167 = vmatpush1.msra.mxu0 0.0
          %1168 = vmatprep.subr.mxu0 0.0
          %1169 = vmatpush1.msra.mxu0 0.0
          %1170 = vmatprep.subr.mxu0 0.0
          %1171 = vmatpush1.msra.mxu0 0.0
          %1172 = vmatprep.subr.mxu0 0.0
          %1173 = vmatpush1.msra.mxu0 0.0
          %1174 = vmatprep.subr.mxu0 0.0
          %1175 = vmatpush1.msra.mxu0 0.0
          %1176 = vmatprep.subr.mxu0 0.0
          %1177 = vmatpush1.msra.mxu0 0.0
          %1178 = vmatprep.subr.mxu0 0.0
          %1179 = vmatpush1.msra.mxu0 0.0
          %1180 = vmatprep.mubr.f32.mxu0 0.0
          %1181 = vmatmul.mubr.f32.gmra.mrb[0].mxu0 %v1111
          %v1182 = vpop.f32.mrb[0].mxu0
          %v1183 = vadd.f32 %v1107, %v1182
          %v1184 = vpop.f32.mrb[0].mxu0
          %1185 = vmatprep.mubr.f32.mxu0 0.0
          %1186 = vmatmul.mubr.f32.gmra.mrb[0].mxu0 %v1114
          %v1187 = vpop.f32.mrb[0].mxu0
          %v1188 = vadd.f32 %v1108, %v1187
          %v1189 = vpop.f32.mrb[0].mxu0
          %1190 = vdwg.mxu0
          %1191 = vst.msk [vmem:[#allocation2] sm:$0xff] %vm1109, %v1183
          %1192 = vst.msk [vmem:[#allocation2 + $0x8] sm:$0xff] %vm1109, %v1188
        $region152: #{tpu_custom_call.1} parent=111 // pred_fallthru
          _
        %v1193 = vld [vmem:[#allocation2] sm:$0xff]
        %v1194 = vld [vmem:[#allocation2 + $0x8] sm:$0xff]
        %v1195 = vld [vmem:[%s1041] sm:$0x7]
        %v1196 = vld [vmem:[%s1045] sm:$0x7]
        %vm1197 = vcmask 261120
        %v1198 = vsel %vm1197, %v1193, 0.0
        %1199 = vadd.xlane.f32.xlu0 %v1198
        %v1200 = vpop.xlane.xlu0 %1199
        %v1201 = vsel %vm1197, %v1194, 0.0
        %1202 = vadd.xlane.f32.xlu0 %v1201
        %v1203 = vpop.xlane.xlu0 %1202
        %v1204 = vrcp.pop 32.0
        %v1205 = vmul.f32 %v1200, %v1204
        %v1206 = vmul.f32 %v1203, %v1204
        %v1207 = vsub.f32 %v1193, %v1205
        %v1208 = vsub.f32 %v1194, %v1206
        %v1209 = vmul.f32 %v1207, %v1207
        %v1210 = vmul.f32 %v1208, %v1208
        %v1211 = vsel %vm1197, %v1209, 0.0
        %1212 = vadd.xlane.f32.xlu0 %v1211
        %v1213 = vpop.xlane.xlu0 %1212
        %v1214 = vsel %vm1197, %v1210, 0.0
        %1215 = vadd.xlane.f32.xlu0 %v1214
        %v1216 = vpop.xlane.xlu0 %1215
        %v1217 = vrcp.pop 31.0
        %v1218 = vmul.f32 %v1213, %v1217
        %v1219 = vmul.f32 %v1216, %v1217
        %v1220 = vrsqrt.pop %v1218
        %v1221 = vmul.f32 %v1218, %v1220
        %vm1222 = vcmp.eq.f32.partialorder %v1218, inf
        %v1223 = vsel %vm1222, %v1218, %v1221
        %vm1224 = vcmp.eq.f32.partialorder %v1218, 0.0
        %v1225 = vand.u32 %v1218, 2147483648
        %v1226 = vsel %vm1224, %v1225, %v1223
        %v1227 = vrsqrt.pop %v1219
        %v1228 = vmul.f32 %v1219, %v1227
        %vm1229 = vcmp.eq.f32.partialorder %v1219, inf
        %v1230 = vsel %vm1229, %v1219, %v1228
        %vm1231 = vcmp.eq.f32.partialorder %v1219, 0.0
        %v1232 = vand.u32 %v1219, 2147483648
        %v1233 = vsel %vm1231, %v1232, %v1230
        %v1234 = vlaneseq
        %v1235 = vshrl.u32 %v1234, 7
        %v1236 = vsub.s32 0, %v1235
        %v1237 = vrot.slane %v1195, %v1236
        %v1238 = vmul.f32 %v1237, %v1207
        %v1239 = vmul.f32 %v1237, %v1208
        %v1240 = vadd.f32 %v1226, 1e-06
        %v1241 = vadd.f32 %v1233, 1e-06
        %v1242 = vrcp.pop %v1240
        %v1243 = vmul.f32 %v1238, %v1242
        %v1244 = vrcp.pop %v1241
        %v1245 = vmul.f32 %v1239, %v1244
        %v1246 = vlaneseq
        %v1247 = vshrl.u32 %v1246, 7
        %v1248 = vsub.s32 0, %v1247
        %v1249 = vrot.slane %v1196, %v1248
        %v1250 = vadd.f32 %v1243, %v1249
        %v1251 = vadd.f32 %v1245, %v1249
        %v1252 = vld [vmem:[#allocation9] sm:$0xff]
        %v1253 = vld [vmem:[#allocation9 + $0x8] sm:$0xff]
        %v1254 = vld [vmem:[%s1050] sm:$0xff]
        %v1255 = vld [vmem:[%s1050 + $0x8] sm:$0xff]
        %v1256 = vld [vmem:[%s1050 + $0x10] sm:$0xff]
        %v1257 = vld [vmem:[%s1050 + $0x18] sm:$0xff]
        %v1259 = vsel %vm1197, %v1250, 0
        %v1262 = vsel %vm1197, %v1251, 0
        %1264 = vmatprep.subr.mxu0 0.0
        %1265 = vmatpush1.msra.mxu0 %v1254
        %1266 = vmatprep.subr.mxu0 0.0
        %1267 = vmatpush1.msra.mxu0 %v1255
        %1268 = vmatprep.subr.mxu0 0.0
        %1269 = vmatpush1.msra.mxu0 %v1256
        %1270 = vmatprep.subr.mxu0 0.0
        %1271 = vmatpush1.msra.mxu0 %v1257
        %1272 = vmatprep.subr.mxu0 0.0
        %1273 = vmatpush1.msra.mxu0 0.0
        %1274 = vmatprep.subr.mxu0 0.0
        %1275 = vmatpush1.msra.mxu0 0.0
        %1276 = vmatprep.subr.mxu0 0.0
        %1277 = vmatpush1.msra.mxu0 0.0
        %1278 = vmatprep.subr.mxu0 0.0
        %1279 = vmatpush1.msra.mxu0 0.0
        %1280 = vmatprep.subr.mxu0 0.0
        %1281 = vmatpush1.msra.mxu0 0.0
        %1282 = vmatprep.subr.mxu0 0.0
        %1283 = vmatpush1.msra.mxu0 0.0
        %1284 = vmatprep.subr.mxu0 0.0
        %1285 = vmatpush1.msra.mxu0 0.0
        %1286 = vmatprep.subr.mxu0 0.0
        %1287 = vmatpush1.msra.mxu0 0.0
        %1288 = vmatprep.subr.mxu0 0.0
        %1289 = vmatpush1.msra.mxu0 0.0
        %1290 = vmatprep.subr.mxu0 0.0
        %1291 = vmatpush1.msra.mxu0 0.0
        %1292 = vmatprep.subr.mxu0 0.0
        %1293 = vmatpush1.msra.mxu0 0.0
        %1294 = vmatprep.subr.mxu0 0.0
        %1295 = vmatpush1.msra.mxu0 0.0
        %1296 = vmatprep.subr.mxu0 0.0
        %1297 = vmatpush1.msra.mxu0 0.0
        %1298 = vmatprep.subr.mxu0 0.0
        %1299 = vmatpush1.msra.mxu0 0.0
        %1300 = vmatprep.subr.mxu0 0.0
        %1301 = vmatpush1.msra.mxu0 0.0
        %1302 = vmatprep.subr.mxu0 0.0
        %1303 = vmatpush1.msra.mxu0 0.0
        %1304 = vmatprep.subr.mxu0 0.0
        %1305 = vmatpush1.msra.mxu0 0.0
        %1306 = vmatprep.subr.mxu0 0.0
        %1307 = vmatpush1.msra.mxu0 0.0
        %1308 = vmatprep.subr.mxu0 0.0
        %1309 = vmatpush1.msra.mxu0 0.0
        %1310 = vmatprep.subr.mxu0 0.0
        %1311 = vmatpush1.msra.mxu0 0.0
        %1312 = vmatprep.subr.mxu0 0.0
        %1313 = vmatpush1.msra.mxu0 0.0
        %1314 = vmatprep.subr.mxu0 0.0
        %1315 = vmatpush1.msra.mxu0 0.0
        %1316 = vmatprep.subr.mxu0 0.0
        %1317 = vmatpush1.msra.mxu0 0.0
        %1318 = vmatprep.subr.mxu0 0.0
        %1319 = vmatpush1.msra.mxu0 0.0
        %1320 = vmatprep.subr.mxu0 0.0
        %1321 = vmatpush1.msra.mxu0 0.0
        %1322 = vmatprep.subr.mxu0 0.0
        %1323 = vmatpush1.msra.mxu0 0.0
        %1324 = vmatprep.subr.mxu0 0.0
        %1325 = vmatpush1.msra.mxu0 0.0
        %1326 = vmatprep.subr.mxu0 0.0
        %1327 = vmatpush1.msra.mxu0 0.0
        %1328 = vmatprep.mubr.f32.mxu0 0.0
        %1329 = vmatmul.mubr.f32.gmra.mrb[0].mxu0 %v1259
        %v1330 = vpop.f32.mrb[0].mxu0
        %v1331 = vadd.f32 0.0, %v1330
        %v1332 = vpop.f32.mrb[0].mxu0
        %1333 = vmatprep.mubr.f32.mxu0 0.0
        %1334 = vmatmul.mubr.f32.gmra.mrb[0].mxu0 %v1262
        %v1335 = vpop.f32.mrb[0].mxu0
        %v1336 = vadd.f32 0.0, %v1335
        %v1337 = vpop.f32.mrb[0].mxu0
        %1338 = vdwg.mxu0
        %v1339 = vmul.f32 %v1331, 0.35355338
        %v1340 = vmul.f32 %v1336, 0.35355338
        %v1341 = vld [vmem:[%s1055] sm:$0xff]
        %v1342 = vld [vmem:[%s1055 + $0x8] sm:$0xff]
        %v1343 = vld [vmem:[%s1055 + $0x10] sm:$0xff]
        %v1344 = vld [vmem:[%s1055 + $0x18] sm:$0xff]
        %1345 = vmatprep.subr.mxu0 0.0
        %1346 = vmatpush1.msra.mxu0 %v1341
        %1347 = vmatprep.subr.mxu0 0.0
        %1348 = vmatpush1.msra.mxu0 %v1342
        %1349 = vmatprep.subr.mxu0 0.0
        %1350 = vmatpush1.msra.mxu0 %v1343
        %1351 = vmatprep.subr.mxu0 0.0
        %1352 = vmatpush1.msra.mxu0 %v1344
        %1353 = vmatprep.subr.mxu0 0.0
        %1354 = vmatpush1.msra.mxu0 0.0
        %1355 = vmatprep.subr.mxu0 0.0
        %1356 = vmatpush1.msra.mxu0 0.0
        %1357 = vmatprep.subr.mxu0 0.0
        %1358 = vmatpush1.msra.mxu0 0.0
        %1359 = vmatprep.subr.mxu0 0.0
        %1360 = vmatpush1.msra.mxu0 0.0
        %1361 = vmatprep.subr.mxu0 0.0
        %1362 = vmatpush1.msra.mxu0 0.0
        %1363 = vmatprep.subr.mxu0 0.0
        %1364 = vmatpush1.msra.mxu0 0.0
        %1365 = vmatprep.subr.mxu0 0.0
        %1366 = vmatpush1.msra.mxu0 0.0
        %1367 = vmatprep.subr.mxu0 0.0
        %1368 = vmatpush1.msra.mxu0 0.0
        %1369 = vmatprep.subr.mxu0 0.0
        %1370 = vmatpush1.msra.mxu0 0.0
        %1371 = vmatprep.subr.mxu0 0.0
        %1372 = vmatpush1.msra.mxu0 0.0
        %1373 = vmatprep.subr.mxu0 0.0
        %1374 = vmatpush1.msra.mxu0 0.0
        %1375 = vmatprep.subr.mxu0 0.0
        %1376 = vmatpush1.msra.mxu0 0.0
        %1377 = vmatprep.subr.mxu0 0.0
        %1378 = vmatpush1.msra.mxu0 0.0
        %1379 = vmatprep.subr.mxu0 0.0
        %1380 = vmatpush1.msra.mxu0 0.0
        %1381 = vmatprep.subr.mxu0 0.0
        %1382 = vmatpush1.msra.mxu0 0.0
        %1383 = vmatprep.subr.mxu0 0.0
        %1384 = vmatpush1.msra.mxu0 0.0
        %1385 = vmatprep.subr.mxu0 0.0
        %1386 = vmatpush1.msra.mxu0 0.0
        %1387 = vmatprep.subr.mxu0 0.0
        %1388 = vmatpush1.msra.mxu0 0.0
        %1389 = vmatprep.subr.mxu0 0.0
        %1390 = vmatpush1.msra.mxu0 0.0
        %1391 = vmatprep.subr.mxu0 0.0
        %1392 = vmatpush1.msra.mxu0 0.0
        %1393 = vmatprep.subr.mxu0 0.0
        %1394 = vmatpush1.msra.mxu0 0.0
        %1395 = vmatprep.subr.mxu0 0.0
        %1396 = vmatpush1.msra.mxu0 0.0
        %1397 = vmatprep.subr.mxu0 0.0
        %1398 = vmatpush1.msra.mxu0 0.0
        %1399 = vmatprep.subr.mxu0 0.0
        %1400 = vmatpush1.msra.mxu0 0.0
        %1401 = vmatprep.subr.mxu0 0.0
        %1402 = vmatpush1.msra.mxu0 0.0
        %1403 = vmatprep.subr.mxu0 0.0
        %1404 = vmatpush1.msra.mxu0 0.0
        %1405 = vmatprep.subr.mxu0 0.0
        %1406 = vmatpush1.msra.mxu0 0.0
        %1407 = vmatprep.subr.mxu0 0.0
        %1408 = vmatpush1.msra.mxu0 0.0
        %1409 = vmatprep.mubr.f32.mxu0 0.0
        %1410 = vmatmul.mubr.f32.gmra.mrb[0].mxu0 %v1259
        %v1411 = vpop.f32.mrb[0].mxu0
        %v1412 = vadd.f32 0.0, %v1411
        %v1413 = vpop.f32.mrb[0].mxu0
        %1414 = vmatprep.mubr.f32.mxu0 0.0
        %1415 = vmatmul.mubr.f32.gmra.mrb[0].mxu0 %v1262
        %v1416 = vpop.f32.mrb[0].mxu0
        %v1417 = vadd.f32 0.0, %v1416
        %v1418 = vpop.f32.mrb[0].mxu0
        %1419 = vdwg.mxu0
        %v1420 = vld [vmem:[%s1060] sm:$0xff]
        %v1421 = vld [vmem:[%s1060 + $0x8] sm:$0xff]
        %v1422 = vld [vmem:[%s1060 + $0x10] sm:$0xff]
        %v1423 = vld [vmem:[%s1060 + $0x18] sm:$0xff]
        %1424 = vmatprep.subr.mxu0 0.0
        %1425 = vmatpush1.msra.mxu0 %v1420
        %1426 = vmatprep.subr.mxu0 0.0
        %1427 = vmatpush1.msra.mxu0 %v1421
        %1428 = vmatprep.subr.mxu0 0.0
        %1429 = vmatpush1.msra.mxu0 %v1422
        %1430 = vmatprep.subr.mxu0 0.0
        %1431 = vmatpush1.msra.mxu0 %v1423
        %1432 = vmatprep.subr.mxu0 0.0
        %1433 = vmatpush1.msra.mxu0 0.0
        %1434 = vmatprep.subr.mxu0 0.0
        %1435 = vmatpush1.msra.mxu0 0.0
        %1436 = vmatprep.subr.mxu0 0.0
        %1437 = vmatpush1.msra.mxu0 0.0
        %1438 = vmatprep.subr.mxu0 0.0
        %1439 = vmatpush1.msra.mxu0 0.0
        %1440 = vmatprep.subr.mxu0 0.0
        %1441 = vmatpush1.msra.mxu0 0.0
        %1442 = vmatprep.subr.mxu0 0.0
        %1443 = vmatpush1.msra.mxu0 0.0
        %1444 = vmatprep.subr.mxu0 0.0
        %1445 = vmatpush1.msra.mxu0 0.0
        %1446 = vmatprep.subr.mxu0 0.0
        %1447 = vmatpush1.msra.mxu0 0.0
        %1448 = vmatprep.subr.mxu0 0.0
        %1449 = vmatpush1.msra.mxu0 0.0
        %1450 = vmatprep.subr.mxu0 0.0
        %1451 = vmatpush1.msra.mxu0 0.0
        %1452 = vmatprep.subr.mxu0 0.0
        %1453 = vmatpush1.msra.mxu0 0.0
        %1454 = vmatprep.subr.mxu0 0.0
        %1455 = vmatpush1.msra.mxu0 0.0
        %1456 = vmatprep.subr.mxu0 0.0
        %1457 = vmatpush1.msra.mxu0 0.0
        %1458 = vmatprep.subr.mxu0 0.0
        %1459 = vmatpush1.msra.mxu0 0.0
        %1460 = vmatprep.subr.mxu0 0.0
        %1461 = vmatpush1.msra.mxu0 0.0
        %1462 = vmatprep.subr.mxu0 0.0
        %1463 = vmatpush1.msra.mxu0 0.0
        %1464 = vmatprep.subr.mxu0 0.0
        %1465 = vmatpush1.msra.mxu0 0.0
        %1466 = vmatprep.subr.mxu0 0.0
        %1467 = vmatpush1.msra.mxu0 0.0
        %1468 = vmatprep.subr.mxu0 0.0
        %1469 = vmatpush1.msra.mxu0 0.0
        %1470 = vmatprep.subr.mxu0 0.0
        %1471 = vmatpush1.msra.mxu0 0.0
        %1472 = vmatprep.subr.mxu0 0.0
        %1473 = vmatpush1.msra.mxu0 0.0
        %1474 = vmatprep.subr.mxu0 0.0
        %1475 = vmatpush1.msra.mxu0 0.0
        %1476 = vmatprep.subr.mxu0 0.0
        %1477 = vmatpush1.msra.mxu0 0.0
        %1478 = vmatprep.subr.mxu0 0.0
        %1479 = vmatpush1.msra.mxu0 0.0
        %1480 = vmatprep.subr.mxu0 0.0
        %1481 = vmatpush1.msra.mxu0 0.0
        %1482 = vmatprep.subr.mxu0 0.0
        %1483 = vmatpush1.msra.mxu0 0.0
        %1484 = vmatprep.subr.mxu0 0.0
        %1485 = vmatpush1.msra.mxu0 0.0
        %1486 = vmatprep.subr.mxu0 0.0
        %1487 = vmatpush1.msra.mxu0 0.0
        %1488 = vmatprep.mubr.f32.mxu0 0.0
        %1489 = vmatmul.mubr.f32.gmra.mrb[0].mxu0 %v1259
        %v1490 = vpop.f32.mrb[0].mxu0
        %v1491 = vadd.f32 0.0, %v1490
        %v1492 = vpop.f32.mrb[0].mxu0
        %1493 = vmatprep.mubr.f32.mxu0 0.0
        %1494 = vmatmul.mubr.f32.gmra.mrb[0].mxu0 %v1262
        %v1495 = vpop.f32.mrb[0].mxu0
        %v1496 = vadd.f32 0.0, %v1495
        %v1497 = vpop.f32.mrb[0].mxu0
        %1498 = vdwg.mxu0
        %vm1499 = vcmask 64512
        %v1501 = vsel %vm1499, %v1339, 0
        %v1504 = vsel %vm1499, %v1412, 0
        %1506 = vmatprep.subr.mxu0 0.0
        %1507 = vmatpush1.xpose.msra.mxu0 %v1504
        %1508 = vmatprep.subr.mxu0 0.0
        %1509 = vmatpush1.xpose.msra.mxu0 0.0
        %1510 = vmatprep.subr.mxu0 0.0
        %1511 = vmatpush1.xpose.msra.mxu0 0.0
        %1512 = vmatprep.subr.mxu0 0.0
        %1513 = vmatpush1.xpose.msra.mxu0 0.0
        %1514 = vmatprep.subr.mxu0 0.0
        %1515 = vmatpush1.xpose.msra.mxu0 0.0
        %1516 = vmatprep.subr.mxu0 0.0
        %1517 = vmatpush1.xpose.msra.mxu0 0.0
        %1518 = vmatprep.subr.mxu0 0.0
        %1519 = vmatpush1.xpose.msra.mxu0 0.0
        %1520 = vmatprep.subr.mxu0 0.0
        %1521 = vmatpush1.xpose.msra.mxu0 0.0
        %1522 = vmatprep.subr.mxu0 0.0
        %1523 = vmatpush1.xpose.msra.mxu0 0.0
        %1524 = vmatprep.subr.mxu0 0.0
        %1525 = vmatpush1.xpose.msra.mxu0 0.0
        %1526 = vmatprep.subr.mxu0 0.0
        %1527 = vmatpush1.xpose.msra.mxu0 0.0
        %1528 = vmatprep.subr.mxu0 0.0
        %1529 = vmatpush1.xpose.msra.mxu0 0.0
        %1530 = vmatprep.subr.mxu0 0.0
        %1531 = vmatpush1.xpose.msra.mxu0 0.0
        %1532 = vmatprep.subr.mxu0 0.0
        %1533 = vmatpush1.xpose.msra.mxu0 0.0
        %1534 = vmatprep.subr.mxu0 0.0
        %1535 = vmatpush1.xpose.msra.mxu0 0.0
        %1536 = vmatprep.subr.mxu0 0.0
        %1537 = vmatpush1.xpose.msra.mxu0 0.0
        %1538 = vmatprep.subr.mxu0 0.0
        %1539 = vmatpush1.xpose.msra.mxu0 0.0
        %1540 = vmatprep.subr.mxu0 0.0
        %1541 = vmatpush1.xpose.msra.mxu0 0.0
        %1542 = vmatprep.subr.mxu0 0.0
        %1543 = vmatpush1.xpose.msra.mxu0 0.0
        %1544 = vmatprep.subr.mxu0 0.0
        %1545 = vmatpush1.xpose.msra.mxu0 0.0
        %1546 = vmatprep.subr.mxu0 0.0
        %1547 = vmatpush1.xpose.msra.mxu0 0.0
        %1548 = vmatprep.subr.mxu0 0.0
        %1549 = vmatpush1.xpose.msra.mxu0 0.0
        %1550 = vmatprep.subr.mxu0 0.0
        %1551 = vmatpush1.xpose.msra.mxu0 0.0
        %1552 = vmatprep.subr.mxu0 0.0
        %1553 = vmatpush1.xpose.msra.mxu0 0.0
        %1554 = vmatprep.subr.mxu0 0.0
        %1555 = vmatpush1.xpose.msra.mxu0 0.0
        %1556 = vmatprep.subr.mxu0 0.0
        %1557 = vmatpush1.xpose.msra.mxu0 0.0
        %1558 = vmatprep.subr.mxu0 0.0
        %1559 = vmatpush1.xpose.msra.mxu0 0.0
        %1560 = vmatprep.subr.mxu0 0.0
        %1561 = vmatpush1.xpose.msra.mxu0 0.0
        %1562 = vmatprep.subr.mxu0 0.0
        %1563 = vmatpush1.xpose.msra.mxu0 0.0
        %1564 = vmatprep.subr.mxu0 0.0
        %1565 = vmatpush1.xpose.msra.mxu0 0.0
        %1566 = vmatprep.subr.mxu0 0.0
        %1567 = vmatpush1.xpose.msra.mxu0 0.0
        %1568 = vmatprep.subr.mxu0 0.0
        %1569 = vmatpush1.xpose.msra.mxu0 0.0
        %1570 = vmatprep.mubr.f32.mxu0 0.0
        %1571 = vmatmul.mubr.f32.gmra.mrb[0].mxu0 %v1501
        %v1572 = vpop.f32.mrb[0].mxu0
        %v1573 = vadd.f32 0.0, %v1572
        %v1574 = vpop.f32.mrb[0].mxu0
        %1575 = vdwg.mxu0
        %v1577 = vsel %vm1499, %v1340, 0
        %v1580 = vsel %vm1499, %v1417, 0
        %1582 = vmatprep.subr.mxu0 0.0
        %1583 = vmatpush1.xpose.msra.mxu0 %v1580
        %1584 = vmatprep.subr.mxu0 0.0
        %1585 = vmatpush1.xpose.msra.mxu0 0.0
        %1586 = vmatprep.subr.mxu0 0.0
        %1587 = vmatpush1.xpose.msra.mxu0 0.0
        %1588 = vmatprep.subr.mxu0 0.0
        %1589 = vmatpush1.xpose.msra.mxu0 0.0
        %1590 = vmatprep.subr.mxu0 0.0
        %1591 = vmatpush1.xpose.msra.mxu0 0.0
        %1592 = vmatprep.subr.mxu0 0.0
        %1593 = vmatpush1.xpose.msra.mxu0 0.0
        %1594 = vmatprep.subr.mxu0 0.0
        %1595 = vmatpush1.xpose.msra.mxu0 0.0
        %1596 = vmatprep.subr.mxu0 0.0
        %1597 = vmatpush1.xpose.msra.mxu0 0.0
        %1598 = vmatprep.subr.mxu0 0.0
        %1599 = vmatpush1.xpose.msra.mxu0 0.0
        %1600 = vmatprep.subr.mxu0 0.0
        %1601 = vmatpush1.xpose.msra.mxu0 0.0
        %1602 = vmatprep.subr.mxu0 0.0
        %1603 = vmatpush1.xpose.msra.mxu0 0.0
        %1604 = vmatprep.subr.mxu0 0.0
        %1605 = vmatpush1.xpose.msra.mxu0 0.0
        %1606 = vmatprep.subr.mxu0 0.0
        %1607 = vmatpush1.xpose.msra.mxu0 0.0
        %1608 = vmatprep.subr.mxu0 0.0
        %1609 = vmatpush1.xpose.msra.mxu0 0.0
        %1610 = vmatprep.subr.mxu0 0.0
        %1611 = vmatpush1.xpose.msra.mxu0 0.0
        %1612 = vmatprep.subr.mxu0 0.0
        %1613 = vmatpush1.xpose.msra.mxu0 0.0
        %1614 = vmatprep.subr.mxu0 0.0
        %1615 = vmatpush1.xpose.msra.mxu0 0.0
        %1616 = vmatprep.subr.mxu0 0.0
        %1617 = vmatpush1.xpose.msra.mxu0 0.0
        %1618 = vmatprep.subr.mxu0 0.0
        %1619 = vmatpush1.xpose.msra.mxu0 0.0
        %1620 = vmatprep.subr.mxu0 0.0
        %1621 = vmatpush1.xpose.msra.mxu0 0.0
        %1622 = vmatprep.subr.mxu0 0.0
        %1623 = vmatpush1.xpose.msra.mxu0 0.0
        %1624 = vmatprep.subr.mxu0 0.0
        %1625 = vmatpush1.xpose.msra.mxu0 0.0
        %1626 = vmatprep.subr.mxu0 0.0
        %1627 = vmatpush1.xpose.msra.mxu0 0.0
        %1628 = vmatprep.subr.mxu0 0.0
        %1629 = vmatpush1.xpose.msra.mxu0 0.0
        %1630 = vmatprep.subr.mxu0 0.0
        %1631 = vmatpush1.xpose.msra.mxu0 0.0
        %1632 = vmatprep.subr.mxu0 0.0
        %1633 = vmatpush1.xpose.msra.mxu0 0.0
        %1634 = vmatprep.subr.mxu0 0.0
        %1635 = vmatpush1.xpose.msra.mxu0 0.0
        %1636 = vmatprep.subr.mxu0 0.0
        %1637 = vmatpush1.xpose.msra.mxu0 0.0
        %1638 = vmatprep.subr.mxu0 0.0
        %1639 = vmatpush1.xpose.msra.mxu0 0.0
        %1640 = vmatprep.subr.mxu0 0.0
        %1641 = vmatpush1.xpose.msra.mxu0 0.0
        %1642 = vmatprep.subr.mxu0 0.0
        %1643 = vmatpush1.xpose.msra.mxu0 0.0
        %1644 = vmatprep.subr.mxu0 0.0
        %1645 = vmatpush1.xpose.msra.mxu0 0.0
        %1646 = vmatprep.mubr.f32.mxu0 0.0
        %1647 = vmatmul.mubr.f32.gmra.mrb[0].mxu0 %v1577
        %v1648 = vpop.f32.mrb[0].mxu0
        %v1649 = vadd.f32 0.0, %v1648
        %v1650 = vpop.f32.mrb[0].mxu0
        %1651 = vdwg.mxu0
        %vm1652 = vcmp.gt.f32.partialorder %v1252, 0.0
        %vm1653 = vcmp.gt.f32.partialorder %v1253, 0.0
        %v1654 = vsel %vm1652, -1e+18, %v1573
        %v1655 = vsel %vm1653, -1e+18, %v1649
        %v1656 = vsel %vm1499, %v1654, -inf
        %1657 = vmax.xlane.f32.xlu0 %v1656
        %v1658 = vpop.xlane.xlu0 %1657
        %v1659 = vsel %vm1499, %v1655, -inf
        %1660 = vmax.xlane.f32.xlu0 %v1659
        %v1661 = vpop.xlane.xlu0 %1660
        %v1662 = vsub.f32 %v1654, %v1658
        %v1663 = vsub.f32 %v1655, %v1661
        %v1664 = vmul.f32 %v1662, 1.442695
        %v1665 = vpow.pop %v1664
        %v1666 = vmul.f32 %v1663, 1.442695
        %v1667 = vpow.pop %v1666
        %v1668 = vsel %vm1499, %v1665, 0.0
        %1669 = vadd.xlane.f32.xlu0 %v1668
        %v1670 = vpop.xlane.xlu0 %1669
        %v1671 = vsel %vm1499, %v1667, 0.0
        %1672 = vadd.xlane.f32.xlu0 %v1671
        %v1673 = vpop.xlane.xlu0 %1672
        %v1674 = vrcp.pop %v1670
        %v1675 = vmul.f32 %v1665, %v1674
        %v1676 = vrcp.pop %v1673
        %v1677 = vmul.f32 %v1667, %v1676
        %v1679 = vsel %vm1499, %v1675, 0
        %1681 = vmatprep.subr.mxu0 0.0
        %1682 = vmatpush1.msra.mxu0 %v1491
        %1683 = vmatprep.subr.mxu0 0.0
        %1684 = vmatpush1.msra.mxu0 0.0
        %1685 = vmatprep.subr.mxu0 0.0
        %1686 = vmatpush1.msra.mxu0 0.0
        %1687 = vmatprep.subr.mxu0 0.0
        %1688 = vmatpush1.msra.mxu0 0.0
        %1689 = vmatprep.subr.mxu0 0.0
        %1690 = vmatpush1.msra.mxu0 0.0
        %1691 = vmatprep.subr.mxu0 0.0
        %1692 = vmatpush1.msra.mxu0 0.0
        %1693 = vmatprep.subr.mxu0 0.0
        %1694 = vmatpush1.msra.mxu0 0.0
        %1695 = vmatprep.subr.mxu0 0.0
        %1696 = vmatpush1.msra.mxu0 0.0
        %1697 = vmatprep.subr.mxu0 0.0
        %1698 = vmatpush1.msra.mxu0 0.0
        %1699 = vmatprep.subr.mxu0 0.0
        %1700 = vmatpush1.msra.mxu0 0.0
        %1701 = vmatprep.subr.mxu0 0.0
        %1702 = vmatpush1.msra.mxu0 0.0
        %1703 = vmatprep.subr.mxu0 0.0
        %1704 = vmatpush1.msra.mxu0 0.0
        %1705 = vmatprep.subr.mxu0 0.0
        %1706 = vmatpush1.msra.mxu0 0.0
        %1707 = vmatprep.subr.mxu0 0.0
        %1708 = vmatpush1.msra.mxu0 0.0
        %1709 = vmatprep.subr.mxu0 0.0
        %1710 = vmatpush1.msra.mxu0 0.0
        %1711 = vmatprep.subr.mxu0 0.0
        %1712 = vmatpush1.msra.mxu0 0.0
        %1713 = vmatprep.subr.mxu0 0.0
        %1714 = vmatpush1.msra.mxu0 0.0
        %1715 = vmatprep.subr.mxu0 0.0
        %1716 = vmatpush1.msra.mxu0 0.0
        %1717 = vmatprep.subr.mxu0 0.0
        %1718 = vmatpush1.msra.mxu0 0.0
        %1719 = vmatprep.subr.mxu0 0.0
        %1720 = vmatpush1.msra.mxu0 0.0
        %1721 = vmatprep.subr.mxu0 0.0
        %1722 = vmatpush1.msra.mxu0 0.0
        %1723 = vmatprep.subr.mxu0 0.0
        %1724 = vmatpush1.msra.mxu0 0.0
        %1725 = vmatprep.subr.mxu0 0.0
        %1726 = vmatpush1.msra.mxu0 0.0
        %1727 = vmatprep.subr.mxu0 0.0
        %1728 = vmatpush1.msra.mxu0 0.0
        %1729 = vmatprep.subr.mxu0 0.0
        %1730 = vmatpush1.msra.mxu0 0.0
        %1731 = vmatprep.subr.mxu0 0.0
        %1732 = vmatpush1.msra.mxu0 0.0
        %1733 = vmatprep.subr.mxu0 0.0
        %1734 = vmatpush1.msra.mxu0 0.0
        %1735 = vmatprep.subr.mxu0 0.0
        %1736 = vmatpush1.msra.mxu0 0.0
        %1737 = vmatprep.subr.mxu0 0.0
        %1738 = vmatpush1.msra.mxu0 0.0
        %1739 = vmatprep.subr.mxu0 0.0
        %1740 = vmatpush1.msra.mxu0 0.0
        %1741 = vmatprep.subr.mxu0 0.0
        %1742 = vmatpush1.msra.mxu0 0.0
        %1743 = vmatprep.subr.mxu0 0.0
        %1744 = vmatpush1.msra.mxu0 0.0
        %1745 = vmatprep.mubr.f32.mxu0 0.0
        %1746 = vmatmul.mubr.f32.gmra.mrb[0].mxu0 %v1679
        %v1747 = vpop.f32.mrb[0].mxu0
        %v1748 = vadd.f32 0.0, %v1747
        %v1749 = vpop.f32.mrb[0].mxu0
        %1750 = vdwg.mxu0
        %v1752 = vsel %vm1499, %v1677, 0
        %1754 = vmatprep.subr.mxu0 0.0
        %1755 = vmatpush1.msra.mxu0 %v1496
        %1756 = vmatprep.subr.mxu0 0.0
        %1757 = vmatpush1.msra.mxu0 0.0
        %1758 = vmatprep.subr.mxu0 0.0
        %1759 = vmatpush1.msra.mxu0 0.0
        %1760 = vmatprep.subr.mxu0 0.0
        %1761 = vmatpush1.msra.mxu0 0.0
        %1762 = vmatprep.subr.mxu0 0.0
        %1763 = vmatpush1.msra.mxu0 0.0
        %1764 = vmatprep.subr.mxu0 0.0
        %1765 = vmatpush1.msra.mxu0 0.0
        %1766 = vmatprep.subr.mxu0 0.0
        %1767 = vmatpush1.msra.mxu0 0.0
        %1768 = vmatprep.subr.mxu0 0.0
        %1769 = vmatpush1.msra.mxu0 0.0
        %1770 = vmatprep.subr.mxu0 0.0
        %1771 = vmatpush1.msra.mxu0 0.0
        %1772 = vmatprep.subr.mxu0 0.0
        %1773 = vmatpush1.msra.mxu0 0.0
        %1774 = vmatprep.subr.mxu0 0.0
        %1775 = vmatpush1.msra.mxu0 0.0
        %1776 = vmatprep.subr.mxu0 0.0
        %1777 = vmatpush1.msra.mxu0 0.0
        %1778 = vmatprep.subr.mxu0 0.0
        %1779 = vmatpush1.msra.mxu0 0.0
        %1780 = vmatprep.subr.mxu0 0.0
        %1781 = vmatpush1.msra.mxu0 0.0
        %1782 = vmatprep.subr.mxu0 0.0
        %1783 = vmatpush1.msra.mxu0 0.0
        %1784 = vmatprep.subr.mxu0 0.0
        %1785 = vmatpush1.msra.mxu0 0.0
        %1786 = vmatprep.subr.mxu0 0.0
        %1787 = vmatpush1.msra.mxu0 0.0
        %1788 = vmatprep.subr.mxu0 0.0
        %1789 = vmatpush1.msra.mxu0 0.0
        %1790 = vmatprep.subr.mxu0 0.0
        %1791 = vmatpush1.msra.mxu0 0.0
        %1792 = vmatprep.subr.mxu0 0.0
        %1793 = vmatpush1.msra.mxu0 0.0
        %1794 = vmatprep.subr.mxu0 0.0
        %1795 = vmatpush1.msra.mxu0 0.0
        %1796 = vmatprep.subr.mxu0 0.0
        %1797 = vmatpush1.msra.mxu0 0.0
        %1798 = vmatprep.subr.mxu0 0.0
        %1799 = vmatpush1.msra.mxu0 0.0
        %1800 = vmatprep.subr.mxu0 0.0
        %1801 = vmatpush1.msra.mxu0 0.0
        %1802 = vmatprep.subr.mxu0 0.0
        %1803 = vmatpush1.msra.mxu0 0.0
        %1804 = vmatprep.subr.mxu0 0.0
        %1805 = vmatpush1.msra.mxu0 0.0
        %1806 = vmatprep.subr.mxu0 0.0
        %1807 = vmatpush1.msra.mxu0 0.0
        %1808 = vmatprep.subr.mxu0 0.0
        %1809 = vmatpush1.msra.mxu0 0.0
        %1810 = vmatprep.subr.mxu0 0.0
        %1811 = vmatpush1.msra.mxu0 0.0
        %1812 = vmatprep.subr.mxu0 0.0
        %1813 = vmatpush1.msra.mxu0 0.0
        %1814 = vmatprep.subr.mxu0 0.0
        %1815 = vmatpush1.msra.mxu0 0.0
        %1816 = vmatprep.subr.mxu0 0.0
        %1817 = vmatpush1.msra.mxu0 0.0
        %1818 = vmatprep.mubr.f32.mxu0 0.0
        %1819 = vmatmul.mubr.f32.gmra.mrb[0].mxu0 %v1752
        %v1820 = vpop.f32.mrb[0].mxu0
        %v1821 = vadd.f32 0.0, %v1820
        %v1822 = vpop.f32.mrb[0].mxu0
        %1823 = vdwg.mxu0
        %1824 = vrot.lane.b32.xlu0 %v1339, 120
        %v1825 = vpop.permute.xlu0 %1824
        %1826 = vrot.lane.b32.xlu0 %v1412, 120
        %v1827 = vpop.permute.xlu0 %1826
        %v1828 = vsel %vm1499, %v1825, 0
        %v1830 = vsel %vm1499, %v1827, 0
        %1832 = vmatprep.subr.mxu0 0.0
        %1833 = vmatpush1.xpose.msra.mxu0 %v1830
        %1834 = vmatprep.subr.mxu0 0.0
        %1835 = vmatpush1.xpose.msra.mxu0 0.0
        %1836 = vmatprep.subr.mxu0 0.0
        %1837 = vmatpush1.xpose.msra.mxu0 0.0
        %1838 = vmatprep.subr.mxu0 0.0
        %1839 = vmatpush1.xpose.msra.mxu0 0.0
        %1840 = vmatprep.subr.mxu0 0.0
        %1841 = vmatpush1.xpose.msra.mxu0 0.0
        %1842 = vmatprep.subr.mxu0 0.0
        %1843 = vmatpush1.xpose.msra.mxu0 0.0
        %1844 = vmatprep.subr.mxu0 0.0
        %1845 = vmatpush1.xpose.msra.mxu0 0.0
        %1846 = vmatprep.subr.mxu0 0.0
        %1847 = vmatpush1.xpose.msra.mxu0 0.0
        %1848 = vmatprep.subr.mxu0 0.0
        %1849 = vmatpush1.xpose.msra.mxu0 0.0
        %1850 = vmatprep.subr.mxu0 0.0
        %1851 = vmatpush1.xpose.msra.mxu0 0.0
        %1852 = vmatprep.subr.mxu0 0.0
        %1853 = vmatpush1.xpose.msra.mxu0 0.0
        %1854 = vmatprep.subr.mxu0 0.0
        %1855 = vmatpush1.xpose.msra.mxu0 0.0
        %1856 = vmatprep.subr.mxu0 0.0
        %1857 = vmatpush1.xpose.msra.mxu0 0.0
        %1858 = vmatprep.subr.mxu0 0.0
        %1859 = vmatpush1.xpose.msra.mxu0 0.0
        %1860 = vmatprep.subr.mxu0 0.0
        %1861 = vmatpush1.xpose.msra.mxu0 0.0
        %1862 = vmatprep.subr.mxu0 0.0
        %1863 = vmatpush1.xpose.msra.mxu0 0.0
        %1864 = vmatprep.subr.mxu0 0.0
        %1865 = vmatpush1.xpose.msra.mxu0 0.0
        %1866 = vmatprep.subr.mxu0 0.0
        %1867 = vmatpush1.xpose.msra.mxu0 0.0
        %1868 = vmatprep.subr.mxu0 0.0
        %1869 = vmatpush1.xpose.msra.mxu0 0.0
        %1870 = vmatprep.subr.mxu0 0.0
        %1871 = vmatpush1.xpose.msra.mxu0 0.0
        %1872 = vmatprep.subr.mxu0 0.0
        %1873 = vmatpush1.xpose.msra.mxu0 0.0
        %1874 = vmatprep.subr.mxu0 0.0
        %1875 = vmatpush1.xpose.msra.mxu0 0.0
        %1876 = vmatprep.subr.mxu0 0.0
        %1877 = vmatpush1.xpose.msra.mxu0 0.0
        %1878 = vmatprep.subr.mxu0 0.0
        %1879 = vmatpush1.xpose.msra.mxu0 0.0
        %1880 = vmatprep.subr.mxu0 0.0
        %1881 = vmatpush1.xpose.msra.mxu0 0.0
        %1882 = vmatprep.subr.mxu0 0.0
        %1883 = vmatpush1.xpose.msra.mxu0 0.0
        %1884 = vmatprep.subr.mxu0 0.0
        %1885 = vmatpush1.xpose.msra.mxu0 0.0
        %1886 = vmatprep.subr.mxu0 0.0
        %1887 = vmatpush1.xpose.msra.mxu0 0.0
        %1888 = vmatprep.subr.mxu0 0.0
        %1889 = vmatpush1.xpose.msra.mxu0 0.0
        %1890 = vmatprep.subr.mxu0 0.0
        %1891 = vmatpush1.xpose.msra.mxu0 0.0
        %1892 = vmatprep.subr.mxu0 0.0
        %1893 = vmatpush1.xpose.msra.mxu0 0.0
        %1894 = vmatprep.subr.mxu0 0.0
        %1895 = vmatpush1.xpose.msra.mxu0 0.0
        %1896 = vmatprep.mubr.f32.mxu0 0.0
        %1897 = vmatmul.mubr.f32.gmra.mrb[0].mxu0 %v1828
        %v1898 = vpop.f32.mrb[0].mxu0
        %v1899 = vadd.f32 0.0, %v1898
        %v1900 = vpop.f32.mrb[0].mxu0
        %1901 = vdwg.mxu0
        %1902 = vrot.lane.b32.xlu0 %v1340, 120
        %v1903 = vpop.permute.xlu0 %1902
        %1904 = vrot.lane.b32.xlu0 %v1417, 120
        %v1905 = vpop.permute.xlu0 %1904
        %v1906 = vsel %vm1499, %v1903, 0
        %v1908 = vsel %vm1499, %v1905, 0
        %1910 = vmatprep.subr.mxu0 0.0
        %1911 = vmatpush1.xpose.msra.mxu0 %v1908
        %1912 = vmatprep.subr.mxu0 0.0
        %1913 = vmatpush1.xpose.msra.mxu0 0.0
        %1914 = vmatprep.subr.mxu0 0.0
        %1915 = vmatpush1.xpose.msra.mxu0 0.0
        %1916 = vmatprep.subr.mxu0 0.0
        %1917 = vmatpush1.xpose.msra.mxu0 0.0
        %1918 = vmatprep.subr.mxu0 0.0
        %1919 = vmatpush1.xpose.msra.mxu0 0.0
        %1920 = vmatprep.subr.mxu0 0.0
        %1921 = vmatpush1.xpose.msra.mxu0 0.0
        %1922 = vmatprep.subr.mxu0 0.0
        %1923 = vmatpush1.xpose.msra.mxu0 0.0
        %1924 = vmatprep.subr.mxu0 0.0
        %1925 = vmatpush1.xpose.msra.mxu0 0.0
        %1926 = vmatprep.subr.mxu0 0.0
        %1927 = vmatpush1.xpose.msra.mxu0 0.0
        %1928 = vmatprep.subr.mxu0 0.0
        %1929 = vmatpush1.xpose.msra.mxu0 0.0
        %1930 = vmatprep.subr.mxu0 0.0
        %1931 = vmatpush1.xpose.msra.mxu0 0.0
        %1932 = vmatprep.subr.mxu0 0.0
        %1933 = vmatpush1.xpose.msra.mxu0 0.0
        %1934 = vmatprep.subr.mxu0 0.0
        %1935 = vmatpush1.xpose.msra.mxu0 0.0
        %1936 = vmatprep.subr.mxu0 0.0
        %1937 = vmatpush1.xpose.msra.mxu0 0.0
        %1938 = vmatprep.subr.mxu0 0.0
        %1939 = vmatpush1.xpose.msra.mxu0 0.0
        %1940 = vmatprep.subr.mxu0 0.0
        %1941 = vmatpush1.xpose.msra.mxu0 0.0
        %1942 = vmatprep.subr.mxu0 0.0
        %1943 = vmatpush1.xpose.msra.mxu0 0.0
        %1944 = vmatprep.subr.mxu0 0.0
        %1945 = vmatpush1.xpose.msra.mxu0 0.0
        %1946 = vmatprep.subr.mxu0 0.0
        %1947 = vmatpush1.xpose.msra.mxu0 0.0
        %1948 = vmatprep.subr.mxu0 0.0
        %1949 = vmatpush1.xpose.msra.mxu0 0.0
        %1950 = vmatprep.subr.mxu0 0.0
        %1951 = vmatpush1.xpose.msra.mxu0 0.0
        %1952 = vmatprep.subr.mxu0 0.0
        %1953 = vmatpush1.xpose.msra.mxu0 0.0
        %1954 = vmatprep.subr.mxu0 0.0
        %1955 = vmatpush1.xpose.msra.mxu0 0.0
        %1956 = vmatprep.subr.mxu0 0.0
        %1957 = vmatpush1.xpose.msra.mxu0 0.0
        %1958 = vmatprep.subr.mxu0 0.0
        %1959 = vmatpush1.xpose.msra.mxu0 0.0
        %1960 = vmatprep.subr.mxu0 0.0
        %1961 = vmatpush1.xpose.msra.mxu0 0.0
        %1962 = vmatprep.subr.mxu0 0.0
        %1963 = vmatpush1.xpose.msra.mxu0 0.0
        %1964 = vmatprep.subr.mxu0 0.0
        %1965 = vmatpush1.xpose.msra.mxu0 0.0
        %1966 = vmatprep.subr.mxu0 0.0
        %1967 = vmatpush1.xpose.msra.mxu0 0.0
        %1968 = vmatprep.subr.mxu0 0.0
        %1969 = vmatpush1.xpose.msra.mxu0 0.0
        %1970 = vmatprep.subr.mxu0 0.0
        %1971 = vmatpush1.xpose.msra.mxu0 0.0
        %1972 = vmatprep.subr.mxu0 0.0
        %1973 = vmatpush1.xpose.msra.mxu0 0.0
        %1974 = vmatprep.mubr.f32.mxu0 0.0
        %1975 = vmatmul.mubr.f32.gmra.mrb[0].mxu0 %v1906
        %v1976 = vpop.f32.mrb[0].mxu0
        %v1977 = vadd.f32 0.0, %v1976
        %v1978 = vpop.f32.mrb[0].mxu0
        %1979 = vdwg.mxu0
        %v1980 = vsel %vm1652, -1e+18, %v1899
        %v1981 = vsel %vm1653, -1e+18, %v1977
        %v1982 = vsel %vm1499, %v1980, -inf
        %1983 = vmax.xlane.f32.xlu0 %v1982
        %v1984 = vpop.xlane.xlu0 %1983
        %v1985 = vsel %vm1499, %v1981, -inf
        %1986 = vmax.xlane.f32.xlu0 %v1985
        %v1987 = vpop.xlane.xlu0 %1986
        %v1988 = vsub.f32 %v1980, %v1984
        %v1989 = vsub.f32 %v1981, %v1987
        %v1990 = vmul.f32 %v1988, 1.442695
        %v1991 = vpow.pop %v1990
        %v1992 = vmul.f32 %v1989, 1.442695
        %v1993 = vpow.pop %v1992
        %v1994 = vsel %vm1499, %v1991, 0.0
        %1995 = vadd.xlane.f32.xlu0 %v1994
        %v1996 = vpop.xlane.xlu0 %1995
        %v1997 = vsel %vm1499, %v1993, 0.0
        %1998 = vadd.xlane.f32.xlu0 %v1997
        %v1999 = vpop.xlane.xlu0 %1998
        %v2000 = vrcp.pop %v1996
        %v2001 = vmul.f32 %v1991, %v2000
        %v2002 = vrcp.pop %v1999
        %v2003 = vmul.f32 %v1993, %v2002
        %2005 = vrot.lane.b32.xlu0 %v1491, 120
        %v2006 = vpop.permute.xlu0 %2005
        %v2009 = vsel %vm1499, %v2001, 0
        %2011 = vmatprep.subr.mxu0 0.0
        %2012 = vmatpush1.msra.mxu0 %v2006
        %2013 = vmatprep.subr.mxu0 0.0
        %2014 = vmatpush1.msra.mxu0 0.0
        %2015 = vmatprep.subr.mxu0 0.0
        %2016 = vmatpush1.msra.mxu0 0.0
        %2017 = vmatprep.subr.mxu0 0.0
        %2018 = vmatpush1.msra.mxu0 0.0
        %2019 = vmatprep.subr.mxu0 0.0
        %2020 = vmatpush1.msra.mxu0 0.0
        %2021 = vmatprep.subr.mxu0 0.0
        %2022 = vmatpush1.msra.mxu0 0.0
        %2023 = vmatprep.subr.mxu0 0.0
        %2024 = vmatpush1.msra.mxu0 0.0
        %2025 = vmatprep.subr.mxu0 0.0
        %2026 = vmatpush1.msra.mxu0 0.0
        %2027 = vmatprep.subr.mxu0 0.0
        %2028 = vmatpush1.msra.mxu0 0.0
        %2029 = vmatprep.subr.mxu0 0.0
        %2030 = vmatpush1.msra.mxu0 0.0
        %2031 = vmatprep.subr.mxu0 0.0
        %2032 = vmatpush1.msra.mxu0 0.0
        %2033 = vmatprep.subr.mxu0 0.0
        %2034 = vmatpush1.msra.mxu0 0.0
        %2035 = vmatprep.subr.mxu0 0.0
        %2036 = vmatpush1.msra.mxu0 0.0
        %2037 = vmatprep.subr.mxu0 0.0
        %2038 = vmatpush1.msra.mxu0 0.0
        %2039 = vmatprep.subr.mxu0 0.0
        %2040 = vmatpush1.msra.mxu0 0.0
        %2041 = vmatprep.subr.mxu0 0.0
        %2042 = vmatpush1.msra.mxu0 0.0
        %2043 = vmatprep.subr.mxu0 0.0
        %2044 = vmatpush1.msra.mxu0 0.0
        %2045 = vmatprep.subr.mxu0 0.0
        %2046 = vmatpush1.msra.mxu0 0.0
        %2047 = vmatprep.subr.mxu0 0.0
        %2048 = vmatpush1.msra.mxu0 0.0
        %2049 = vmatprep.subr.mxu0 0.0
        %2050 = vmatpush1.msra.mxu0 0.0
        %2051 = vmatprep.subr.mxu0 0.0
        %2052 = vmatpush1.msra.mxu0 0.0
        %2053 = vmatprep.subr.mxu0 0.0
        %2054 = vmatpush1.msra.mxu0 0.0
        %2055 = vmatprep.subr.mxu0 0.0
        %2056 = vmatpush1.msra.mxu0 0.0
        %2057 = vmatprep.subr.mxu0 0.0
        %2058 = vmatpush1.msra.mxu0 0.0
        %2059 = vmatprep.subr.mxu0 0.0
        %2060 = vmatpush1.msra.mxu0 0.0
        %2061 = vmatprep.subr.mxu0 0.0
        %2062 = vmatpush1.msra.mxu0 0.0
        %2063 = vmatprep.subr.mxu0 0.0
        %2064 = vmatpush1.msra.mxu0 0.0
        %2065 = vmatprep.subr.mxu0 0.0
        %2066 = vmatpush1.msra.mxu0 0.0
        %2067 = vmatprep.subr.mxu0 0.0
        %2068 = vmatpush1.msra.mxu0 0.0
        %2069 = vmatprep.subr.mxu0 0.0
        %2070 = vmatpush1.msra.mxu0 0.0
        %2071 = vmatprep.subr.mxu0 0.0
        %2072 = vmatpush1.msra.mxu0 0.0
        %2073 = vmatprep.subr.mxu0 0.0
        %2074 = vmatpush1.msra.mxu0 0.0
        %2075 = vmatprep.mubr.f32.mxu0 0.0
        %2076 = vmatmul.mubr.f32.gmra.mrb[0].mxu0 %v2009
        %v2077 = vpop.f32.mrb[0].mxu0
        %v2078 = vadd.f32 0.0, %v2077
        %v2079 = vpop.f32.mrb[0].mxu0
        %2080 = vdwg.mxu0
        %2082 = vrot.lane.b32.xlu0 %v1496, 120
        %v2083 = vpop.permute.xlu0 %2082
        %v2086 = vsel %vm1499, %v2003, 0
        %2088 = vmatprep.subr.mxu0 0.0
        %2089 = vmatpush1.msra.mxu0 %v2083
        %2090 = vmatprep.subr.mxu0 0.0
        %2091 = vmatpush1.msra.mxu0 0.0
        %2092 = vmatprep.subr.mxu0 0.0
        %2093 = vmatpush1.msra.mxu0 0.0
        %2094 = vmatprep.subr.mxu0 0.0
        %2095 = vmatpush1.msra.mxu0 0.0
        %2096 = vmatprep.subr.mxu0 0.0
        %2097 = vmatpush1.msra.mxu0 0.0
        %2098 = vmatprep.subr.mxu0 0.0
        %2099 = vmatpush1.msra.mxu0 0.0
        %2100 = vmatprep.subr.mxu0 0.0
        %2101 = vmatpush1.msra.mxu0 0.0
        %2102 = vmatprep.subr.mxu0 0.0
        %2103 = vmatpush1.msra.mxu0 0.0
        %2104 = vmatprep.subr.mxu0 0.0
        %2105 = vmatpush1.msra.mxu0 0.0
        %2106 = vmatprep.subr.mxu0 0.0
        %2107 = vmatpush1.msra.mxu0 0.0
        %2108 = vmatprep.subr.mxu0 0.0
        %2109 = vmatpush1.msra.mxu0 0.0
        %2110 = vmatprep.subr.mxu0 0.0
        %2111 = vmatpush1.msra.mxu0 0.0
        %2112 = vmatprep.subr.mxu0 0.0
        %2113 = vmatpush1.msra.mxu0 0.0
        %2114 = vmatprep.subr.mxu0 0.0
        %2115 = vmatpush1.msra.mxu0 0.0
        %2116 = vmatprep.subr.mxu0 0.0
        %2117 = vmatpush1.msra.mxu0 0.0
        %2118 = vmatprep.subr.mxu0 0.0
        %2119 = vmatpush1.msra.mxu0 0.0
        %2120 = vmatprep.subr.mxu0 0.0
        %2121 = vmatpush1.msra.mxu0 0.0
        %2122 = vmatprep.subr.mxu0 0.0
        %2123 = vmatpush1.msra.mxu0 0.0
        %2124 = vmatprep.subr.mxu0 0.0
        %2125 = vmatpush1.msra.mxu0 0.0
        %2126 = vmatprep.subr.mxu0 0.0
        %2127 = vmatpush1.msra.mxu0 0.0
        %2128 = vmatprep.subr.mxu0 0.0
        %2129 = vmatpush1.msra.mxu0 0.0
        %2130 = vmatprep.subr.mxu0 0.0
        %2131 = vmatpush1.msra.mxu0 0.0
        %2132 = vmatprep.subr.mxu0 0.0
        %2133 = vmatpush1.msra.mxu0 0.0
        %2134 = vmatprep.subr.mxu0 0.0
        %2135 = vmatpush1.msra.mxu0 0.0
        %2136 = vmatprep.subr.mxu0 0.0
        %2137 = vmatpush1.msra.mxu0 0.0
        %2138 = vmatprep.subr.mxu0 0.0
        %2139 = vmatpush1.msra.mxu0 0.0
        %2140 = vmatprep.subr.mxu0 0.0
        %2141 = vmatpush1.msra.mxu0 0.0
        %2142 = vmatprep.subr.mxu0 0.0
        %2143 = vmatpush1.msra.mxu0 0.0
        %2144 = vmatprep.subr.mxu0 0.0
        %2145 = vmatpush1.msra.mxu0 0.0
        %2146 = vmatprep.subr.mxu0 0.0
        %2147 = vmatpush1.msra.mxu0 0.0
        %2148 = vmatprep.subr.mxu0 0.0
        %2149 = vmatpush1.msra.mxu0 0.0
        %2150 = vmatprep.subr.mxu0 0.0
        %2151 = vmatpush1.msra.mxu0 0.0
        %2152 = vmatprep.mubr.f32.mxu0 0.0
        %2153 = vmatmul.mubr.f32.gmra.mrb[0].mxu0 %v2086
        %v2154 = vpop.f32.mrb[0].mxu0
        %v2155 = vadd.f32 0.0, %v2154
        %v2156 = vpop.f32.mrb[0].mxu0
        %2157 = vdwg.mxu0
        %2158 = vrot.lane.b32.xlu0 %v1339, 112
        %v2159 = vpop.permute.xlu0 %2158
        %2160 = vrot.lane.b32.xlu0 %v1412, 112
        %v2161 = vpop.permute.xlu0 %2160
        %v2162 = vsel %vm1499, %v2159, 0
        %v2164 = vsel %vm1499, %v2161, 0
        %2166 = vmatprep.subr.mxu0 0.0
        %2167 = vmatpush1.xpose.msra.mxu0 %v2164
        %2168 = vmatprep.subr.mxu0 0.0
        %2169 = vmatpush1.xpose.msra.mxu0 0.0
        %2170 = vmatprep.subr.mxu0 0.0
        %2171 = vmatpush1.xpose.msra.mxu0 0.0
        %2172 = vmatprep.subr.mxu0 0.0
        %2173 = vmatpush1.xpose.msra.mxu0 0.0
        %2174 = vmatprep.subr.mxu0 0.0
        %2175 = vmatpush1.xpose.msra.mxu0 0.0
        %2176 = vmatprep.subr.mxu0 0.0
        %2177 = vmatpush1.xpose.msra.mxu0 0.0
        %2178 = vmatprep.subr.mxu0 0.0
        %2179 = vmatpush1.xpose.msra.mxu0 0.0
        %2180 = vmatprep.subr.mxu0 0.0
        %2181 = vmatpush1.xpose.msra.mxu0 0.0
        %2182 = vmatprep.subr.mxu0 0.0
        %2183 = vmatpush1.xpose.msra.mxu0 0.0
        %2184 = vmatprep.subr.mxu0 0.0
        %2185 = vmatpush1.xpose.msra.mxu0 0.0
        %2186 = vmatprep.subr.mxu0 0.0
        %2187 = vmatpush1.xpose.msra.mxu0 0.0
        %2188 = vmatprep.subr.mxu0 0.0
        %2189 = vmatpush1.xpose.msra.mxu0 0.0
        %2190 = vmatprep.subr.mxu0 0.0
        %2191 = vmatpush1.xpose.msra.mxu0 0.0
        %2192 = vmatprep.subr.mxu0 0.0
        %2193 = vmatpush1.xpose.msra.mxu0 0.0
        %2194 = vmatprep.subr.mxu0 0.0
        %2195 = vmatpush1.xpose.msra.mxu0 0.0
        %2196 = vmatprep.subr.mxu0 0.0
        %2197 = vmatpush1.xpose.msra.mxu0 0.0
        %2198 = vmatprep.subr.mxu0 0.0
        %2199 = vmatpush1.xpose.msra.mxu0 0.0
        %2200 = vmatprep.subr.mxu0 0.0
        %2201 = vmatpush1.xpose.msra.mxu0 0.0
        %2202 = vmatprep.subr.mxu0 0.0
        %2203 = vmatpush1.xpose.msra.mxu0 0.0
        %2204 = vmatprep.subr.mxu0 0.0
        %2205 = vmatpush1.xpose.msra.mxu0 0.0
        %2206 = vmatprep.subr.mxu0 0.0
        %2207 = vmatpush1.xpose.msra.mxu0 0.0
        %2208 = vmatprep.subr.mxu0 0.0
        %2209 = vmatpush1.xpose.msra.mxu0 0.0
        %2210 = vmatprep.subr.mxu0 0.0
        %2211 = vmatpush1.xpose.msra.mxu0 0.0
        %2212 = vmatprep.subr.mxu0 0.0
        %2213 = vmatpush1.xpose.msra.mxu0 0.0
        %2214 = vmatprep.subr.mxu0 0.0
        %2215 = vmatpush1.xpose.msra.mxu0 0.0
        %2216 = vmatprep.subr.mxu0 0.0
        %2217 = vmatpush1.xpose.msra.mxu0 0.0
        %2218 = vmatprep.subr.mxu0 0.0
        %2219 = vmatpush1.xpose.msra.mxu0 0.0
        %2220 = vmatprep.subr.mxu0 0.0
        %2221 = vmatpush1.xpose.msra.mxu0 0.0
        %2222 = vmatprep.subr.mxu0 0.0
        %2223 = vmatpush1.xpose.msra.mxu0 0.0
        %2224 = vmatprep.subr.mxu0 0.0
        %2225 = vmatpush1.xpose.msra.mxu0 0.0
        %2226 = vmatprep.subr.mxu0 0.0
        %2227 = vmatpush1.xpose.msra.mxu0 0.0
        %2228 = vmatprep.subr.mxu0 0.0
        %2229 = vmatpush1.xpose.msra.mxu0 0.0
        %2230 = vmatprep.mubr.f32.mxu0 0.0
        %2231 = vmatmul.mubr.f32.gmra.mrb[0].mxu0 %v2162
        %v2232 = vpop.f32.mrb[0].mxu0
        %v2233 = vadd.f32 0.0, %v2232
        %v2234 = vpop.f32.mrb[0].mxu0
        %2235 = vdwg.mxu0
        %2236 = vrot.lane.b32.xlu0 %v1340, 112
        %v2237 = vpop.permute.xlu0 %2236
        %2238 = vrot.lane.b32.xlu0 %v1417, 112
        %v2239 = vpop.permute.xlu0 %2238
        %v2240 = vsel %vm1499, %v2237, 0
        %v2242 = vsel %vm1499, %v2239, 0
        %2244 = vmatprep.subr.mxu0 0.0
        %2245 = vmatpush1.xpose.msra.mxu0 %v2242
        %2246 = vmatprep.subr.mxu0 0.0
        %2247 = vmatpush1.xpose.msra.mxu0 0.0
        %2248 = vmatprep.subr.mxu0 0.0
        %2249 = vmatpush1.xpose.msra.mxu0 0.0
        %2250 = vmatprep.subr.mxu0 0.0
        %2251 = vmatpush1.xpose.msra.mxu0 0.0
        %2252 = vmatprep.subr.mxu0 0.0
        %2253 = vmatpush1.xpose.msra.mxu0 0.0
        %2254 = vmatprep.subr.mxu0 0.0
        %2255 = vmatpush1.xpose.msra.mxu0 0.0
        %2256 = vmatprep.subr.mxu0 0.0
        %2257 = vmatpush1.xpose.msra.mxu0 0.0
        %2258 = vmatprep.subr.mxu0 0.0
        %2259 = vmatpush1.xpose.msra.mxu0 0.0
        %2260 = vmatprep.subr.mxu0 0.0
        %2261 = vmatpush1.xpose.msra.mxu0 0.0
        %2262 = vmatprep.subr.mxu0 0.0
        %2263 = vmatpush1.xpose.msra.mxu0 0.0
        %2264 = vmatprep.subr.mxu0 0.0
        %2265 = vmatpush1.xpose.msra.mxu0 0.0
        %2266 = vmatprep.subr.mxu0 0.0
        %2267 = vmatpush1.xpose.msra.mxu0 0.0
        %2268 = vmatprep.subr.mxu0 0.0
        %2269 = vmatpush1.xpose.msra.mxu0 0.0
        %2270 = vmatprep.subr.mxu0 0.0
        %2271 = vmatpush1.xpose.msra.mxu0 0.0
        %2272 = vmatprep.subr.mxu0 0.0
        %2273 = vmatpush1.xpose.msra.mxu0 0.0
        %2274 = vmatprep.subr.mxu0 0.0
        %2275 = vmatpush1.xpose.msra.mxu0 0.0
        %2276 = vmatprep.subr.mxu0 0.0
        %2277 = vmatpush1.xpose.msra.mxu0 0.0
        %2278 = vmatprep.subr.mxu0 0.0
        %2279 = vmatpush1.xpose.msra.mxu0 0.0
        %2280 = vmatprep.subr.mxu0 0.0
        %2281 = vmatpush1.xpose.msra.mxu0 0.0
        %2282 = vmatprep.subr.mxu0 0.0
        %2283 = vmatpush1.xpose.msra.mxu0 0.0
        %2284 = vmatprep.subr.mxu0 0.0
        %2285 = vmatpush1.xpose.msra.mxu0 0.0
        %2286 = vmatprep.subr.mxu0 0.0
        %2287 = vmatpush1.xpose.msra.mxu0 0.0
        %2288 = vmatprep.subr.mxu0 0.0
        %2289 = vmatpush1.xpose.msra.mxu0 0.0
        %2290 = vmatprep.subr.mxu0 0.0
        %2291 = vmatpush1.xpose.msra.mxu0 0.0
        %2292 = vmatprep.subr.mxu0 0.0
        %2293 = vmatpush1.xpose.msra.mxu0 0.0
        %2294 = vmatprep.subr.mxu0 0.0
        %2295 = vmatpush1.xpose.msra.mxu0 0.0
        %2296 = vmatprep.subr.mxu0 0.0
        %2297 = vmatpush1.xpose.msra.mxu0 0.0
        %2298 = vmatprep.subr.mxu0 0.0
        %2299 = vmatpush1.xpose.msra.mxu0 0.0
        %2300 = vmatprep.subr.mxu0 0.0
        %2301 = vmatpush1.xpose.msra.mxu0 0.0
        %2302 = vmatprep.subr.mxu0 0.0
        %2303 = vmatpush1.xpose.msra.mxu0 0.0
        %2304 = vmatprep.subr.mxu0 0.0
        %2305 = vmatpush1.xpose.msra.mxu0 0.0
        %2306 = vmatprep.subr.mxu0 0.0
        %2307 = vmatpush1.xpose.msra.mxu0 0.0
        %2308 = vmatprep.mubr.f32.mxu0 0.0
        %2309 = vmatmul.mubr.f32.gmra.mrb[0].mxu0 %v2240
        %v2310 = vpop.f32.mrb[0].mxu0
        %v2311 = vadd.f32 0.0, %v2310
        %v2312 = vpop.f32.mrb[0].mxu0
        %2313 = vdwg.mxu0
        %v2314 = vsel %vm1652, -1e+18, %v2233
        %v2315 = vsel %vm1653, -1e+18, %v2311
        %v2316 = vsel %vm1499, %v2314, -inf
        %2317 = vmax.xlane.f32.xlu0 %v2316
        %v2318 = vpop.xlane.xlu0 %2317
        %v2319 = vsel %vm1499, %v2315, -inf
        %2320 = vmax.xlane.f32.xlu0 %v2319
        %v2321 = vpop.xlane.xlu0 %2320
        %v2322 = vsub.f32 %v2314, %v2318
        %v2323 = vsub.f32 %v2315, %v2321
        %v2324 = vmul.f32 %v2322, 1.442695
        %v2325 = vpow.pop %v2324
        %v2326 = vmul.f32 %v2323, 1.442695
        %v2327 = vpow.pop %v2326
        %v2328 = vsel %vm1499, %v2325, 0.0
        %2329 = vadd.xlane.f32.xlu0 %v2328
        %v2330 = vpop.xlane.xlu0 %2329
        %v2331 = vsel %vm1499, %v2327, 0.0
        %2332 = vadd.xlane.f32.xlu0 %v2331
        %v2333 = vpop.xlane.xlu0 %2332
        %v2334 = vrcp.pop %v2330
        %v2335 = vmul.f32 %v2325, %v2334
        %v2336 = vrcp.pop %v2333
        %v2337 = vmul.f32 %v2327, %v2336
        %2338 = vrot.lane.b32.xlu0 %v1491, 112
        %v2339 = vpop.permute.xlu0 %2338
        %v2342 = vsel %vm1499, %v2335, 0
        %2344 = vmatprep.subr.mxu0 0.0
        %2345 = vmatpush1.msra.mxu0 %v2339
        %2346 = vmatprep.subr.mxu0 0.0
        %2347 = vmatpush1.msra.mxu0 0.0
        %2348 = vmatprep.subr.mxu0 0.0
        %2349 = vmatpush1.msra.mxu0 0.0
        %2350 = vmatprep.subr.mxu0 0.0
        %2351 = vmatpush1.msra.mxu0 0.0
        %2352 = vmatprep.subr.mxu0 0.0
        %2353 = vmatpush1.msra.mxu0 0.0
        %2354 = vmatprep.subr.mxu0 0.0
        %2355 = vmatpush1.msra.mxu0 0.0
        %2356 = vmatprep.subr.mxu0 0.0
        %2357 = vmatpush1.msra.mxu0 0.0
        %2358 = vmatprep.subr.mxu0 0.0
        %2359 = vmatpush1.msra.mxu0 0.0
        %2360 = vmatprep.subr.mxu0 0.0
        %2361 = vmatpush1.msra.mxu0 0.0
        %2362 = vmatprep.subr.mxu0 0.0
        %2363 = vmatpush1.msra.mxu0 0.0
        %2364 = vmatprep.subr.mxu0 0.0
        %2365 = vmatpush1.msra.mxu0 0.0
        %2366 = vmatprep.subr.mxu0 0.0
        %2367 = vmatpush1.msra.mxu0 0.0
        %2368 = vmatprep.subr.mxu0 0.0
        %2369 = vmatpush1.msra.mxu0 0.0
        %2370 = vmatprep.subr.mxu0 0.0
        %2371 = vmatpush1.msra.mxu0 0.0
        %2372 = vmatprep.subr.mxu0 0.0
        %2373 = vmatpush1.msra.mxu0 0.0
        %2374 = vmatprep.subr.mxu0 0.0
        %2375 = vmatpush1.msra.mxu0 0.0
        %2376 = vmatprep.subr.mxu0 0.0
        %2377 = vmatpush1.msra.mxu0 0.0
        %2378 = vmatprep.subr.mxu0 0.0
        %2379 = vmatpush1.msra.mxu0 0.0
        %2380 = vmatprep.subr.mxu0 0.0
        %2381 = vmatpush1.msra.mxu0 0.0
        %2382 = vmatprep.subr.mxu0 0.0
        %2383 = vmatpush1.msra.mxu0 0.0
        %2384 = vmatprep.subr.mxu0 0.0
        %2385 = vmatpush1.msra.mxu0 0.0
        %2386 = vmatprep.subr.mxu0 0.0
        %2387 = vmatpush1.msra.mxu0 0.0
        %2388 = vmatprep.subr.mxu0 0.0
        %2389 = vmatpush1.msra.mxu0 0.0
        %2390 = vmatprep.subr.mxu0 0.0
        %2391 = vmatpush1.msra.mxu0 0.0
        %2392 = vmatprep.subr.mxu0 0.0
        %2393 = vmatpush1.msra.mxu0 0.0
        %2394 = vmatprep.subr.mxu0 0.0
        %2395 = vmatpush1.msra.mxu0 0.0
        %2396 = vmatprep.subr.mxu0 0.0
        %2397 = vmatpush1.msra.mxu0 0.0
        %2398 = vmatprep.subr.mxu0 0.0
        %2399 = vmatpush1.msra.mxu0 0.0
        %2400 = vmatprep.subr.mxu0 0.0
        %2401 = vmatpush1.msra.mxu0 0.0
        %2402 = vmatprep.subr.mxu0 0.0
        %2403 = vmatpush1.msra.mxu0 0.0
        %2404 = vmatprep.subr.mxu0 0.0
        %2405 = vmatpush1.msra.mxu0 0.0
        %2406 = vmatprep.subr.mxu0 0.0
        %2407 = vmatpush1.msra.mxu0 0.0
        %2408 = vmatprep.mubr.f32.mxu0 0.0
        %2409 = vmatmul.mubr.f32.gmra.mrb[0].mxu0 %v2342
        %v2410 = vpop.f32.mrb[0].mxu0
        %v2411 = vadd.f32 0.0, %v2410
        %v2412 = vpop.f32.mrb[0].mxu0
        %2413 = vdwg.mxu0
        %2414 = vrot.lane.b32.xlu0 %v1496, 112
        %v2415 = vpop.permute.xlu0 %2414
        %v2418 = vsel %vm1499, %v2337, 0
        %2420 = vmatprep.subr.mxu0 0.0
        %2421 = vmatpush1.msra.mxu0 %v2415
        %2422 = vmatprep.subr.mxu0 0.0
        %2423 = vmatpush1.msra.mxu0 0.0
        %2424 = vmatprep.subr.mxu0 0.0
        %2425 = vmatpush1.msra.mxu0 0.0
        %2426 = vmatprep.subr.mxu0 0.0
        %2427 = vmatpush1.msra.mxu0 0.0
        %2428 = vmatprep.subr.mxu0 0.0
        %2429 = vmatpush1.msra.mxu0 0.0
        %2430 = vmatprep.subr.mxu0 0.0
        %2431 = vmatpush1.msra.mxu0 0.0
        %2432 = vmatprep.subr.mxu0 0.0
        %2433 = vmatpush1.msra.mxu0 0.0
        %2434 = vmatprep.subr.mxu0 0.0
        %2435 = vmatpush1.msra.mxu0 0.0
        %2436 = vmatprep.subr.mxu0 0.0
        %2437 = vmatpush1.msra.mxu0 0.0
        %2438 = vmatprep.subr.mxu0 0.0
        %2439 = vmatpush1.msra.mxu0 0.0
        %2440 = vmatprep.subr.mxu0 0.0
        %2441 = vmatpush1.msra.mxu0 0.0
        %2442 = vmatprep.subr.mxu0 0.0
        %2443 = vmatpush1.msra.mxu0 0.0
        %2444 = vmatprep.subr.mxu0 0.0
        %2445 = vmatpush1.msra.mxu0 0.0
        %2446 = vmatprep.subr.mxu0 0.0
        %2447 = vmatpush1.msra.mxu0 0.0
        %2448 = vmatprep.subr.mxu0 0.0
        %2449 = vmatpush1.msra.mxu0 0.0
        %2450 = vmatprep.subr.mxu0 0.0
        %2451 = vmatpush1.msra.mxu0 0.0
        %2452 = vmatprep.subr.mxu0 0.0
        %2453 = vmatpush1.msra.mxu0 0.0
        %2454 = vmatprep.subr.mxu0 0.0
        %2455 = vmatpush1.msra.mxu0 0.0
        %2456 = vmatprep.subr.mxu0 0.0
        %2457 = vmatpush1.msra.mxu0 0.0
        %2458 = vmatprep.subr.mxu0 0.0
        %2459 = vmatpush1.msra.mxu0 0.0
        %2460 = vmatprep.subr.mxu0 0.0
        %2461 = vmatpush1.msra.mxu0 0.0
        %2462 = vmatprep.subr.mxu0 0.0
        %2463 = vmatpush1.msra.mxu0 0.0
        %2464 = vmatprep.subr.mxu0 0.0
        %2465 = vmatpush1.msra.mxu0 0.0
        %2466 = vmatprep.subr.mxu0 0.0
        %2467 = vmatpush1.msra.mxu0 0.0
        %2468 = vmatprep.subr.mxu0 0.0
        %2469 = vmatpush1.msra.mxu0 0.0
        %2470 = vmatprep.subr.mxu0 0.0
        %2471 = vmatpush1.msra.mxu0 0.0
        %2472 = vmatprep.subr.mxu0 0.0
        %2473 = vmatpush1.msra.mxu0 0.0
        %2474 = vmatprep.subr.mxu0 0.0
        %2475 = vmatpush1.msra.mxu0 0.0
        %2476 = vmatprep.subr.mxu0 0.0
        %2477 = vmatpush1.msra.mxu0 0.0
        %2478 = vmatprep.subr.mxu0 0.0
        %2479 = vmatpush1.msra.mxu0 0.0
        %2480 = vmatprep.subr.mxu0 0.0
        %2481 = vmatpush1.msra.mxu0 0.0
        %2482 = vmatprep.subr.mxu0 0.0
        %2483 = vmatpush1.msra.mxu0 0.0
        %2484 = vmatprep.mubr.f32.mxu0 0.0
        %2485 = vmatmul.mubr.f32.gmra.mrb[0].mxu0 %v2418
        %v2486 = vpop.f32.mrb[0].mxu0
        %v2487 = vadd.f32 0.0, %v2486
        %v2488 = vpop.f32.mrb[0].mxu0
        %2489 = vdwg.mxu0
        %2490 = vrot.lane.b32.xlu0 %v1339, 104
        %v2491 = vpop.permute.xlu0 %2490
        %2492 = vrot.lane.b32.xlu0 %v1412, 104
        %v2493 = vpop.permute.xlu0 %2492
        %v2494 = vsel %vm1499, %v2491, 0
        %v2496 = vsel %vm1499, %v2493, 0
        %2498 = vmatprep.subr.mxu0 0.0
        %2499 = vmatpush1.xpose.msra.mxu0 %v2496
        %2500 = vmatprep.subr.mxu0 0.0
        %2501 = vmatpush1.xpose.msra.mxu0 0.0
        %2502 = vmatprep.subr.mxu0 0.0
        %2503 = vmatpush1.xpose.msra.mxu0 0.0
        %2504 = vmatprep.subr.mxu0 0.0
        %2505 = vmatpush1.xpose.msra.mxu0 0.0
        %2506 = vmatprep.subr.mxu0 0.0
        %2507 = vmatpush1.xpose.msra.mxu0 0.0
        %2508 = vmatprep.subr.mxu0 0.0
        %2509 = vmatpush1.xpose.msra.mxu0 0.0
        %2510 = vmatprep.subr.mxu0 0.0
        %2511 = vmatpush1.xpose.msra.mxu0 0.0
        %2512 = vmatprep.subr.mxu0 0.0
        %2513 = vmatpush1.xpose.msra.mxu0 0.0
        %2514 = vmatprep.subr.mxu0 0.0
        %2515 = vmatpush1.xpose.msra.mxu0 0.0
        %2516 = vmatprep.subr.mxu0 0.0
        %2517 = vmatpush1.xpose.msra.mxu0 0.0
        %2518 = vmatprep.subr.mxu0 0.0
        %2519 = vmatpush1.xpose.msra.mxu0 0.0
        %2520 = vmatprep.subr.mxu0 0.0
        %2521 = vmatpush1.xpose.msra.mxu0 0.0
        %2522 = vmatprep.subr.mxu0 0.0
        %2523 = vmatpush1.xpose.msra.mxu0 0.0
        %2524 = vmatprep.subr.mxu0 0.0
        %2525 = vmatpush1.xpose.msra.mxu0 0.0
        %2526 = vmatprep.subr.mxu0 0.0
        %2527 = vmatpush1.xpose.msra.mxu0 0.0
        %2528 = vmatprep.subr.mxu0 0.0
        %2529 = vmatpush1.xpose.msra.mxu0 0.0
        %2530 = vmatprep.subr.mxu0 0.0
        %2531 = vmatpush1.xpose.msra.mxu0 0.0
        %2532 = vmatprep.subr.mxu0 0.0
        %2533 = vmatpush1.xpose.msra.mxu0 0.0
        %2534 = vmatprep.subr.mxu0 0.0
        %2535 = vmatpush1.xpose.msra.mxu0 0.0
        %2536 = vmatprep.subr.mxu0 0.0
        %2537 = vmatpush1.xpose.msra.mxu0 0.0
        %2538 = vmatprep.subr.mxu0 0.0
        %2539 = vmatpush1.xpose.msra.mxu0 0.0
        %2540 = vmatprep.subr.mxu0 0.0
        %2541 = vmatpush1.xpose.msra.mxu0 0.0
        %2542 = vmatprep.subr.mxu0 0.0
        %2543 = vmatpush1.xpose.msra.mxu0 0.0
        %2544 = vmatprep.subr.mxu0 0.0
        %2545 = vmatpush1.xpose.msra.mxu0 0.0
        %2546 = vmatprep.subr.mxu0 0.0
        %2547 = vmatpush1.xpose.msra.mxu0 0.0
        %2548 = vmatprep.subr.mxu0 0.0
        %2549 = vmatpush1.xpose.msra.mxu0 0.0
        %2550 = vmatprep.subr.mxu0 0.0
        %2551 = vmatpush1.xpose.msra.mxu0 0.0
        %2552 = vmatprep.subr.mxu0 0.0
        %2553 = vmatpush1.xpose.msra.mxu0 0.0
        %2554 = vmatprep.subr.mxu0 0.0
        %2555 = vmatpush1.xpose.msra.mxu0 0.0
        %2556 = vmatprep.subr.mxu0 0.0
        %2557 = vmatpush1.xpose.msra.mxu0 0.0
        %2558 = vmatprep.subr.mxu0 0.0
        %2559 = vmatpush1.xpose.msra.mxu0 0.0
        %2560 = vmatprep.subr.mxu0 0.0
        %2561 = vmatpush1.xpose.msra.mxu0 0.0
        %2562 = vmatprep.mubr.f32.mxu0 0.0
        %2563 = vmatmul.mubr.f32.gmra.mrb[0].mxu0 %v2494
        %v2564 = vpop.f32.mrb[0].mxu0
        %v2565 = vadd.f32 0.0, %v2564
        %v2566 = vpop.f32.mrb[0].mxu0
        %2567 = vdwg.mxu0
        %2568 = vrot.lane.b32.xlu0 %v1340, 104
        %v2569 = vpop.permute.xlu0 %2568
        %2570 = vrot.lane.b32.xlu0 %v1417, 104
        %v2571 = vpop.permute.xlu0 %2570
        %v2572 = vsel %vm1499, %v2569, 0
        %v2574 = vsel %vm1499, %v2571, 0
        %2576 = vmatprep.subr.mxu0 0.0
        %2577 = vmatpush1.xpose.msra.mxu0 %v2574
        %2578 = vmatprep.subr.mxu0 0.0
        %2579 = vmatpush1.xpose.msra.mxu0 0.0
        %2580 = vmatprep.subr.mxu0 0.0
        %2581 = vmatpush1.xpose.msra.mxu0 0.0
        %2582 = vmatprep.subr.mxu0 0.0
        %2583 = vmatpush1.xpose.msra.mxu0 0.0
        %2584 = vmatprep.subr.mxu0 0.0
        %2585 = vmatpush1.xpose.msra.mxu0 0.0
        %2586 = vmatprep.subr.mxu0 0.0
        %2587 = vmatpush1.xpose.msra.mxu0 0.0
        %2588 = vmatprep.subr.mxu0 0.0
        %2589 = vmatpush1.xpose.msra.mxu0 0.0
        %2590 = vmatprep.subr.mxu0 0.0
        %2591 = vmatpush1.xpose.msra.mxu0 0.0
        %2592 = vmatprep.subr.mxu0 0.0
        %2593 = vmatpush1.xpose.msra.mxu0 0.0
        %2594 = vmatprep.subr.mxu0 0.0
        %2595 = vmatpush1.xpose.msra.mxu0 0.0
        %2596 = vmatprep.subr.mxu0 0.0
        %2597 = vmatpush1.xpose.msra.mxu0 0.0
        %2598 = vmatprep.subr.mxu0 0.0
        %2599 = vmatpush1.xpose.msra.mxu0 0.0
        %2600 = vmatprep.subr.mxu0 0.0
        %2601 = vmatpush1.xpose.msra.mxu0 0.0
        %2602 = vmatprep.subr.mxu0 0.0
        %2603 = vmatpush1.xpose.msra.mxu0 0.0
        %2604 = vmatprep.subr.mxu0 0.0
        %2605 = vmatpush1.xpose.msra.mxu0 0.0
        %2606 = vmatprep.subr.mxu0 0.0
        %2607 = vmatpush1.xpose.msra.mxu0 0.0
        %2608 = vmatprep.subr.mxu0 0.0
        %2609 = vmatpush1.xpose.msra.mxu0 0.0
        %2610 = vmatprep.subr.mxu0 0.0
        %2611 = vmatpush1.xpose.msra.mxu0 0.0
        %2612 = vmatprep.subr.mxu0 0.0
        %2613 = vmatpush1.xpose.msra.mxu0 0.0
        %2614 = vmatprep.subr.mxu0 0.0
        %2615 = vmatpush1.xpose.msra.mxu0 0.0
        %2616 = vmatprep.subr.mxu0 0.0
        %2617 = vmatpush1.xpose.msra.mxu0 0.0
        %2618 = vmatprep.subr.mxu0 0.0
        %2619 = vmatpush1.xpose.msra.mxu0 0.0
        %2620 = vmatprep.subr.mxu0 0.0
        %2621 = vmatpush1.xpose.msra.mxu0 0.0
        %2622 = vmatprep.subr.mxu0 0.0
        %2623 = vmatpush1.xpose.msra.mxu0 0.0
        %2624 = vmatprep.subr.mxu0 0.0
        %2625 = vmatpush1.xpose.msra.mxu0 0.0
        %2626 = vmatprep.subr.mxu0 0.0
        %2627 = vmatpush1.xpose.msra.mxu0 0.0
        %2628 = vmatprep.subr.mxu0 0.0
        %2629 = vmatpush1.xpose.msra.mxu0 0.0
        %2630 = vmatprep.subr.mxu0 0.0
        %2631 = vmatpush1.xpose.msra.mxu0 0.0
        %2632 = vmatprep.subr.mxu0 0.0
        %2633 = vmatpush1.xpose.msra.mxu0 0.0
        %2634 = vmatprep.subr.mxu0 0.0
        %2635 = vmatpush1.xpose.msra.mxu0 0.0
        %2636 = vmatprep.subr.mxu0 0.0
        %2637 = vmatpush1.xpose.msra.mxu0 0.0
        %2638 = vmatprep.subr.mxu0 0.0
        %2639 = vmatpush1.xpose.msra.mxu0 0.0
        %2640 = vmatprep.mubr.f32.mxu0 0.0
        %2641 = vmatmul.mubr.f32.gmra.mrb[0].mxu0 %v2572
        %v2642 = vpop.f32.mrb[0].mxu0
        %v2643 = vadd.f32 0.0, %v2642
        %v2644 = vpop.f32.mrb[0].mxu0
        %2645 = vdwg.mxu0
        %v2646 = vsel %vm1652, -1e+18, %v2565
        %v2647 = vsel %vm1653, -1e+18, %v2643
        %v2648 = vsel %vm1499, %v2646, -inf
        %2649 = vmax.xlane.f32.xlu0 %v2648
        %v2650 = vpop.xlane.xlu0 %2649
        %v2651 = vsel %vm1499, %v2647, -inf
        %2652 = vmax.xlane.f32.xlu0 %v2651
        %v2653 = vpop.xlane.xlu0 %2652
        %v2654 = vsub.f32 %v2646, %v2650
        %v2655 = vsub.f32 %v2647, %v2653
        %v2656 = vmul.f32 %v2654, 1.442695
        %v2657 = vpow.pop %v2656
        %v2658 = vmul.f32 %v2655, 1.442695
        %v2659 = vpow.pop %v2658
        %v2660 = vsel %vm1499, %v2657, 0.0
        %2661 = vadd.xlane.f32.xlu0 %v2660
        %v2662 = vpop.xlane.xlu0 %2661
        %v2663 = vsel %vm1499, %v2659, 0.0
        %2664 = vadd.xlane.f32.xlu0 %v2663
        %v2665 = vpop.xlane.xlu0 %2664
        %v2666 = vrcp.pop %v2662
        %v2667 = vmul.f32 %v2657, %v2666
        %v2668 = vrcp.pop %v2665
        %v2669 = vmul.f32 %v2659, %v2668
        %2670 = vrot.lane.b32.xlu0 %v1491, 104
        %v2671 = vpop.permute.xlu0 %2670
        %v2674 = vsel %vm1499, %v2667, 0
        %2676 = vmatprep.subr.mxu0 0.0
        %2677 = vmatpush1.msra.mxu0 %v2671
        %2678 = vmatprep.subr.mxu0 0.0
        %2679 = vmatpush1.msra.mxu0 0.0
        %2680 = vmatprep.subr.mxu0 0.0
        %2681 = vmatpush1.msra.mxu0 0.0
        %2682 = vmatprep.subr.mxu0 0.0
        %2683 = vmatpush1.msra.mxu0 0.0
        %2684 = vmatprep.subr.mxu0 0.0
        %2685 = vmatpush1.msra.mxu0 0.0
        %2686 = vmatprep.subr.mxu0 0.0
        %2687 = vmatpush1.msra.mxu0 0.0
        %2688 = vmatprep.subr.mxu0 0.0
        %2689 = vmatpush1.msra.mxu0 0.0
        %2690 = vmatprep.subr.mxu0 0.0
        %2691 = vmatpush1.msra.mxu0 0.0
        %2692 = vmatprep.subr.mxu0 0.0
        %2693 = vmatpush1.msra.mxu0 0.0
        %2694 = vmatprep.subr.mxu0 0.0
        %2695 = vmatpush1.msra.mxu0 0.0
        %2696 = vmatprep.subr.mxu0 0.0
        %2697 = vmatpush1.msra.mxu0 0.0
        %2698 = vmatprep.subr.mxu0 0.0
        %2699 = vmatpush1.msra.mxu0 0.0
        %2700 = vmatprep.subr.mxu0 0.0
        %2701 = vmatpush1.msra.mxu0 0.0
        %2702 = vmatprep.subr.mxu0 0.0
        %2703 = vmatpush1.msra.mxu0 0.0
        %2704 = vmatprep.subr.mxu0 0.0
        %2705 = vmatpush1.msra.mxu0 0.0
        %2706 = vmatprep.subr.mxu0 0.0
        %2707 = vmatpush1.msra.mxu0 0.0
        %2708 = vmatprep.subr.mxu0 0.0
        %2709 = vmatpush1.msra.mxu0 0.0
        %2710 = vmatprep.subr.mxu0 0.0
        %2711 = vmatpush1.msra.mxu0 0.0
        %2712 = vmatprep.subr.mxu0 0.0
        %2713 = vmatpush1.msra.mxu0 0.0
        %2714 = vmatprep.subr.mxu0 0.0
        %2715 = vmatpush1.msra.mxu0 0.0
        %2716 = vmatprep.subr.mxu0 0.0
        %2717 = vmatpush1.msra.mxu0 0.0
        %2718 = vmatprep.subr.mxu0 0.0
        %2719 = vmatpush1.msra.mxu0 0.0
        %2720 = vmatprep.subr.mxu0 0.0
        %2721 = vmatpush1.msra.mxu0 0.0
        %2722 = vmatprep.subr.mxu0 0.0
        %2723 = vmatpush1.msra.mxu0 0.0
        %2724 = vmatprep.subr.mxu0 0.0
        %2725 = vmatpush1.msra.mxu0 0.0
        %2726 = vmatprep.subr.mxu0 0.0
        %2727 = vmatpush1.msra.mxu0 0.0
        %2728 = vmatprep.subr.mxu0 0.0
        %2729 = vmatpush1.msra.mxu0 0.0
        %2730 = vmatprep.subr.mxu0 0.0
        %2731 = vmatpush1.msra.mxu0 0.0
        %2732 = vmatprep.subr.mxu0 0.0
        %2733 = vmatpush1.msra.mxu0 0.0
        %2734 = vmatprep.subr.mxu0 0.0
        %2735 = vmatpush1.msra.mxu0 0.0
        %2736 = vmatprep.subr.mxu0 0.0
        %2737 = vmatpush1.msra.mxu0 0.0
        %2738 = vmatprep.subr.mxu0 0.0
        %2739 = vmatpush1.msra.mxu0 0.0
        %2740 = vmatprep.mubr.f32.mxu0 0.0
        %2741 = vmatmul.mubr.f32.gmra.mrb[0].mxu0 %v2674
        %v2742 = vpop.f32.mrb[0].mxu0
        %v2743 = vadd.f32 0.0, %v2742
        %v2744 = vpop.f32.mrb[0].mxu0
        %2745 = vdwg.mxu0
        %2746 = vrot.lane.b32.xlu0 %v1496, 104
        %v2747 = vpop.permute.xlu0 %2746
        %v2750 = vsel %vm1499, %v2669, 0
        %2752 = vmatprep.subr.mxu0 0.0
        %2753 = vmatpush1.msra.mxu0 %v2747
        %2754 = vmatprep.subr.mxu0 0.0
        %2755 = vmatpush1.msra.mxu0 0.0
        %2756 = vmatprep.subr.mxu0 0.0
        %2757 = vmatpush1.msra.mxu0 0.0
        %2758 = vmatprep.subr.mxu0 0.0
        %2759 = vmatpush1.msra.mxu0 0.0
        %2760 = vmatprep.subr.mxu0 0.0
        %2761 = vmatpush1.msra.mxu0 0.0
        %2762 = vmatprep.subr.mxu0 0.0
        %2763 = vmatpush1.msra.mxu0 0.0
        %2764 = vmatprep.subr.mxu0 0.0
        %2765 = vmatpush1.msra.mxu0 0.0
        %2766 = vmatprep.subr.mxu0 0.0
        %2767 = vmatpush1.msra.mxu0 0.0
        %2768 = vmatprep.subr.mxu0 0.0
        %2769 = vmatpush1.msra.mxu0 0.0
        %2770 = vmatprep.subr.mxu0 0.0
        %2771 = vmatpush1.msra.mxu0 0.0
        %2772 = vmatprep.subr.mxu0 0.0
        %2773 = vmatpush1.msra.mxu0 0.0
        %2774 = vmatprep.subr.mxu0 0.0
        %2775 = vmatpush1.msra.mxu0 0.0
        %2776 = vmatprep.subr.mxu0 0.0
        %2777 = vmatpush1.msra.mxu0 0.0
        %2778 = vmatprep.subr.mxu0 0.0
        %2779 = vmatpush1.msra.mxu0 0.0
        %2780 = vmatprep.subr.mxu0 0.0
        %2781 = vmatpush1.msra.mxu0 0.0
        %2782 = vmatprep.subr.mxu0 0.0
        %2783 = vmatpush1.msra.mxu0 0.0
        %2784 = vmatprep.subr.mxu0 0.0
        %2785 = vmatpush1.msra.mxu0 0.0
        %2786 = vmatprep.subr.mxu0 0.0
        %2787 = vmatpush1.msra.mxu0 0.0
        %2788 = vmatprep.subr.mxu0 0.0
        %2789 = vmatpush1.msra.mxu0 0.0
        %2790 = vmatprep.subr.mxu0 0.0
        %2791 = vmatpush1.msra.mxu0 0.0
        %2792 = vmatprep.subr.mxu0 0.0
        %2793 = vmatpush1.msra.mxu0 0.0
        %2794 = vmatprep.subr.mxu0 0.0
        %2795 = vmatpush1.msra.mxu0 0.0
        %2796 = vmatprep.subr.mxu0 0.0
        %2797 = vmatpush1.msra.mxu0 0.0
        %2798 = vmatprep.subr.mxu0 0.0
        %2799 = vmatpush1.msra.mxu0 0.0
        %2800 = vmatprep.subr.mxu0 0.0
        %2801 = vmatpush1.msra.mxu0 0.0
        %2802 = vmatprep.subr.mxu0 0.0
        %2803 = vmatpush1.msra.mxu0 0.0
        %2804 = vmatprep.subr.mxu0 0.0
        %2805 = vmatpush1.msra.mxu0 0.0
        %2806 = vmatprep.subr.mxu0 0.0
        %2807 = vmatpush1.msra.mxu0 0.0
        %2808 = vmatprep.subr.mxu0 0.0
        %2809 = vmatpush1.msra.mxu0 0.0
        %2810 = vmatprep.subr.mxu0 0.0
        %2811 = vmatpush1.msra.mxu0 0.0
        %2812 = vmatprep.subr.mxu0 0.0
        %2813 = vmatpush1.msra.mxu0 0.0
        %2814 = vmatprep.subr.mxu0 0.0
        %2815 = vmatpush1.msra.mxu0 0.0
        %2816 = vmatprep.mubr.f32.mxu0 0.0
        %2817 = vmatmul.mubr.f32.gmra.mrb[0].mxu0 %v2750
        %v2818 = vpop.f32.mrb[0].mxu0
        %v2819 = vadd.f32 0.0, %v2818
        %v2820 = vpop.f32.mrb[0].mxu0
        %2821 = vdwg.mxu0
        %2824 = vrot.lane.b32.xlu0 %v2078, 8
        %v2825 = vpop.permute.xlu0 %2824
        %2826 = vrot.lane.b32.xlu0 %v2155, 8
        %v2827 = vpop.permute.xlu0 %2826
        %2832 = vrot.lane.b32.xlu0 %v2411, 16
        %v2833 = vpop.permute.xlu0 %2832
        %2834 = vrot.lane.b32.xlu0 %v2487, 16
        %v2835 = vpop.permute.xlu0 %2834
        %2840 = vrot.lane.b32.xlu0 %v2743, 24
        %v2841 = vpop.permute.xlu0 %2840
        %2842 = vrot.lane.b32.xlu0 %v2819, 24
        %v2843 = vpop.permute.xlu0 %2842
        %v2846 = vsel %vm1499, %v1748, %v2825
        %v2847 = vsel %vm1499, %v1821, %v2827
        %vm2848 = vcmask 130048
        %v2849 = vsel %vm2848, %v2846, %v2833
        %v2850 = vsel %vm2848, %v2847, %v2835
        %vm2851 = vcmask 195584
        %v2852 = vsel %vm2851, %v2849, %v2841
        %v2853 = vsel %vm2851, %v2850, %v2843
        %v2854 = vld [vmem:[%s1065] sm:$0xff]
        %v2855 = vld [vmem:[%s1065 + $0x8] sm:$0xff]
        %v2856 = vld [vmem:[%s1065 + $0x10] sm:$0xff]
        %v2857 = vld [vmem:[%s1065 + $0x18] sm:$0xff]
        %v2859 = vsel %vm1197, %v2852, 0
        %v2862 = vsel %vm1197, %v2853, 0
        %2864 = vmatprep.subr.mxu0 0.0
        %2865 = vmatpush1.msra.mxu0 %v2854
        %2866 = vmatprep.subr.mxu0 0.0
        %2867 = vmatpush1.msra.mxu0 %v2855
        %2868 = vmatprep.subr.mxu0 0.0
        %2869 = vmatpush1.msra.mxu0 %v2856
        %2870 = vmatprep.subr.mxu0 0.0
        %2871 = vmatpush1.msra.mxu0 %v2857
        %2872 = vmatprep.subr.mxu0 0.0
        %2873 = vmatpush1.msra.mxu0 0.0
        %2874 = vmatprep.subr.mxu0 0.0
        %2875 = vmatpush1.msra.mxu0 0.0
        %2876 = vmatprep.subr.mxu0 0.0
        %2877 = vmatpush1.msra.mxu0 0.0
        %2878 = vmatprep.subr.mxu0 0.0
        %2879 = vmatpush1.msra.mxu0 0.0
        %2880 = vmatprep.subr.mxu0 0.0
        %2881 = vmatpush1.msra.mxu0 0.0
        %2882 = vmatprep.subr.mxu0 0.0
        %2883 = vmatpush1.msra.mxu0 0.0
        %2884 = vmatprep.subr.mxu0 0.0
        %2885 = vmatpush1.msra.mxu0 0.0
        %2886 = vmatprep.subr.mxu0 0.0
        %2887 = vmatpush1.msra.mxu0 0.0
        %2888 = vmatprep.subr.mxu0 0.0
        %2889 = vmatpush1.msra.mxu0 0.0
        %2890 = vmatprep.subr.mxu0 0.0
        %2891 = vmatpush1.msra.mxu0 0.0
        %2892 = vmatprep.subr.mxu0 0.0
        %2893 = vmatpush1.msra.mxu0 0.0
        %2894 = vmatprep.subr.mxu0 0.0
        %2895 = vmatpush1.msra.mxu0 0.0
        %2896 = vmatprep.subr.mxu0 0.0
        %2897 = vmatpush1.msra.mxu0 0.0
        %2898 = vmatprep.subr.mxu0 0.0
        %2899 = vmatpush1.msra.mxu0 0.0
        %2900 = vmatprep.subr.mxu0 0.0
        %2901 = vmatpush1.msra.mxu0 0.0
        %2902 = vmatprep.subr.mxu0 0.0
        %2903 = vmatpush1.msra.mxu0 0.0
        %2904 = vmatprep.subr.mxu0 0.0
        %2905 = vmatpush1.msra.mxu0 0.0
        %2906 = vmatprep.subr.mxu0 0.0
        %2907 = vmatpush1.msra.mxu0 0.0
        %2908 = vmatprep.subr.mxu0 0.0
        %2909 = vmatpush1.msra.mxu0 0.0
        %2910 = vmatprep.subr.mxu0 0.0
        %2911 = vmatpush1.msra.mxu0 0.0
        %2912 = vmatprep.subr.mxu0 0.0
        %2913 = vmatpush1.msra.mxu0 0.0
        %2914 = vmatprep.subr.mxu0 0.0
        %2915 = vmatpush1.msra.mxu0 0.0
        %2916 = vmatprep.subr.mxu0 0.0
        %2917 = vmatpush1.msra.mxu0 0.0
        %2918 = vmatprep.subr.mxu0 0.0
        %2919 = vmatpush1.msra.mxu0 0.0
        %2920 = vmatprep.subr.mxu0 0.0
        %2921 = vmatpush1.msra.mxu0 0.0
        %2922 = vmatprep.subr.mxu0 0.0
        %2923 = vmatpush1.msra.mxu0 0.0
        %2924 = vmatprep.subr.mxu0 0.0
        %2925 = vmatpush1.msra.mxu0 0.0
        %2926 = vmatprep.subr.mxu0 0.0
        %2927 = vmatpush1.msra.mxu0 0.0
        %2928 = vmatprep.mubr.f32.mxu0 0.0
        %2929 = vmatmul.mubr.f32.gmra.mrb[0].mxu0 %v2859
        %v2930 = vpop.f32.mrb[0].mxu0
        %v2931 = vadd.f32 0.0, %v2930
        %v2932 = vpop.f32.mrb[0].mxu0
        %2933 = vmatprep.mubr.f32.mxu0 0.0
        %2934 = vmatmul.mubr.f32.gmra.mrb[0].mxu0 %v2862
        %v2935 = vpop.f32.mrb[0].mxu0
        %v2936 = vadd.f32 0.0, %v2935
        %v2937 = vpop.f32.mrb[0].mxu0
        %2938 = vdwg.mxu0
        %v2939 = vadd.f32 %v1193, %v2931
        %v2940 = vadd.f32 %v1194, %v2936
        %v2941 = vsel %vm1197, %v2939, 0.0
        %2942 = vadd.xlane.f32.xlu0 %v2941
        %v2943 = vpop.xlane.xlu0 %2942
        %v2944 = vsel %vm1197, %v2940, 0.0
        %2945 = vadd.xlane.f32.xlu0 %v2944
        %v2946 = vpop.xlane.xlu0 %2945
        %v2947 = vmul.f32 %v2943, %v1204
        %v2948 = vmul.f32 %v2946, %v1204
        %v2949 = vsub.f32 %v2939, %v2947
        %v2950 = vsub.f32 %v2940, %v2948
        %v2951 = vmul.f32 %v2949, %v2949
        %v2952 = vmul.f32 %v2950, %v2950
        %v2953 = vsel %vm1197, %v2951, 0.0
        %2954 = vadd.xlane.f32.xlu0 %v2953
        %v2955 = vpop.xlane.xlu0 %2954
        %v2956 = vsel %vm1197, %v2952, 0.0
        %2957 = vadd.xlane.f32.xlu0 %v2956
        %v2958 = vpop.xlane.xlu0 %2957
        %v2959 = vmul.f32 %v2955, %v1217
        %v2960 = vmul.f32 %v2958, %v1217
        %v2961 = vrsqrt.pop %v2959
        %v2962 = vmul.f32 %v2959, %v2961
        %vm2963 = vcmp.eq.f32.partialorder %v2959, inf
        %v2964 = vsel %vm2963, %v2959, %v2962
        %vm2965 = vcmp.eq.f32.partialorder %v2959, 0.0
        %v2966 = vand.u32 %v2959, 2147483648
        %v2967 = vsel %vm2965, %v2966, %v2964
        %v2968 = vrsqrt.pop %v2960
        %v2969 = vmul.f32 %v2960, %v2968
        %vm2970 = vcmp.eq.f32.partialorder %v2960, inf
        %v2971 = vsel %vm2970, %v2960, %v2969
        %vm2972 = vcmp.eq.f32.partialorder %v2960, 0.0
        %v2973 = vand.u32 %v2960, 2147483648
        %v2974 = vsel %vm2972, %v2973, %v2971
        %v2975 = vlaneseq
        %v2976 = vshrl.u32 %v2975, 7
        %v2977 = vsub.s32 1, %v2976
        %v2978 = vrot.slane %v1195, %v2977
        %v2979 = vmul.f32 %v2978, %v2949
        %v2980 = vmul.f32 %v2978, %v2950
        %v2981 = vadd.f32 %v2967, 1e-06
        %v2982 = vadd.f32 %v2974, 1e-06
        %v2983 = vrcp.pop %v2981
        %v2984 = vmul.f32 %v2979, %v2983
        %v2985 = vrcp.pop %v2982
        %v2986 = vmul.f32 %v2980, %v2985
        %v2987 = vlaneseq
        %v2988 = vshrl.u32 %v2987, 7
        %v2989 = vsub.s32 1, %v2988
        %v2990 = vrot.slane %v1196, %v2989
        %v2991 = vadd.f32 %v2984, %v2990
        %v2992 = vadd.f32 %v2986, %v2990
        %v2993 = vld [vmem:[#allocation8] sm:$0xff]
        %v2994 = vld [vmem:[#allocation8 + $0x8] sm:$0xff]
        %v2995 = vld [vmem:[#allocation11] sm:$0xff]
        %v2996 = vld [vmem:[#allocation11 + $0x8] sm:$0xff]
        %v2997 = vld [vmem:[%s1070] sm:$0xff]
        %v2998 = vld [vmem:[%s1070 + $0x8] sm:$0xff]
        %v2999 = vld [vmem:[%s1070 + $0x10] sm:$0xff]
        %v3000 = vld [vmem:[%s1070 + $0x18] sm:$0xff]
        %v3002 = vsel %vm1197, %v2991, 0
        %v3005 = vsel %vm1197, %v2992, 0
        %3007 = vmatprep.subr.mxu0 0.0
        %3008 = vmatpush1.msra.mxu0 %v2997
        %3009 = vmatprep.subr.mxu0 0.0
        %3010 = vmatpush1.msra.mxu0 %v2998
        %3011 = vmatprep.subr.mxu0 0.0
        %3012 = vmatpush1.msra.mxu0 %v2999
        %3013 = vmatprep.subr.mxu0 0.0
        %3014 = vmatpush1.msra.mxu0 %v3000
        %3015 = vmatprep.subr.mxu0 0.0
        %3016 = vmatpush1.msra.mxu0 0.0
        %3017 = vmatprep.subr.mxu0 0.0
        %3018 = vmatpush1.msra.mxu0 0.0
        %3019 = vmatprep.subr.mxu0 0.0
        %3020 = vmatpush1.msra.mxu0 0.0
        %3021 = vmatprep.subr.mxu0 0.0
        %3022 = vmatpush1.msra.mxu0 0.0
        %3023 = vmatprep.subr.mxu0 0.0
        %3024 = vmatpush1.msra.mxu0 0.0
        %3025 = vmatprep.subr.mxu0 0.0
        %3026 = vmatpush1.msra.mxu0 0.0
        %3027 = vmatprep.subr.mxu0 0.0
        %3028 = vmatpush1.msra.mxu0 0.0
        %3029 = vmatprep.subr.mxu0 0.0
        %3030 = vmatpush1.msra.mxu0 0.0
        %3031 = vmatprep.subr.mxu0 0.0
        %3032 = vmatpush1.msra.mxu0 0.0
        %3033 = vmatprep.subr.mxu0 0.0
        %3034 = vmatpush1.msra.mxu0 0.0
        %3035 = vmatprep.subr.mxu0 0.0
        %3036 = vmatpush1.msra.mxu0 0.0
        %3037 = vmatprep.subr.mxu0 0.0
        %3038 = vmatpush1.msra.mxu0 0.0
        %3039 = vmatprep.subr.mxu0 0.0
        %3040 = vmatpush1.msra.mxu0 0.0
        %3041 = vmatprep.subr.mxu0 0.0
        %3042 = vmatpush1.msra.mxu0 0.0
        %3043 = vmatprep.subr.mxu0 0.0
        %3044 = vmatpush1.msra.mxu0 0.0
        %3045 = vmatprep.subr.mxu0 0.0
        %3046 = vmatpush1.msra.mxu0 0.0
        %3047 = vmatprep.subr.mxu0 0.0
        %3048 = vmatpush1.msra.mxu0 0.0
        %3049 = vmatprep.subr.mxu0 0.0
        %3050 = vmatpush1.msra.mxu0 0.0
        %3051 = vmatprep.subr.mxu0 0.0
        %3052 = vmatpush1.msra.mxu0 0.0
        %3053 = vmatprep.subr.mxu0 0.0
        %3054 = vmatpush1.msra.mxu0 0.0
        %3055 = vmatprep.subr.mxu0 0.0
        %3056 = vmatpush1.msra.mxu0 0.0
        %3057 = vmatprep.subr.mxu0 0.0
        %3058 = vmatpush1.msra.mxu0 0.0
        %3059 = vmatprep.subr.mxu0 0.0
        %3060 = vmatpush1.msra.mxu0 0.0
        %3061 = vmatprep.subr.mxu0 0.0
        %3062 = vmatpush1.msra.mxu0 0.0
        %3063 = vmatprep.subr.mxu0 0.0
        %3064 = vmatpush1.msra.mxu0 0.0
        %3065 = vmatprep.subr.mxu0 0.0
        %3066 = vmatpush1.msra.mxu0 0.0
        %3067 = vmatprep.subr.mxu0 0.0
        %3068 = vmatpush1.msra.mxu0 0.0
        %3069 = vmatprep.subr.mxu0 0.0
        %3070 = vmatpush1.msra.mxu0 0.0
        %3071 = vmatprep.mubr.f32.mxu0 0.0
        %3072 = vmatmul.mubr.f32.gmra.mrb[0].mxu0 %v3002
        %v3073 = vpop.f32.mrb[0].mxu0
        %v3074 = vadd.f32 0.0, %v3073
        %v3075 = vpop.f32.mrb[0].mxu0
        %3076 = vmatprep.mubr.f32.mxu0 0.0
        %3077 = vmatmul.mubr.f32.gmra.mrb[0].mxu0 %v3005
        %v3078 = vpop.f32.mrb[0].mxu0
        %v3079 = vadd.f32 0.0, %v3078
        %v3080 = vpop.f32.mrb[0].mxu0
        %3081 = vdwg.mxu0
        %v3082 = vmul.f32 %v3074, 0.35355338
        %v3083 = vmul.f32 %v3079, 0.35355338
        %v3084 = vld [vmem:[%s1075] sm:$0xff]
        %v3085 = vld [vmem:[%s1075 + $0x8] sm:$0xff]
        %v3086 = vld [vmem:[%s1075 + $0x10] sm:$0xff]
        %v3087 = vld [vmem:[%s1075 + $0x18] sm:$0xff]
        %v3089 = vsel %vm1197, %v2993, 0
        %v3092 = vsel %vm1197, %v2994, 0
        %3094 = vmatprep.subr.mxu0 0.0
        %3095 = vmatpush1.msra.mxu0 %v3084
        %3096 = vmatprep.subr.mxu0 0.0
        %3097 = vmatpush1.msra.mxu0 %v3085
        %3098 = vmatprep.subr.mxu0 0.0
        %3099 = vmatpush1.msra.mxu0 %v3086
        %3100 = vmatprep.subr.mxu0 0.0
        %3101 = vmatpush1.msra.mxu0 %v3087
        %3102 = vmatprep.subr.mxu0 0.0
        %3103 = vmatpush1.msra.mxu0 0.0
        %3104 = vmatprep.subr.mxu0 0.0
        %3105 = vmatpush1.msra.mxu0 0.0
        %3106 = vmatprep.subr.mxu0 0.0
        %3107 = vmatpush1.msra.mxu0 0.0
        %3108 = vmatprep.subr.mxu0 0.0
        %3109 = vmatpush1.msra.mxu0 0.0
        %3110 = vmatprep.subr.mxu0 0.0
        %3111 = vmatpush1.msra.mxu0 0.0
        %3112 = vmatprep.subr.mxu0 0.0
        %3113 = vmatpush1.msra.mxu0 0.0
        %3114 = vmatprep.subr.mxu0 0.0
        %3115 = vmatpush1.msra.mxu0 0.0
        %3116 = vmatprep.subr.mxu0 0.0
        %3117 = vmatpush1.msra.mxu0 0.0
        %3118 = vmatprep.subr.mxu0 0.0
        %3119 = vmatpush1.msra.mxu0 0.0
        %3120 = vmatprep.subr.mxu0 0.0
        %3121 = vmatpush1.msra.mxu0 0.0
        %3122 = vmatprep.subr.mxu0 0.0
        %3123 = vmatpush1.msra.mxu0 0.0
        %3124 = vmatprep.subr.mxu0 0.0
        %3125 = vmatpush1.msra.mxu0 0.0
        %3126 = vmatprep.subr.mxu0 0.0
        %3127 = vmatpush1.msra.mxu0 0.0
        %3128 = vmatprep.subr.mxu0 0.0
        %3129 = vmatpush1.msra.mxu0 0.0
        %3130 = vmatprep.subr.mxu0 0.0
        %3131 = vmatpush1.msra.mxu0 0.0
        %3132 = vmatprep.subr.mxu0 0.0
        %3133 = vmatpush1.msra.mxu0 0.0
        %3134 = vmatprep.subr.mxu0 0.0
        %3135 = vmatpush1.msra.mxu0 0.0
        %3136 = vmatprep.subr.mxu0 0.0
        %3137 = vmatpush1.msra.mxu0 0.0
        %3138 = vmatprep.subr.mxu0 0.0
        %3139 = vmatpush1.msra.mxu0 0.0
        %3140 = vmatprep.subr.mxu0 0.0
        %3141 = vmatpush1.msra.mxu0 0.0
        %3142 = vmatprep.subr.mxu0 0.0
        %3143 = vmatpush1.msra.mxu0 0.0
        %3144 = vmatprep.subr.mxu0 0.0
        %3145 = vmatpush1.msra.mxu0 0.0
        %3146 = vmatprep.subr.mxu0 0.0
        %3147 = vmatpush1.msra.mxu0 0.0
        %3148 = vmatprep.subr.mxu0 0.0
        %3149 = vmatpush1.msra.mxu0 0.0
        %3150 = vmatprep.subr.mxu0 0.0
        %3151 = vmatpush1.msra.mxu0 0.0
        %3152 = vmatprep.subr.mxu0 0.0
        %3153 = vmatpush1.msra.mxu0 0.0
        %3154 = vmatprep.subr.mxu0 0.0
        %3155 = vmatpush1.msra.mxu0 0.0
        %3156 = vmatprep.subr.mxu0 0.0
        %3157 = vmatpush1.msra.mxu0 0.0
        %3158 = vmatprep.mubr.f32.mxu0 0.0
        %3159 = vmatmul.mubr.f32.gmra.mrb[0].mxu0 %v3089
        %v3160 = vpop.f32.mrb[0].mxu0
        %v3161 = vadd.f32 0.0, %v3160
        %v3162 = vpop.f32.mrb[0].mxu0
        %3163 = vmatprep.mubr.f32.mxu0 0.0
        %3164 = vmatmul.mubr.f32.gmra.mrb[0].mxu0 %v3092
        %v3165 = vpop.f32.mrb[0].mxu0
        %v3166 = vadd.f32 0.0, %v3165
        %v3167 = vpop.f32.mrb[0].mxu0
        %3168 = vdwg.mxu0
        %v3169 = vld [vmem:[%s1080] sm:$0xff]
        %v3170 = vld [vmem:[%s1080 + $0x8] sm:$0xff]
        %v3171 = vld [vmem:[%s1080 + $0x10] sm:$0xff]
        %v3172 = vld [vmem:[%s1080 + $0x18] sm:$0xff]
        %3173 = vmatprep.subr.mxu0 0.0
        %3174 = vmatpush1.msra.mxu0 %v3169
        %3175 = vmatprep.subr.mxu0 0.0
        %3176 = vmatpush1.msra.mxu0 %v3170
        %3177 = vmatprep.subr.mxu0 0.0
        %3178 = vmatpush1.msra.mxu0 %v3171
        %3179 = vmatprep.subr.mxu0 0.0
        %3180 = vmatpush1.msra.mxu0 %v3172
        %3181 = vmatprep.subr.mxu0 0.0
        %3182 = vmatpush1.msra.mxu0 0.0
        %3183 = vmatprep.subr.mxu0 0.0
        %3184 = vmatpush1.msra.mxu0 0.0
        %3185 = vmatprep.subr.mxu0 0.0
        %3186 = vmatpush1.msra.mxu0 0.0
        %3187 = vmatprep.subr.mxu0 0.0
        %3188 = vmatpush1.msra.mxu0 0.0
        %3189 = vmatprep.subr.mxu0 0.0
        %3190 = vmatpush1.msra.mxu0 0.0
        %3191 = vmatprep.subr.mxu0 0.0
        %3192 = vmatpush1.msra.mxu0 0.0
        %3193 = vmatprep.subr.mxu0 0.0
        %3194 = vmatpush1.msra.mxu0 0.0
        %3195 = vmatprep.subr.mxu0 0.0
        %3196 = vmatpush1.msra.mxu0 0.0
        %3197 = vmatprep.subr.mxu0 0.0
        %3198 = vmatpush1.msra.mxu0 0.0
        %3199 = vmatprep.subr.mxu0 0.0
        %3200 = vmatpush1.msra.mxu0 0.0
        %3201 = vmatprep.subr.mxu0 0.0
        %3202 = vmatpush1.msra.mxu0 0.0
        %3203 = vmatprep.subr.mxu0 0.0
        %3204 = vmatpush1.msra.mxu0 0.0
        %3205 = vmatprep.subr.mxu0 0.0
        %3206 = vmatpush1.msra.mxu0 0.0
        %3207 = vmatprep.subr.mxu0 0.0
        %3208 = vmatpush1.msra.mxu0 0.0
        %3209 = vmatprep.subr.mxu0 0.0
        %3210 = vmatpush1.msra.mxu0 0.0
        %3211 = vmatprep.subr.mxu0 0.0
        %3212 = vmatpush1.msra.mxu0 0.0
        %3213 = vmatprep.subr.mxu0 0.0
        %3214 = vmatpush1.msra.mxu0 0.0
        %3215 = vmatprep.subr.mxu0 0.0
        %3216 = vmatpush1.msra.mxu0 0.0
        %3217 = vmatprep.subr.mxu0 0.0
        %3218 = vmatpush1.msra.mxu0 0.0
        %3219 = vmatprep.subr.mxu0 0.0
        %3220 = vmatpush1.msra.mxu0 0.0
        %3221 = vmatprep.subr.mxu0 0.0
        %3222 = vmatpush1.msra.mxu0 0.0
        %3223 = vmatprep.subr.mxu0 0.0
        %3224 = vmatpush1.msra.mxu0 0.0
        %3225 = vmatprep.subr.mxu0 0.0
        %3226 = vmatpush1.msra.mxu0 0.0
        %3227 = vmatprep.subr.mxu0 0.0
        %3228 = vmatpush1.msra.mxu0 0.0
        %3229 = vmatprep.subr.mxu0 0.0
        %3230 = vmatpush1.msra.mxu0 0.0
        %3231 = vmatprep.subr.mxu0 0.0
        %3232 = vmatpush1.msra.mxu0 0.0
        %3233 = vmatprep.subr.mxu0 0.0
        %3234 = vmatpush1.msra.mxu0 0.0
        %3235 = vmatprep.subr.mxu0 0.0
        %3236 = vmatpush1.msra.mxu0 0.0
        %3237 = vmatprep.mubr.f32.mxu0 0.0
        %3238 = vmatmul.mubr.f32.gmra.mrb[0].mxu0 %v3089
        %v3239 = vpop.f32.mrb[0].mxu0
        %v3240 = vadd.f32 0.0, %v3239
        %v3241 = vpop.f32.mrb[0].mxu0
        %3242 = vmatprep.mubr.f32.mxu0 0.0
        %3243 = vmatmul.mubr.f32.gmra.mrb[0].mxu0 %v3092
        %v3244 = vpop.f32.mrb[0].mxu0
        %v3245 = vadd.f32 0.0, %v3244
        %v3246 = vpop.f32.mrb[0].mxu0
        %3247 = vdwg.mxu0
        %v3249 = vsel %vm1499, %v3082, 0
        %v3252 = vsel %vm1499, %v3161, 0
        %3254 = vmatprep.subr.mxu0 0.0
        %3255 = vmatpush1.xpose.msra.mxu0 %v3252
        %3256 = vmatprep.subr.mxu0 0.0
        %3257 = vmatpush1.xpose.msra.mxu0 0.0
        %3258 = vmatprep.subr.mxu0 0.0
        %3259 = vmatpush1.xpose.msra.mxu0 0.0
        %3260 = vmatprep.subr.mxu0 0.0
        %3261 = vmatpush1.xpose.msra.mxu0 0.0
        %3262 = vmatprep.subr.mxu0 0.0
        %3263 = vmatpush1.xpose.msra.mxu0 0.0
        %3264 = vmatprep.subr.mxu0 0.0
        %3265 = vmatpush1.xpose.msra.mxu0 0.0
        %3266 = vmatprep.subr.mxu0 0.0
        %3267 = vmatpush1.xpose.msra.mxu0 0.0
        %3268 = vmatprep.subr.mxu0 0.0
        %3269 = vmatpush1.xpose.msra.mxu0 0.0
        %3270 = vmatprep.subr.mxu0 0.0
        %3271 = vmatpush1.xpose.msra.mxu0 0.0
        %3272 = vmatprep.subr.mxu0 0.0
        %3273 = vmatpush1.xpose.msra.mxu0 0.0
        %3274 = vmatprep.subr.mxu0 0.0
        %3275 = vmatpush1.xpose.msra.mxu0 0.0
        %3276 = vmatprep.subr.mxu0 0.0
        %3277 = vmatpush1.xpose.msra.mxu0 0.0
        %3278 = vmatprep.subr.mxu0 0.0
        %3279 = vmatpush1.xpose.msra.mxu0 0.0
        %3280 = vmatprep.subr.mxu0 0.0
        %3281 = vmatpush1.xpose.msra.mxu0 0.0
        %3282 = vmatprep.subr.mxu0 0.0
        %3283 = vmatpush1.xpose.msra.mxu0 0.0
        %3284 = vmatprep.subr.mxu0 0.0
        %3285 = vmatpush1.xpose.msra.mxu0 0.0
        %3286 = vmatprep.subr.mxu0 0.0
        %3287 = vmatpush1.xpose.msra.mxu0 0.0
        %3288 = vmatprep.subr.mxu0 0.0
        %3289 = vmatpush1.xpose.msra.mxu0 0.0
        %3290 = vmatprep.subr.mxu0 0.0
        %3291 = vmatpush1.xpose.msra.mxu0 0.0
        %3292 = vmatprep.subr.mxu0 0.0
        %3293 = vmatpush1.xpose.msra.mxu0 0.0
        %3294 = vmatprep.subr.mxu0 0.0
        %3295 = vmatpush1.xpose.msra.mxu0 0.0
        %3296 = vmatprep.subr.mxu0 0.0
        %3297 = vmatpush1.xpose.msra.mxu0 0.0
        %3298 = vmatprep.subr.mxu0 0.0
        %3299 = vmatpush1.xpose.msra.mxu0 0.0
        %3300 = vmatprep.subr.mxu0 0.0
        %3301 = vmatpush1.xpose.msra.mxu0 0.0
        %3302 = vmatprep.subr.mxu0 0.0
        %3303 = vmatpush1.xpose.msra.mxu0 0.0
        %3304 = vmatprep.subr.mxu0 0.0
        %3305 = vmatpush1.xpose.msra.mxu0 0.0
        %3306 = vmatprep.subr.mxu0 0.0
        %3307 = vmatpush1.xpose.msra.mxu0 0.0
        %3308 = vmatprep.subr.mxu0 0.0
        %3309 = vmatpush1.xpose.msra.mxu0 0.0
        %3310 = vmatprep.subr.mxu0 0.0
        %3311 = vmatpush1.xpose.msra.mxu0 0.0
        %3312 = vmatprep.subr.mxu0 0.0
        %3313 = vmatpush1.xpose.msra.mxu0 0.0
        %3314 = vmatprep.subr.mxu0 0.0
        %3315 = vmatpush1.xpose.msra.mxu0 0.0
        %3316 = vmatprep.subr.mxu0 0.0
        %3317 = vmatpush1.xpose.msra.mxu0 0.0
        %3318 = vmatprep.mubr.f32.mxu0 0.0
        %3319 = vmatmul.mubr.f32.gmra.mrb[0].mxu0 %v3249
        %v3320 = vpop.f32.mrb[0].mxu0
        %v3321 = vadd.f32 0.0, %v3320
        %v3322 = vpop.f32.mrb[0].mxu0
        %3323 = vdwg.mxu0
        %v3325 = vsel %vm1499, %v3083, 0
        %v3328 = vsel %vm1499, %v3166, 0
        %3330 = vmatprep.subr.mxu0 0.0
        %3331 = vmatpush1.xpose.msra.mxu0 %v3328
        %3332 = vmatprep.subr.mxu0 0.0
        %3333 = vmatpush1.xpose.msra.mxu0 0.0
        %3334 = vmatprep.subr.mxu0 0.0
        %3335 = vmatpush1.xpose.msra.mxu0 0.0
        %3336 = vmatprep.subr.mxu0 0.0
        %3337 = vmatpush1.xpose.msra.mxu0 0.0
        %3338 = vmatprep.subr.mxu0 0.0
        %3339 = vmatpush1.xpose.msra.mxu0 0.0
        %3340 = vmatprep.subr.mxu0 0.0
        %3341 = vmatpush1.xpose.msra.mxu0 0.0
        %3342 = vmatprep.subr.mxu0 0.0
        %3343 = vmatpush1.xpose.msra.mxu0 0.0
        %3344 = vmatprep.subr.mxu0 0.0
        %3345 = vmatpush1.xpose.msra.mxu0 0.0
        %3346 = vmatprep.subr.mxu0 0.0
        %3347 = vmatpush1.xpose.msra.mxu0 0.0
        %3348 = vmatprep.subr.mxu0 0.0
        %3349 = vmatpush1.xpose.msra.mxu0 0.0
        %3350 = vmatprep.subr.mxu0 0.0
        %3351 = vmatpush1.xpose.msra.mxu0 0.0
        %3352 = vmatprep.subr.mxu0 0.0
        %3353 = vmatpush1.xpose.msra.mxu0 0.0
        %3354 = vmatprep.subr.mxu0 0.0
        %3355 = vmatpush1.xpose.msra.mxu0 0.0
        %3356 = vmatprep.subr.mxu0 0.0
        %3357 = vmatpush1.xpose.msra.mxu0 0.0
        %3358 = vmatprep.subr.mxu0 0.0
        %3359 = vmatpush1.xpose.msra.mxu0 0.0
        %3360 = vmatprep.subr.mxu0 0.0
        %3361 = vmatpush1.xpose.msra.mxu0 0.0
        %3362 = vmatprep.subr.mxu0 0.0
        %3363 = vmatpush1.xpose.msra.mxu0 0.0
        %3364 = vmatprep.subr.mxu0 0.0
        %3365 = vmatpush1.xpose.msra.mxu0 0.0
        %3366 = vmatprep.subr.mxu0 0.0
        %3367 = vmatpush1.xpose.msra.mxu0 0.0
        %3368 = vmatprep.subr.mxu0 0.0
        %3369 = vmatpush1.xpose.msra.mxu0 0.0
        %3370 = vmatprep.subr.mxu0 0.0
        %3371 = vmatpush1.xpose.msra.mxu0 0.0
        %3372 = vmatprep.subr.mxu0 0.0
        %3373 = vmatpush1.xpose.msra.mxu0 0.0
        %3374 = vmatprep.subr.mxu0 0.0
        %3375 = vmatpush1.xpose.msra.mxu0 0.0
        %3376 = vmatprep.subr.mxu0 0.0
        %3377 = vmatpush1.xpose.msra.mxu0 0.0
        %3378 = vmatprep.subr.mxu0 0.0
        %3379 = vmatpush1.xpose.msra.mxu0 0.0
        %3380 = vmatprep.subr.mxu0 0.0
        %3381 = vmatpush1.xpose.msra.mxu0 0.0
        %3382 = vmatprep.subr.mxu0 0.0
        %3383 = vmatpush1.xpose.msra.mxu0 0.0
        %3384 = vmatprep.subr.mxu0 0.0
        %3385 = vmatpush1.xpose.msra.mxu0 0.0
        %3386 = vmatprep.subr.mxu0 0.0
        %3387 = vmatpush1.xpose.msra.mxu0 0.0
        %3388 = vmatprep.subr.mxu0 0.0
        %3389 = vmatpush1.xpose.msra.mxu0 0.0
        %3390 = vmatprep.subr.mxu0 0.0
        %3391 = vmatpush1.xpose.msra.mxu0 0.0
        %3392 = vmatprep.subr.mxu0 0.0
        %3393 = vmatpush1.xpose.msra.mxu0 0.0
        %3394 = vmatprep.mubr.f32.mxu0 0.0
        %3395 = vmatmul.mubr.f32.gmra.mrb[0].mxu0 %v3325
        %v3396 = vpop.f32.mrb[0].mxu0
        %v3397 = vadd.f32 0.0, %v3396
        %v3398 = vpop.f32.mrb[0].mxu0
        %3399 = vdwg.mxu0
        %vm3400 = vcmp.gt.f32.partialorder %v2995, 0.0
        %vm3401 = vcmp.gt.f32.partialorder %v2996, 0.0
        %v3402 = vsel %vm3400, -1e+18, %v3321
        %v3403 = vsel %vm3401, -1e+18, %v3397
        %v3404 = vadd.f32 %v3402, 0.0
        %v3405 = vadd.f32 %v3403, 0.0
        %v3406 = vsel %vm1499, %v3402, -inf
        %3407 = vmax.xlane.f32.xlu0 %v3406
        %v3408 = vpop.xlane.xlu0 %3407
        %v3409 = vsel %vm1499, %v3403, -inf
        %3410 = vmax.xlane.f32.xlu0 %v3409
        %v3411 = vpop.xlane.xlu0 %3410
        %v3412 = vsub.f32 %v3402, %v3408
        %v3413 = vsub.f32 %v3403, %v3411
        %v3414 = vmul.f32 %v3412, 1.442695
        %v3415 = vpow.pop %v3414
        %v3416 = vmul.f32 %v3413, 1.442695
        %v3417 = vpow.pop %v3416
        %v3418 = vsel %vm1499, %v3415, 0.0
        %3419 = vadd.xlane.f32.xlu0 %v3418
        %v3420 = vpop.xlane.xlu0 %3419
        %v3421 = vsel %vm1499, %v3417, 0.0
        %3422 = vadd.xlane.f32.xlu0 %v3421
        %v3423 = vpop.xlane.xlu0 %3422
        %v3424 = vrcp.pop %v3420
        %v3425 = vmul.f32 %v3415, %v3424
        %v3426 = vrcp.pop %v3423
        %v3427 = vmul.f32 %v3417, %v3426
        %v3429 = vsel %vm1499, %v3425, 0
        %3431 = vmatprep.subr.mxu0 0.0
        %3432 = vmatpush1.msra.mxu0 %v3240
        %3433 = vmatprep.subr.mxu0 0.0
        %3434 = vmatpush1.msra.mxu0 0.0
        %3435 = vmatprep.subr.mxu0 0.0
        %3436 = vmatpush1.msra.mxu0 0.0
        %3437 = vmatprep.subr.mxu0 0.0
        %3438 = vmatpush1.msra.mxu0 0.0
        %3439 = vmatprep.subr.mxu0 0.0
        %3440 = vmatpush1.msra.mxu0 0.0
        %3441 = vmatprep.subr.mxu0 0.0
        %3442 = vmatpush1.msra.mxu0 0.0
        %3443 = vmatprep.subr.mxu0 0.0
        %3444 = vmatpush1.msra.mxu0 0.0
        %3445 = vmatprep.subr.mxu0 0.0
        %3446 = vmatpush1.msra.mxu0 0.0
        %3447 = vmatprep.subr.mxu0 0.0
        %3448 = vmatpush1.msra.mxu0 0.0
        %3449 = vmatprep.subr.mxu0 0.0
        %3450 = vmatpush1.msra.mxu0 0.0
        %3451 = vmatprep.subr.mxu0 0.0
        %3452 = vmatpush1.msra.mxu0 0.0
        %3453 = vmatprep.subr.mxu0 0.0
        %3454 = vmatpush1.msra.mxu0 0.0
        %3455 = vmatprep.subr.mxu0 0.0
        %3456 = vmatpush1.msra.mxu0 0.0
        %3457 = vmatprep.subr.mxu0 0.0
        %3458 = vmatpush1.msra.mxu0 0.0
        %3459 = vmatprep.subr.mxu0 0.0
        %3460 = vmatpush1.msra.mxu0 0.0
        %3461 = vmatprep.subr.mxu0 0.0
        %3462 = vmatpush1.msra.mxu0 0.0
        %3463 = vmatprep.subr.mxu0 0.0
        %3464 = vmatpush1.msra.mxu0 0.0
        %3465 = vmatprep.subr.mxu0 0.0
        %3466 = vmatpush1.msra.mxu0 0.0
        %3467 = vmatprep.subr.mxu0 0.0
        %3468 = vmatpush1.msra.mxu0 0.0
        %3469 = vmatprep.subr.mxu0 0.0
        %3470 = vmatpush1.msra.mxu0 0.0
        %3471 = vmatprep.subr.mxu0 0.0
        %3472 = vmatpush1.msra.mxu0 0.0
        %3473 = vmatprep.subr.mxu0 0.0
        %3474 = vmatpush1.msra.mxu0 0.0
        %3475 = vmatprep.subr.mxu0 0.0
        %3476 = vmatpush1.msra.mxu0 0.0
        %3477 = vmatprep.subr.mxu0 0.0
        %3478 = vmatpush1.msra.mxu0 0.0
        %3479 = vmatprep.subr.mxu0 0.0
        %3480 = vmatpush1.msra.mxu0 0.0
        %3481 = vmatprep.subr.mxu0 0.0
        %3482 = vmatpush1.msra.mxu0 0.0
        %3483 = vmatprep.subr.mxu0 0.0
        %3484 = vmatpush1.msra.mxu0 0.0
        %3485 = vmatprep.subr.mxu0 0.0
        %3486 = vmatpush1.msra.mxu0 0.0
        %3487 = vmatprep.subr.mxu0 0.0
        %3488 = vmatpush1.msra.mxu0 0.0
        %3489 = vmatprep.subr.mxu0 0.0
        %3490 = vmatpush1.msra.mxu0 0.0
        %3491 = vmatprep.subr.mxu0 0.0
        %3492 = vmatpush1.msra.mxu0 0.0
        %3493 = vmatprep.subr.mxu0 0.0
        %3494 = vmatpush1.msra.mxu0 0.0
        %3495 = vmatprep.mubr.f32.mxu0 0.0
        %3496 = vmatmul.mubr.f32.gmra.mrb[0].mxu0 %v3429
        %v3497 = vpop.f32.mrb[0].mxu0
        %v3498 = vadd.f32 0.0, %v3497
        %v3499 = vpop.f32.mrb[0].mxu0
        %3500 = vdwg.mxu0
        %v3502 = vsel %vm1499, %v3427, 0
        %3504 = vmatprep.subr.mxu0 0.0
        %3505 = vmatpush1.msra.mxu0 %v3245
        %3506 = vmatprep.subr.mxu0 0.0
        %3507 = vmatpush1.msra.mxu0 0.0
        %3508 = vmatprep.subr.mxu0 0.0
        %3509 = vmatpush1.msra.mxu0 0.0
        %3510 = vmatprep.subr.mxu0 0.0
        %3511 = vmatpush1.msra.mxu0 0.0
        %3512 = vmatprep.subr.mxu0 0.0
        %3513 = vmatpush1.msra.mxu0 0.0
        %3514 = vmatprep.subr.mxu0 0.0
        %3515 = vmatpush1.msra.mxu0 0.0
        %3516 = vmatprep.subr.mxu0 0.0
        %3517 = vmatpush1.msra.mxu0 0.0
        %3518 = vmatprep.subr.mxu0 0.0
        %3519 = vmatpush1.msra.mxu0 0.0
        %3520 = vmatprep.subr.mxu0 0.0
        %3521 = vmatpush1.msra.mxu0 0.0
        %3522 = vmatprep.subr.mxu0 0.0
        %3523 = vmatpush1.msra.mxu0 0.0
        %3524 = vmatprep.subr.mxu0 0.0
        %3525 = vmatpush1.msra.mxu0 0.0
        %3526 = vmatprep.subr.mxu0 0.0
        %3527 = vmatpush1.msra.mxu0 0.0
        %3528 = vmatprep.subr.mxu0 0.0
        %3529 = vmatpush1.msra.mxu0 0.0
        %3530 = vmatprep.subr.mxu0 0.0
        %3531 = vmatpush1.msra.mxu0 0.0
        %3532 = vmatprep.subr.mxu0 0.0
        %3533 = vmatpush1.msra.mxu0 0.0
        %3534 = vmatprep.subr.mxu0 0.0
        %3535 = vmatpush1.msra.mxu0 0.0
        %3536 = vmatprep.subr.mxu0 0.0
        %3537 = vmatpush1.msra.mxu0 0.0
        %3538 = vmatprep.subr.mxu0 0.0
        %3539 = vmatpush1.msra.mxu0 0.0
        %3540 = vmatprep.subr.mxu0 0.0
        %3541 = vmatpush1.msra.mxu0 0.0
        %3542 = vmatprep.subr.mxu0 0.0
        %3543 = vmatpush1.msra.mxu0 0.0
        %3544 = vmatprep.subr.mxu0 0.0
        %3545 = vmatpush1.msra.mxu0 0.0
        %3546 = vmatprep.subr.mxu0 0.0
        %3547 = vmatpush1.msra.mxu0 0.0
        %3548 = vmatprep.subr.mxu0 0.0
        %3549 = vmatpush1.msra.mxu0 0.0
        %3550 = vmatprep.subr.mxu0 0.0
        %3551 = vmatpush1.msra.mxu0 0.0
        %3552 = vmatprep.subr.mxu0 0.0
        %3553 = vmatpush1.msra.mxu0 0.0
        %3554 = vmatprep.subr.mxu0 0.0
        %3555 = vmatpush1.msra.mxu0 0.0
        %3556 = vmatprep.subr.mxu0 0.0
        %3557 = vmatpush1.msra.mxu0 0.0
        %3558 = vmatprep.subr.mxu0 0.0
        %3559 = vmatpush1.msra.mxu0 0.0
        %3560 = vmatprep.subr.mxu0 0.0
        %3561 = vmatpush1.msra.mxu0 0.0
        %3562 = vmatprep.subr.mxu0 0.0
        %3563 = vmatpush1.msra.mxu0 0.0
        %3564 = vmatprep.subr.mxu0 0.0
        %3565 = vmatpush1.msra.mxu0 0.0
        %3566 = vmatprep.subr.mxu0 0.0
        %3567 = vmatpush1.msra.mxu0 0.0
        %3568 = vmatprep.mubr.f32.mxu0 0.0
        %3569 = vmatmul.mubr.f32.gmra.mrb[0].mxu0 %v3502
        %v3570 = vpop.f32.mrb[0].mxu0
        %v3571 = vadd.f32 0.0, %v3570
        %v3572 = vpop.f32.mrb[0].mxu0
        %3573 = vdwg.mxu0
        %3574 = vrot.lane.b32.xlu0 %v3082, 120
        %v3575 = vpop.permute.xlu0 %3574
        %3576 = vrot.lane.b32.xlu0 %v3161, 120
        %v3577 = vpop.permute.xlu0 %3576
        %v3578 = vsel %vm1499, %v3575, 0
        %v3580 = vsel %vm1499, %v3577, 0
        %3582 = vmatprep.subr.mxu0 0.0
        %3583 = vmatpush1.xpose.msra.mxu0 %v3580
        %3584 = vmatprep.subr.mxu0 0.0
        %3585 = vmatpush1.xpose.msra.mxu0 0.0
        %3586 = vmatprep.subr.mxu0 0.0
        %3587 = vmatpush1.xpose.msra.mxu0 0.0
        %3588 = vmatprep.subr.mxu0 0.0
        %3589 = vmatpush1.xpose.msra.mxu0 0.0
        %3590 = vmatprep.subr.mxu0 0.0
        %3591 = vmatpush1.xpose.msra.mxu0 0.0
        %3592 = vmatprep.subr.mxu0 0.0
        %3593 = vmatpush1.xpose.msra.mxu0 0.0
        %3594 = vmatprep.subr.mxu0 0.0
        %3595 = vmatpush1.xpose.msra.mxu0 0.0
        %3596 = vmatprep.subr.mxu0 0.0
        %3597 = vmatpush1.xpose.msra.mxu0 0.0
        %3598 = vmatprep.subr.mxu0 0.0
        %3599 = vmatpush1.xpose.msra.mxu0 0.0
        %3600 = vmatprep.subr.mxu0 0.0
        %3601 = vmatpush1.xpose.msra.mxu0 0.0
        %3602 = vmatprep.subr.mxu0 0.0
        %3603 = vmatpush1.xpose.msra.mxu0 0.0
        %3604 = vmatprep.subr.mxu0 0.0
        %3605 = vmatpush1.xpose.msra.mxu0 0.0
        %3606 = vmatprep.subr.mxu0 0.0
        %3607 = vmatpush1.xpose.msra.mxu0 0.0
        %3608 = vmatprep.subr.mxu0 0.0
        %3609 = vmatpush1.xpose.msra.mxu0 0.0
        %3610 = vmatprep.subr.mxu0 0.0
        %3611 = vmatpush1.xpose.msra.mxu0 0.0
        %3612 = vmatprep.subr.mxu0 0.0
        %3613 = vmatpush1.xpose.msra.mxu0 0.0
        %3614 = vmatprep.subr.mxu0 0.0
        %3615 = vmatpush1.xpose.msra.mxu0 0.0
        %3616 = vmatprep.subr.mxu0 0.0
        %3617 = vmatpush1.xpose.msra.mxu0 0.0
        %3618 = vmatprep.subr.mxu0 0.0
        %3619 = vmatpush1.xpose.msra.mxu0 0.0
        %3620 = vmatprep.subr.mxu0 0.0
        %3621 = vmatpush1.xpose.msra.mxu0 0.0
        %3622 = vmatprep.subr.mxu0 0.0
        %3623 = vmatpush1.xpose.msra.mxu0 0.0
        %3624 = vmatprep.subr.mxu0 0.0
        %3625 = vmatpush1.xpose.msra.mxu0 0.0
        %3626 = vmatprep.subr.mxu0 0.0
        %3627 = vmatpush1.xpose.msra.mxu0 0.0
        %3628 = vmatprep.subr.mxu0 0.0
        %3629 = vmatpush1.xpose.msra.mxu0 0.0
        %3630 = vmatprep.subr.mxu0 0.0
        %3631 = vmatpush1.xpose.msra.mxu0 0.0
        %3632 = vmatprep.subr.mxu0 0.0
        %3633 = vmatpush1.xpose.msra.mxu0 0.0
        %3634 = vmatprep.subr.mxu0 0.0
        %3635 = vmatpush1.xpose.msra.mxu0 0.0
        %3636 = vmatprep.subr.mxu0 0.0
        %3637 = vmatpush1.xpose.msra.mxu0 0.0
        %3638 = vmatprep.subr.mxu0 0.0
        %3639 = vmatpush1.xpose.msra.mxu0 0.0
        %3640 = vmatprep.subr.mxu0 0.0
        %3641 = vmatpush1.xpose.msra.mxu0 0.0
        %3642 = vmatprep.subr.mxu0 0.0
        %3643 = vmatpush1.xpose.msra.mxu0 0.0
        %3644 = vmatprep.subr.mxu0 0.0
        %3645 = vmatpush1.xpose.msra.mxu0 0.0
        %3646 = vmatprep.mubr.f32.mxu0 0.0
        %3647 = vmatmul.mubr.f32.gmra.mrb[0].mxu0 %v3578
        %v3648 = vpop.f32.mrb[0].mxu0
        %v3649 = vadd.f32 0.0, %v3648
        %v3650 = vpop.f32.mrb[0].mxu0
        %3651 = vdwg.mxu0
        %3652 = vrot.lane.b32.xlu0 %v3083, 120
        %v3653 = vpop.permute.xlu0 %3652
        %3654 = vrot.lane.b32.xlu0 %v3166, 120
        %v3655 = vpop.permute.xlu0 %3654
        %v3656 = vsel %vm1499, %v3653, 0
        %v3658 = vsel %vm1499, %v3655, 0
        %3660 = vmatprep.subr.mxu0 0.0
        %3661 = vmatpush1.xpose.msra.mxu0 %v3658
        %3662 = vmatprep.subr.mxu0 0.0
        %3663 = vmatpush1.xpose.msra.mxu0 0.0
        %3664 = vmatprep.subr.mxu0 0.0
        %3665 = vmatpush1.xpose.msra.mxu0 0.0
        %3666 = vmatprep.subr.mxu0 0.0
        %3667 = vmatpush1.xpose.msra.mxu0 0.0
        %3668 = vmatprep.subr.mxu0 0.0
        %3669 = vmatpush1.xpose.msra.mxu0 0.0
        %3670 = vmatprep.subr.mxu0 0.0
        %3671 = vmatpush1.xpose.msra.mxu0 0.0
        %3672 = vmatprep.subr.mxu0 0.0
        %3673 = vmatpush1.xpose.msra.mxu0 0.0
        %3674 = vmatprep.subr.mxu0 0.0
        %3675 = vmatpush1.xpose.msra.mxu0 0.0
        %3676 = vmatprep.subr.mxu0 0.0
        %3677 = vmatpush1.xpose.msra.mxu0 0.0
        %3678 = vmatprep.subr.mxu0 0.0
        %3679 = vmatpush1.xpose.msra.mxu0 0.0
        %3680 = vmatprep.subr.mxu0 0.0
        %3681 = vmatpush1.xpose.msra.mxu0 0.0
        %3682 = vmatprep.subr.mxu0 0.0
        %3683 = vmatpush1.xpose.msra.mxu0 0.0
        %3684 = vmatprep.subr.mxu0 0.0
        %3685 = vmatpush1.xpose.msra.mxu0 0.0
        %3686 = vmatprep.subr.mxu0 0.0
        %3687 = vmatpush1.xpose.msra.mxu0 0.0
        %3688 = vmatprep.subr.mxu0 0.0
        %3689 = vmatpush1.xpose.msra.mxu0 0.0
        %3690 = vmatprep.subr.mxu0 0.0
        %3691 = vmatpush1.xpose.msra.mxu0 0.0
        %3692 = vmatprep.subr.mxu0 0.0
        %3693 = vmatpush1.xpose.msra.mxu0 0.0
        %3694 = vmatprep.subr.mxu0 0.0
        %3695 = vmatpush1.xpose.msra.mxu0 0.0
        %3696 = vmatprep.subr.mxu0 0.0
        %3697 = vmatpush1.xpose.msra.mxu0 0.0
        %3698 = vmatprep.subr.mxu0 0.0
        %3699 = vmatpush1.xpose.msra.mxu0 0.0
        %3700 = vmatprep.subr.mxu0 0.0
        %3701 = vmatpush1.xpose.msra.mxu0 0.0
        %3702 = vmatprep.subr.mxu0 0.0
        %3703 = vmatpush1.xpose.msra.mxu0 0.0
        %3704 = vmatprep.subr.mxu0 0.0
        %3705 = vmatpush1.xpose.msra.mxu0 0.0
        %3706 = vmatprep.subr.mxu0 0.0
        %3707 = vmatpush1.xpose.msra.mxu0 0.0
        %3708 = vmatprep.subr.mxu0 0.0
        %3709 = vmatpush1.xpose.msra.mxu0 0.0
        %3710 = vmatprep.subr.mxu0 0.0
        %3711 = vmatpush1.xpose.msra.mxu0 0.0
        %3712 = vmatprep.subr.mxu0 0.0
        %3713 = vmatpush1.xpose.msra.mxu0 0.0
        %3714 = vmatprep.subr.mxu0 0.0
        %3715 = vmatpush1.xpose.msra.mxu0 0.0
        %3716 = vmatprep.subr.mxu0 0.0
        %3717 = vmatpush1.xpose.msra.mxu0 0.0
        %3718 = vmatprep.subr.mxu0 0.0
        %3719 = vmatpush1.xpose.msra.mxu0 0.0
        %3720 = vmatprep.subr.mxu0 0.0
        %3721 = vmatpush1.xpose.msra.mxu0 0.0
        %3722 = vmatprep.subr.mxu0 0.0
        %3723 = vmatpush1.xpose.msra.mxu0 0.0
        %3724 = vmatprep.mubr.f32.mxu0 0.0
        %3725 = vmatmul.mubr.f32.gmra.mrb[0].mxu0 %v3656
        %v3726 = vpop.f32.mrb[0].mxu0
        %v3727 = vadd.f32 0.0, %v3726
        %v3728 = vpop.f32.mrb[0].mxu0
        %3729 = vdwg.mxu0
        %v3730 = vsel %vm3400, -1e+18, %v3649
        %v3731 = vsel %vm3401, -1e+18, %v3727
        %v3732 = vadd.f32 %v3404, %v3730
        %v3733 = vadd.f32 %v3405, %v3731
        %v3734 = vsel %vm1499, %v3730, -inf
        %3735 = vmax.xlane.f32.xlu0 %v3734
        %v3736 = vpop.xlane.xlu0 %3735
        %v3737 = vsel %vm1499, %v3731, -inf
        %3738 = vmax.xlane.f32.xlu0 %v3737
        %v3739 = vpop.xlane.xlu0 %3738
        %v3740 = vsub.f32 %v3730, %v3736
        %v3741 = vsub.f32 %v3731, %v3739
        %v3742 = vmul.f32 %v3740, 1.442695
        %v3743 = vpow.pop %v3742
        %v3744 = vmul.f32 %v3741, 1.442695
        %v3745 = vpow.pop %v3744
        %v3746 = vsel %vm1499, %v3743, 0.0
        %3747 = vadd.xlane.f32.xlu0 %v3746
        %v3748 = vpop.xlane.xlu0 %3747
        %v3749 = vsel %vm1499, %v3745, 0.0
        %3750 = vadd.xlane.f32.xlu0 %v3749
        %v3751 = vpop.xlane.xlu0 %3750
        %v3752 = vrcp.pop %v3748
        %v3753 = vmul.f32 %v3743, %v3752
        %v3754 = vrcp.pop %v3751
        %v3755 = vmul.f32 %v3745, %v3754
        %3757 = vrot.lane.b32.xlu0 %v3240, 120
        %v3758 = vpop.permute.xlu0 %3757
        %v3761 = vsel %vm1499, %v3753, 0
        %3763 = vmatprep.subr.mxu0 0.0
        %3764 = vmatpush1.msra.mxu0 %v3758
        %3765 = vmatprep.subr.mxu0 0.0
        %3766 = vmatpush1.msra.mxu0 0.0
        %3767 = vmatprep.subr.mxu0 0.0
        %3768 = vmatpush1.msra.mxu0 0.0
        %3769 = vmatprep.subr.mxu0 0.0
        %3770 = vmatpush1.msra.mxu0 0.0
        %3771 = vmatprep.subr.mxu0 0.0
        %3772 = vmatpush1.msra.mxu0 0.0
        %3773 = vmatprep.subr.mxu0 0.0
        %3774 = vmatpush1.msra.mxu0 0.0
        %3775 = vmatprep.subr.mxu0 0.0
        %3776 = vmatpush1.msra.mxu0 0.0
        %3777 = vmatprep.subr.mxu0 0.0
        %3778 = vmatpush1.msra.mxu0 0.0
        %3779 = vmatprep.subr.mxu0 0.0
        %3780 = vmatpush1.msra.mxu0 0.0
        %3781 = vmatprep.subr.mxu0 0.0
        %3782 = vmatpush1.msra.mxu0 0.0
        %3783 = vmatprep.subr.mxu0 0.0
        %3784 = vmatpush1.msra.mxu0 0.0
        %3785 = vmatprep.subr.mxu0 0.0
        %3786 = vmatpush1.msra.mxu0 0.0
        %3787 = vmatprep.subr.mxu0 0.0
        %3788 = vmatpush1.msra.mxu0 0.0
        %3789 = vmatprep.subr.mxu0 0.0
        %3790 = vmatpush1.msra.mxu0 0.0
        %3791 = vmatprep.subr.mxu0 0.0
        %3792 = vmatpush1.msra.mxu0 0.0
        %3793 = vmatprep.subr.mxu0 0.0
        %3794 = vmatpush1.msra.mxu0 0.0
        %3795 = vmatprep.subr.mxu0 0.0
        %3796 = vmatpush1.msra.mxu0 0.0
        %3797 = vmatprep.subr.mxu0 0.0
        %3798 = vmatpush1.msra.mxu0 0.0
        %3799 = vmatprep.subr.mxu0 0.0
        %3800 = vmatpush1.msra.mxu0 0.0
        %3801 = vmatprep.subr.mxu0 0.0
        %3802 = vmatpush1.msra.mxu0 0.0
        %3803 = vmatprep.subr.mxu0 0.0
        %3804 = vmatpush1.msra.mxu0 0.0
        %3805 = vmatprep.subr.mxu0 0.0
        %3806 = vmatpush1.msra.mxu0 0.0
        %3807 = vmatprep.subr.mxu0 0.0
        %3808 = vmatpush1.msra.mxu0 0.0
        %3809 = vmatprep.subr.mxu0 0.0
        %3810 = vmatpush1.msra.mxu0 0.0
        %3811 = vmatprep.subr.mxu0 0.0
        %3812 = vmatpush1.msra.mxu0 0.0
        %3813 = vmatprep.subr.mxu0 0.0
        %3814 = vmatpush1.msra.mxu0 0.0
        %3815 = vmatprep.subr.mxu0 0.0
        %3816 = vmatpush1.msra.mxu0 0.0
        %3817 = vmatprep.subr.mxu0 0.0
        %3818 = vmatpush1.msra.mxu0 0.0
        %3819 = vmatprep.subr.mxu0 0.0
        %3820 = vmatpush1.msra.mxu0 0.0
        %3821 = vmatprep.subr.mxu0 0.0
        %3822 = vmatpush1.msra.mxu0 0.0
        %3823 = vmatprep.subr.mxu0 0.0
        %3824 = vmatpush1.msra.mxu0 0.0
        %3825 = vmatprep.subr.mxu0 0.0
        %3826 = vmatpush1.msra.mxu0 0.0
        %3827 = vmatprep.mubr.f32.mxu0 0.0
        %3828 = vmatmul.mubr.f32.gmra.mrb[0].mxu0 %v3761
        %v3829 = vpop.f32.mrb[0].mxu0
        %v3830 = vadd.f32 0.0, %v3829
        %v3831 = vpop.f32.mrb[0].mxu0
        %3832 = vdwg.mxu0
        %3834 = vrot.lane.b32.xlu0 %v3245, 120
        %v3835 = vpop.permute.xlu0 %3834
        %v3838 = vsel %vm1499, %v3755, 0
        %3840 = vmatprep.subr.mxu0 0.0
        %3841 = vmatpush1.msra.mxu0 %v3835
        %3842 = vmatprep.subr.mxu0 0.0
        %3843 = vmatpush1.msra.mxu0 0.0
        %3844 = vmatprep.subr.mxu0 0.0
        %3845 = vmatpush1.msra.mxu0 0.0
        %3846 = vmatprep.subr.mxu0 0.0
        %3847 = vmatpush1.msra.mxu0 0.0
        %3848 = vmatprep.subr.mxu0 0.0
        %3849 = vmatpush1.msra.mxu0 0.0
        %3850 = vmatprep.subr.mxu0 0.0
        %3851 = vmatpush1.msra.mxu0 0.0
        %3852 = vmatprep.subr.mxu0 0.0
        %3853 = vmatpush1.msra.mxu0 0.0
        %3854 = vmatprep.subr.mxu0 0.0
        %3855 = vmatpush1.msra.mxu0 0.0
        %3856 = vmatprep.subr.mxu0 0.0
        %3857 = vmatpush1.msra.mxu0 0.0
        %3858 = vmatprep.subr.mxu0 0.0
        %3859 = vmatpush1.msra.mxu0 0.0
        %3860 = vmatprep.subr.mxu0 0.0
        %3861 = vmatpush1.msra.mxu0 0.0
        %3862 = vmatprep.subr.mxu0 0.0
        %3863 = vmatpush1.msra.mxu0 0.0
        %3864 = vmatprep.subr.mxu0 0.0
        %3865 = vmatpush1.msra.mxu0 0.0
        %3866 = vmatprep.subr.mxu0 0.0
        %3867 = vmatpush1.msra.mxu0 0.0
        %3868 = vmatprep.subr.mxu0 0.0
        %3869 = vmatpush1.msra.mxu0 0.0
        %3870 = vmatprep.subr.mxu0 0.0
        %3871 = vmatpush1.msra.mxu0 0.0
        %3872 = vmatprep.subr.mxu0 0.0
        %3873 = vmatpush1.msra.mxu0 0.0
        %3874 = vmatprep.subr.mxu0 0.0
        %3875 = vmatpush1.msra.mxu0 0.0
        %3876 = vmatprep.subr.mxu0 0.0
        %3877 = vmatpush1.msra.mxu0 0.0
        %3878 = vmatprep.subr.mxu0 0.0
        %3879 = vmatpush1.msra.mxu0 0.0
        %3880 = vmatprep.subr.mxu0 0.0
        %3881 = vmatpush1.msra.mxu0 0.0
        %3882 = vmatprep.subr.mxu0 0.0
        %3883 = vmatpush1.msra.mxu0 0.0
        %3884 = vmatprep.subr.mxu0 0.0
        %3885 = vmatpush1.msra.mxu0 0.0
        %3886 = vmatprep.subr.mxu0 0.0
        %3887 = vmatpush1.msra.mxu0 0.0
        %3888 = vmatprep.subr.mxu0 0.0
        %3889 = vmatpush1.msra.mxu0 0.0
        %3890 = vmatprep.subr.mxu0 0.0
        %3891 = vmatpush1.msra.mxu0 0.0
        %3892 = vmatprep.subr.mxu0 0.0
        %3893 = vmatpush1.msra.mxu0 0.0
        %3894 = vmatprep.subr.mxu0 0.0
        %3895 = vmatpush1.msra.mxu0 0.0
        %3896 = vmatprep.subr.mxu0 0.0
        %3897 = vmatpush1.msra.mxu0 0.0
        %3898 = vmatprep.subr.mxu0 0.0
        %3899 = vmatpush1.msra.mxu0 0.0
        %3900 = vmatprep.subr.mxu0 0.0
        %3901 = vmatpush1.msra.mxu0 0.0
        %3902 = vmatprep.subr.mxu0 0.0
        %3903 = vmatpush1.msra.mxu0 0.0
        %3904 = vmatprep.mubr.f32.mxu0 0.0
        %3905 = vmatmul.mubr.f32.gmra.mrb[0].mxu0 %v3838
        %v3906 = vpop.f32.mrb[0].mxu0
        %v3907 = vadd.f32 0.0, %v3906
        %v3908 = vpop.f32.mrb[0].mxu0
        %3909 = vdwg.mxu0
        %3910 = vrot.lane.b32.xlu0 %v3082, 112
        %v3911 = vpop.permute.xlu0 %3910
        %3912 = vrot.lane.b32.xlu0 %v3161, 112
        %v3913 = vpop.permute.xlu0 %3912
        %v3914 = vsel %vm1499, %v3911, 0
        %v3916 = vsel %vm1499, %v3913, 0
        %3918 = vmatprep.subr.mxu0 0.0
        %3919 = vmatpush1.xpose.msra.mxu0 %v3916
        %3920 = vmatprep.subr.mxu0 0.0
        %3921 = vmatpush1.xpose.msra.mxu0 0.0
        %3922 = vmatprep.subr.mxu0 0.0
        %3923 = vmatpush1.xpose.msra.mxu0 0.0
        %3924 = vmatprep.subr.mxu0 0.0
        %3925 = vmatpush1.xpose.msra.mxu0 0.0
        %3926 = vmatprep.subr.mxu0 0.0
        %3927 = vmatpush1.xpose.msra.mxu0 0.0
        %3928 = vmatprep.subr.mxu0 0.0
        %3929 = vmatpush1.xpose.msra.mxu0 0.0
        %3930 = vmatprep.subr.mxu0 0.0
        %3931 = vmatpush1.xpose.msra.mxu0 0.0
        %3932 = vmatprep.subr.mxu0 0.0
        %3933 = vmatpush1.xpose.msra.mxu0 0.0
        %3934 = vmatprep.subr.mxu0 0.0
        %3935 = vmatpush1.xpose.msra.mxu0 0.0
        %3936 = vmatprep.subr.mxu0 0.0
        %3937 = vmatpush1.xpose.msra.mxu0 0.0
        %3938 = vmatprep.subr.mxu0 0.0
        %3939 = vmatpush1.xpose.msra.mxu0 0.0
        %3940 = vmatprep.subr.mxu0 0.0
        %3941 = vmatpush1.xpose.msra.mxu0 0.0
        %3942 = vmatprep.subr.mxu0 0.0
        %3943 = vmatpush1.xpose.msra.mxu0 0.0
        %3944 = vmatprep.subr.mxu0 0.0
        %3945 = vmatpush1.xpose.msra.mxu0 0.0
        %3946 = vmatprep.subr.mxu0 0.0
        %3947 = vmatpush1.xpose.msra.mxu0 0.0
        %3948 = vmatprep.subr.mxu0 0.0
        %3949 = vmatpush1.xpose.msra.mxu0 0.0
        %3950 = vmatprep.subr.mxu0 0.0
        %3951 = vmatpush1.xpose.msra.mxu0 0.0
        %3952 = vmatprep.subr.mxu0 0.0
        %3953 = vmatpush1.xpose.msra.mxu0 0.0
        %3954 = vmatprep.subr.mxu0 0.0
        %3955 = vmatpush1.xpose.msra.mxu0 0.0
        %3956 = vmatprep.subr.mxu0 0.0
        %3957 = vmatpush1.xpose.msra.mxu0 0.0
        %3958 = vmatprep.subr.mxu0 0.0
        %3959 = vmatpush1.xpose.msra.mxu0 0.0
        %3960 = vmatprep.subr.mxu0 0.0
        %3961 = vmatpush1.xpose.msra.mxu0 0.0
        %3962 = vmatprep.subr.mxu0 0.0
        %3963 = vmatpush1.xpose.msra.mxu0 0.0
        %3964 = vmatprep.subr.mxu0 0.0
        %3965 = vmatpush1.xpose.msra.mxu0 0.0
        %3966 = vmatprep.subr.mxu0 0.0
        %3967 = vmatpush1.xpose.msra.mxu0 0.0
        %3968 = vmatprep.subr.mxu0 0.0
        %3969 = vmatpush1.xpose.msra.mxu0 0.0
        %3970 = vmatprep.subr.mxu0 0.0
        %3971 = vmatpush1.xpose.msra.mxu0 0.0
        %3972 = vmatprep.subr.mxu0 0.0
        %3973 = vmatpush1.xpose.msra.mxu0 0.0
        %3974 = vmatprep.subr.mxu0 0.0
        %3975 = vmatpush1.xpose.msra.mxu0 0.0
        %3976 = vmatprep.subr.mxu0 0.0
        %3977 = vmatpush1.xpose.msra.mxu0 0.0
        %3978 = vmatprep.subr.mxu0 0.0
        %3979 = vmatpush1.xpose.msra.mxu0 0.0
        %3980 = vmatprep.subr.mxu0 0.0
        %3981 = vmatpush1.xpose.msra.mxu0 0.0
        %3982 = vmatprep.mubr.f32.mxu0 0.0
        %3983 = vmatmul.mubr.f32.gmra.mrb[0].mxu0 %v3914
        %v3984 = vpop.f32.mrb[0].mxu0
        %v3985 = vadd.f32 0.0, %v3984
        %v3986 = vpop.f32.mrb[0].mxu0
        %3987 = vdwg.mxu0
        %3988 = vrot.lane.b32.xlu0 %v3083, 112
        %v3989 = vpop.permute.xlu0 %3988
        %3990 = vrot.lane.b32.xlu0 %v3166, 112
        %v3991 = vpop.permute.xlu0 %3990
        %v3992 = vsel %vm1499, %v3989, 0
        %v3994 = vsel %vm1499, %v3991, 0
        %3996 = vmatprep.subr.mxu0 0.0
        %3997 = vmatpush1.xpose.msra.mxu0 %v3994
        %3998 = vmatprep.subr.mxu0 0.0
        %3999 = vmatpush1.xpose.msra.mxu0 0.0
        %4000 = vmatprep.subr.mxu0 0.0
        %4001 = vmatpush1.xpose.msra.mxu0 0.0
        %4002 = vmatprep.subr.mxu0 0.0
        %4003 = vmatpush1.xpose.msra.mxu0 0.0
        %4004 = vmatprep.subr.mxu0 0.0
        %4005 = vmatpush1.xpose.msra.mxu0 0.0
        %4006 = vmatprep.subr.mxu0 0.0
        %4007 = vmatpush1.xpose.msra.mxu0 0.0
        %4008 = vmatprep.subr.mxu0 0.0
        %4009 = vmatpush1.xpose.msra.mxu0 0.0
        %4010 = vmatprep.subr.mxu0 0.0
        %4011 = vmatpush1.xpose.msra.mxu0 0.0
        %4012 = vmatprep.subr.mxu0 0.0
        %4013 = vmatpush1.xpose.msra.mxu0 0.0
        %4014 = vmatprep.subr.mxu0 0.0
        %4015 = vmatpush1.xpose.msra.mxu0 0.0
        %4016 = vmatprep.subr.mxu0 0.0
        %4017 = vmatpush1.xpose.msra.mxu0 0.0
        %4018 = vmatprep.subr.mxu0 0.0
        %4019 = vmatpush1.xpose.msra.mxu0 0.0
        %4020 = vmatprep.subr.mxu0 0.0
        %4021 = vmatpush1.xpose.msra.mxu0 0.0
        %4022 = vmatprep.subr.mxu0 0.0
        %4023 = vmatpush1.xpose.msra.mxu0 0.0
        %4024 = vmatprep.subr.mxu0 0.0
        %4025 = vmatpush1.xpose.msra.mxu0 0.0
        %4026 = vmatprep.subr.mxu0 0.0
        %4027 = vmatpush1.xpose.msra.mxu0 0.0
        %4028 = vmatprep.subr.mxu0 0.0
        %4029 = vmatpush1.xpose.msra.mxu0 0.0
        %4030 = vmatprep.subr.mxu0 0.0
        %4031 = vmatpush1.xpose.msra.mxu0 0.0
        %4032 = vmatprep.subr.mxu0 0.0
        %4033 = vmatpush1.xpose.msra.mxu0 0.0
        %4034 = vmatprep.subr.mxu0 0.0
        %4035 = vmatpush1.xpose.msra.mxu0 0.0
        %4036 = vmatprep.subr.mxu0 0.0
        %4037 = vmatpush1.xpose.msra.mxu0 0.0
        %4038 = vmatprep.subr.mxu0 0.0
        %4039 = vmatpush1.xpose.msra.mxu0 0.0
        %4040 = vmatprep.subr.mxu0 0.0
        %4041 = vmatpush1.xpose.msra.mxu0 0.0
        %4042 = vmatprep.subr.mxu0 0.0
        %4043 = vmatpush1.xpose.msra.mxu0 0.0
        %4044 = vmatprep.subr.mxu0 0.0
        %4045 = vmatpush1.xpose.msra.mxu0 0.0
        %4046 = vmatprep.subr.mxu0 0.0
        %4047 = vmatpush1.xpose.msra.mxu0 0.0
        %4048 = vmatprep.subr.mxu0 0.0
        %4049 = vmatpush1.xpose.msra.mxu0 0.0
        %4050 = vmatprep.subr.mxu0 0.0
        %4051 = vmatpush1.xpose.msra.mxu0 0.0
        %4052 = vmatprep.subr.mxu0 0.0
        %4053 = vmatpush1.xpose.msra.mxu0 0.0
        %4054 = vmatprep.subr.mxu0 0.0
        %4055 = vmatpush1.xpose.msra.mxu0 0.0
        %4056 = vmatprep.subr.mxu0 0.0
        %4057 = vmatpush1.xpose.msra.mxu0 0.0
        %4058 = vmatprep.subr.mxu0 0.0
        %4059 = vmatpush1.xpose.msra.mxu0 0.0
        %4060 = vmatprep.mubr.f32.mxu0 0.0
        %4061 = vmatmul.mubr.f32.gmra.mrb[0].mxu0 %v3992
        %v4062 = vpop.f32.mrb[0].mxu0
        %v4063 = vadd.f32 0.0, %v4062
        %v4064 = vpop.f32.mrb[0].mxu0
        %4065 = vdwg.mxu0
        %v4066 = vsel %vm3400, -1e+18, %v3985
        %v4067 = vsel %vm3401, -1e+18, %v4063
        %v4068 = vadd.f32 %v3732, %v4066
        %v4069 = vadd.f32 %v3733, %v4067
        %v4070 = vsel %vm1499, %v4066, -inf
        %4071 = vmax.xlane.f32.xlu0 %v4070
        %v4072 = vpop.xlane.xlu0 %4071
        %v4073 = vsel %vm1499, %v4067, -inf
        %4074 = vmax.xlane.f32.xlu0 %v4073
        %v4075 = vpop.xlane.xlu0 %4074
        %v4076 = vsub.f32 %v4066, %v4072
        %v4077 = vsub.f32 %v4067, %v4075
        %v4078 = vmul.f32 %v4076, 1.442695
        %v4079 = vpow.pop %v4078
        %v4080 = vmul.f32 %v4077, 1.442695
        %v4081 = vpow.pop %v4080
        %v4082 = vsel %vm1499, %v4079, 0.0
        %4083 = vadd.xlane.f32.xlu0 %v4082
        %v4084 = vpop.xlane.xlu0 %4083
        %v4085 = vsel %vm1499, %v4081, 0.0
        %4086 = vadd.xlane.f32.xlu0 %v4085
        %v4087 = vpop.xlane.xlu0 %4086
        %v4088 = vrcp.pop %v4084
        %v4089 = vmul.f32 %v4079, %v4088
        %v4090 = vrcp.pop %v4087
        %v4091 = vmul.f32 %v4081, %v4090
        %4092 = vrot.lane.b32.xlu0 %v3240, 112
        %v4093 = vpop.permute.xlu0 %4092
        %v4096 = vsel %vm1499, %v4089, 0
        %4098 = vmatprep.subr.mxu0 0.0
        %4099 = vmatpush1.msra.mxu0 %v4093
        %4100 = vmatprep.subr.mxu0 0.0
        %4101 = vmatpush1.msra.mxu0 0.0
        %4102 = vmatprep.subr.mxu0 0.0
        %4103 = vmatpush1.msra.mxu0 0.0
        %4104 = vmatprep.subr.mxu0 0.0
        %4105 = vmatpush1.msra.mxu0 0.0
        %4106 = vmatprep.subr.mxu0 0.0
        %4107 = vmatpush1.msra.mxu0 0.0
        %4108 = vmatprep.subr.mxu0 0.0
        %4109 = vmatpush1.msra.mxu0 0.0
        %4110 = vmatprep.subr.mxu0 0.0
        %4111 = vmatpush1.msra.mxu0 0.0
        %4112 = vmatprep.subr.mxu0 0.0
        %4113 = vmatpush1.msra.mxu0 0.0
        %4114 = vmatprep.subr.mxu0 0.0
        %4115 = vmatpush1.msra.mxu0 0.0
        %4116 = vmatprep.subr.mxu0 0.0
        %4117 = vmatpush1.msra.mxu0 0.0
        %4118 = vmatprep.subr.mxu0 0.0
        %4119 = vmatpush1.msra.mxu0 0.0
        %4120 = vmatprep.subr.mxu0 0.0
        %4121 = vmatpush1.msra.mxu0 0.0
        %4122 = vmatprep.subr.mxu0 0.0
        %4123 = vmatpush1.msra.mxu0 0.0
        %4124 = vmatprep.subr.mxu0 0.0
        %4125 = vmatpush1.msra.mxu0 0.0
        %4126 = vmatprep.subr.mxu0 0.0
        %4127 = vmatpush1.msra.mxu0 0.0
        %4128 = vmatprep.subr.mxu0 0.0
        %4129 = vmatpush1.msra.mxu0 0.0
        %4130 = vmatprep.subr.mxu0 0.0
        %4131 = vmatpush1.msra.mxu0 0.0
        %4132 = vmatprep.subr.mxu0 0.0
        %4133 = vmatpush1.msra.mxu0 0.0
        %4134 = vmatprep.subr.mxu0 0.0
        %4135 = vmatpush1.msra.mxu0 0.0
        %4136 = vmatprep.subr.mxu0 0.0
        %4137 = vmatpush1.msra.mxu0 0.0
        %4138 = vmatprep.subr.mxu0 0.0
        %4139 = vmatpush1.msra.mxu0 0.0
        %4140 = vmatprep.subr.mxu0 0.0
        %4141 = vmatpush1.msra.mxu0 0.0
        %4142 = vmatprep.subr.mxu0 0.0
        %4143 = vmatpush1.msra.mxu0 0.0
        %4144 = vmatprep.subr.mxu0 0.0
        %4145 = vmatpush1.msra.mxu0 0.0
        %4146 = vmatprep.subr.mxu0 0.0
        %4147 = vmatpush1.msra.mxu0 0.0
        %4148 = vmatprep.subr.mxu0 0.0
        %4149 = vmatpush1.msra.mxu0 0.0
        %4150 = vmatprep.subr.mxu0 0.0
        %4151 = vmatpush1.msra.mxu0 0.0
        %4152 = vmatprep.subr.mxu0 0.0
        %4153 = vmatpush1.msra.mxu0 0.0
        %4154 = vmatprep.subr.mxu0 0.0
        %4155 = vmatpush1.msra.mxu0 0.0
        %4156 = vmatprep.subr.mxu0 0.0
        %4157 = vmatpush1.msra.mxu0 0.0
        %4158 = vmatprep.subr.mxu0 0.0
        %4159 = vmatpush1.msra.mxu0 0.0
        %4160 = vmatprep.subr.mxu0 0.0
        %4161 = vmatpush1.msra.mxu0 0.0
        %4162 = vmatprep.mubr.f32.mxu0 0.0
        %4163 = vmatmul.mubr.f32.gmra.mrb[0].mxu0 %v4096
        %v4164 = vpop.f32.mrb[0].mxu0
        %v4165 = vadd.f32 0.0, %v4164
        %v4166 = vpop.f32.mrb[0].mxu0
        %4167 = vdwg.mxu0
        %4168 = vrot.lane.b32.xlu0 %v3245, 112
        %v4169 = vpop.permute.xlu0 %4168
        %v4172 = vsel %vm1499, %v4091, 0
        %4174 = vmatprep.subr.mxu0 0.0
        %4175 = vmatpush1.msra.mxu0 %v4169
        %4176 = vmatprep.subr.mxu0 0.0
        %4177 = vmatpush1.msra.mxu0 0.0
        %4178 = vmatprep.subr.mxu0 0.0
        %4179 = vmatpush1.msra.mxu0 0.0
        %4180 = vmatprep.subr.mxu0 0.0
        %4181 = vmatpush1.msra.mxu0 0.0
        %4182 = vmatprep.subr.mxu0 0.0
        %4183 = vmatpush1.msra.mxu0 0.0
        %4184 = vmatprep.subr.mxu0 0.0
        %4185 = vmatpush1.msra.mxu0 0.0
        %4186 = vmatprep.subr.mxu0 0.0
        %4187 = vmatpush1.msra.mxu0 0.0
        %4188 = vmatprep.subr.mxu0 0.0
        %4189 = vmatpush1.msra.mxu0 0.0
        %4190 = vmatprep.subr.mxu0 0.0
        %4191 = vmatpush1.msra.mxu0 0.0
        %4192 = vmatprep.subr.mxu0 0.0
        %4193 = vmatpush1.msra.mxu0 0.0
        %4194 = vmatprep.subr.mxu0 0.0
        %4195 = vmatpush1.msra.mxu0 0.0
        %4196 = vmatprep.subr.mxu0 0.0
        %4197 = vmatpush1.msra.mxu0 0.0
        %4198 = vmatprep.subr.mxu0 0.0
        %4199 = vmatpush1.msra.mxu0 0.0
        %4200 = vmatprep.subr.mxu0 0.0
        %4201 = vmatpush1.msra.mxu0 0.0
        %4202 = vmatprep.subr.mxu0 0.0
        %4203 = vmatpush1.msra.mxu0 0.0
        %4204 = vmatprep.subr.mxu0 0.0
        %4205 = vmatpush1.msra.mxu0 0.0
        %4206 = vmatprep.subr.mxu0 0.0
        %4207 = vmatpush1.msra.mxu0 0.0
        %4208 = vmatprep.subr.mxu0 0.0
        %4209 = vmatpush1.msra.mxu0 0.0
        %4210 = vmatprep.subr.mxu0 0.0
        %4211 = vmatpush1.msra.mxu0 0.0
        %4212 = vmatprep.subr.mxu0 0.0
        %4213 = vmatpush1.msra.mxu0 0.0
        %4214 = vmatprep.subr.mxu0 0.0
        %4215 = vmatpush1.msra.mxu0 0.0
        %4216 = vmatprep.subr.mxu0 0.0
        %4217 = vmatpush1.msra.mxu0 0.0
        %4218 = vmatprep.subr.mxu0 0.0
        %4219 = vmatpush1.msra.mxu0 0.0
        %4220 = vmatprep.subr.mxu0 0.0
        %4221 = vmatpush1.msra.mxu0 0.0
        %4222 = vmatprep.subr.mxu0 0.0
        %4223 = vmatpush1.msra.mxu0 0.0
        %4224 = vmatprep.subr.mxu0 0.0
        %4225 = vmatpush1.msra.mxu0 0.0
        %4226 = vmatprep.subr.mxu0 0.0
        %4227 = vmatpush1.msra.mxu0 0.0
        %4228 = vmatprep.subr.mxu0 0.0
        %4229 = vmatpush1.msra.mxu0 0.0
        %4230 = vmatprep.subr.mxu0 0.0
        %4231 = vmatpush1.msra.mxu0 0.0
        %4232 = vmatprep.subr.mxu0 0.0
        %4233 = vmatpush1.msra.mxu0 0.0
        %4234 = vmatprep.subr.mxu0 0.0
        %4235 = vmatpush1.msra.mxu0 0.0
        %4236 = vmatprep.subr.mxu0 0.0
        %4237 = vmatpush1.msra.mxu0 0.0
        %4238 = vmatprep.mubr.f32.mxu0 0.0
        %4239 = vmatmul.mubr.f32.gmra.mrb[0].mxu0 %v4172
        %v4240 = vpop.f32.mrb[0].mxu0
        %v4241 = vadd.f32 0.0, %v4240
        %v4242 = vpop.f32.mrb[0].mxu0
        %4243 = vdwg.mxu0
        %4244 = vrot.lane.b32.xlu0 %v3082, 104
        %v4245 = vpop.permute.xlu0 %4244
        %4246 = vrot.lane.b32.xlu0 %v3161, 104
        %v4247 = vpop.permute.xlu0 %4246
        %v4248 = vsel %vm1499, %v4245, 0
        %v4250 = vsel %vm1499, %v4247, 0
        %4252 = vmatprep.subr.mxu0 0.0
        %4253 = vmatpush1.xpose.msra.mxu0 %v4250
        %4254 = vmatprep.subr.mxu0 0.0
        %4255 = vmatpush1.xpose.msra.mxu0 0.0
        %4256 = vmatprep.subr.mxu0 0.0
        %4257 = vmatpush1.xpose.msra.mxu0 0.0
        %4258 = vmatprep.subr.mxu0 0.0
        %4259 = vmatpush1.xpose.msra.mxu0 0.0
        %4260 = vmatprep.subr.mxu0 0.0
        %4261 = vmatpush1.xpose.msra.mxu0 0.0
        %4262 = vmatprep.subr.mxu0 0.0
        %4263 = vmatpush1.xpose.msra.mxu0 0.0
        %4264 = vmatprep.subr.mxu0 0.0
        %4265 = vmatpush1.xpose.msra.mxu0 0.0
        %4266 = vmatprep.subr.mxu0 0.0
        %4267 = vmatpush1.xpose.msra.mxu0 0.0
        %4268 = vmatprep.subr.mxu0 0.0
        %4269 = vmatpush1.xpose.msra.mxu0 0.0
        %4270 = vmatprep.subr.mxu0 0.0
        %4271 = vmatpush1.xpose.msra.mxu0 0.0
        %4272 = vmatprep.subr.mxu0 0.0
        %4273 = vmatpush1.xpose.msra.mxu0 0.0
        %4274 = vmatprep.subr.mxu0 0.0
        %4275 = vmatpush1.xpose.msra.mxu0 0.0
        %4276 = vmatprep.subr.mxu0 0.0
        %4277 = vmatpush1.xpose.msra.mxu0 0.0
        %4278 = vmatprep.subr.mxu0 0.0
        %4279 = vmatpush1.xpose.msra.mxu0 0.0
        %4280 = vmatprep.subr.mxu0 0.0
        %4281 = vmatpush1.xpose.msra.mxu0 0.0
        %4282 = vmatprep.subr.mxu0 0.0
        %4283 = vmatpush1.xpose.msra.mxu0 0.0
        %4284 = vmatprep.subr.mxu0 0.0
        %4285 = vmatpush1.xpose.msra.mxu0 0.0
        %4286 = vmatprep.subr.mxu0 0.0
        %4287 = vmatpush1.xpose.msra.mxu0 0.0
        %4288 = vmatprep.subr.mxu0 0.0
        %4289 = vmatpush1.xpose.msra.mxu0 0.0
        %4290 = vmatprep.subr.mxu0 0.0
        %4291 = vmatpush1.xpose.msra.mxu0 0.0
        %4292 = vmatprep.subr.mxu0 0.0
        %4293 = vmatpush1.xpose.msra.mxu0 0.0
        %4294 = vmatprep.subr.mxu0 0.0
        %4295 = vmatpush1.xpose.msra.mxu0 0.0
        %4296 = vmatprep.subr.mxu0 0.0
        %4297 = vmatpush1.xpose.msra.mxu0 0.0
        %4298 = vmatprep.subr.mxu0 0.0
        %4299 = vmatpush1.xpose.msra.mxu0 0.0
        %4300 = vmatprep.subr.mxu0 0.0
        %4301 = vmatpush1.xpose.msra.mxu0 0.0
        %4302 = vmatprep.subr.mxu0 0.0
        %4303 = vmatpush1.xpose.msra.mxu0 0.0
        %4304 = vmatprep.subr.mxu0 0.0
        %4305 = vmatpush1.xpose.msra.mxu0 0.0
        %4306 = vmatprep.subr.mxu0 0.0
        %4307 = vmatpush1.xpose.msra.mxu0 0.0
        %4308 = vmatprep.subr.mxu0 0.0
        %4309 = vmatpush1.xpose.msra.mxu0 0.0
        %4310 = vmatprep.subr.mxu0 0.0
        %4311 = vmatpush1.xpose.msra.mxu0 0.0
        %4312 = vmatprep.subr.mxu0 0.0
        %4313 = vmatpush1.xpose.msra.mxu0 0.0
        %4314 = vmatprep.subr.mxu0 0.0
        %4315 = vmatpush1.xpose.msra.mxu0 0.0
        %4316 = vmatprep.mubr.f32.mxu0 0.0
        %4317 = vmatmul.mubr.f32.gmra.mrb[0].mxu0 %v4248
        %v4318 = vpop.f32.mrb[0].mxu0
        %v4319 = vadd.f32 0.0, %v4318
        %v4320 = vpop.f32.mrb[0].mxu0
        %4321 = vdwg.mxu0
        %4322 = vrot.lane.b32.xlu0 %v3083, 104
        %v4323 = vpop.permute.xlu0 %4322
        %4324 = vrot.lane.b32.xlu0 %v3166, 104
        %v4325 = vpop.permute.xlu0 %4324
        %v4326 = vsel %vm1499, %v4323, 0
        %v4328 = vsel %vm1499, %v4325, 0
        %4330 = vmatprep.subr.mxu0 0.0
        %4331 = vmatpush1.xpose.msra.mxu0 %v4328
        %4332 = vmatprep.subr.mxu0 0.0
        %4333 = vmatpush1.xpose.msra.mxu0 0.0
        %4334 = vmatprep.subr.mxu0 0.0
        %4335 = vmatpush1.xpose.msra.mxu0 0.0
        %4336 = vmatprep.subr.mxu0 0.0
        %4337 = vmatpush1.xpose.msra.mxu0 0.0
        %4338 = vmatprep.subr.mxu0 0.0
        %4339 = vmatpush1.xpose.msra.mxu0 0.0
        %4340 = vmatprep.subr.mxu0 0.0
        %4341 = vmatpush1.xpose.msra.mxu0 0.0
        %4342 = vmatprep.subr.mxu0 0.0
        %4343 = vmatpush1.xpose.msra.mxu0 0.0
        %4344 = vmatprep.subr.mxu0 0.0
        %4345 = vmatpush1.xpose.msra.mxu0 0.0
        %4346 = vmatprep.subr.mxu0 0.0
        %4347 = vmatpush1.xpose.msra.mxu0 0.0
        %4348 = vmatprep.subr.mxu0 0.0
        %4349 = vmatpush1.xpose.msra.mxu0 0.0
        %4350 = vmatprep.subr.mxu0 0.0
        %4351 = vmatpush1.xpose.msra.mxu0 0.0
        %4352 = vmatprep.subr.mxu0 0.0
        %4353 = vmatpush1.xpose.msra.mxu0 0.0
        %4354 = vmatprep.subr.mxu0 0.0
        %4355 = vmatpush1.xpose.msra.mxu0 0.0
        %4356 = vmatprep.subr.mxu0 0.0
        %4357 = vmatpush1.xpose.msra.mxu0 0.0
        %4358 = vmatprep.subr.mxu0 0.0
        %4359 = vmatpush1.xpose.msra.mxu0 0.0
        %4360 = vmatprep.subr.mxu0 0.0
        %4361 = vmatpush1.xpose.msra.mxu0 0.0
        %4362 = vmatprep.subr.mxu0 0.0
        %4363 = vmatpush1.xpose.msra.mxu0 0.0
        %4364 = vmatprep.subr.mxu0 0.0
        %4365 = vmatpush1.xpose.msra.mxu0 0.0
        %4366 = vmatprep.subr.mxu0 0.0
        %4367 = vmatpush1.xpose.msra.mxu0 0.0
        %4368 = vmatprep.subr.mxu0 0.0
        %4369 = vmatpush1.xpose.msra.mxu0 0.0
        %4370 = vmatprep.subr.mxu0 0.0
        %4371 = vmatpush1.xpose.msra.mxu0 0.0
        %4372 = vmatprep.subr.mxu0 0.0
        %4373 = vmatpush1.xpose.msra.mxu0 0.0
        %4374 = vmatprep.subr.mxu0 0.0
        %4375 = vmatpush1.xpose.msra.mxu0 0.0
        %4376 = vmatprep.subr.mxu0 0.0
        %4377 = vmatpush1.xpose.msra.mxu0 0.0
        %4378 = vmatprep.subr.mxu0 0.0
        %4379 = vmatpush1.xpose.msra.mxu0 0.0
        %4380 = vmatprep.subr.mxu0 0.0
        %4381 = vmatpush1.xpose.msra.mxu0 0.0
        %4382 = vmatprep.subr.mxu0 0.0
        %4383 = vmatpush1.xpose.msra.mxu0 0.0
        %4384 = vmatprep.subr.mxu0 0.0
        %4385 = vmatpush1.xpose.msra.mxu0 0.0
        %4386 = vmatprep.subr.mxu0 0.0
        %4387 = vmatpush1.xpose.msra.mxu0 0.0
        %4388 = vmatprep.subr.mxu0 0.0
        %4389 = vmatpush1.xpose.msra.mxu0 0.0
        %4390 = vmatprep.subr.mxu0 0.0
        %4391 = vmatpush1.xpose.msra.mxu0 0.0
        %4392 = vmatprep.subr.mxu0 0.0
        %4393 = vmatpush1.xpose.msra.mxu0 0.0
        %4394 = vmatprep.mubr.f32.mxu0 0.0
        %4395 = vmatmul.mubr.f32.gmra.mrb[0].mxu0 %v4326
        %v4396 = vpop.f32.mrb[0].mxu0
        %v4397 = vadd.f32 0.0, %v4396
        %v4398 = vpop.f32.mrb[0].mxu0
        %4399 = vdwg.mxu0
        %v4400 = vsel %vm3400, -1e+18, %v4319
        %v4401 = vsel %vm3401, -1e+18, %v4397
        %v4402 = vadd.f32 %v4068, %v4400
        %v4403 = vadd.f32 %v4069, %v4401
        %v4404 = vsel %vm1499, %v4400, -inf
        %4405 = vmax.xlane.f32.xlu0 %v4404
        %v4406 = vpop.xlane.xlu0 %4405
        %v4407 = vsel %vm1499, %v4401, -inf
        %4408 = vmax.xlane.f32.xlu0 %v4407
        %v4409 = vpop.xlane.xlu0 %4408
        %v4410 = vsub.f32 %v4400, %v4406
        %v4411 = vsub.f32 %v4401, %v4409
        %v4412 = vmul.f32 %v4410, 1.442695
        %v4413 = vpow.pop %v4412
        %v4414 = vmul.f32 %v4411, 1.442695
        %v4415 = vpow.pop %v4414
        %v4416 = vsel %vm1499, %v4413, 0.0
        %4417 = vadd.xlane.f32.xlu0 %v4416
        %v4418 = vpop.xlane.xlu0 %4417
        %v4419 = vsel %vm1499, %v4415, 0.0
        %4420 = vadd.xlane.f32.xlu0 %v4419
        %v4421 = vpop.xlane.xlu0 %4420
        %v4422 = vrcp.pop %v4418
        %v4423 = vmul.f32 %v4413, %v4422
        %v4424 = vrcp.pop %v4421
        %v4425 = vmul.f32 %v4415, %v4424
        %4426 = vrot.lane.b32.xlu0 %v3240, 104
        %v4427 = vpop.permute.xlu0 %4426
        %v4430 = vsel %vm1499, %v4423, 0
        %4432 = vmatprep.subr.mxu0 0.0
        %4433 = vmatpush1.msra.mxu0 %v4427
        %4434 = vmatprep.subr.mxu0 0.0
        %4435 = vmatpush1.msra.mxu0 0.0
        %4436 = vmatprep.subr.mxu0 0.0
        %4437 = vmatpush1.msra.mxu0 0.0
        %4438 = vmatprep.subr.mxu0 0.0
        %4439 = vmatpush1.msra.mxu0 0.0
        %4440 = vmatprep.subr.mxu0 0.0
        %4441 = vmatpush1.msra.mxu0 0.0
        %4442 = vmatprep.subr.mxu0 0.0
        %4443 = vmatpush1.msra.mxu0 0.0
        %4444 = vmatprep.subr.mxu0 0.0
        %4445 = vmatpush1.msra.mxu0 0.0
        %4446 = vmatprep.subr.mxu0 0.0
        %4447 = vmatpush1.msra.mxu0 0.0
        %4448 = vmatprep.subr.mxu0 0.0
        %4449 = vmatpush1.msra.mxu0 0.0
        %4450 = vmatprep.subr.mxu0 0.0
        %4451 = vmatpush1.msra.mxu0 0.0
        %4452 = vmatprep.subr.mxu0 0.0
        %4453 = vmatpush1.msra.mxu0 0.0
        %4454 = vmatprep.subr.mxu0 0.0
        %4455 = vmatpush1.msra.mxu0 0.0
        %4456 = vmatprep.subr.mxu0 0.0
        %4457 = vmatpush1.msra.mxu0 0.0
        %4458 = vmatprep.subr.mxu0 0.0
        %4459 = vmatpush1.msra.mxu0 0.0
        %4460 = vmatprep.subr.mxu0 0.0
        %4461 = vmatpush1.msra.mxu0 0.0
        %4462 = vmatprep.subr.mxu0 0.0
        %4463 = vmatpush1.msra.mxu0 0.0
        %4464 = vmatprep.subr.mxu0 0.0
        %4465 = vmatpush1.msra.mxu0 0.0
        %4466 = vmatprep.subr.mxu0 0.0
        %4467 = vmatpush1.msra.mxu0 0.0
        %4468 = vmatprep.subr.mxu0 0.0
        %4469 = vmatpush1.msra.mxu0 0.0
        %4470 = vmatprep.subr.mxu0 0.0
        %4471 = vmatpush1.msra.mxu0 0.0
        %4472 = vmatprep.subr.mxu0 0.0
        %4473 = vmatpush1.msra.mxu0 0.0
        %4474 = vmatprep.subr.mxu0 0.0
        %4475 = vmatpush1.msra.mxu0 0.0
        %4476 = vmatprep.subr.mxu0 0.0
        %4477 = vmatpush1.msra.mxu0 0.0
        %4478 = vmatprep.subr.mxu0 0.0
        %4479 = vmatpush1.msra.mxu0 0.0
        %4480 = vmatprep.subr.mxu0 0.0
        %4481 = vmatpush1.msra.mxu0 0.0
        %4482 = vmatprep.subr.mxu0 0.0
        %4483 = vmatpush1.msra.mxu0 0.0
        %4484 = vmatprep.subr.mxu0 0.0
        %4485 = vmatpush1.msra.mxu0 0.0
        %4486 = vmatprep.subr.mxu0 0.0
        %4487 = vmatpush1.msra.mxu0 0.0
        %4488 = vmatprep.subr.mxu0 0.0
        %4489 = vmatpush1.msra.mxu0 0.0
        %4490 = vmatprep.subr.mxu0 0.0
        %4491 = vmatpush1.msra.mxu0 0.0
        %4492 = vmatprep.subr.mxu0 0.0
        %4493 = vmatpush1.msra.mxu0 0.0
        %4494 = vmatprep.subr.mxu0 0.0
        %4495 = vmatpush1.msra.mxu0 0.0
        %4496 = vmatprep.mubr.f32.mxu0 0.0
        %4497 = vmatmul.mubr.f32.gmra.mrb[0].mxu0 %v4430
        %v4498 = vpop.f32.mrb[0].mxu0
        %v4499 = vadd.f32 0.0, %v4498
        %v4500 = vpop.f32.mrb[0].mxu0
        %4501 = vdwg.mxu0
        %4502 = vrot.lane.b32.xlu0 %v3245, 104
        %v4503 = vpop.permute.xlu0 %4502
        %v4506 = vsel %vm1499, %v4425, 0
        %4508 = vmatprep.subr.mxu0 0.0
        %4509 = vmatpush1.msra.mxu0 %v4503
        %4510 = vmatprep.subr.mxu0 0.0
        %4511 = vmatpush1.msra.mxu0 0.0
        %4512 = vmatprep.subr.mxu0 0.0
        %4513 = vmatpush1.msra.mxu0 0.0
        %4514 = vmatprep.subr.mxu0 0.0
        %4515 = vmatpush1.msra.mxu0 0.0
        %4516 = vmatprep.subr.mxu0 0.0
        %4517 = vmatpush1.msra.mxu0 0.0
        %4518 = vmatprep.subr.mxu0 0.0
        %4519 = vmatpush1.msra.mxu0 0.0
        %4520 = vmatprep.subr.mxu0 0.0
        %4521 = vmatpush1.msra.mxu0 0.0
        %4522 = vmatprep.subr.mxu0 0.0
        %4523 = vmatpush1.msra.mxu0 0.0
        %4524 = vmatprep.subr.mxu0 0.0
        %4525 = vmatpush1.msra.mxu0 0.0
        %4526 = vmatprep.subr.mxu0 0.0
        %4527 = vmatpush1.msra.mxu0 0.0
        %4528 = vmatprep.subr.mxu0 0.0
        %4529 = vmatpush1.msra.mxu0 0.0
        %4530 = vmatprep.subr.mxu0 0.0
        %4531 = vmatpush1.msra.mxu0 0.0
        %4532 = vmatprep.subr.mxu0 0.0
        %4533 = vmatpush1.msra.mxu0 0.0
        %4534 = vmatprep.subr.mxu0 0.0
        %4535 = vmatpush1.msra.mxu0 0.0
        %4536 = vmatprep.subr.mxu0 0.0
        %4537 = vmatpush1.msra.mxu0 0.0
        %4538 = vmatprep.subr.mxu0 0.0
        %4539 = vmatpush1.msra.mxu0 0.0
        %4540 = vmatprep.subr.mxu0 0.0
        %4541 = vmatpush1.msra.mxu0 0.0
        %4542 = vmatprep.subr.mxu0 0.0
        %4543 = vmatpush1.msra.mxu0 0.0
        %4544 = vmatprep.subr.mxu0 0.0
        %4545 = vmatpush1.msra.mxu0 0.0
        %4546 = vmatprep.subr.mxu0 0.0
        %4547 = vmatpush1.msra.mxu0 0.0
        %4548 = vmatprep.subr.mxu0 0.0
        %4549 = vmatpush1.msra.mxu0 0.0
        %4550 = vmatprep.subr.mxu0 0.0
        %4551 = vmatpush1.msra.mxu0 0.0
        %4552 = vmatprep.subr.mxu0 0.0
        %4553 = vmatpush1.msra.mxu0 0.0
        %4554 = vmatprep.subr.mxu0 0.0
        %4555 = vmatpush1.msra.mxu0 0.0
        %4556 = vmatprep.subr.mxu0 0.0
        %4557 = vmatpush1.msra.mxu0 0.0
        %4558 = vmatprep.subr.mxu0 0.0
        %4559 = vmatpush1.msra.mxu0 0.0
        %4560 = vmatprep.subr.mxu0 0.0
        %4561 = vmatpush1.msra.mxu0 0.0
        %4562 = vmatprep.subr.mxu0 0.0
        %4563 = vmatpush1.msra.mxu0 0.0
        %4564 = vmatprep.subr.mxu0 0.0
        %4565 = vmatpush1.msra.mxu0 0.0
        %4566 = vmatprep.subr.mxu0 0.0
        %4567 = vmatpush1.msra.mxu0 0.0
        %4568 = vmatprep.subr.mxu0 0.0
        %4569 = vmatpush1.msra.mxu0 0.0
        %4570 = vmatprep.subr.mxu0 0.0
        %4571 = vmatpush1.msra.mxu0 0.0
        %4572 = vmatprep.mubr.f32.mxu0 0.0
        %4573 = vmatmul.mubr.f32.gmra.mrb[0].mxu0 %v4506
        %v4574 = vpop.f32.mrb[0].mxu0
        %v4575 = vadd.f32 0.0, %v4574
        %v4576 = vpop.f32.mrb[0].mxu0
        %4577 = vdwg.mxu0
        %4580 = vrot.lane.b32.xlu0 %v3830, 8
        %v4581 = vpop.permute.xlu0 %4580
        %4582 = vrot.lane.b32.xlu0 %v3907, 8
        %v4583 = vpop.permute.xlu0 %4582
        %4588 = vrot.lane.b32.xlu0 %v4165, 16
        %v4589 = vpop.permute.xlu0 %4588
        %4590 = vrot.lane.b32.xlu0 %v4241, 16
        %v4591 = vpop.permute.xlu0 %4590
        %4596 = vrot.lane.b32.xlu0 %v4499, 24
        %v4597 = vpop.permute.xlu0 %4596
        %4598 = vrot.lane.b32.xlu0 %v4575, 24
        %v4599 = vpop.permute.xlu0 %4598
        %v4602 = vsel %vm1499, %v3498, %v4581
        %v4603 = vsel %vm1499, %v3571, %v4583
        %v4604 = vsel %vm2848, %v4602, %v4589
        %v4605 = vsel %vm2848, %v4603, %v4591
        %v4606 = vsel %vm2851, %v4604, %v4597
        %v4607 = vsel %vm2851, %v4605, %v4599
        %v4608 = vld [vmem:[%s919] sm:$0xff]
        %v4609 = vld [vmem:[%s919 + $0x8] sm:$0xff]
        %v4610 = vld [vmem:[%s919 + $0x10] sm:$0xff]
        %v4611 = vld [vmem:[%s919 + $0x18] sm:$0xff]
        %v4613 = vsel %vm1197, %v4606, 0
        %v4616 = vsel %vm1197, %v4607, 0
        %4618 = vmatprep.subr.mxu0 0.0
        %4619 = vmatpush1.msra.mxu0 %v4608
        %4620 = vmatprep.subr.mxu0 0.0
        %4621 = vmatpush1.msra.mxu0 %v4609
        %4622 = vmatprep.subr.mxu0 0.0
        %4623 = vmatpush1.msra.mxu0 %v4610
        %4624 = vmatprep.subr.mxu0 0.0
        %4625 = vmatpush1.msra.mxu0 %v4611
        %4626 = vmatprep.subr.mxu0 0.0
        %4627 = vmatpush1.msra.mxu0 0.0
        %4628 = vmatprep.subr.mxu0 0.0
        %4629 = vmatpush1.msra.mxu0 0.0
        %4630 = vmatprep.subr.mxu0 0.0
        %4631 = vmatpush1.msra.mxu0 0.0
        %4632 = vmatprep.subr.mxu0 0.0
        %4633 = vmatpush1.msra.mxu0 0.0
        %4634 = vmatprep.subr.mxu0 0.0
        %4635 = vmatpush1.msra.mxu0 0.0
        %4636 = vmatprep.subr.mxu0 0.0
        %4637 = vmatpush1.msra.mxu0 0.0
        %4638 = vmatprep.subr.mxu0 0.0
        %4639 = vmatpush1.msra.mxu0 0.0
        %4640 = vmatprep.subr.mxu0 0.0
        %4641 = vmatpush1.msra.mxu0 0.0
        %4642 = vmatprep.subr.mxu0 0.0
        %4643 = vmatpush1.msra.mxu0 0.0
        %4644 = vmatprep.subr.mxu0 0.0
        %4645 = vmatpush1.msra.mxu0 0.0
        %4646 = vmatprep.subr.mxu0 0.0
        %4647 = vmatpush1.msra.mxu0 0.0
        %4648 = vmatprep.subr.mxu0 0.0
        %4649 = vmatpush1.msra.mxu0 0.0
        %4650 = vmatprep.subr.mxu0 0.0
        %4651 = vmatpush1.msra.mxu0 0.0
        %4652 = vmatprep.subr.mxu0 0.0
        %4653 = vmatpush1.msra.mxu0 0.0
        %4654 = vmatprep.subr.mxu0 0.0
        %4655 = vmatpush1.msra.mxu0 0.0
        %4656 = vmatprep.subr.mxu0 0.0
        %4657 = vmatpush1.msra.mxu0 0.0
        %4658 = vmatprep.subr.mxu0 0.0
        %4659 = vmatpush1.msra.mxu0 0.0
        %4660 = vmatprep.subr.mxu0 0.0
        %4661 = vmatpush1.msra.mxu0 0.0
        %4662 = vmatprep.subr.mxu0 0.0
        %4663 = vmatpush1.msra.mxu0 0.0
        %4664 = vmatprep.subr.mxu0 0.0
        %4665 = vmatpush1.msra.mxu0 0.0
        %4666 = vmatprep.subr.mxu0 0.0
        %4667 = vmatpush1.msra.mxu0 0.0
        %4668 = vmatprep.subr.mxu0 0.0
        %4669 = vmatpush1.msra.mxu0 0.0
        %4670 = vmatprep.subr.mxu0 0.0
        %4671 = vmatpush1.msra.mxu0 0.0
        %4672 = vmatprep.subr.mxu0 0.0
        %4673 = vmatpush1.msra.mxu0 0.0
        %4674 = vmatprep.subr.mxu0 0.0
        %4675 = vmatpush1.msra.mxu0 0.0
        %4676 = vmatprep.subr.mxu0 0.0
        %4677 = vmatpush1.msra.mxu0 0.0
        %4678 = vmatprep.subr.mxu0 0.0
        %4679 = vmatpush1.msra.mxu0 0.0
        %4680 = vmatprep.subr.mxu0 0.0
        %4681 = vmatpush1.msra.mxu0 0.0
        %4682 = vmatprep.mubr.f32.mxu0 0.0
        %4683 = vmatmul.mubr.f32.gmra.mrb[0].mxu0 %v4613
        %v4684 = vpop.f32.mrb[0].mxu0
        %v4685 = vadd.f32 0.0, %v4684
        %v4686 = vpop.f32.mrb[0].mxu0
        %4687 = vmatprep.mubr.f32.mxu0 0.0
        %4688 = vmatmul.mubr.f32.gmra.mrb[0].mxu0 %v4616
        %v4689 = vpop.f32.mrb[0].mxu0
        %v4690 = vadd.f32 0.0, %v4689
        %v4691 = vpop.f32.mrb[0].mxu0
        %4692 = vdwg.mxu0
        %v4693 = vrcp.pop 4.0
        %v4694 = vmul.f32 %v4402, %v4693
        %v4695 = vmul.f32 %v4403, %v4693
        %v4696 = vadd.f32 %v2939, %v4685
        %v4697 = vadd.f32 %v2940, %v4690
        %p4698 = scmp.eq.s32.totalorder %s43, 1
        // Predicated region
        $region153: #{tpu_custom_call.1} parent=111 // pred_check
          %p4699 = pneg %p4698
        $region154: #{tpu_custom_call.1} parent=111 // pred_check_branch
          %4701 = sbr.rel (%p4699) target = $region156
        $region155: #{tpu_custom_call.1} parent=111 // pred_region
          %4702 = vst.msk [vmem:[#allocation19] sm:$0xff] %vm1499, %v4694
          %4703 = vst.msk [vmem:[#allocation19 + $0x8] sm:$0xff] %vm1499, %v4695
        $region156: #{tpu_custom_call.1} parent=111 // pred_fallthru
          _
        %v4704 = vsel %vm1197, %v4696, 0.0
        %4705 = vadd.xlane.f32.xlu0 %v4704
        %v4706 = vpop.xlane.xlu0 %4705
        %v4707 = vsel %vm1197, %v4697, 0.0
        %4708 = vadd.xlane.f32.xlu0 %v4707
        %v4709 = vpop.xlane.xlu0 %4708
        %v4710 = vmul.f32 %v4706, %v1204
        %v4711 = vmul.f32 %v4709, %v1204
        %v4712 = vsub.f32 %v4696, %v4710
        %v4713 = vsub.f32 %v4697, %v4711
        %v4714 = vmul.f32 %v4712, %v4712
        %v4715 = vmul.f32 %v4713, %v4713
        %v4716 = vsel %vm1197, %v4714, 0.0
        %4717 = vadd.xlane.f32.xlu0 %v4716
        %v4718 = vpop.xlane.xlu0 %4717
        %v4719 = vsel %vm1197, %v4715, 0.0
        %4720 = vadd.xlane.f32.xlu0 %v4719
        %v4721 = vpop.xlane.xlu0 %4720
        %v4722 = vmul.f32 %v4718, %v1217
        %v4723 = vmul.f32 %v4721, %v1217
        %v4724 = vrsqrt.pop %v4722
        %v4725 = vmul.f32 %v4722, %v4724
        %vm4726 = vcmp.eq.f32.partialorder %v4722, inf
        %v4727 = vsel %vm4726, %v4722, %v4725
        %vm4728 = vcmp.eq.f32.partialorder %v4722, 0.0
        %v4729 = vand.u32 %v4722, 2147483648
        %v4730 = vsel %vm4728, %v4729, %v4727
        %v4731 = vrsqrt.pop %v4723
        %v4732 = vmul.f32 %v4723, %v4731
        %vm4733 = vcmp.eq.f32.partialorder %v4723, inf
        %v4734 = vsel %vm4733, %v4723, %v4732
        %vm4735 = vcmp.eq.f32.partialorder %v4723, 0.0
        %v4736 = vand.u32 %v4723, 2147483648
        %v4737 = vsel %vm4735, %v4736, %v4734
        %v4738 = vlaneseq
        %v4739 = vshrl.u32 %v4738, 7
        %v4740 = vsub.s32 2, %v4739
        %v4741 = vrot.slane %v1195, %v4740
        %v4742 = vmul.f32 %v4741, %v4712
        %v4743 = vmul.f32 %v4741, %v4713
        %v4744 = vadd.f32 %v4730, 1e-06
        %v4745 = vadd.f32 %v4737, 1e-06
        %v4746 = vrcp.pop %v4744
        %v4747 = vmul.f32 %v4742, %v4746
        %v4748 = vrcp.pop %v4745
        %v4749 = vmul.f32 %v4743, %v4748
        %v4750 = vlaneseq
        %v4751 = vshrl.u32 %v4750, 7
        %v4752 = vsub.s32 2, %v4751
        %v4753 = vrot.slane %v1196, %v4752
        %v4754 = vadd.f32 %v4747, %v4753
        %v4755 = vadd.f32 %v4749, %v4753
        %v4756 = vld [vmem:[%s1088] sm:$0x1]
        %v4757 = vld [vmem:[#allocation12] sm:$0xff]
        %v4758 = vld [vmem:[#allocation12 + $0x8] sm:$0xff]
        %v4760 = vsel %vm2848, %v4757, 0
        %v4763 = vsel %vm2848, %v4758, 0
        %4765 = vmatprep.subr.mxu0 0.0
        %4766 = vmatpush1.msra.mxu0 %v4754
        %4767 = vmatprep.subr.mxu0 0.0
        %4768 = vmatpush1.msra.mxu0 %v4755
        %4769 = vmatprep.subr.mxu0 0.0
        %4770 = vmatpush1.msra.mxu0 0.0
        %4771 = vmatprep.subr.mxu0 0.0
        %4772 = vmatpush1.msra.mxu0 0.0
        %4773 = vmatprep.subr.mxu0 0.0
        %4774 = vmatpush1.msra.mxu0 0.0
        %4775 = vmatprep.subr.mxu0 0.0
        %4776 = vmatpush1.msra.mxu0 0.0
        %4777 = vmatprep.subr.mxu0 0.0
        %4778 = vmatpush1.msra.mxu0 0.0
        %4779 = vmatprep.subr.mxu0 0.0
        %4780 = vmatpush1.msra.mxu0 0.0
        %4781 = vmatprep.subr.mxu0 0.0
        %4782 = vmatpush1.msra.mxu0 0.0
        %4783 = vmatprep.subr.mxu0 0.0
        %4784 = vmatpush1.msra.mxu0 0.0
        %4785 = vmatprep.subr.mxu0 0.0
        %4786 = vmatpush1.msra.mxu0 0.0
        %4787 = vmatprep.subr.mxu0 0.0
        %4788 = vmatpush1.msra.mxu0 0.0
        %4789 = vmatprep.subr.mxu0 0.0
        %4790 = vmatpush1.msra.mxu0 0.0
        %4791 = vmatprep.subr.mxu0 0.0
        %4792 = vmatpush1.msra.mxu0 0.0
        %4793 = vmatprep.subr.mxu0 0.0
        %4794 = vmatpush1.msra.mxu0 0.0
        %4795 = vmatprep.subr.mxu0 0.0
        %4796 = vmatpush1.msra.mxu0 0.0
        %4797 = vmatprep.subr.mxu0 0.0
        %4798 = vmatpush1.msra.mxu0 0.0
        %4799 = vmatprep.subr.mxu0 0.0
        %4800 = vmatpush1.msra.mxu0 0.0
        %4801 = vmatprep.subr.mxu0 0.0
        %4802 = vmatpush1.msra.mxu0 0.0
        %4803 = vmatprep.subr.mxu0 0.0
        %4804 = vmatpush1.msra.mxu0 0.0
        %4805 = vmatprep.subr.mxu0 0.0
        %4806 = vmatpush1.msra.mxu0 0.0
        %4807 = vmatprep.subr.mxu0 0.0
        %4808 = vmatpush1.msra.mxu0 0.0
        %4809 = vmatprep.subr.mxu0 0.0
        %4810 = vmatpush1.msra.mxu0 0.0
        %4811 = vmatprep.subr.mxu0 0.0
        %4812 = vmatpush1.msra.mxu0 0.0
        %4813 = vmatprep.subr.mxu0 0.0
        %4814 = vmatpush1.msra.mxu0 0.0
        %4815 = vmatprep.subr.mxu0 0.0
        %4816 = vmatpush1.msra.mxu0 0.0
        %4817 = vmatprep.subr.mxu0 0.0
        %4818 = vmatpush1.msra.mxu0 0.0
        %4819 = vmatprep.subr.mxu0 0.0
        %4820 = vmatpush1.msra.mxu0 0.0
        %4821 = vmatprep.subr.mxu0 0.0
        %4822 = vmatpush1.msra.mxu0 0.0
        %4823 = vmatprep.subr.mxu0 0.0
        %4824 = vmatpush1.msra.mxu0 0.0
        %4825 = vmatprep.subr.mxu0 0.0
        %4826 = vmatpush1.msra.mxu0 0.0
        %4827 = vmatprep.subr.mxu0 0.0
        %4828 = vmatpush1.msra.mxu0 0.0
        %4829 = vmatprep.mubr.f32.mxu0 0.0
        %4830 = vmatmul.mubr.f32.gmra.mrb[0].mxu0 %v4760
        %v4831 = vpop.f32.mrb[0].mxu0
        %v4832 = vadd.f32 0.0, %v4831
        %v4833 = vpop.f32.mrb[0].mxu0
        %4834 = vmatprep.mubr.f32.mxu0 0.0
        %4835 = vmatmul.mubr.f32.gmra.mrb[0].mxu0 %v4763
        %v4836 = vpop.f32.mrb[0].mxu0
        %v4837 = vadd.f32 0.0, %v4836
        %v4838 = vpop.f32.mrb[0].mxu0
        %4839 = vdwg.mxu0
        %4840 = vmatprep.subr.mxu0 0.0
        %4841 = vmatpush1.msra.mxu0 %v4832
        %4842 = vmatprep.subr.mxu0 0.0
        %4843 = vmatpush1.msra.mxu0 %v4837
        %4844 = vmatprep.subr.mxu0 0.0
        %4845 = vmatpush1.msra.mxu0 0.0
        %4846 = vmatprep.subr.mxu0 0.0
        %4847 = vmatpush1.msra.mxu0 0.0
        %4848 = vmatprep.subr.mxu0 0.0
        %4849 = vmatpush1.msra.mxu0 0.0
        %4850 = vmatprep.subr.mxu0 0.0
        %4851 = vmatpush1.msra.mxu0 0.0
        %4852 = vmatprep.subr.mxu0 0.0
        %4853 = vmatpush1.msra.mxu0 0.0
        %4854 = vmatprep.subr.mxu0 0.0
        %4855 = vmatpush1.msra.mxu0 0.0
        %4856 = vmatprep.subr.mxu0 0.0
        %4857 = vmatpush1.msra.mxu0 0.0
        %4858 = vmatprep.subr.mxu0 0.0
        %4859 = vmatpush1.msra.mxu0 0.0
        %4860 = vmatprep.subr.mxu0 0.0
        %4861 = vmatpush1.msra.mxu0 0.0
        %4862 = vmatprep.subr.mxu0 0.0
        %4863 = vmatpush1.msra.mxu0 0.0
        %4864 = vmatprep.subr.mxu0 0.0
        %4865 = vmatpush1.msra.mxu0 0.0
        %4866 = vmatprep.subr.mxu0 0.0
        %4867 = vmatpush1.msra.mxu0 0.0
        %4868 = vmatprep.subr.mxu0 0.0
        %4869 = vmatpush1.msra.mxu0 0.0
        %4870 = vmatprep.subr.mxu0 0.0
        %4871 = vmatpush1.msra.mxu0 0.0
        %4872 = vmatprep.subr.mxu0 0.0
        %4873 = vmatpush1.msra.mxu0 0.0
        %4874 = vmatprep.subr.mxu0 0.0
        %4875 = vmatpush1.msra.mxu0 0.0
        %4876 = vmatprep.subr.mxu0 0.0
        %4877 = vmatpush1.msra.mxu0 0.0
        %4878 = vmatprep.subr.mxu0 0.0
        %4879 = vmatpush1.msra.mxu0 0.0
        %4880 = vmatprep.subr.mxu0 0.0
        %4881 = vmatpush1.msra.mxu0 0.0
        %4882 = vmatprep.subr.mxu0 0.0
        %4883 = vmatpush1.msra.mxu0 0.0
        %4884 = vmatprep.subr.mxu0 0.0
        %4885 = vmatpush1.msra.mxu0 0.0
        %4886 = vmatprep.subr.mxu0 0.0
        %4887 = vmatpush1.msra.mxu0 0.0
        %4888 = vmatprep.subr.mxu0 0.0
        %4889 = vmatpush1.msra.mxu0 0.0
        %4890 = vmatprep.subr.mxu0 0.0
        %4891 = vmatpush1.msra.mxu0 0.0
        %4892 = vmatprep.subr.mxu0 0.0
        %4893 = vmatpush1.msra.mxu0 0.0
        %4894 = vmatprep.subr.mxu0 0.0
        %4895 = vmatpush1.msra.mxu0 0.0
        %4896 = vmatprep.subr.mxu0 0.0
        %4897 = vmatpush1.msra.mxu0 0.0
        %4898 = vmatprep.subr.mxu0 0.0
        %4899 = vmatpush1.msra.mxu0 0.0
        %4900 = vmatprep.subr.mxu0 0.0
        %4901 = vmatpush1.msra.mxu0 0.0
        %4902 = vmatprep.subr.mxu0 0.0
        %4903 = vmatpush1.msra.mxu0 0.0
        %4904 = vmatprep.mubr.f32.mxu0 0.0
        %4905 = vmatmul.mubr.f32.gmra.mrb[0].mxu0 %v4760
        %v4906 = vpop.f32.mrb[0].mxu0
        %v4907 = vadd.f32 0.0, %v4906
        %v4908 = vpop.f32.mrb[0].mxu0
        %4909 = vmatprep.mubr.f32.mxu0 0.0
        %4910 = vmatmul.mubr.f32.gmra.mrb[0].mxu0 %v4763
        %v4911 = vpop.f32.mrb[0].mxu0
        %v4912 = vadd.f32 0.0, %v4911
        %v4913 = vpop.f32.mrb[0].mxu0
        %4914 = vdwg.mxu0
        %v4915 = vld [vmem:[%s1085] sm:$0xff]
        %v4916 = vld [vmem:[%s1085 + $0x8] sm:$0xff]
        %v4917 = vld [vmem:[%s1085 + $0x10] sm:$0xff]
        %v4918 = vld [vmem:[%s1085 + $0x18] sm:$0xff]
        %s4919 = scalar_lea.vmem %s1085, 32
        %v4920 = vld [vmem:[%s4919] sm:$0xff]
        %v4921 = vld [vmem:[%s4919 + $0x8] sm:$0xff]
        %v4922 = vld [vmem:[%s4919 + $0x10] sm:$0xff]
        %v4923 = vld [vmem:[%s4919 + $0x18] sm:$0xff]
        %v4925 = vsel %vm1197, %v4832, 0
        %v4928 = vsel %vm1197, %v4837, 0
        %4930 = vmatprep.subr.mxu0 0.0
        %4931 = vmatpush1.msra.mxu0 %v4920
        %4932 = vmatprep.subr.mxu0 0.0
        %4933 = vmatpush1.msra.mxu0 %v4921
        %4934 = vmatprep.subr.mxu0 0.0
        %4935 = vmatpush1.msra.mxu0 %v4922
        %4936 = vmatprep.subr.mxu0 0.0
        %4937 = vmatpush1.msra.mxu0 %v4923
        %4938 = vmatprep.subr.mxu0 0.0
        %4939 = vmatpush1.msra.mxu0 0.0
        %4940 = vmatprep.subr.mxu0 0.0
        %4941 = vmatpush1.msra.mxu0 0.0
        %4942 = vmatprep.subr.mxu0 0.0
        %4943 = vmatpush1.msra.mxu0 0.0
        %4944 = vmatprep.subr.mxu0 0.0
        %4945 = vmatpush1.msra.mxu0 0.0
        %4946 = vmatprep.subr.mxu0 0.0
        %4947 = vmatpush1.msra.mxu0 0.0
        %4948 = vmatprep.subr.mxu0 0.0
        %4949 = vmatpush1.msra.mxu0 0.0
        %4950 = vmatprep.subr.mxu0 0.0
        %4951 = vmatpush1.msra.mxu0 0.0
        %4952 = vmatprep.subr.mxu0 0.0
        %4953 = vmatpush1.msra.mxu0 0.0
        %4954 = vmatprep.subr.mxu0 0.0
        %4955 = vmatpush1.msra.mxu0 0.0
        %4956 = vmatprep.subr.mxu0 0.0
        %4957 = vmatpush1.msra.mxu0 0.0
        %4958 = vmatprep.subr.mxu0 0.0
        %4959 = vmatpush1.msra.mxu0 0.0
        %4960 = vmatprep.subr.mxu0 0.0
        %4961 = vmatpush1.msra.mxu0 0.0
        %4962 = vmatprep.subr.mxu0 0.0
        %4963 = vmatpush1.msra.mxu0 0.0
        %4964 = vmatprep.subr.mxu0 0.0
        %4965 = vmatpush1.msra.mxu0 0.0
        %4966 = vmatprep.subr.mxu0 0.0
        %4967 = vmatpush1.msra.mxu0 0.0
        %4968 = vmatprep.subr.mxu0 0.0
        %4969 = vmatpush1.msra.mxu0 0.0
        %4970 = vmatprep.subr.mxu0 0.0
        %4971 = vmatpush1.msra.mxu0 0.0
        %4972 = vmatprep.subr.mxu0 0.0
        %4973 = vmatpush1.msra.mxu0 0.0
        %4974 = vmatprep.subr.mxu0 0.0
        %4975 = vmatpush1.msra.mxu0 0.0
        %4976 = vmatprep.subr.mxu0 0.0
        %4977 = vmatpush1.msra.mxu0 0.0
        %4978 = vmatprep.subr.mxu0 0.0
        %4979 = vmatpush1.msra.mxu0 0.0
        %4980 = vmatprep.subr.mxu0 0.0
        %4981 = vmatpush1.msra.mxu0 0.0
        %4982 = vmatprep.subr.mxu0 0.0
        %4983 = vmatpush1.msra.mxu0 0.0
        %4984 = vmatprep.subr.mxu0 0.0
        %4985 = vmatpush1.msra.mxu0 0.0
        %4986 = vmatprep.subr.mxu0 0.0
        %4987 = vmatpush1.msra.mxu0 0.0
        %4988 = vmatprep.subr.mxu0 0.0
        %4989 = vmatpush1.msra.mxu0 0.0
        %4990 = vmatprep.subr.mxu0 0.0
        %4991 = vmatpush1.msra.mxu0 0.0
        %4992 = vmatprep.subr.mxu0 0.0
        %4993 = vmatpush1.msra.mxu0 0.0
        %4994 = vmatprep.mubr.f32.mxu0 0.0
        %4995 = vmatmul.mubr.f32.gmra.mrb[0].mxu0 %v4925
        %v4996 = vpop.f32.mrb[0].mxu0
        %v4997 = vadd.f32 0.0, %v4996
        %v4998 = vpop.f32.mrb[0].mxu0
        %4999 = vmatprep.mubr.f32.mxu0 0.0
        %5000 = vmatmul.mubr.f32.gmra.mrb[0].mxu0 %v4928
        %v5001 = vpop.f32.mrb[0].mxu0
        %v5002 = vadd.f32 0.0, %v5001
        %v5003 = vpop.f32.mrb[0].mxu0
        %5004 = vdwg.mxu0
        %v5006 = vsel %vm1197, %v4907, 0
        %v5009 = vsel %vm1197, %v4912, 0
        %5011 = vmatprep.subr.mxu0 0.0
        %5012 = vmatpush1.msra.mxu0 %v4915
        %5013 = vmatprep.subr.mxu0 0.0
        %5014 = vmatpush1.msra.mxu0 %v4916
        %5015 = vmatprep.subr.mxu0 0.0
        %5016 = vmatpush1.msra.mxu0 %v4917
        %5017 = vmatprep.subr.mxu0 0.0
        %5018 = vmatpush1.msra.mxu0 %v4918
        %5019 = vmatprep.subr.mxu0 0.0
        %5020 = vmatpush1.msra.mxu0 0.0
        %5021 = vmatprep.subr.mxu0 0.0
        %5022 = vmatpush1.msra.mxu0 0.0
        %5023 = vmatprep.subr.mxu0 0.0
        %5024 = vmatpush1.msra.mxu0 0.0
        %5025 = vmatprep.subr.mxu0 0.0
        %5026 = vmatpush1.msra.mxu0 0.0
        %5027 = vmatprep.subr.mxu0 0.0
        %5028 = vmatpush1.msra.mxu0 0.0
        %5029 = vmatprep.subr.mxu0 0.0
        %5030 = vmatpush1.msra.mxu0 0.0
        %5031 = vmatprep.subr.mxu0 0.0
        %5032 = vmatpush1.msra.mxu0 0.0
        %5033 = vmatprep.subr.mxu0 0.0
        %5034 = vmatpush1.msra.mxu0 0.0
        %5035 = vmatprep.subr.mxu0 0.0
        %5036 = vmatpush1.msra.mxu0 0.0
        %5037 = vmatprep.subr.mxu0 0.0
        %5038 = vmatpush1.msra.mxu0 0.0
        %5039 = vmatprep.subr.mxu0 0.0
        %5040 = vmatpush1.msra.mxu0 0.0
        %5041 = vmatprep.subr.mxu0 0.0
        %5042 = vmatpush1.msra.mxu0 0.0
        %5043 = vmatprep.subr.mxu0 0.0
        %5044 = vmatpush1.msra.mxu0 0.0
        %5045 = vmatprep.subr.mxu0 0.0
        %5046 = vmatpush1.msra.mxu0 0.0
        %5047 = vmatprep.subr.mxu0 0.0
        %5048 = vmatpush1.msra.mxu0 0.0
        %5049 = vmatprep.subr.mxu0 0.0
        %5050 = vmatpush1.msra.mxu0 0.0
        %5051 = vmatprep.subr.mxu0 0.0
        %5052 = vmatpush1.msra.mxu0 0.0
        %5053 = vmatprep.subr.mxu0 0.0
        %5054 = vmatpush1.msra.mxu0 0.0
        %5055 = vmatprep.subr.mxu0 0.0
        %5056 = vmatpush1.msra.mxu0 0.0
        %5057 = vmatprep.subr.mxu0 0.0
        %5058 = vmatpush1.msra.mxu0 0.0
        %5059 = vmatprep.subr.mxu0 0.0
        %5060 = vmatpush1.msra.mxu0 0.0
        %5061 = vmatprep.subr.mxu0 0.0
        %5062 = vmatpush1.msra.mxu0 0.0
        %5063 = vmatprep.subr.mxu0 0.0
        %5064 = vmatpush1.msra.mxu0 0.0
        %5065 = vmatprep.subr.mxu0 0.0
        %5066 = vmatpush1.msra.mxu0 0.0
        %5067 = vmatprep.subr.mxu0 0.0
        %5068 = vmatpush1.msra.mxu0 0.0
        %5069 = vmatprep.subr.mxu0 0.0
        %5070 = vmatpush1.msra.mxu0 0.0
        %5071 = vmatprep.subr.mxu0 0.0
        %5072 = vmatpush1.msra.mxu0 0.0
        %5073 = vmatprep.subr.mxu0 0.0
        %5074 = vmatpush1.msra.mxu0 0.0
        %5075 = vmatprep.mubr.f32.mxu0 0.0
        %5076 = vmatmul.mubr.f32.gmra.mrb[0].mxu0 %v5006
        %v5077 = vpop.f32.mrb[0].mxu0
        %v5078 = vadd.f32 %v4997, %v5077
        %v5079 = vpop.f32.mrb[0].mxu0
        %5080 = vmatprep.mubr.f32.mxu0 0.0
        %5081 = vmatmul.mubr.f32.gmra.mrb[0].mxu0 %v5009
        %v5082 = vpop.f32.mrb[0].mxu0
        %v5083 = vadd.f32 %v5002, %v5082
        %v5084 = vpop.f32.mrb[0].mxu0
        %5085 = vdwg.mxu0
        %s5086 = scalar_lea.vmem %s1085, 64
        %v5087 = vld [vmem:[%s5086] sm:$0xff]
        %v5088 = vld [vmem:[%s5086 + $0x8] sm:$0xff]
        %v5089 = vld [vmem:[%s5086 + $0x10] sm:$0xff]
        %v5090 = vld [vmem:[%s5086 + $0x18] sm:$0xff]
        %v5092 = vsel %vm1197, %v4754, 0
        %v5095 = vsel %vm1197, %v4755, 0
        %5097 = vmatprep.subr.mxu0 0.0
        %5098 = vmatpush1.msra.mxu0 %v5087
        %5099 = vmatprep.subr.mxu0 0.0
        %5100 = vmatpush1.msra.mxu0 %v5088
        %5101 = vmatprep.subr.mxu0 0.0
        %5102 = vmatpush1.msra.mxu0 %v5089
        %5103 = vmatprep.subr.mxu0 0.0
        %5104 = vmatpush1.msra.mxu0 %v5090
        %5105 = vmatprep.subr.mxu0 0.0
        %5106 = vmatpush1.msra.mxu0 0.0
        %5107 = vmatprep.subr.mxu0 0.0
        %5108 = vmatpush1.msra.mxu0 0.0
        %5109 = vmatprep.subr.mxu0 0.0
        %5110 = vmatpush1.msra.mxu0 0.0
        %5111 = vmatprep.subr.mxu0 0.0
        %5112 = vmatpush1.msra.mxu0 0.0
        %5113 = vmatprep.subr.mxu0 0.0
        %5114 = vmatpush1.msra.mxu0 0.0
        %5115 = vmatprep.subr.mxu0 0.0
        %5116 = vmatpush1.msra.mxu0 0.0
        %5117 = vmatprep.subr.mxu0 0.0
        %5118 = vmatpush1.msra.mxu0 0.0
        %5119 = vmatprep.subr.mxu0 0.0
        %5120 = vmatpush1.msra.mxu0 0.0
        %5121 = vmatprep.subr.mxu0 0.0
        %5122 = vmatpush1.msra.mxu0 0.0
        %5123 = vmatprep.subr.mxu0 0.0
        %5124 = vmatpush1.msra.mxu0 0.0
        %5125 = vmatprep.subr.mxu0 0.0
        %5126 = vmatpush1.msra.mxu0 0.0
        %5127 = vmatprep.subr.mxu0 0.0
        %5128 = vmatpush1.msra.mxu0 0.0
        %5129 = vmatprep.subr.mxu0 0.0
        %5130 = vmatpush1.msra.mxu0 0.0
        %5131 = vmatprep.subr.mxu0 0.0
        %5132 = vmatpush1.msra.mxu0 0.0
        %5133 = vmatprep.subr.mxu0 0.0
        %5134 = vmatpush1.msra.mxu0 0.0
        %5135 = vmatprep.subr.mxu0 0.0
        %5136 = vmatpush1.msra.mxu0 0.0
        %5137 = vmatprep.subr.mxu0 0.0
        %5138 = vmatpush1.msra.mxu0 0.0
        %5139 = vmatprep.subr.mxu0 0.0
        %5140 = vmatpush1.msra.mxu0 0.0
        %5141 = vmatprep.subr.mxu0 0.0
        %5142 = vmatpush1.msra.mxu0 0.0
        %5143 = vmatprep.subr.mxu0 0.0
        %5144 = vmatpush1.msra.mxu0 0.0
        %5145 = vmatprep.subr.mxu0 0.0
        %5146 = vmatpush1.msra.mxu0 0.0
        %5147 = vmatprep.subr.mxu0 0.0
        %5148 = vmatpush1.msra.mxu0 0.0
        %5149 = vmatprep.subr.mxu0 0.0
        %5150 = vmatpush1.msra.mxu0 0.0
        %5151 = vmatprep.subr.mxu0 0.0
        %5152 = vmatpush1.msra.mxu0 0.0
        %5153 = vmatprep.subr.mxu0 0.0
        %5154 = vmatpush1.msra.mxu0 0.0
        %5155 = vmatprep.subr.mxu0 0.0
        %5156 = vmatpush1.msra.mxu0 0.0
        %5157 = vmatprep.subr.mxu0 0.0
        %5158 = vmatpush1.msra.mxu0 0.0
        %5159 = vmatprep.subr.mxu0 0.0
        %5160 = vmatpush1.msra.mxu0 0.0
        %5161 = vmatprep.mubr.f32.mxu0 0.0
        %5162 = vmatmul.mubr.f32.gmra.mrb[0].mxu0 %v5092
        %v5163 = vpop.f32.mrb[0].mxu0
        %v5164 = vadd.f32 0.0, %v5163
        %v5165 = vpop.f32.mrb[0].mxu0
        %5166 = vmatprep.mubr.f32.mxu0 0.0
        %5167 = vmatmul.mubr.f32.gmra.mrb[0].mxu0 %v5095
        %v5168 = vpop.f32.mrb[0].mxu0
        %v5169 = vadd.f32 0.0, %v5168
        %v5170 = vpop.f32.mrb[0].mxu0
        %5171 = vdwg.mxu0
        %v5172 = vadd.f32 %v5078, %v5164
        %v5173 = vadd.f32 %v5083, %v5169
        %v5175 = vlaneseq
        %v5176 = vshrl.u32 %v5175, 7
        %v5177 = vsub.s32 0, %v5176
        %v5178 = vrot.slane %v4756, %v5177
        %v5180 = vadd.f32 %v5172, %v5178
        %v5181 = vadd.f32 %v5173, %v5178
        %v5182 = vmax.f32 %v5180, 0.0
        %v5183 = vmax.f32 %v5181, 0.0
        %v5184 = vld [vmem:[%s1096] sm:$0x1]
        %5185 = vmatprep.subr.mxu0 0.0
        %5186 = vmatpush1.msra.mxu0 %v5182
        %5187 = vmatprep.subr.mxu0 0.0
        %5188 = vmatpush1.msra.mxu0 %v5183
        %5189 = vmatprep.subr.mxu0 0.0
        %5190 = vmatpush1.msra.mxu0 0.0
        %5191 = vmatprep.subr.mxu0 0.0
        %5192 = vmatpush1.msra.mxu0 0.0
        %5193 = vmatprep.subr.mxu0 0.0
        %5194 = vmatpush1.msra.mxu0 0.0
        %5195 = vmatprep.subr.mxu0 0.0
        %5196 = vmatpush1.msra.mxu0 0.0
        %5197 = vmatprep.subr.mxu0 0.0
        %5198 = vmatpush1.msra.mxu0 0.0
        %5199 = vmatprep.subr.mxu0 0.0
        %5200 = vmatpush1.msra.mxu0 0.0
        %5201 = vmatprep.subr.mxu0 0.0
        %5202 = vmatpush1.msra.mxu0 0.0
        %5203 = vmatprep.subr.mxu0 0.0
        %5204 = vmatpush1.msra.mxu0 0.0
        %5205 = vmatprep.subr.mxu0 0.0
        %5206 = vmatpush1.msra.mxu0 0.0
        %5207 = vmatprep.subr.mxu0 0.0
        %5208 = vmatpush1.msra.mxu0 0.0
        %5209 = vmatprep.subr.mxu0 0.0
        %5210 = vmatpush1.msra.mxu0 0.0
        %5211 = vmatprep.subr.mxu0 0.0
        %5212 = vmatpush1.msra.mxu0 0.0
        %5213 = vmatprep.subr.mxu0 0.0
        %5214 = vmatpush1.msra.mxu0 0.0
        %5215 = vmatprep.subr.mxu0 0.0
        %5216 = vmatpush1.msra.mxu0 0.0
        %5217 = vmatprep.subr.mxu0 0.0
        %5218 = vmatpush1.msra.mxu0 0.0
        %5219 = vmatprep.subr.mxu0 0.0
        %5220 = vmatpush1.msra.mxu0 0.0
        %5221 = vmatprep.subr.mxu0 0.0
        %5222 = vmatpush1.msra.mxu0 0.0
        %5223 = vmatprep.subr.mxu0 0.0
        %5224 = vmatpush1.msra.mxu0 0.0
        %5225 = vmatprep.subr.mxu0 0.0
        %5226 = vmatpush1.msra.mxu0 0.0
        %5227 = vmatprep.subr.mxu0 0.0
        %5228 = vmatpush1.msra.mxu0 0.0
        %5229 = vmatprep.subr.mxu0 0.0
        %5230 = vmatpush1.msra.mxu0 0.0
        %5231 = vmatprep.subr.mxu0 0.0
        %5232 = vmatpush1.msra.mxu0 0.0
        %5233 = vmatprep.subr.mxu0 0.0
        %5234 = vmatpush1.msra.mxu0 0.0
        %5235 = vmatprep.subr.mxu0 0.0
        %5236 = vmatpush1.msra.mxu0 0.0
        %5237 = vmatprep.subr.mxu0 0.0
        %5238 = vmatpush1.msra.mxu0 0.0
        %5239 = vmatprep.subr.mxu0 0.0
        %5240 = vmatpush1.msra.mxu0 0.0
        %5241 = vmatprep.subr.mxu0 0.0
        %5242 = vmatpush1.msra.mxu0 0.0
        %5243 = vmatprep.subr.mxu0 0.0
        %5244 = vmatpush1.msra.mxu0 0.0
        %5245 = vmatprep.subr.mxu0 0.0
        %5246 = vmatpush1.msra.mxu0 0.0
        %5247 = vmatprep.subr.mxu0 0.0
        %5248 = vmatpush1.msra.mxu0 0.0
        %5249 = vmatprep.mubr.f32.mxu0 0.0
        %5250 = vmatmul.mubr.f32.gmra.mrb[0].mxu0 %v4760
        %v5251 = vpop.f32.mrb[0].mxu0
        %v5252 = vadd.f32 0.0, %v5251
        %v5253 = vpop.f32.mrb[0].mxu0
        %5254 = vmatprep.mubr.f32.mxu0 0.0
        %5255 = vmatmul.mubr.f32.gmra.mrb[0].mxu0 %v4763
        %v5256 = vpop.f32.mrb[0].mxu0
        %v5257 = vadd.f32 0.0, %v5256
        %v5258 = vpop.f32.mrb[0].mxu0
        %5259 = vdwg.mxu0
        %5260 = vmatprep.subr.mxu0 0.0
        %5261 = vmatpush1.msra.mxu0 %v5252
        %5262 = vmatprep.subr.mxu0 0.0
        %5263 = vmatpush1.msra.mxu0 %v5257
        %5264 = vmatprep.subr.mxu0 0.0
        %5265 = vmatpush1.msra.mxu0 0.0
        %5266 = vmatprep.subr.mxu0 0.0
        %5267 = vmatpush1.msra.mxu0 0.0
        %5268 = vmatprep.subr.mxu0 0.0
        %5269 = vmatpush1.msra.mxu0 0.0
        %5270 = vmatprep.subr.mxu0 0.0
        %5271 = vmatpush1.msra.mxu0 0.0
        %5272 = vmatprep.subr.mxu0 0.0
        %5273 = vmatpush1.msra.mxu0 0.0
        %5274 = vmatprep.subr.mxu0 0.0
        %5275 = vmatpush1.msra.mxu0 0.0
        %5276 = vmatprep.subr.mxu0 0.0
        %5277 = vmatpush1.msra.mxu0 0.0
        %5278 = vmatprep.subr.mxu0 0.0
        %5279 = vmatpush1.msra.mxu0 0.0
        %5280 = vmatprep.subr.mxu0 0.0
        %5281 = vmatpush1.msra.mxu0 0.0
        %5282 = vmatprep.subr.mxu0 0.0
        %5283 = vmatpush1.msra.mxu0 0.0
        %5284 = vmatprep.subr.mxu0 0.0
        %5285 = vmatpush1.msra.mxu0 0.0
        %5286 = vmatprep.subr.mxu0 0.0
        %5287 = vmatpush1.msra.mxu0 0.0
        %5288 = vmatprep.subr.mxu0 0.0
        %5289 = vmatpush1.msra.mxu0 0.0
        %5290 = vmatprep.subr.mxu0 0.0
        %5291 = vmatpush1.msra.mxu0 0.0
        %5292 = vmatprep.subr.mxu0 0.0
        %5293 = vmatpush1.msra.mxu0 0.0
        %5294 = vmatprep.subr.mxu0 0.0
        %5295 = vmatpush1.msra.mxu0 0.0
        %5296 = vmatprep.subr.mxu0 0.0
        %5297 = vmatpush1.msra.mxu0 0.0
        %5298 = vmatprep.subr.mxu0 0.0
        %5299 = vmatpush1.msra.mxu0 0.0
        %5300 = vmatprep.subr.mxu0 0.0
        %5301 = vmatpush1.msra.mxu0 0.0
        %5302 = vmatprep.subr.mxu0 0.0
        %5303 = vmatpush1.msra.mxu0 0.0
        %5304 = vmatprep.subr.mxu0 0.0
        %5305 = vmatpush1.msra.mxu0 0.0
        %5306 = vmatprep.subr.mxu0 0.0
        %5307 = vmatpush1.msra.mxu0 0.0
        %5308 = vmatprep.subr.mxu0 0.0
        %5309 = vmatpush1.msra.mxu0 0.0
        %5310 = vmatprep.subr.mxu0 0.0
        %5311 = vmatpush1.msra.mxu0 0.0
        %5312 = vmatprep.subr.mxu0 0.0
        %5313 = vmatpush1.msra.mxu0 0.0
        %5314 = vmatprep.subr.mxu0 0.0
        %5315 = vmatpush1.msra.mxu0 0.0
        %5316 = vmatprep.subr.mxu0 0.0
        %5317 = vmatpush1.msra.mxu0 0.0
        %5318 = vmatprep.subr.mxu0 0.0
        %5319 = vmatpush1.msra.mxu0 0.0
        %5320 = vmatprep.subr.mxu0 0.0
        %5321 = vmatpush1.msra.mxu0 0.0
        %5322 = vmatprep.subr.mxu0 0.0
        %5323 = vmatpush1.msra.mxu0 0.0
        %5324 = vmatprep.mubr.f32.mxu0 0.0
        %5325 = vmatmul.mubr.f32.gmra.mrb[0].mxu0 %v4760
        %v5326 = vpop.f32.mrb[0].mxu0
        %v5327 = vadd.f32 0.0, %v5326
        %v5328 = vpop.f32.mrb[0].mxu0
        %5329 = vmatprep.mubr.f32.mxu0 0.0
        %5330 = vmatmul.mubr.f32.gmra.mrb[0].mxu0 %v4763
        %v5331 = vpop.f32.mrb[0].mxu0
        %v5332 = vadd.f32 0.0, %v5331
        %v5333 = vpop.f32.mrb[0].mxu0
        %5334 = vdwg.mxu0
        %v5335 = vld [vmem:[%s1093] sm:$0xff]
        %v5336 = vld [vmem:[%s1093 + $0x8] sm:$0xff]
        %v5337 = vld [vmem:[%s1093 + $0x10] sm:$0xff]
        %v5338 = vld [vmem:[%s1093 + $0x18] sm:$0xff]
        %v5339 = vld [vmem:[%s1093 + $0x20] sm:$0xff]
        %v5340 = vld [vmem:[%s1093 + $0x28] sm:$0xff]
        %v5341 = vld [vmem:[%s1093 + $0x30] sm:$0xff]
        %v5342 = vld [vmem:[%s1093 + $0x38] sm:$0xff]
        %s5343 = scalar_lea.vmem %s1093, 64
        %v5344 = vld [vmem:[%s5343] sm:$0xff]
        %v5345 = vld [vmem:[%s5343 + $0x8] sm:$0xff]
        %v5346 = vld [vmem:[%s5343 + $0x10] sm:$0xff]
        %v5347 = vld [vmem:[%s5343 + $0x18] sm:$0xff]
        %v5348 = vld [vmem:[%s5343 + $0x20] sm:$0xff]
        %v5349 = vld [vmem:[%s5343 + $0x28] sm:$0xff]
        %v5350 = vld [vmem:[%s5343 + $0x30] sm:$0xff]
        %v5351 = vld [vmem:[%s5343 + $0x38] sm:$0xff]
        %vm5352 = vcmask 523264
        %v5354 = vsel %vm5352, %v5252, 0
        %v5357 = vsel %vm5352, %v5257, 0
        %5359 = vmatprep.subr.mxu0 0.0
        %5360 = vmatpush1.msra.mxu0 %v5344
        %5361 = vmatprep.subr.mxu0 0.0
        %5362 = vmatpush1.msra.mxu0 %v5345
        %5363 = vmatprep.subr.mxu0 0.0
        %5364 = vmatpush1.msra.mxu0 %v5346
        %5365 = vmatprep.subr.mxu0 0.0
        %5366 = vmatpush1.msra.mxu0 %v5347
        %5367 = vmatprep.subr.mxu0 0.0
        %5368 = vmatpush1.msra.mxu0 %v5348
        %5369 = vmatprep.subr.mxu0 0.0
        %5370 = vmatpush1.msra.mxu0 %v5349
        %5371 = vmatprep.subr.mxu0 0.0
        %5372 = vmatpush1.msra.mxu0 %v5350
        %5373 = vmatprep.subr.mxu0 0.0
        %5374 = vmatpush1.msra.mxu0 %v5351
        %5375 = vmatprep.subr.mxu0 0.0
        %5376 = vmatpush1.msra.mxu0 0.0
        %5377 = vmatprep.subr.mxu0 0.0
        %5378 = vmatpush1.msra.mxu0 0.0
        %5379 = vmatprep.subr.mxu0 0.0
        %5380 = vmatpush1.msra.mxu0 0.0
        %5381 = vmatprep.subr.mxu0 0.0
        %5382 = vmatpush1.msra.mxu0 0.0
        %5383 = vmatprep.subr.mxu0 0.0
        %5384 = vmatpush1.msra.mxu0 0.0
        %5385 = vmatprep.subr.mxu0 0.0
        %5386 = vmatpush1.msra.mxu0 0.0
        %5387 = vmatprep.subr.mxu0 0.0
        %5388 = vmatpush1.msra.mxu0 0.0
        %5389 = vmatprep.subr.mxu0 0.0
        %5390 = vmatpush1.msra.mxu0 0.0
        %5391 = vmatprep.subr.mxu0 0.0
        %5392 = vmatpush1.msra.mxu0 0.0
        %5393 = vmatprep.subr.mxu0 0.0
        %5394 = vmatpush1.msra.mxu0 0.0
        %5395 = vmatprep.subr.mxu0 0.0
        %5396 = vmatpush1.msra.mxu0 0.0
        %5397 = vmatprep.subr.mxu0 0.0
        %5398 = vmatpush1.msra.mxu0 0.0
        %5399 = vmatprep.subr.mxu0 0.0
        %5400 = vmatpush1.msra.mxu0 0.0
        %5401 = vmatprep.subr.mxu0 0.0
        %5402 = vmatpush1.msra.mxu0 0.0
        %5403 = vmatprep.subr.mxu0 0.0
        %5404 = vmatpush1.msra.mxu0 0.0
        %5405 = vmatprep.subr.mxu0 0.0
        %5406 = vmatpush1.msra.mxu0 0.0
        %5407 = vmatprep.subr.mxu0 0.0
        %5408 = vmatpush1.msra.mxu0 0.0
        %5409 = vmatprep.subr.mxu0 0.0
        %5410 = vmatpush1.msra.mxu0 0.0
        %5411 = vmatprep.subr.mxu0 0.0
        %5412 = vmatpush1.msra.mxu0 0.0
        %5413 = vmatprep.subr.mxu0 0.0
        %5414 = vmatpush1.msra.mxu0 0.0
        %5415 = vmatprep.subr.mxu0 0.0
        %5416 = vmatpush1.msra.mxu0 0.0
        %5417 = vmatprep.subr.mxu0 0.0
        %5418 = vmatpush1.msra.mxu0 0.0
        %5419 = vmatprep.subr.mxu0 0.0
        %5420 = vmatpush1.msra.mxu0 0.0
        %5421 = vmatprep.subr.mxu0 0.0
        %5422 = vmatpush1.msra.mxu0 0.0
        %5423 = vmatprep.mubr.f32.mxu0 0.0
        %5424 = vmatmul.mubr.f32.gmra.mrb[0].mxu0 %v5354
        %v5425 = vpop.f32.mrb[0].mxu0
        %v5426 = vadd.f32 0.0, %v5425
        %v5427 = vpop.f32.mrb[0].mxu0
        %5428 = vmatprep.mubr.f32.mxu0 0.0
        %5429 = vmatmul.mubr.f32.gmra.mrb[0].mxu0 %v5357
        %v5430 = vpop.f32.mrb[0].mxu0
        %v5431 = vadd.f32 0.0, %v5430
        %v5432 = vpop.f32.mrb[0].mxu0
        %5433 = vdwg.mxu0
        %v5435 = vsel %vm5352, %v5327, 0
        %v5438 = vsel %vm5352, %v5332, 0
        %5440 = vmatprep.subr.mxu0 0.0
        %5441 = vmatpush1.msra.mxu0 %v5335
        %5442 = vmatprep.subr.mxu0 0.0
        %5443 = vmatpush1.msra.mxu0 %v5336
        %5444 = vmatprep.subr.mxu0 0.0
        %5445 = vmatpush1.msra.mxu0 %v5337
        %5446 = vmatprep.subr.mxu0 0.0
        %5447 = vmatpush1.msra.mxu0 %v5338
        %5448 = vmatprep.subr.mxu0 0.0
        %5449 = vmatpush1.msra.mxu0 %v5339
        %5450 = vmatprep.subr.mxu0 0.0
        %5451 = vmatpush1.msra.mxu0 %v5340
        %5452 = vmatprep.subr.mxu0 0.0
        %5453 = vmatpush1.msra.mxu0 %v5341
        %5454 = vmatprep.subr.mxu0 0.0
        %5455 = vmatpush1.msra.mxu0 %v5342
        %5456 = vmatprep.subr.mxu0 0.0
        %5457 = vmatpush1.msra.mxu0 0.0
        %5458 = vmatprep.subr.mxu0 0.0
        %5459 = vmatpush1.msra.mxu0 0.0
        %5460 = vmatprep.subr.mxu0 0.0
        %5461 = vmatpush1.msra.mxu0 0.0
        %5462 = vmatprep.subr.mxu0 0.0
        %5463 = vmatpush1.msra.mxu0 0.0
        %5464 = vmatprep.subr.mxu0 0.0
        %5465 = vmatpush1.msra.mxu0 0.0
        %5466 = vmatprep.subr.mxu0 0.0
        %5467 = vmatpush1.msra.mxu0 0.0
        %5468 = vmatprep.subr.mxu0 0.0
        %5469 = vmatpush1.msra.mxu0 0.0
        %5470 = vmatprep.subr.mxu0 0.0
        %5471 = vmatpush1.msra.mxu0 0.0
        %5472 = vmatprep.subr.mxu0 0.0
        %5473 = vmatpush1.msra.mxu0 0.0
        %5474 = vmatprep.subr.mxu0 0.0
        %5475 = vmatpush1.msra.mxu0 0.0
        %5476 = vmatprep.subr.mxu0 0.0
        %5477 = vmatpush1.msra.mxu0 0.0
        %5478 = vmatprep.subr.mxu0 0.0
        %5479 = vmatpush1.msra.mxu0 0.0
        %5480 = vmatprep.subr.mxu0 0.0
        %5481 = vmatpush1.msra.mxu0 0.0
        %5482 = vmatprep.subr.mxu0 0.0
        %5483 = vmatpush1.msra.mxu0 0.0
        %5484 = vmatprep.subr.mxu0 0.0
        %5485 = vmatpush1.msra.mxu0 0.0
        %5486 = vmatprep.subr.mxu0 0.0
        %5487 = vmatpush1.msra.mxu0 0.0
        %5488 = vmatprep.subr.mxu0 0.0
        %5489 = vmatpush1.msra.mxu0 0.0
        %5490 = vmatprep.subr.mxu0 0.0
        %5491 = vmatpush1.msra.mxu0 0.0
        %5492 = vmatprep.subr.mxu0 0.0
        %5493 = vmatpush1.msra.mxu0 0.0
        %5494 = vmatprep.subr.mxu0 0.0
        %5495 = vmatpush1.msra.mxu0 0.0
        %5496 = vmatprep.subr.mxu0 0.0
        %5497 = vmatpush1.msra.mxu0 0.0
        %5498 = vmatprep.subr.mxu0 0.0
        %5499 = vmatpush1.msra.mxu0 0.0
        %5500 = vmatprep.subr.mxu0 0.0
        %5501 = vmatpush1.msra.mxu0 0.0
        %5502 = vmatprep.subr.mxu0 0.0
        %5503 = vmatpush1.msra.mxu0 0.0
        %5504 = vmatprep.mubr.f32.mxu0 0.0
        %5505 = vmatmul.mubr.f32.gmra.mrb[0].mxu0 %v5435
        %v5506 = vpop.f32.mrb[0].mxu0
        %v5507 = vadd.f32 %v5426, %v5506
        %v5508 = vpop.f32.mrb[0].mxu0
        %5509 = vmatprep.mubr.f32.mxu0 0.0
        %5510 = vmatmul.mubr.f32.gmra.mrb[0].mxu0 %v5438
        %v5511 = vpop.f32.mrb[0].mxu0
        %v5512 = vadd.f32 %v5431, %v5511
        %v5513 = vpop.f32.mrb[0].mxu0
        %5514 = vdwg.mxu0
        %s5515 = scalar_lea.vmem %s1093, 128
        %v5516 = vld [vmem:[%s5515] sm:$0xff]
        %v5517 = vld [vmem:[%s5515 + $0x8] sm:$0xff]
        %v5518 = vld [vmem:[%s5515 + $0x10] sm:$0xff]
        %v5519 = vld [vmem:[%s5515 + $0x18] sm:$0xff]
        %v5520 = vld [vmem:[%s5515 + $0x20] sm:$0xff]
        %v5521 = vld [vmem:[%s5515 + $0x28] sm:$0xff]
        %v5522 = vld [vmem:[%s5515 + $0x30] sm:$0xff]
        %v5523 = vld [vmem:[%s5515 + $0x38] sm:$0xff]
        %v5525 = vsel %vm5352, %v5182, 0
        %v5528 = vsel %vm5352, %v5183, 0
        %5530 = vmatprep.subr.mxu0 0.0
        %5531 = vmatpush1.msra.mxu0 %v5516
        %5532 = vmatprep.subr.mxu0 0.0
        %5533 = vmatpush1.msra.mxu0 %v5517
        %5534 = vmatprep.subr.mxu0 0.0
        %5535 = vmatpush1.msra.mxu0 %v5518
        %5536 = vmatprep.subr.mxu0 0.0
        %5537 = vmatpush1.msra.mxu0 %v5519
        %5538 = vmatprep.subr.mxu0 0.0
        %5539 = vmatpush1.msra.mxu0 %v5520
        %5540 = vmatprep.subr.mxu0 0.0
        %5541 = vmatpush1.msra.mxu0 %v5521
        %5542 = vmatprep.subr.mxu0 0.0
        %5543 = vmatpush1.msra.mxu0 %v5522
        %5544 = vmatprep.subr.mxu0 0.0
        %5545 = vmatpush1.msra.mxu0 %v5523
        %5546 = vmatprep.subr.mxu0 0.0
        %5547 = vmatpush1.msra.mxu0 0.0
        %5548 = vmatprep.subr.mxu0 0.0
        %5549 = vmatpush1.msra.mxu0 0.0
        %5550 = vmatprep.subr.mxu0 0.0
        %5551 = vmatpush1.msra.mxu0 0.0
        %5552 = vmatprep.subr.mxu0 0.0
        %5553 = vmatpush1.msra.mxu0 0.0
        %5554 = vmatprep.subr.mxu0 0.0
        %5555 = vmatpush1.msra.mxu0 0.0
        %5556 = vmatprep.subr.mxu0 0.0
        %5557 = vmatpush1.msra.mxu0 0.0
        %5558 = vmatprep.subr.mxu0 0.0
        %5559 = vmatpush1.msra.mxu0 0.0
        %5560 = vmatprep.subr.mxu0 0.0
        %5561 = vmatpush1.msra.mxu0 0.0
        %5562 = vmatprep.subr.mxu0 0.0
        %5563 = vmatpush1.msra.mxu0 0.0
        %5564 = vmatprep.subr.mxu0 0.0
        %5565 = vmatpush1.msra.mxu0 0.0
        %5566 = vmatprep.subr.mxu0 0.0
        %5567 = vmatpush1.msra.mxu0 0.0
        %5568 = vmatprep.subr.mxu0 0.0
        %5569 = vmatpush1.msra.mxu0 0.0
        %5570 = vmatprep.subr.mxu0 0.0
        %5571 = vmatpush1.msra.mxu0 0.0
        %5572 = vmatprep.subr.mxu0 0.0
        %5573 = vmatpush1.msra.mxu0 0.0
        %5574 = vmatprep.subr.mxu0 0.0
        %5575 = vmatpush1.msra.mxu0 0.0
        %5576 = vmatprep.subr.mxu0 0.0
        %5577 = vmatpush1.msra.mxu0 0.0
        %5578 = vmatprep.subr.mxu0 0.0
        %5579 = vmatpush1.msra.mxu0 0.0
        %5580 = vmatprep.subr.mxu0 0.0
        %5581 = vmatpush1.msra.mxu0 0.0
        %5582 = vmatprep.subr.mxu0 0.0
        %5583 = vmatpush1.msra.mxu0 0.0
        %5584 = vmatprep.subr.mxu0 0.0
        %5585 = vmatpush1.msra.mxu0 0.0
        %5586 = vmatprep.subr.mxu0 0.0
        %5587 = vmatpush1.msra.mxu0 0.0
        %5588 = vmatprep.subr.mxu0 0.0
        %5589 = vmatpush1.msra.mxu0 0.0
        %5590 = vmatprep.subr.mxu0 0.0
        %5591 = vmatpush1.msra.mxu0 0.0
        %5592 = vmatprep.subr.mxu0 0.0
        %5593 = vmatpush1.msra.mxu0 0.0
        %5594 = vmatprep.mubr.f32.mxu0 0.0
        %5595 = vmatmul.mubr.f32.gmra.mrb[0].mxu0 %v5525
        %v5596 = vpop.f32.mrb[0].mxu0
        %v5597 = vadd.f32 0.0, %v5596
        %v5598 = vpop.f32.mrb[0].mxu0
        %5599 = vmatprep.mubr.f32.mxu0 0.0
        %5600 = vmatmul.mubr.f32.gmra.mrb[0].mxu0 %v5528
        %v5601 = vpop.f32.mrb[0].mxu0
        %v5602 = vadd.f32 0.0, %v5601
        %v5603 = vpop.f32.mrb[0].mxu0
        %5604 = vdwg.mxu0
        %v5605 = vadd.f32 %v5507, %v5597
        %v5606 = vadd.f32 %v5512, %v5602
        %v5608 = vlaneseq
        %v5609 = vshrl.u32 %v5608, 7
        %v5610 = vsub.s32 0, %v5609
        %v5611 = vrot.slane %v5184, %v5610
        %v5613 = vadd.f32 %v5605, %v5611
        %v5614 = vadd.f32 %v5606, %v5611
        %v5615 = vmax.f32 %v5613, 0.0
        %v5616 = vmax.f32 %v5614, 0.0
        %v5617 = vadd.f32 %v4696, %v5615
        %v5618 = vadd.f32 %v4697, %v5616
        %5619 = vst.msk [vmem:[#allocation2] sm:$0xff] %vm1197, %v5617
        %5620 = vst.msk [vmem:[#allocation2 + $0x8] sm:$0xff] %vm1197, %v5618
        // Predicated region
        $region157: #{tpu_custom_call.1} parent=111 // pred_check
          %p5621 = pneg %p4698
        $region158: #{tpu_custom_call.1} parent=111 // pred_check_branch
          %5623 = sbr.rel (%p5621) target = $region160
        $region159: #{tpu_custom_call.1} parent=111 // pred_region
          %v5624 = vld [vmem:[%s7] sm:$0x1]
          %v5625 = vld [vmem:[#allocation15] sm:$0x1]
          %v5626 = vsel %vm1197, %v5617, 0.0
          %5627 = vadd.xlane.f32.xlu0 %v5626
          %v5628 = vpop.xlane.xlu0 %5627
          %v5629 = vsel %vm1197, %v5618, 0.0
          %5630 = vadd.xlane.f32.xlu0 %v5629
          %v5631 = vpop.xlane.xlu0 %5630
          %v5632 = vmul.f32 %v5628, %v1204
          %v5633 = vmul.f32 %v5631, %v1204
          %v5634 = vsub.f32 %v5617, %v5632
          %v5635 = vsub.f32 %v5618, %v5633
          %v5636 = vmul.f32 %v5634, %v5634
          %v5637 = vmul.f32 %v5635, %v5635
          %v5638 = vsel %vm1197, %v5636, 0.0
          %5639 = vadd.xlane.f32.xlu0 %v5638
          %v5640 = vpop.xlane.xlu0 %5639
          %v5641 = vsel %vm1197, %v5637, 0.0
          %5642 = vadd.xlane.f32.xlu0 %v5641
          %v5643 = vpop.xlane.xlu0 %5642
          %v5644 = vmul.f32 %v5640, %v1217
          %v5645 = vmul.f32 %v5643, %v1217
          %v5646 = vrsqrt.pop %v5644
          %v5647 = vmul.f32 %v5644, %v5646
          %vm5648 = vcmp.eq.f32.partialorder %v5644, inf
          %v5649 = vsel %vm5648, %v5644, %v5647
          %vm5650 = vcmp.eq.f32.partialorder %v5644, 0.0
          %v5651 = vand.u32 %v5644, 2147483648
          %v5652 = vsel %vm5650, %v5651, %v5649
          %v5653 = vrsqrt.pop %v5645
          %v5654 = vmul.f32 %v5645, %v5653
          %vm5655 = vcmp.eq.f32.partialorder %v5645, inf
          %v5656 = vsel %vm5655, %v5645, %v5654
          %vm5657 = vcmp.eq.f32.partialorder %v5645, 0.0
          %v5658 = vand.u32 %v5645, 2147483648
          %v5659 = vsel %vm5657, %v5658, %v5656
          %v5661 = vlaneseq
          %v5662 = vshrl.u32 %v5661, 7
          %v5663 = vsub.s32 0, %v5662
          %v5664 = vrot.slane %v5624, %v5663
          %v5666 = vmul.f32 %v5664, %v5634
          %v5667 = vmul.f32 %v5664, %v5635
          %v5668 = vadd.f32 %v5652, 1e-06
          %v5669 = vadd.f32 %v5659, 1e-06
          %v5670 = vrcp.pop %v5668
          %v5671 = vmul.f32 %v5666, %v5670
          %v5672 = vrcp.pop %v5669
          %v5673 = vmul.f32 %v5667, %v5672
          %v5675 = vlaneseq
          %v5676 = vshrl.u32 %v5675, 7
          %v5677 = vsub.s32 0, %v5676
          %v5678 = vrot.slane %v5625, %v5677
          %v5680 = vadd.f32 %v5671, %v5678
          %v5681 = vadd.f32 %v5673, %v5678
          %5682 = vst.msk [vmem:[#allocation18] sm:$0xff] %vm1197, %v5680
          %5683 = vst.msk [vmem:[#allocation18 + $0x8] sm:$0xff] %vm1197, %v5681
        $region160: #{tpu_custom_call.1} parent=111 // pred_fallthru
          _
        // Predicated region
        $region161: #{tpu_custom_call.1} parent=111 // pred_check
          %p5684 = pneg %p609
        $region162: #{tpu_custom_call.1} parent=111 // pred_check_branch
          %5686 = sbr.rel (%p5684) target = $region164
        $region163: #{tpu_custom_call.1} parent=111 // pred_region
          %s5688 = ssub.s32 256, 256
          %5689 = vsyncadd [#allocation5], %s5688
          %s5690 = sshll.u32 [#allocation18], 4
          %s5691 = int_to_ptr.vmem [resolvable:$true] %s5690
          %5696 = dma.vmem_to_hbm [thread:$0]  %s5691, 256, %s23, [#allocation5], 128, 128, 8
        $region164: #{tpu_custom_call.1} parent=111 // pred_fallthru
          _
        // Predicated region
        $region165: #{tpu_custom_call.1} parent=111 // pred_check
          %p5697 = pneg %p630
        $region166: #{tpu_custom_call.1} parent=111 // pred_check_branch
          %5699 = sbr.rel (%p5697) target = $region168
        $region167: #{tpu_custom_call.1} parent=111 // pred_region
          %s5701 = ssub.s32 256, 256
          %5702 = vsyncadd [#allocation20], %s5701
          %s5703 = sshll.u32 [#allocation19], 4
          %s5704 = int_to_ptr.vmem [resolvable:$true] %s5703
          %5709 = dma.vmem_to_hbm [thread:$0]  %s5704, 256, %s24, [#allocation20], 128, 128, 8
        $region168: #{tpu_custom_call.1} parent=111 // pred_fallthru
          _
        // Predicated region
        $region169: #{tpu_custom_call.1} parent=111 // pred_check
          %p5710 = pneg %p609
        $region170: #{tpu_custom_call.1} parent=111 // pred_check_branch
          %5712 = sbr.rel (%p5710) target = $region172
        $region171: #{tpu_custom_call.1} parent=111 // pred_region
          %5713 = dma.done [#allocation5], 256
        $region172: #{tpu_custom_call.1} parent=111 // pred_fallthru
          _
        // Predicated region
        $region173: #{tpu_custom_call.1} parent=111 // pred_check
          %p5714 = pneg %p630
        $region174: #{tpu_custom_call.1} parent=111 // pred_check_branch
          %5716 = sbr.rel (%p5714) target = $region176
        $region175: #{tpu_custom_call.1} parent=111 // pred_region
          %5717 = dma.done [#allocation20], 256
        $region176: #{tpu_custom_call.1} parent=111 // pred_fallthru
          _
      $region112: #{tpu_custom_call.1} parent=5 // pred_fallthru
        _
      %p5718 = scmp.le.s32.totalorder 2, %s38
      // Predicated region
      $region177: #{tpu_custom_call.1} parent=5 // pred_check
        %p5719 = pneg %p5718
      $region178: #{tpu_custom_call.1} parent=5 // pred_check_branch
        %5721 = sbr.rel (%p5719) target = $region180
      $region179: #{tpu_custom_call.1} parent=5 // pred_region
        %s5722 = ssub.s32 %s38, 2
      $region180: #{tpu_custom_call.1} parent=5 // pred_fallthru
        _
    $region6: #{tpu_custom_call.1} parent=1 // loop_footer
      %s42 = sadd.s32 1, %s38
    $region7: #{tpu_custom_call.1} parent=1 // loop_footer_branch
      %37 = sbr.rel target = $region3
    $region8: #{tpu_custom_call.1} parent=1 // loop_exit
      _
    %5723 = vsyncpa [#allocation4], 1
    %s5724 = scalar_lea.sflag [#allocation4], 1
    %5725 = vsyncpa %s5724, 1
    %5726 = vsyncpa [#allocation7], 1
    %5727 = vsyncpa [#allocation10], 1
    %5728 = vsyncpa [#allocation13], 1
    %5729 = vsyncpa [#allocation16], 1
    %5730 = vsyncpa [#allocation5], 1
    %s5731 = scalar_lea.sflag [#allocation5], 1
    %5732 = vsyncpa %s5731, 1
    %5733 = vsyncpa [#allocation20], 1

</llo_original>
